<compile_context>
chip_gen: v7x
topology: tpu7x:2x2x1
jax: 0.10.0
libtpu: 0.0.40
codegen_flags: <defaults>
</compile_context>

<pallas_src>
import functools

import jax
import jax.numpy as jnp
import numpy as np
from jax import lax
from jax.experimental import pallas as pl
from jax.experimental.pallas import tpu as pltpu

EPS = 1e-6


def _layernorm(y, gamma, beta):
    mu = jnp.mean(y, axis=-1, keepdims=True)
    var = jnp.mean((y - mu) ** 2, axis=-1, keepdims=True)
    return (y - mu) * lax.rsqrt(var + EPS) * gamma + beta


# ---------------------------------------------------------------------------
# In-kernel helpers
# ---------------------------------------------------------------------------
def _project_kv(x_kv, wkv, bkv, k_ref, v_ref, n_heads, d_k):
    """Fused K/V projection of a full sequence into lane-dense VMEM scratch.

    Scratch layout is (H, d_k, Skv) bf16 (per-head transposed): last dim is the
    sequence (>=128 lanes), so both the one-time store and every per-tile reload
    are unmasked and waste no lanes.
    """
    d_model = n_heads * d_k
    kv = jnp.dot(x_kv, wkv, preferred_element_type=jnp.float32) + bkv   # (Skv, 2D) f32
    kv_t = kv.astype(jnp.bfloat16).T                                    # (2D, Skv) bf16
    k_ref[...] = jnp.stack(
        [kv_t[h * d_k:(h + 1) * d_k] for h in range(n_heads)], axis=0)
    v_ref[...] = jnp.stack(
        [kv_t[d_model + h * d_k:d_model + (h + 1) * d_k] for h in range(n_heads)],
        axis=0)


def _attention(x_q, wq, bq, wo, bo, gamma, beta, k_ref, v_ref, n_heads, d_k):
    """Multi-head attention sub-layer on one (TQ, D) f32 query tile.

    1/sqrt(d_k) is already folded into wq/bq by the wrapper. K/V live in VMEM
    scratch as (H, d_k, Skv) bf16; score and PV products are head-batched bf16
    MXU contractions with f32 accumulation.
    """
    q = jnp.dot(x_q.astype(jnp.bfloat16), wq,
                preferred_element_type=jnp.float32) + bq                # (TQ, D) f32
    qb = q.astype(jnp.bfloat16)
    qh = jnp.stack([qb[:, h * d_k:(h + 1) * d_k] for h in range(n_heads)],
                   axis=0)                                              # (H, TQ, d_k)

    kT = k_ref[...]                                                     # (H, d_k, Skv)
    vT = v_ref[...]                                                     # (H, d_k, Skv)

    s = jnp.einsum("hqd,hdk->hqk", qh, kT,
                   preferred_element_type=jnp.float32)                  # (H, TQ, Skv) f32
    m = jnp.max(s, axis=-1, keepdims=True)
    e = jnp.exp(s - m)
    p = (e * pl.reciprocal(jnp.sum(e, axis=-1, keepdims=True),
                           approx=True)).astype(jnp.bfloat16)
    o = jnp.einsum("hqk,hdk->hqd", p, vT,
                   preferred_element_type=jnp.float32)                  # (H, TQ, d_k) f32

    concat = jnp.concatenate([o[h] for h in range(n_heads)], axis=-1)   # (TQ, D)
    y = jnp.dot(concat.astype(jnp.bfloat16), wo,
                preferred_element_type=jnp.float32) + bo + x_q          # residual
    return _layernorm(y, gamma, beta)


# ---------------------------------------------------------------------------
# Fused DecoderLayer kernel: one (batch, q-tile) block per grid step
# ---------------------------------------------------------------------------
def decoder_layer_kernel(
        n_heads, tile_q,
        # inputs
        dec_full_ref, enc_full_ref,
        wq_s_ref, bq_s_ref, wkv_s_ref, bkv_s_ref, wo_s_ref, bo_s_ref, g_s_ref, be_s_ref,
        wq_c_ref, bq_c_ref, wkv_c_ref, bkv_c_ref, wo_c_ref, bo_c_ref, g_c_ref, be_c_ref,
        w1_ref, b1_ref, w2_ref, b2_ref, g_f_ref, be_f_ref,
        # outputs
        o_ref,
        # scratch
        ks_ref, vs_ref, kc_ref, vc_ref):
    d_model = dec_full_ref.shape[-1]
    d_k = d_model // n_heads

    # Hoisted K/V projections: keys/values do not depend on the query tile, so
    # they are computed once per batch element (first q-tile) into VMEM scratch
    # and reused by every remaining q-tile of that batch element.  Correct only
    # while the q-tile axis is the innermost sequential ("arbitrary") grid axis.
    @pl.when(pl.program_id(1) == 0)
    def _():
        _project_kv(dec_full_ref[0], wkv_s_ref[...], bkv_s_ref[...],
                    ks_ref, vs_ref, n_heads, d_k)
        _project_kv(enc_full_ref[0], wkv_c_ref[...], bkv_c_ref[...],
                    kc_ref, vc_ref, n_heads, d_k)

    # Slice the q-tile out of the resident full-sequence decoder block
    # (no duplicated decoder-input operand / second HBM read).
    q0 = pl.multiple_of(pl.program_id(1) * tile_q, tile_q)
    x = dec_full_ref[0, pl.ds(q0, tile_q), :].astype(jnp.float32)       # (TQ, D) f32

    a1 = _attention(x, wq_s_ref[...], bq_s_ref[...], wo_s_ref[...], bo_s_ref[...],
                    g_s_ref[...], be_s_ref[...], ks_ref, vs_ref, n_heads, d_k)
    a2 = _attention(a1, wq_c_ref[...], bq_c_ref[...], wo_c_ref[...], bo_c_ref[...],
                    g_c_ref[...], be_c_ref[...], kc_ref, vc_ref, n_heads, d_k)

    # Position-wise feed-forward (+ residual + LayerNorm)
    h1 = jnp.dot(a2.astype(jnp.bfloat16), w1_ref[...],
                 preferred_element_type=jnp.float32) + b1_ref[...]
    h1 = jnp.maximum(h1, 0.0)
    y = jnp.dot(h1.astype(jnp.bfloat16), w2_ref[...],
                preferred_element_type=jnp.float32) + b2_ref[...] + a2
    o_ref[0] = _layernorm(y, g_f_ref[...], be_f_ref[...])


# ---------------------------------------------------------------------------
# Wrapper
# ---------------------------------------------------------------------------
def decoder_layer(decoder_input, encoder_out, params, n_heads, tile_q=128):
    B, S_dec, D = decoder_input.shape
    Be, S_enc, De = encoder_out.shape
    assert Be == B and De == D and D % n_heads == 0
    tile_q = min(tile_q, S_dec)
    assert S_dec % tile_q == 0
    d_k = D // n_heads
    n_qt = S_dec // tile_q
    scale = np.float32(1.0 / np.sqrt(d_k))

    def pack_attn(p):
        # Fold 1/sqrt(d_k) into the Q projection; fuse K/V weights into (D, 2D);
        # cast matmul weights to bf16 (biases / LN params stay f32).
        return ((p["wq"] * scale).astype(jnp.bfloat16), p["bq"] * scale,
                jnp.concatenate([p["wk"], p["wv"]], axis=1).astype(jnp.bfloat16),
                jnp.concatenate([p["bk"], p["bv"]], axis=1),
                p["wo"].astype(jnp.bfloat16), p["bo"],
                p["gamma"], p["beta"])

    slf = pack_attn(params["slf_attn"])
    crs = pack_attn(params["cross_attn"])
    f = params["pos_fedfod"]
    ffn = (f["w1"].astype(jnp.bfloat16), f["b1"],
           f["w2"].astype(jnp.bfloat16), f["b2"], f["gamma"], f["beta"])

    def wspec(a):
        # Constant block index -> weights stay resident across all grid steps.
        return pl.BlockSpec(a.shape, lambda b, qt: (0, 0))

    in_specs = (
        [pl.BlockSpec((1, S_dec, D), lambda b, qt: (b, 0, 0)),     # full decoder seq
         pl.BlockSpec((1, S_enc, D), lambda b, qt: (b, 0, 0))]     # full encoder seq
        + [wspec(a) for a in slf]
        + [wspec(a) for a in crs]
        + [wspec(a) for a in ffn]
    )

    kernel = functools.partial(decoder_layer_kernel, n_heads, tile_q)

    return pl.pallas_call(
        kernel,
        out_shape=jax.ShapeDtypeStruct((B, S_dec, D), jnp.float32),
        grid_spec=pltpu.PrefetchScalarGridSpec(
            num_scalar_prefetch=0,
            grid=(B, n_qt),
            in_specs=in_specs,
            out_specs=pl.BlockSpec((1, tile_q, D), lambda b, qt: (b, qt, 0)),
            scratch_shapes=[
                pltpu.VMEM((n_heads, d_k, S_dec), jnp.bfloat16),   # K^T self
                pltpu.VMEM((n_heads, d_k, S_dec), jnp.bfloat16),   # V^T self
                pltpu.VMEM((n_heads, d_k, S_enc), jnp.bfloat16),   # K^T cross
                pltpu.VMEM((n_heads, d_k, S_enc), jnp.bfloat16),   # V^T cross
            ]),
        compiler_params=pltpu.CompilerParams(
            dimension_semantics=("parallel", "arbitrary")),
    )(decoder_input.astype(jnp.bfloat16),            # bf16 activations -> half the HBM read
      encoder_out.astype(jnp.bfloat16),
      *slf, *crs, *ffn)


# ---------------------------------------------------------------------------
# Parameter init (deterministic)
# ---------------------------------------------------------------------------
def _init_linear(key, d_in, d_out):
    k1, k2 = jax.random.split(key)
    w = jax.random.normal(k1, (d_in, d_out), jnp.float32) * 0.05
    b = jax.random.normal(k2, (1, d_out), jnp.float32) * 0.05
    return w, b


def init_mha_params(key, d_model):
    ks = jax.random.split(key, 4)
    wq, bq = _init_linear(ks[0], d_model, d_model)
    wk, bk = _init_linear(ks[1], d_model, d_model)
    wv, bv = _init_linear(ks[2], d_model, d_model)
    wo, bo = _init_linear(ks[3], d_model, d_model)
    return dict(wq=wq, bq=bq, wk=wk, bk=bk, wv=wv, bv=bv, wo=wo, bo=bo,
                gamma=jnp.ones((1, d_model), jnp.float32),
                beta=jnp.zeros((1, d_model), jnp.float32))


def init_ffn_params(key, d_model, d_hidden):
    k1, k2 = jax.random.split(key)
    w1, b1 = _init_linear(k1, d_model, d_hidden)
    w2, b2 = _init_linear(k2, d_hidden, d_model)
    return dict(w1=w1, b1=b1, w2=w2, b2=b2,
                gamma=jnp.ones((1, d_model), jnp.float32),
                beta=jnp.zeros((1, d_model), jnp.float32))


# ---------------------------------------------------------------------------
# Pure-JAX reference (mirrors the kernel's bf16 operand numerics)
# ---------------------------------------------------------------------------
def _bmm(x, w):
    return jnp.einsum("...k,kn->...n", x.astype(jnp.bfloat16),
                      w.astype(jnp.bfloat16),
                      preferred_element_type=jnp.float32)


def ref_mha(x_q, x_kv, p, n_heads):
    B, Sq, D = x_q.shape
    d_k = D // n_heads
    scale = np.float32(1.0 / np.sqrt(d_k))
    q = _bmm(x_q, p["wq"]) + p["bq"]
    k = _bmm(x_kv, p["wk"]) + p["bk"]
    v = _bmm(x_kv, p["wv"]) + p["bv"]
    q = (q * scale).astype(jnp.bfloat16).reshape(B, Sq, n_heads, d_k)
    k = k.astype(jnp.bfloat16).reshape(B, -1, n_heads, d_k)
    v = v.astype(jnp.bfloat16).reshape(B, -1, n_heads, d_k)
    s = jnp.einsum("bqhd,bkhd->bhqk", q, k, preferred_element_type=jnp.float32)
    a = jax.nn.softmax(s, axis=-1)
    o = jnp.einsum("bhqk,bkhd->bqhd", a.astype(jnp.bfloat16), v,
                   preferred_element_type=jnp.float32).reshape(B, Sq, D)
    y = _bmm(o, p["wo"]) + p["bo"] + x_q
    return _layernorm(y, p["gamma"], p["beta"])


def ref_ffn(x, p):
    h = jnp.maximum(_bmm(x, p["w1"]) + p["b1"], 0.0)
    y = _bmm(h, p["w2"]) + p["b2"] + x
    return _layernorm(y, p["gamma"], p["beta"])


def ref_decoder_layer(dec_in, enc_out, params, n_heads):
    # Mirror the kernel, which consumes bf16-cast activations.
    dec_in = dec_in.astype(jnp.bfloat16).astype(jnp.float32)
    enc_out = enc_out.astype(jnp.bfloat16).astype(jnp.float32)
    x = ref_mha(dec_in, dec_in, params["slf_attn"], n_heads)
    x = ref_mha(x, enc_out, params["cross_attn"], n_heads)
    return ref_ffn(x, params["pos_fedfod"])


if __name__ == "__main__":
    # Lane-dense small config: D multiple of 128, two q-tiles (exercises the
    # hoisted-K/V reuse path), even batch for megacore.
    B, S_DEC, S_ENC, D_MODEL, D_HIDDEN, H = 2, 256, 128, 128, 256, 4

    key = jax.random.PRNGKey(0)
    k_in, k_enc, k_slf, k_cross, k_ffn = jax.random.split(key, 5)

    decoder_input = jax.random.normal(k_in, (B, S_DEC, D_MODEL), jnp.float32)
    encoder_out = jax.random.normal(k_enc, (B, S_ENC, D_MODEL), jnp.float32)

    params = dict(
        slf_attn=init_mha_params(k_slf, D_MODEL),
        cross_attn=init_mha_params(k_cross, D_MODEL),
        pos_fedfod=init_ffn_params(k_ffn, D_MODEL),
    ) if False else dict(
        slf_attn=init_mha_params(k_slf, D_MODEL),
        cross_attn=init_mha_params(k_cross, D_MODEL),
        pos_fedfod=init_ffn_params(k_ffn, D_MODEL, D_HIDDEN),
    )

    out = decoder_layer(decoder_input, encoder_out, params, H, tile_q=128)
    out = jax.block_until_ready(out)

    ref = ref_decoder_layer(decoder_input, encoder_out, params, H)
    np.testing.assert_allclose(np.asarray(out), np.asarray(ref),
                               rtol=2e-2, atol=2e-2)

    assert out.shape == (B, S_DEC, D_MODEL)
    print("KERNEL_OK")
</pallas_src>

<mosaic_0001>
module attributes {stable_mosaic.version = 11 : i64} {
  func.func @decoder_layer_kernel(%arg0: i32, %arg1: i32, %arg2: memref<1x256x128xbf16, #tpu.memory_space<vmem>>, %arg3: memref<1x128x128xbf16, #tpu.memory_space<vmem>>, %arg4: memref<128x128xbf16, #tpu.memory_space<vmem>>, %arg5: memref<1x128xf32, #tpu.memory_space<vmem>>, %arg6: memref<128x256xbf16, #tpu.memory_space<vmem>>, %arg7: memref<1x256xf32, #tpu.memory_space<vmem>>, %arg8: memref<128x128xbf16, #tpu.memory_space<vmem>>, %arg9: memref<1x128xf32, #tpu.memory_space<vmem>>, %arg10: memref<1x128xf32, #tpu.memory_space<vmem>>, %arg11: memref<1x128xf32, #tpu.memory_space<vmem>>, %arg12: memref<128x128xbf16, #tpu.memory_space<vmem>>, %arg13: memref<1x128xf32, #tpu.memory_space<vmem>>, %arg14: memref<128x256xbf16, #tpu.memory_space<vmem>>, %arg15: memref<1x256xf32, #tpu.memory_space<vmem>>, %arg16: memref<128x128xbf16, #tpu.memory_space<vmem>>, %arg17: memref<1x128xf32, #tpu.memory_space<vmem>>, %arg18: memref<1x128xf32, #tpu.memory_space<vmem>>, %arg19: memref<1x128xf32, #tpu.memory_space<vmem>>, %arg20: memref<128x256xbf16, #tpu.memory_space<vmem>>, %arg21: memref<1x256xf32, #tpu.memory_space<vmem>>, %arg22: memref<256x128xbf16, #tpu.memory_space<vmem>>, %arg23: memref<1x128xf32, #tpu.memory_space<vmem>>, %arg24: memref<1x128xf32, #tpu.memory_space<vmem>>, %arg25: memref<1x128xf32, #tpu.memory_space<vmem>>, %arg26: memref<1x128x128xf32, #tpu.memory_space<vmem>>, %arg27: memref<4x32x256xbf16, #tpu.memory_space<vmem>>, %arg28: memref<4x32x256xbf16, #tpu.memory_space<vmem>>, %arg29: memref<4x32x128xbf16, #tpu.memory_space<vmem>>, %arg30: memref<4x32x128xbf16, #tpu.memory_space<vmem>>) attributes {dimension_semantics = [#tpu.dimension_semantics<parallel>, #tpu.dimension_semantics<arbitrary>], iteration_bounds = array<i64: 2, 2>, scalar_prefetch = 0 : i64, scratch_operands = 4 : i64, tpu.core_type = #tpu.core_type<tc>, window_params = [{transform_indices = @transform_0, window_bounds = array<i64: 1, 256, 128>}, {transform_indices = @transform_1, window_bounds = array<i64: 1, 128, 128>}, {pipeline_mode = #tpu.pipeline_mode<synchronous>, transform_indices = @transform_2, window_bounds = array<i64: 128, 128>}, {pipeline_mode = #tpu.pipeline_mode<synchronous>, transform_indices = @transform_3, window_bounds = array<i64: 1, 128>}, {pipeline_mode = #tpu.pipeline_mode<synchronous>, transform_indices = @transform_4, window_bounds = array<i64: 128, 256>}, {pipeline_mode = #tpu.pipeline_mode<synchronous>, transform_indices = @transform_5, window_bounds = array<i64: 1, 256>}, {pipeline_mode = #tpu.pipeline_mode<synchronous>, transform_indices = @transform_6, window_bounds = array<i64: 128, 128>}, {pipeline_mode = #tpu.pipeline_mode<synchronous>, transform_indices = @transform_7, window_bounds = array<i64: 1, 128>}, {pipeline_mode = #tpu.pipeline_mode<synchronous>, transform_indices = @transform_8, window_bounds = array<i64: 1, 128>}, {pipeline_mode = #tpu.pipeline_mode<synchronous>, transform_indices = @transform_9, window_bounds = array<i64: 1, 128>}, {pipeline_mode = #tpu.pipeline_mode<synchronous>, transform_indices = @transform_10, window_bounds = array<i64: 128, 128>}, {pipeline_mode = #tpu.pipeline_mode<synchronous>, transform_indices = @transform_11, window_bounds = array<i64: 1, 128>}, {pipeline_mode = #tpu.pipeline_mode<synchronous>, transform_indices = @transform_12, window_bounds = array<i64: 128, 256>}, {pipeline_mode = #tpu.pipeline_mode<synchronous>, transform_indices = @transform_13, window_bounds = array<i64: 1, 256>}, {pipeline_mode = #tpu.pipeline_mode<synchronous>, transform_indices = @transform_14, window_bounds = array<i64: 128, 128>}, {pipeline_mode = #tpu.pipeline_mode<synchronous>, transform_indices = @transform_15, window_bounds = array<i64: 1, 128>}, {pipeline_mode = #tpu.pipeline_mode<synchronous>, transform_indices = @transform_16, window_bounds = array<i64: 1, 128>}, {pipeline_mode = #tpu.pipeline_mode<synchronous>, transform_indices = @transform_17, window_bounds = array<i64: 1, 128>}, {pipeline_mode = #tpu.pipeline_mode<synchronous>, transform_indices = @transform_18, window_bounds = array<i64: 128, 256>}, {pipeline_mode = #tpu.pipeline_mode<synchronous>, transform_indices = @transform_19, window_bounds = array<i64: 1, 256>}, {pipeline_mode = #tpu.pipeline_mode<synchronous>, transform_indices = @transform_20, window_bounds = array<i64: 256, 128>}, {pipeline_mode = #tpu.pipeline_mode<synchronous>, transform_indices = @transform_21, window_bounds = array<i64: 1, 128>}, {pipeline_mode = #tpu.pipeline_mode<synchronous>, transform_indices = @transform_22, window_bounds = array<i64: 1, 128>}, {pipeline_mode = #tpu.pipeline_mode<synchronous>, transform_indices = @transform_23, window_bounds = array<i64: 1, 128>}, {transform_indices = @transform_24, window_bounds = array<i64: 1, 128, 128>}]} {
    %c0_i32 = arith.constant 0 : i32
    %0 = arith.cmpi eq, %arg1, %c0_i32 : i32
    %1 = arith.extui %0 : i1 to i32
    %c0_i32_0 = arith.constant 0 : i32
    %2 = arith.cmpi ne, %1, %c0_i32_0 : i32
    scf.if %2 {
      %c0_82 = arith.constant 0 : index
      %c0_83 = arith.constant 0 : index
      %c0_84 = arith.constant 0 : index
      %193 = vector.load %arg2[%c0_82, %c0_83, %c0_84] : memref<1x256x128xbf16, #tpu.memory_space<vmem>>, vector<1x256x128xbf16>
      %194 = vector.shape_cast %193 : vector<1x256x128xbf16> to vector<256x128xbf16>
      %c0_85 = arith.constant 0 : index
      %c0_86 = arith.constant 0 : index
      %195 = vector.load %arg6[%c0_85, %c0_86] : memref<128x256xbf16, #tpu.memory_space<vmem>>, vector<128x256xbf16>
      %c0_87 = arith.constant 0 : index
      %c0_88 = arith.constant 0 : index
      %196 = vector.load %arg7[%c0_87, %c0_88] : memref<1x256xf32, #tpu.memory_space<vmem>>, vector<1x256xf32>
      %cst_89 = arith.constant dense<0.000000e+00> : vector<256x256xf32>
      %197 = tpu.matmul %194, %195, %cst_89 {dimension_numbers = #tpu.dot_dimension_numbers<[1], [0], [0], [1], [0, 0, 1, 1], [], []>} : vector<256x128xbf16>, vector<128x256xbf16>, vector<256x256xf32> -> vector<256x256xf32>
      %198 = vector.broadcast %196 : vector<1x256xf32> to vector<256x256xf32>
      %199 = arith.addf %197, %198 : vector<256x256xf32>
      %200 = arith.truncf %199 : vector<256x256xf32> to vector<256x256xbf16>
      %201 = tpu.transpose %200, [1, 0] : vector<256x256xbf16> -> vector<256x256xbf16>
      %202 = vector.extract_strided_slice %201 {offsets = [0, 0], sizes = [32, 256], strides = [1, 1]} : vector<256x256xbf16> to vector<32x256xbf16>
      %203 = vector.extract_strided_slice %201 {offsets = [32, 0], sizes = [32, 256], strides = [1, 1]} : vector<256x256xbf16> to vector<32x256xbf16>
      %204 = vector.extract_strided_slice %201 {offsets = [64, 0], sizes = [32, 256], strides = [1, 1]} : vector<256x256xbf16> to vector<32x256xbf16>
      %205 = vector.extract_strided_slice %201 {offsets = [96, 0], sizes = [32, 256], strides = [1, 1]} : vector<256x256xbf16> to vector<32x256xbf16>
      %206 = vector.shape_cast %202 : vector<32x256xbf16> to vector<1x32x256xbf16>
      %207 = vector.shape_cast %203 : vector<32x256xbf16> to vector<1x32x256xbf16>
      %208 = vector.shape_cast %204 : vector<32x256xbf16> to vector<1x32x256xbf16>
      %209 = vector.shape_cast %205 : vector<32x256xbf16> to vector<1x32x256xbf16>
      %210 = tpu.concatenate %206, %207, %208, %209 in 0 : vector<1x32x256xbf16>, vector<1x32x256xbf16>, vector<1x32x256xbf16>, vector<1x32x256xbf16> -> vector<4x32x256xbf16>
      %c0_90 = arith.constant 0 : index
      %c0_91 = arith.constant 0 : index
      %c0_92 = arith.constant 0 : index
      %211 = vector.load %arg27[%c0_90, %c0_91, %c0_92] : memref<4x32x256xbf16, #tpu.memory_space<vmem>>, vector<4x32x256xbf16>
      tpu.vector_store %arg27[%c0_90, %c0_91, %c0_92], %210 {strides = array<i32>} : memref<4x32x256xbf16, #tpu.memory_space<vmem>>, vector<4x32x256xbf16>,
      %212 = vector.extract_strided_slice %201 {offsets = [128, 0], sizes = [32, 256], strides = [1, 1]} : vector<256x256xbf16> to vector<32x256xbf16>
      %213 = vector.extract_strided_slice %201 {offsets = [160, 0], sizes = [32, 256], strides = [1, 1]} : vector<256x256xbf16> to vector<32x256xbf16>
      %214 = vector.extract_strided_slice %201 {offsets = [192, 0], sizes = [32, 256], strides = [1, 1]} : vector<256x256xbf16> to vector<32x256xbf16>
      %215 = vector.extract_strided_slice %201 {offsets = [224, 0], sizes = [32, 256], strides = [1, 1]} : vector<256x256xbf16> to vector<32x256xbf16>
      %216 = vector.shape_cast %212 : vector<32x256xbf16> to vector<1x32x256xbf16>
      %217 = vector.shape_cast %213 : vector<32x256xbf16> to vector<1x32x256xbf16>
      %218 = vector.shape_cast %214 : vector<32x256xbf16> to vector<1x32x256xbf16>
      %219 = vector.shape_cast %215 : vector<32x256xbf16> to vector<1x32x256xbf16>
      %220 = tpu.concatenate %216, %217, %218, %219 in 0 : vector<1x32x256xbf16>, vector<1x32x256xbf16>, vector<1x32x256xbf16>, vector<1x32x256xbf16> -> vector<4x32x256xbf16>
      %c0_93 = arith.constant 0 : index
      %c0_94 = arith.constant 0 : index
      %c0_95 = arith.constant 0 : index
      %221 = vector.load %arg28[%c0_93, %c0_94, %c0_95] : memref<4x32x256xbf16, #tpu.memory_space<vmem>>, vector<4x32x256xbf16>
      tpu.vector_store %arg28[%c0_93, %c0_94, %c0_95], %220 {strides = array<i32>} : memref<4x32x256xbf16, #tpu.memory_space<vmem>>, vector<4x32x256xbf16>,
      %c0_96 = arith.constant 0 : index
      %c0_97 = arith.constant 0 : index
      %c0_98 = arith.constant 0 : index
      %222 = vector.load %arg3[%c0_96, %c0_97, %c0_98] : memref<1x128x128xbf16, #tpu.memory_space<vmem>>, vector<1x128x128xbf16>
      %223 = vector.shape_cast %222 : vector<1x128x128xbf16> to vector<128x128xbf16>
      %c0_99 = arith.constant 0 : index
      %c0_100 = arith.constant 0 : index
      %224 = vector.load %arg14[%c0_99, %c0_100] : memref<128x256xbf16, #tpu.memory_space<vmem>>, vector<128x256xbf16>
      %c0_101 = arith.constant 0 : index
      %c0_102 = arith.constant 0 : index
      %225 = vector.load %arg15[%c0_101, %c0_102] : memref<1x256xf32, #tpu.memory_space<vmem>>, vector<1x256xf32>
      %cst_103 = arith.constant dense<0.000000e+00> : vector<128x256xf32>
      %226 = tpu.matmul %223, %224, %cst_103 {dimension_numbers = #tpu.dot_dimension_numbers<[1], [0], [0], [1], [0, 0, 1, 1], [], []>} : vector<128x128xbf16>, vector<128x256xbf16>, vector<128x256xf32> -> vector<128x256xf32>
      %227 = vector.broadcast %225 : vector<1x256xf32> to vector<128x256xf32>
      %228 = arith.addf %226, %227 : vector<128x256xf32>
      %229 = arith.truncf %228 : vector<128x256xf32> to vector<128x256xbf16>
      %230 = tpu.transpose %229, [1, 0] : vector<128x256xbf16> -> vector<256x128xbf16>
      %231 = vector.extract_strided_slice %230 {offsets = [0, 0], sizes = [32, 128], strides = [1, 1]} : vector<256x128xbf16> to vector<32x128xbf16>
      %232 = vector.extract_strided_slice %230 {offsets = [32, 0], sizes = [32, 128], strides = [1, 1]} : vector<256x128xbf16> to vector<32x128xbf16>
      %233 = vector.extract_strided_slice %230 {offsets = [64, 0], sizes = [32, 128], strides = [1, 1]} : vector<256x128xbf16> to vector<32x128xbf16>
      %234 = vector.extract_strided_slice %230 {offsets = [96, 0], sizes = [32, 128], strides = [1, 1]} : vector<256x128xbf16> to vector<32x128xbf16>
      %235 = vector.shape_cast %231 : vector<32x128xbf16> to vector<1x32x128xbf16>
      %236 = vector.shape_cast %232 : vector<32x128xbf16> to vector<1x32x128xbf16>
      %237 = vector.shape_cast %233 : vector<32x128xbf16> to vector<1x32x128xbf16>
      %238 = vector.shape_cast %234 : vector<32x128xbf16> to vector<1x32x128xbf16>
      %239 = tpu.concatenate %235, %236, %237, %238 in 0 : vector<1x32x128xbf16>, vector<1x32x128xbf16>, vector<1x32x128xbf16>, vector<1x32x128xbf16> -> vector<4x32x128xbf16>
      %c0_104 = arith.constant 0 : index
      %c0_105 = arith.constant 0 : index
      %c0_106 = arith.constant 0 : index
      %240 = vector.load %arg29[%c0_104, %c0_105, %c0_106] : memref<4x32x128xbf16, #tpu.memory_space<vmem>>, vector<4x32x128xbf16>
      tpu.vector_store %arg29[%c0_104, %c0_105, %c0_106], %239 {strides = array<i32>} : memref<4x32x128xbf16, #tpu.memory_space<vmem>>, vector<4x32x128xbf16>,
      %241 = vector.extract_strided_slice %230 {offsets = [128, 0], sizes = [32, 128], strides = [1, 1]} : vector<256x128xbf16> to vector<32x128xbf16>
      %242 = vector.extract_strided_slice %230 {offsets = [160, 0], sizes = [32, 128], strides = [1, 1]} : vector<256x128xbf16> to vector<32x128xbf16>
      %243 = vector.extract_strided_slice %230 {offsets = [192, 0], sizes = [32, 128], strides = [1, 1]} : vector<256x128xbf16> to vector<32x128xbf16>
      %244 = vector.extract_strided_slice %230 {offsets = [224, 0], sizes = [32, 128], strides = [1, 1]} : vector<256x128xbf16> to vector<32x128xbf16>
      %245 = vector.shape_cast %241 : vector<32x128xbf16> to vector<1x32x128xbf16>
      %246 = vector.shape_cast %242 : vector<32x128xbf16> to vector<1x32x128xbf16>
      %247 = vector.shape_cast %243 : vector<32x128xbf16> to vector<1x32x128xbf16>
      %248 = vector.shape_cast %244 : vector<32x128xbf16> to vector<1x32x128xbf16>
      %249 = tpu.concatenate %245, %246, %247, %248 in 0 : vector<1x32x128xbf16>, vector<1x32x128xbf16>, vector<1x32x128xbf16>, vector<1x32x128xbf16> -> vector<4x32x128xbf16>
      %c0_107 = arith.constant 0 : index
      %c0_108 = arith.constant 0 : index
      %c0_109 = arith.constant 0 : index
      %250 = vector.load %arg30[%c0_107, %c0_108, %c0_109] : memref<4x32x128xbf16, #tpu.memory_space<vmem>>, vector<4x32x128xbf16>
      tpu.vector_store %arg30[%c0_107, %c0_108, %c0_109], %249 {strides = array<i32>} : memref<4x32x128xbf16, #tpu.memory_space<vmem>>, vector<4x32x128xbf16>,
    } else {
    }
    %c128_i32 = arith.constant 128 : i32
    %3 = arith.muli %arg1, %c128_i32 : i32
    %4 = tpu.assume_multiple %3, 128 : i32
    %c0 = arith.constant 0 : index
    %5 = arith.index_cast %4 : i32 to index
    %c0_1 = arith.constant 0 : index
    %6 = vector.load %arg2[%c0, %5, %c0_1] : memref<1x256x128xbf16, #tpu.memory_space<vmem>>, vector<1x128x128xbf16>
    %7 = vector.shape_cast %6 : vector<1x128x128xbf16> to vector<128x128xbf16>
    %8 = arith.extf %7 : vector<128x128xbf16> to vector<128x128xf32>
    %c0_2 = arith.constant 0 : index
    %c0_3 = arith.constant 0 : index
    %9 = vector.load %arg4[%c0_2, %c0_3] : memref<128x128xbf16, #tpu.memory_space<vmem>>, vector<128x128xbf16>
    %c0_4 = arith.constant 0 : index
    %c0_5 = arith.constant 0 : index
    %10 = vector.load %arg5[%c0_4, %c0_5] : memref<1x128xf32, #tpu.memory_space<vmem>>, vector<1x128xf32>
    %c0_6 = arith.constant 0 : index
    %c0_7 = arith.constant 0 : index
    %11 = vector.load %arg8[%c0_6, %c0_7] : memref<128x128xbf16, #tpu.memory_space<vmem>>, vector<128x128xbf16>
    %c0_8 = arith.constant 0 : index
    %c0_9 = arith.constant 0 : index
    %12 = vector.load %arg9[%c0_8, %c0_9] : memref<1x128xf32, #tpu.memory_space<vmem>>, vector<1x128xf32>
    %c0_10 = arith.constant 0 : index
    %c0_11 = arith.constant 0 : index
    %13 = vector.load %arg10[%c0_10, %c0_11] : memref<1x128xf32, #tpu.memory_space<vmem>>, vector<1x128xf32>
    %c0_12 = arith.constant 0 : index
    %c0_13 = arith.constant 0 : index
    %14 = vector.load %arg11[%c0_12, %c0_13] : memref<1x128xf32, #tpu.memory_space<vmem>>, vector<1x128xf32>
    %15 = arith.truncf %8 : vector<128x128xf32> to vector<128x128xbf16>
    %cst = arith.constant dense<0.000000e+00> : vector<128x128xf32>
    %16 = tpu.matmul %15, %9, %cst {dimension_numbers = #tpu.dot_dimension_numbers<[1], [0], [0], [1], [0, 0, 1, 1], [], []>} : vector<128x128xbf16>, vector<128x128xbf16>, vector<128x128xf32> -> vector<128x128xf32>
    %17 = vector.broadcast %10 : vector<1x128xf32> to vector<128x128xf32>
    %18 = arith.addf %16, %17 : vector<128x128xf32>
    %19 = arith.truncf %18 : vector<128x128xf32> to vector<128x128xbf16>
    %20 = vector.extract_strided_slice %19 {offsets = [0, 0], sizes = [128, 32], strides = [1, 1]} : vector<128x128xbf16> to vector<128x32xbf16>
    %21 = vector.extract_strided_slice %19 {offsets = [0, 32], sizes = [128, 32], strides = [1, 1]} : vector<128x128xbf16> to vector<128x32xbf16>
    %22 = vector.extract_strided_slice %19 {offsets = [0, 64], sizes = [128, 32], strides = [1, 1]} : vector<128x128xbf16> to vector<128x32xbf16>
    %23 = vector.extract_strided_slice %19 {offsets = [0, 96], sizes = [128, 32], strides = [1, 1]} : vector<128x128xbf16> to vector<128x32xbf16>
    %24 = vector.shape_cast %20 : vector<128x32xbf16> to vector<1x128x32xbf16>
    %25 = vector.shape_cast %21 : vector<128x32xbf16> to vector<1x128x32xbf16>
    %26 = vector.shape_cast %22 : vector<128x32xbf16> to vector<1x128x32xbf16>
    %27 = vector.shape_cast %23 : vector<128x32xbf16> to vector<1x128x32xbf16>
    %28 = tpu.concatenate %24, %25, %26, %27 in 0 : vector<1x128x32xbf16>, vector<1x128x32xbf16>, vector<1x128x32xbf16>, vector<1x128x32xbf16> -> vector<4x128x32xbf16>
    %c0_14 = arith.constant 0 : index
    %c0_15 = arith.constant 0 : index
    %c0_16 = arith.constant 0 : index
    %29 = vector.load %arg27[%c0_14, %c0_15, %c0_16] : memref<4x32x256xbf16, #tpu.memory_space<vmem>>, vector<4x32x256xbf16>
    %c0_17 = arith.constant 0 : index
    %c0_18 = arith.constant 0 : index
    %c0_19 = arith.constant 0 : index
    %30 = vector.load %arg28[%c0_17, %c0_18, %c0_19] : memref<4x32x256xbf16, #tpu.memory_space<vmem>>, vector<4x32x256xbf16>
    "tpu.trace_start"() <{level = 10 : i32, message = "hqd,hdk->hqk"}> : () -> ()
    %cst_20 = arith.constant dense<0.000000e+00> : vector<4x128x256xf32>
    %31 = tpu.matmul %28, %29, %cst_20 {dimension_numbers = #tpu.dot_dimension_numbers<[2], [1], [1], [2], [0, 0, 0, 1, 1, 2], [0], [0]>} : vector<4x128x32xbf16>, vector<4x32x256xbf16>, vector<4x128x256xf32> -> vector<4x128x256xf32>
    "tpu.trace_stop"() : () -> ()
    %cst_21 = arith.constant dense<0xFF800000> : vector<4x128xf32>
    %32 = vector.multi_reduction <maximumf>, %31, %cst_21 [2] : vector<4x128x256xf32> to vector<4x128xf32>
    %33 = vector.shape_cast %32 : vector<4x128xf32> to vector<4x128x1xf32>
    %34 = vector.broadcast %33 : vector<4x128x1xf32> to vector<4x128x256xf32>
    %35 = arith.subf %31, %34 : vector<4x128x256xf32>
    %36 = math.exp %35 : vector<4x128x256xf32>
    %cst_22 = arith.constant dense<0.000000e+00> : vector<4x128xf32>
    %37 = vector.multi_reduction <add>, %36, %cst_22 [2] : vector<4x128x256xf32> to vector<4x128xf32>
    %38 = vector.shape_cast %37 : vector<4x128xf32> to vector<4x128x1xf32>
    %39 = tpu.reciprocal %38 {approx = true} : vector<4x128x1xf32> -> vector<4x128x1xf32>
    %40 = vector.broadcast %39 : vector<4x128x1xf32> to vector<4x128x256xf32>
    %41 = arith.mulf %36, %40 : vector<4x128x256xf32>
    %42 = arith.truncf %41 : vector<4x128x256xf32> to vector<4x128x256xbf16>
    "tpu.trace_start"() <{level = 10 : i32, message = "hqk,hdk->hqd"}> : () -> ()
    %cst_23 = arith.constant dense<0.000000e+00> : vector<4x128x32xf32>
    %43 = tpu.matmul %42, %30, %cst_23 {dimension_numbers = #tpu.dot_dimension_numbers<[2], [2], [1], [1], [0, 0, 0, 1, 1, 1], [0], [0]>} : vector<4x128x256xbf16>, vector<4x32x256xbf16>, vector<4x128x32xf32> -> vector<4x128x32xf32>
    "tpu.trace_stop"() : () -> ()
    %44 = vector.extract_strided_slice %43 {offsets = [0, 0, 0], sizes = [1, 128, 32], strides = [1, 1, 1]} : vector<4x128x32xf32> to vector<1x128x32xf32>
    %45 = vector.shape_cast %44 : vector<1x128x32xf32> to vector<128x32xf32>
    %46 = vector.extract_strided_slice %43 {offsets = [1, 0, 0], sizes = [1, 128, 32], strides = [1, 1, 1]} : vector<4x128x32xf32> to vector<1x128x32xf32>
    %47 = vector.shape_cast %46 : vector<1x128x32xf32> to vector<128x32xf32>
    %48 = vector.extract_strided_slice %43 {offsets = [2, 0, 0], sizes = [1, 128, 32], strides = [1, 1, 1]} : vector<4x128x32xf32> to vector<1x128x32xf32>
    %49 = vector.shape_cast %48 : vector<1x128x32xf32> to vector<128x32xf32>
    %50 = vector.extract_strided_slice %43 {offsets = [3, 0, 0], sizes = [1, 128, 32], strides = [1, 1, 1]} : vector<4x128x32xf32> to vector<1x128x32xf32>
    %51 = vector.shape_cast %50 : vector<1x128x32xf32> to vector<128x32xf32>
    %52 = tpu.concatenate %45, %47, %49, %51 in 1 : vector<128x32xf32>, vector<128x32xf32>, vector<128x32xf32>, vector<128x32xf32> -> vector<128x128xf32>
    %53 = arith.truncf %52 : vector<128x128xf32> to vector<128x128xbf16>
    %cst_24 = arith.constant dense<0.000000e+00> : vector<128x128xf32>
    %54 = tpu.matmul %53, %11, %cst_24 {dimension_numbers = #tpu.dot_dimension_numbers<[1], [0], [0], [1], [0, 0, 1, 1], [], []>} : vector<128x128xbf16>, vector<128x128xbf16>, vector<128x128xf32> -> vector<128x128xf32>
    %55 = vector.broadcast %12 : vector<1x128xf32> to vector<128x128xf32>
    %56 = arith.addf %54, %55 : vector<128x128xf32>
    %57 = arith.addf %56, %8 : vector<128x128xf32>
    %cst_25 = arith.constant dense<0.000000e+00> : vector<128xf32>
    %58 = vector.multi_reduction <add>, %57, %cst_25 [1] : vector<128x128xf32> to vector<128xf32>
    %59 = vector.shape_cast %58 : vector<128xf32> to vector<128x1xf32>
    %cst_26 = arith.constant 1.280000e+02 : f32
    %60 = vector.broadcast %cst_26 : f32 to vector<128x1xf32>
    %61 = arith.divf %59, %60 : vector<128x1xf32>
    %62 = vector.broadcast %61 : vector<128x1xf32> to vector<128x128xf32>
    %63 = arith.subf %57, %62 : vector<128x128xf32>
    %64 = arith.mulf %63, %63 : vector<128x128xf32>
    %cst_27 = arith.constant dense<0.000000e+00> : vector<128xf32>
    %65 = vector.multi_reduction <add>, %64, %cst_27 [1] : vector<128x128xf32> to vector<128xf32>
    %66 = vector.shape_cast %65 : vector<128xf32> to vector<128x1xf32>
    %cst_28 = arith.constant 1.280000e+02 : f32
    %67 = vector.broadcast %cst_28 : f32 to vector<128x1xf32>
    %68 = arith.divf %66, %67 : vector<128x1xf32>
    %69 = vector.broadcast %61 : vector<128x1xf32> to vector<128x128xf32>
    %70 = arith.subf %57, %69 : vector<128x128xf32>
    %cst_29 = arith.constant 9.99999997E-7 : f32
    %71 = vector.broadcast %cst_29 : f32 to vector<128x1xf32>
    %72 = arith.addf %68, %71 : vector<128x1xf32>
    %73 = math.rsqrt %72 : vector<128x1xf32>
    %74 = vector.broadcast %73 : vector<128x1xf32> to vector<128x128xf32>
    %75 = arith.mulf %70, %74 : vector<128x128xf32>
    %76 = vector.broadcast %13 : vector<1x128xf32> to vector<128x128xf32>
    %77 = arith.mulf %75, %76 : vector<128x128xf32>
    %78 = vector.broadcast %14 : vector<1x128xf32> to vector<128x128xf32>
    %79 = arith.addf %77, %78 : vector<128x128xf32>
    %c0_30 = arith.constant 0 : index
    %c0_31 = arith.constant 0 : index
    %80 = vector.load %arg12[%c0_30, %c0_31] : memref<128x128xbf16, #tpu.memory_space<vmem>>, vector<128x128xbf16>
    %c0_32 = arith.constant 0 : index
    %c0_33 = arith.constant 0 : index
    %81 = vector.load %arg13[%c0_32, %c0_33] : memref<1x128xf32, #tpu.memory_space<vmem>>, vector<1x128xf32>
    %c0_34 = arith.constant 0 : index
    %c0_35 = arith.constant 0 : index
    %82 = vector.load %arg16[%c0_34, %c0_35] : memref<128x128xbf16, #tpu.memory_space<vmem>>, vector<128x128xbf16>
    %c0_36 = arith.constant 0 : index
    %c0_37 = arith.constant 0 : index
    %83 = vector.load %arg17[%c0_36, %c0_37] : memref<1x128xf32, #tpu.memory_space<vmem>>, vector<1x128xf32>
    %c0_38 = arith.constant 0 : index
    %c0_39 = arith.constant 0 : index
    %84 = vector.load %arg18[%c0_38, %c0_39] : memref<1x128xf32, #tpu.memory_space<vmem>>, vector<1x128xf32>
    %c0_40 = arith.constant 0 : index
    %c0_41 = arith.constant 0 : index
    %85 = vector.load %arg19[%c0_40, %c0_41] : memref<1x128xf32, #tpu.memory_space<vmem>>, vector<1x128xf32>
    %86 = arith.truncf %79 : vector<128x128xf32> to vector<128x128xbf16>
    %cst_42 = arith.constant dense<0.000000e+00> : vector<128x128xf32>
    %87 = tpu.matmul %86, %80, %cst_42 {dimension_numbers = #tpu.dot_dimension_numbers<[1], [0], [0], [1], [0, 0, 1, 1], [], []>} : vector<128x128xbf16>, vector<128x128xbf16>, vector<128x128xf32> -> vector<128x128xf32>
    %88 = vector.broadcast %81 : vector<1x128xf32> to vector<128x128xf32>
    %89 = arith.addf %87, %88 : vector<128x128xf32>
    %90 = arith.truncf %89 : vector<128x128xf32> to vector<128x128xbf16>
    %91 = vector.extract_strided_slice %90 {offsets = [0, 0], sizes = [128, 32], strides = [1, 1]} : vector<128x128xbf16> to vector<128x32xbf16>
    %92 = vector.extract_strided_slice %90 {offsets = [0, 32], sizes = [128, 32], strides = [1, 1]} : vector<128x128xbf16> to vector<128x32xbf16>
    %93 = vector.extract_strided_slice %90 {offsets = [0, 64], sizes = [128, 32], strides = [1, 1]} : vector<128x128xbf16> to vector<128x32xbf16>
    %94 = vector.extract_strided_slice %90 {offsets = [0, 96], sizes = [128, 32], strides = [1, 1]} : vector<128x128xbf16> to vector<128x32xbf16>
    %95 = vector.shape_cast %91 : vector<128x32xbf16> to vector<1x128x32xbf16>
    %96 = vector.shape_cast %92 : vector<128x32xbf16> to vector<1x128x32xbf16>
    %97 = vector.shape_cast %93 : vector<128x32xbf16> to vector<1x128x32xbf16>
    %98 = vector.shape_cast %94 : vector<128x32xbf16> to vector<1x128x32xbf16>
    %99 = tpu.concatenate %95, %96, %97, %98 in 0 : vector<1x128x32xbf16>, vector<1x128x32xbf16>, vector<1x128x32xbf16>, vector<1x128x32xbf16> -> vector<4x128x32xbf16>
    %c0_43 = arith.constant 0 : index
    %c0_44 = arith.constant 0 : index
    %c0_45 = arith.constant 0 : index
    %100 = vector.load %arg29[%c0_43, %c0_44, %c0_45] : memref<4x32x128xbf16, #tpu.memory_space<vmem>>, vector<4x32x128xbf16>
    %c0_46 = arith.constant 0 : index
    %c0_47 = arith.constant 0 : index
    %c0_48 = arith.constant 0 : index
    %101 = vector.load %arg30[%c0_46, %c0_47, %c0_48] : memref<4x32x128xbf16, #tpu.memory_space<vmem>>, vector<4x32x128xbf16>
    "tpu.trace_start"() <{level = 10 : i32, message = "hqd,hdk->hqk"}> : () -> ()
    %cst_49 = arith.constant dense<0.000000e+00> : vector<4x128x128xf32>
    %102 = tpu.matmul %99, %100, %cst_49 {dimension_numbers = #tpu.dot_dimension_numbers<[2], [1], [1], [2], [0, 0, 0, 1, 1, 2], [0], [0]>} : vector<4x128x32xbf16>, vector<4x32x128xbf16>, vector<4x128x128xf32> -> vector<4x128x128xf32>
    "tpu.trace_stop"() : () -> ()
    %cst_50 = arith.constant dense<0xFF800000> : vector<4x128xf32>
    %103 = vector.multi_reduction <maximumf>, %102, %cst_50 [2] : vector<4x128x128xf32> to vector<4x128xf32>
    %104 = vector.shape_cast %103 : vector<4x128xf32> to vector<4x128x1xf32>
    %105 = vector.broadcast %104 : vector<4x128x1xf32> to vector<4x128x128xf32>
    %106 = arith.subf %102, %105 : vector<4x128x128xf32>
    %107 = math.exp %106 : vector<4x128x128xf32>
    %cst_51 = arith.constant dense<0.000000e+00> : vector<4x128xf32>
    %108 = vector.multi_reduction <add>, %107, %cst_51 [2] : vector<4x128x128xf32> to vector<4x128xf32>
    %109 = vector.shape_cast %108 : vector<4x128xf32> to vector<4x128x1xf32>
    %110 = tpu.reciprocal %109 {approx = true} : vector<4x128x1xf32> -> vector<4x128x1xf32>
    %111 = vector.broadcast %110 : vector<4x128x1xf32> to vector<4x128x128xf32>
    %112 = arith.mulf %107, %111 : vector<4x128x128xf32>
    %113 = arith.truncf %112 : vector<4x128x128xf32> to vector<4x128x128xbf16>
    "tpu.trace_start"() <{level = 10 : i32, message = "hqk,hdk->hqd"}> : () -> ()
    %cst_52 = arith.constant dense<0.000000e+00> : vector<4x128x32xf32>
    %114 = tpu.matmul %113, %101, %cst_52 {dimension_numbers = #tpu.dot_dimension_numbers<[2], [2], [1], [1], [0, 0, 0, 1, 1, 1], [0], [0]>} : vector<4x128x128xbf16>, vector<4x32x128xbf16>, vector<4x128x32xf32> -> vector<4x128x32xf32>
    "tpu.trace_stop"() : () -> ()
    %115 = vector.extract_strided_slice %114 {offsets = [0, 0, 0], sizes = [1, 128, 32], strides = [1, 1, 1]} : vector<4x128x32xf32> to vector<1x128x32xf32>
    %116 = vector.shape_cast %115 : vector<1x128x32xf32> to vector<128x32xf32>
    %117 = vector.extract_strided_slice %114 {offsets = [1, 0, 0], sizes = [1, 128, 32], strides = [1, 1, 1]} : vector<4x128x32xf32> to vector<1x128x32xf32>
    %118 = vector.shape_cast %117 : vector<1x128x32xf32> to vector<128x32xf32>
    %119 = vector.extract_strided_slice %114 {offsets = [2, 0, 0], sizes = [1, 128, 32], strides = [1, 1, 1]} : vector<4x128x32xf32> to vector<1x128x32xf32>
    %120 = vector.shape_cast %119 : vector<1x128x32xf32> to vector<128x32xf32>
    %121 = vector.extract_strided_slice %114 {offsets = [3, 0, 0], sizes = [1, 128, 32], strides = [1, 1, 1]} : vector<4x128x32xf32> to vector<1x128x32xf32>
    %122 = vector.shape_cast %121 : vector<1x128x32xf32> to vector<128x32xf32>
    %123 = tpu.concatenate %116, %118, %120, %122 in 1 : vector<128x32xf32>, vector<128x32xf32>, vector<128x32xf32>, vector<128x32xf32> -> vector<128x128xf32>
    %124 = arith.truncf %123 : vector<128x128xf32> to vector<128x128xbf16>
    %cst_53 = arith.constant dense<0.000000e+00> : vector<128x128xf32>
    %125 = tpu.matmul %124, %82, %cst_53 {dimension_numbers = #tpu.dot_dimension_numbers<[1], [0], [0], [1], [0, 0, 1, 1], [], []>} : vector<128x128xbf16>, vector<128x128xbf16>, vector<128x128xf32> -> vector<128x128xf32>
    %126 = vector.broadcast %83 : vector<1x128xf32> to vector<128x128xf32>
    %127 = arith.addf %125, %126 : vector<128x128xf32>
    %128 = arith.addf %127, %79 : vector<128x128xf32>
    %cst_54 = arith.constant dense<0.000000e+00> : vector<128xf32>
    %129 = vector.multi_reduction <add>, %128, %cst_54 [1] : vector<128x128xf32> to vector<128xf32>
    %130 = vector.shape_cast %129 : vector<128xf32> to vector<128x1xf32>
    %cst_55 = arith.constant 1.280000e+02 : f32
    %131 = vector.broadcast %cst_55 : f32 to vector<128x1xf32>
    %132 = arith.divf %130, %131 : vector<128x1xf32>
    %133 = vector.broadcast %132 : vector<128x1xf32> to vector<128x128xf32>
    %134 = arith.subf %128, %133 : vector<128x128xf32>
    %135 = arith.mulf %134, %134 : vector<128x128xf32>
    %cst_56 = arith.constant dense<0.000000e+00> : vector<128xf32>
    %136 = vector.multi_reduction <add>, %135, %cst_56 [1] : vector<128x128xf32> to vector<128xf32>
    %137 = vector.shape_cast %136 : vector<128xf32> to vector<128x1xf32>
    %cst_57 = arith.constant 1.280000e+02 : f32
    %138 = vector.broadcast %cst_57 : f32 to vector<128x1xf32>
    %139 = arith.divf %137, %138 : vector<128x1xf32>
    %140 = vector.broadcast %132 : vector<128x1xf32> to vector<128x128xf32>
    %141 = arith.subf %128, %140 : vector<128x128xf32>
    %cst_58 = arith.constant 9.99999997E-7 : f32
    %142 = vector.broadcast %cst_58 : f32 to vector<128x1xf32>
    %143 = arith.addf %139, %142 : vector<128x1xf32>
    %144 = math.rsqrt %143 : vector<128x1xf32>
    %145 = vector.broadcast %144 : vector<128x1xf32> to vector<128x128xf32>
    %146 = arith.mulf %141, %145 : vector<128x128xf32>
    %147 = vector.broadcast %84 : vector<1x128xf32> to vector<128x128xf32>
    %148 = arith.mulf %146, %147 : vector<128x128xf32>
    %149 = vector.broadcast %85 : vector<1x128xf32> to vector<128x128xf32>
    %150 = arith.addf %148, %149 : vector<128x128xf32>
    %151 = arith.truncf %150 : vector<128x128xf32> to vector<128x128xbf16>
    %c0_59 = arith.constant 0 : index
    %c0_60 = arith.constant 0 : index
    %152 = vector.load %arg20[%c0_59, %c0_60] : memref<128x256xbf16, #tpu.memory_space<vmem>>, vector<128x256xbf16>
    %cst_61 = arith.constant dense<0.000000e+00> : vector<128x256xf32>
    %153 = tpu.matmul %151, %152, %cst_61 {dimension_numbers = #tpu.dot_dimension_numbers<[1], [0], [0], [1], [0, 0, 1, 1], [], []>} : vector<128x128xbf16>, vector<128x256xbf16>, vector<128x256xf32> -> vector<128x256xf32>
    %c0_62 = arith.constant 0 : index
    %c0_63 = arith.constant 0 : index
    %154 = vector.load %arg21[%c0_62, %c0_63] : memref<1x256xf32, #tpu.memory_space<vmem>>, vector<1x256xf32>
    %155 = vector.broadcast %154 : vector<1x256xf32> to vector<128x256xf32>
    %156 = arith.addf %153, %155 : vector<128x256xf32>
    %cst_64 = arith.constant 0.000000e+00 : f32
    %157 = vector.broadcast %cst_64 : f32 to vector<128x256xf32>
    %158 = arith.maximumf %156, %157 : vector<128x256xf32>
    %159 = arith.truncf %158 : vector<128x256xf32> to vector<128x256xbf16>
    %c0_65 = arith.constant 0 : index
    %c0_66 = arith.constant 0 : index
    %160 = vector.load %arg22[%c0_65, %c0_66] : memref<256x128xbf16, #tpu.memory_space<vmem>>, vector<256x128xbf16>
    %cst_67 = arith.constant dense<0.000000e+00> : vector<128x128xf32>
    %161 = tpu.matmul %159, %160, %cst_67 {dimension_numbers = #tpu.dot_dimension_numbers<[1], [0], [0], [1], [0, 0, 1, 1], [], []>} : vector<128x256xbf16>, vector<256x128xbf16>, vector<128x128xf32> -> vector<128x128xf32>
    %c0_68 = arith.constant 0 : index
    %c0_69 = arith.constant 0 : index
    %162 = vector.load %arg23[%c0_68, %c0_69] : memref<1x128xf32, #tpu.memory_space<vmem>>, vector<1x128xf32>
    %163 = vector.broadcast %162 : vector<1x128xf32> to vector<128x128xf32>
    %164 = arith.addf %161, %163 : vector<128x128xf32>
    %165 = arith.addf %164, %150 : vector<128x128xf32>
    %c0_70 = arith.constant 0 : index
    %c0_71 = arith.constant 0 : index
    %166 = vector.load %arg24[%c0_70, %c0_71] : memref<1x128xf32, #tpu.memory_space<vmem>>, vector<1x128xf32>
    %c0_72 = arith.constant 0 : index
    %c0_73 = arith.constant 0 : index
    %167 = vector.load %arg25[%c0_72, %c0_73] : memref<1x128xf32, #tpu.memory_space<vmem>>, vector<1x128xf32>
    %cst_74 = arith.constant dense<0.000000e+00> : vector<128xf32>
    %168 = vector.multi_reduction <add>, %165, %cst_74 [1] : vector<128x128xf32> to vector<128xf32>
    %169 = vector.shape_cast %168 : vector<128xf32> to vector<128x1xf32>
    %cst_75 = arith.constant 1.280000e+02 : f32
    %170 = vector.broadcast %cst_75 : f32 to vector<128x1xf32>
    %171 = arith.divf %169, %170 : vector<128x1xf32>
    %172 = vector.broadcast %171 : vector<128x1xf32> to vector<128x128xf32>
    %173 = arith.subf %165, %172 : vector<128x128xf32>
    %174 = arith.mulf %173, %173 : vector<128x128xf32>
    %cst_76 = arith.constant dense<0.000000e+00> : vector<128xf32>
    %175 = vector.multi_reduction <add>, %174, %cst_76 [1] : vector<128x128xf32> to vector<128xf32>
    %176 = vector.shape_cast %175 : vector<128xf32> to vector<128x1xf32>
    %cst_77 = arith.constant 1.280000e+02 : f32
    %177 = vector.broadcast %cst_77 : f32 to vector<128x1xf32>
    %178 = arith.divf %176, %177 : vector<128x1xf32>
    %179 = vector.broadcast %171 : vector<128x1xf32> to vector<128x128xf32>
    %180 = arith.subf %165, %179 : vector<128x128xf32>
    %cst_78 = arith.constant 9.99999997E-7 : f32
    %181 = vector.broadcast %cst_78 : f32 to vector<128x1xf32>
    %182 = arith.addf %178, %181 : vector<128x1xf32>
    %183 = math.rsqrt %182 : vector<128x1xf32>
    %184 = vector.broadcast %183 : vector<128x1xf32> to vector<128x128xf32>
    %185 = arith.mulf %180, %184 : vector<128x128xf32>
    %186 = vector.broadcast %166 : vector<1x128xf32> to vector<128x128xf32>
    %187 = arith.mulf %185, %186 : vector<128x128xf32>
    %188 = vector.broadcast %167 : vector<1x128xf32> to vector<128x128xf32>
    %189 = arith.addf %187, %188 : vector<128x128xf32>
    %c0_79 = arith.constant 0 : index
    %c0_80 = arith.constant 0 : index
    %c0_81 = arith.constant 0 : index
    %190 = vector.load %arg26[%c0_79, %c0_80, %c0_81] : memref<1x128x128xf32, #tpu.memory_space<vmem>>, vector<1x128x128xf32>
    %191 = vector.shape_cast %190 : vector<1x128x128xf32> to vector<128x128xf32>
    %192 = vector.shape_cast %189 : vector<128x128xf32> to vector<1x128x128xf32>
    tpu.vector_store %arg26[%c0_79, %c0_80, %c0_81], %192 {strides = array<i32>} : memref<1x128x128xf32, #tpu.memory_space<vmem>>, vector<1x128x128xf32>,
    return
  }
  func.func @transform_0(%arg0: i32, %arg1: i32) -> (i32, i32, i32) {
    %c0_i32 = arith.constant 0 : i32
    %c0_i32_0 = arith.constant 0 : i32
    %c0_i32_1 = arith.constant 0 : i32
    return %arg0, %c0_i32, %c0_i32_0 : i32, i32, i32
  }
  func.func @transform_1(%arg0: i32, %arg1: i32) -> (i32, i32, i32) {
    %c0_i32 = arith.constant 0 : i32
    %c0_i32_0 = arith.constant 0 : i32
    %c0_i32_1 = arith.constant 0 : i32
    return %arg0, %c0_i32, %c0_i32_0 : i32, i32, i32
  }
  func.func @transform_2(%arg0: i32, %arg1: i32) -> (i32, i32) {
    %c0_i32 = arith.constant 0 : i32
    %c0_i32_0 = arith.constant 0 : i32
    %c0_i32_1 = arith.constant 0 : i32
    return %c0_i32, %c0_i32_0 : i32, i32
  }
  func.func @transform_3(%arg0: i32, %arg1: i32) -> (i32, i32) {
    %c0_i32 = arith.constant 0 : i32
    %c0_i32_0 = arith.constant 0 : i32
    %c0_i32_1 = arith.constant 0 : i32
    return %c0_i32, %c0_i32_0 : i32, i32
  }
  func.func @transform_4(%arg0: i32, %arg1: i32) -> (i32, i32) {
    %c0_i32 = arith.constant 0 : i32
    %c0_i32_0 = arith.constant 0 : i32
    %c0_i32_1 = arith.constant 0 : i32
    return %c0_i32, %c0_i32_0 : i32, i32
  }
  func.func @transform_5(%arg0: i32, %arg1: i32) -> (i32, i32) {
    %c0_i32 = arith.constant 0 : i32
    %c0_i32_0 = arith.constant 0 : i32
    %c0_i32_1 = arith.constant 0 : i32
    return %c0_i32, %c0_i32_0 : i32, i32
  }
  func.func @transform_6(%arg0: i32, %arg1: i32) -> (i32, i32) {
    %c0_i32 = arith.constant 0 : i32
    %c0_i32_0 = arith.constant 0 : i32
    %c0_i32_1 = arith.constant 0 : i32
    return %c0_i32, %c0_i32_0 : i32, i32
  }
  func.func @transform_7(%arg0: i32, %arg1: i32) -> (i32, i32) {
    %c0_i32 = arith.constant 0 : i32
    %c0_i32_0 = arith.constant 0 : i32
    %c0_i32_1 = arith.constant 0 : i32
    return %c0_i32, %c0_i32_0 : i32, i32
  }
  func.func @transform_8(%arg0: i32, %arg1: i32) -> (i32, i32) {
    %c0_i32 = arith.constant 0 : i32
    %c0_i32_0 = arith.constant 0 : i32
    %c0_i32_1 = arith.constant 0 : i32
    return %c0_i32, %c0_i32_0 : i32, i32
  }
  func.func @transform_9(%arg0: i32, %arg1: i32) -> (i32, i32) {
    %c0_i32 = arith.constant 0 : i32
    %c0_i32_0 = arith.constant 0 : i32
    %c0_i32_1 = arith.constant 0 : i32
    return %c0_i32, %c0_i32_0 : i32, i32
  }
  func.func @transform_10(%arg0: i32, %arg1: i32) -> (i32, i32) {
    %c0_i32 = arith.constant 0 : i32
    %c0_i32_0 = arith.constant 0 : i32
    %c0_i32_1 = arith.constant 0 : i32
    return %c0_i32, %c0_i32_0 : i32, i32
  }
  func.func @transform_11(%arg0: i32, %arg1: i32) -> (i32, i32) {
    %c0_i32 = arith.constant 0 : i32
    %c0_i32_0 = arith.constant 0 : i32
    %c0_i32_1 = arith.constant 0 : i32
    return %c0_i32, %c0_i32_0 : i32, i32
  }
  func.func @transform_12(%arg0: i32, %arg1: i32) -> (i32, i32) {
    %c0_i32 = arith.constant 0 : i32
    %c0_i32_0 = arith.constant 0 : i32
    %c0_i32_1 = arith.constant 0 : i32
    return %c0_i32, %c0_i32_0 : i32, i32
  }
  func.func @transform_13(%arg0: i32, %arg1: i32) -> (i32, i32) {
    %c0_i32 = arith.constant 0 : i32
    %c0_i32_0 = arith.constant 0 : i32
    %c0_i32_1 = arith.constant 0 : i32
    return %c0_i32, %c0_i32_0 : i32, i32
  }
  func.func @transform_14(%arg0: i32, %arg1: i32) -> (i32, i32) {
    %c0_i32 = arith.constant 0 : i32
    %c0_i32_0 = arith.constant 0 : i32
    %c0_i32_1 = arith.constant 0 : i32
    return %c0_i32, %c0_i32_0 : i32, i32
  }
  func.func @transform_15(%arg0: i32, %arg1: i32) -> (i32, i32) {
    %c0_i32 = arith.constant 0 : i32
    %c0_i32_0 = arith.constant 0 : i32
    %c0_i32_1 = arith.constant 0 : i32
    return %c0_i32, %c0_i32_0 : i32, i32
  }
  func.func @transform_16(%arg0: i32, %arg1: i32) -> (i32, i32) {
    %c0_i32 = arith.constant 0 : i32
    %c0_i32_0 = arith.constant 0 : i32
    %c0_i32_1 = arith.constant 0 : i32
    return %c0_i32, %c0_i32_0 : i32, i32
  }
  func.func @transform_17(%arg0: i32, %arg1: i32) -> (i32, i32) {
    %c0_i32 = arith.constant 0 : i32
    %c0_i32_0 = arith.constant 0 : i32
    %c0_i32_1 = arith.constant 0 : i32
    return %c0_i32, %c0_i32_0 : i32, i32
  }
  func.func @transform_18(%arg0: i32, %arg1: i32) -> (i32, i32) {
    %c0_i32 = arith.constant 0 : i32
    %c0_i32_0 = arith.constant 0 : i32
    %c0_i32_1 = arith.constant 0 : i32
    return %c0_i32, %c0_i32_0 : i32, i32
  }
  func.func @transform_19(%arg0: i32, %arg1: i32) -> (i32, i32) {
    %c0_i32 = arith.constant 0 : i32
    %c0_i32_0 = arith.constant 0 : i32
    %c0_i32_1 = arith.constant 0 : i32
    return %c0_i32, %c0_i32_0 : i32, i32
  }
  func.func @transform_20(%arg0: i32, %arg1: i32) -> (i32, i32) {
    %c0_i32 = arith.constant 0 : i32
    %c0_i32_0 = arith.constant 0 : i32
    %c0_i32_1 = arith.constant 0 : i32
    return %c0_i32, %c0_i32_0 : i32, i32
  }
  func.func @transform_21(%arg0: i32, %arg1: i32) -> (i32, i32) {
    %c0_i32 = arith.constant 0 : i32
    %c0_i32_0 = arith.constant 0 : i32
    %c0_i32_1 = arith.constant 0 : i32
    return %c0_i32, %c0_i32_0 : i32, i32
  }
  func.func @transform_22(%arg0: i32, %arg1: i32) -> (i32, i32) {
    %c0_i32 = arith.constant 0 : i32
    %c0_i32_0 = arith.constant 0 : i32
    %c0_i32_1 = arith.constant 0 : i32
    return %c0_i32, %c0_i32_0 : i32, i32
  }
  func.func @transform_23(%arg0: i32, %arg1: i32) -> (i32, i32) {
    %c0_i32 = arith.constant 0 : i32
    %c0_i32_0 = arith.constant 0 : i32
    %c0_i32_1 = arith.constant 0 : i32
    return %c0_i32, %c0_i32_0 : i32, i32
  }
  func.func @transform_24(%arg0: i32, %arg1: i32) -> (i32, i32, i32) {
    %c0_i32 = arith.constant 0 : i32
    %c0_i32_0 = arith.constant 0 : i32
    return %arg0, %arg1, %c0_i32 : i32, i32, i32
  }
}

</mosaic_0001>

<llo_original>
// kernel: tpu_custom_call.1
$region0: #{tpu_custom_call.1}
  #allocation0 [shape = 'u32[]', space=smem, size = 0x4, offset = 0x4, fixed_abs, tag = 'smem constant byte address 0x4 - core index']
  #allocation1 [shape = 'u32[144,128]{1,0:T(1,128)}', space=vmem, size = 0x12000, scoped, tag = 'internal scratch']
  #allocation2 [shape = 'bf16[4,32,256]{2,1,0:T(16,128)(2,1)}', space=vmem, size = 0x10000, scoped, tag = 'scratch operand']
  #allocation3 [shape = 'bf16[4,32,256]{2,1,0:T(16,128)(2,1)}', space=vmem, size = 0x10000, scoped, tag = 'scratch operand']
  #allocation4 [shape = 'bf16[4,32,128]{2,1,0:T(16,128)(2,1)}', space=vmem, size = 0x8000, scoped, tag = 'scratch operand']
  #allocation5 [shape = 'bf16[4,32,128]{2,1,0:T(16,128)(2,1)}', space=vmem, size = 0x8000, scoped, tag = 'scratch operand']
  %s0 = inlined_call_operand.hbm [shape: bf16[2,256,128], index: 0, kind: input, shape index: {}]
  %s1 = inlined_call_operand.hbm [shape: bf16[2,128,128], index: 1, kind: input, shape index: {}]
  %s2 = inlined_call_operand.hbm [shape: bf16[128,128], index: 2, kind: input, shape index: {}]
  %s3 = inlined_call_operand.vmem [shape: f32[1,128], index: 3, kind: input, shape index: {}]
  %s4 = inlined_call_operand.hbm [shape: bf16[128,256], index: 4, kind: input, shape index: {}]
  %s5 = inlined_call_operand.vmem [shape: f32[1,256], index: 5, kind: input, shape index: {}]
  %s6 = inlined_call_operand.hbm [shape: bf16[128,128], index: 6, kind: input, shape index: {}]
  %s7 = inlined_call_operand.vmem [shape: f32[1,128], index: 7, kind: input, shape index: {}]
  %s8 = inlined_call_operand.vmem [shape: f32[1,128], index: 8, kind: input, shape index: {}]
  %s9 = inlined_call_operand.vmem [shape: f32[1,128], index: 9, kind: input, shape index: {}]
  %s10 = inlined_call_operand.hbm [shape: bf16[128,128], index: 10, kind: input, shape index: {}]
  %s11 = inlined_call_operand.vmem [shape: f32[1,128], index: 11, kind: input, shape index: {}]
  %s12 = inlined_call_operand.hbm [shape: bf16[128,256], index: 12, kind: input, shape index: {}]
  %s13 = inlined_call_operand.vmem [shape: f32[1,256], index: 13, kind: input, shape index: {}]
  %s14 = inlined_call_operand.hbm [shape: bf16[128,128], index: 14, kind: input, shape index: {}]
  %s15 = inlined_call_operand.vmem [shape: f32[1,128], index: 15, kind: input, shape index: {}]
  %s16 = inlined_call_operand.vmem [shape: f32[1,128], index: 16, kind: input, shape index: {}]
  %s17 = inlined_call_operand.vmem [shape: f32[1,128], index: 17, kind: input, shape index: {}]
  %s18 = inlined_call_operand.hbm [shape: bf16[128,256], index: 18, kind: input, shape index: {}]
  %s19 = inlined_call_operand.vmem [shape: f32[1,256], index: 19, kind: input, shape index: {}]
  %s20 = inlined_call_operand.hbm [shape: bf16[256,128], index: 20, kind: input, shape index: {}]
  %s21 = inlined_call_operand.vmem [shape: f32[1,128], index: 21, kind: input, shape index: {}]
  %s22 = inlined_call_operand.vmem [shape: f32[1,128], index: 22, kind: input, shape index: {}]
  %s23 = inlined_call_operand.vmem [shape: f32[1,128], index: 23, kind: input, shape index: {}]
  %s24 = inlined_call_operand.hbm [shape: f32[2,256,128], index: 24, kind: output, shape index: {}]
  %s25 = sld [smem:[#allocation0]]
  $region173: #{tpu_custom_call.1} parent=0
    _
  %s27 = ssub.s32 1, %s25
  %s28 = scalar_select 0, %s27, %s25
  $region1: #{tpu_custom_call.1} parent=0
    #allocation6 [shape = 'u8[131072]{0}', space=vmem, size = 0x20000, scoped, tag = 'input window, operand 0']
    #allocation7 [shape = 's32[2]{0}', space=sflag, size = 0x8, scoped, tag = 'scoped memory for tpu_custom_call.1']
    #allocation8 [shape = 's32[2]{0}', space=sflag, size = 0x8, scoped, tag = 'scoped memory for tpu_custom_call.1']
    #allocation9 [shape = 'u8[65536]{0}', space=vmem, size = 0x10000, scoped, tag = 'input window, operand 1']
    #allocation10 [shape = 's32[2]{0}', space=sflag, size = 0x8, scoped, tag = 'scoped memory for tpu_custom_call.1']
    #allocation11 [shape = 'u8[32768]{0}', space=vmem, size = 0x8000, scoped, tag = 'input window, operand 2, single buffered']
    #allocation12 [shape = 'u8[65536]{0}', space=vmem, size = 0x10000, scoped, tag = 'input window, operand 4, single buffered']
    #allocation13 [shape = 's32[1]{0}', space=sflag, size = 0x4, scoped, tag = 'scoped memory for tpu_custom_call.1']
    #allocation14 [shape = 'u8[32768]{0}', space=vmem, size = 0x8000, scoped, tag = 'input window, operand 6, single buffered']
    #allocation15 [shape = 'u8[32768]{0}', space=vmem, size = 0x8000, scoped, tag = 'input window, operand 10, single buffered']
    #allocation16 [shape = 's32[1]{0}', space=sflag, size = 0x4, scoped, tag = 'scoped memory for tpu_custom_call.1']
    #allocation17 [shape = 'u8[65536]{0}', space=vmem, size = 0x10000, scoped, tag = 'input window, operand 12, single buffered']
    #allocation18 [shape = 'u8[32768]{0}', space=vmem, size = 0x8000, scoped, tag = 'input window, operand 14, single buffered']
    #allocation19 [shape = 's32[1]{0}', space=sflag, size = 0x4, scoped, tag = 'scoped memory for tpu_custom_call.1']
    #allocation20 [shape = 'u8[65536]{0}', space=vmem, size = 0x10000, scoped, tag = 'input window, operand 18, single buffered']
    #allocation21 [shape = 'u8[65536]{0}', space=vmem, size = 0x10000, scoped, tag = 'input window, operand 20, single buffered']
    #allocation22 [shape = 's32[1]{0}', space=sflag, size = 0x4, scoped, tag = 'scoped memory for tpu_custom_call.1']
    #allocation23 [shape = 'u8[131072]{0}', space=vmem, size = 0x20000, scoped, tag = 'output window, operand 0']
    %29 = vsyncpa [#allocation7], 0
    %s30 = scalar_lea.sflag [#allocation7], 1
    %31 = vsyncpa %s30, 0
    %32 = vsyncpa [#allocation10], 0
    %s33 = scalar_lea.sflag [#allocation10], 1
    %34 = vsyncpa %s33, 0
    %35 = vsyncpa [#allocation13], 0
    %36 = vsyncpa [#allocation16], 0
    %37 = vsyncpa [#allocation19], 0
    %38 = vsyncpa [#allocation22], 0
    %39 = vsyncpa [#allocation8], 0
    %s40 = scalar_lea.sflag [#allocation8], 1
    %41 = vsyncpa %s40, 0
    loop: start=0, step=1, limit=6
    $region2: #{tpu_custom_call.1} parent=1 // loop_pre_header
      _
    $region3: #{tpu_custom_call.1} parent=1 // loop_header
      %s43 = sphi 0, %s47
      %p44 = scmp.ge.s32.totalorder %s43, 6
      %s50 = sphi 0, %s62
      %s51 = sphi 0, %s58
      %s52 = sphi 0, %s50
      %s53 = sphi 0, %s51
      %s54 = sphi 0, %s52
      %s55 = sphi 0, %s53
      %s65 = sphi 0, %s67
      %s68 = sphi 0, %s65
      %s69 = sphi 0, %s68
      %s85 = sphi 0, %s69
      %s91 = sphi 0, %s93
      %s94 = sphi 0, %s91
      %s95 = sphi 0, %s94
      %s111 = sphi 0, %s95
      %s115 = sphi 0, %s115
      %s117 = sphi 0, %s115
      %s118 = sphi 0, %s117
      %s132 = sphi 0, %s118
      %s136 = sphi 0, %s136
      %s138 = sphi 0, %s136
      %s139 = sphi 0, %s138
      %s153 = sphi 0, %s139
      %s157 = sphi 0, %s157
      %s159 = sphi 0, %s157
      %s160 = sphi 0, %s159
      %s174 = sphi 0, %s160
      %s178 = sphi 0, %s178
      %s180 = sphi 0, %s178
      %s181 = sphi 0, %s180
      %s195 = sphi 0, %s181
      %s199 = sphi 0, %s199
      %s201 = sphi 0, %s199
      %s202 = sphi 0, %s201
      %s216 = sphi 0, %s202
      %s220 = sphi 0, %s220
      %s222 = sphi 0, %s220
      %s223 = sphi 0, %s222
      %s237 = sphi 0, %s223
      %s241 = sphi 0, %s241
      %s243 = sphi 0, %s241
      %s244 = sphi 0, %s243
      %s258 = sphi 0, %s244
      %s262 = sphi 0, %s262
      %s264 = sphi 0, %s262
      %s265 = sphi 0, %s264
      %s279 = sphi 0, %s265
      %s283 = sphi 0, %s283
      %s285 = sphi 0, %s283
      %s286 = sphi 0, %s285
      %s300 = sphi 0, %s286
      %s304 = sphi 0, %s304
      %s306 = sphi 0, %s304
      %s307 = sphi 0, %s306
      %s321 = sphi 0, %s307
      %s325 = sphi 0, %s325
      %s327 = sphi 0, %s325
      %s328 = sphi 0, %s327
      %s342 = sphi 0, %s328
      %s346 = sphi 0, %s346
      %s348 = sphi 0, %s346
      %s349 = sphi 0, %s348
      %s363 = sphi 0, %s349
      %s367 = sphi 0, %s367
      %s369 = sphi 0, %s367
      %s370 = sphi 0, %s369
      %s384 = sphi 0, %s370
      %s388 = sphi 0, %s388
      %s390 = sphi 0, %s388
      %s391 = sphi 0, %s390
      %s405 = sphi 0, %s391
      %s409 = sphi 0, %s409
      %s411 = sphi 0, %s409
      %s412 = sphi 0, %s411
      %s426 = sphi 0, %s412
      %s430 = sphi 0, %s430
      %s432 = sphi 0, %s430
      %s433 = sphi 0, %s432
      %s447 = sphi 0, %s433
      %s451 = sphi 0, %s451
      %s453 = sphi 0, %s451
      %s454 = sphi 0, %s453
      %s468 = sphi 0, %s454
      %s472 = sphi 0, %s472
      %s474 = sphi 0, %s472
      %s475 = sphi 0, %s474
      %s489 = sphi 0, %s475
      %s493 = sphi 0, %s493
      %s495 = sphi 0, %s493
      %s496 = sphi 0, %s495
      %s510 = sphi 0, %s496
      %s514 = sphi 0, %s514
      %s516 = sphi 0, %s514
      %s517 = sphi 0, %s516
      %s531 = sphi 0, %s517
      %s535 = sphi 0, %s535
      %s537 = sphi 0, %s535
      %s538 = sphi 0, %s537
      %s552 = sphi 0, %s538
      %s556 = sphi 0, %s556
      %s558 = sphi 0, %s556
      %s559 = sphi 0, %s558
      %s573 = sphi 0, %s559
      %s581 = sphi 0, %s583
      %s584 = sphi 0, %s581
      %s585 = sphi 0, %s584
      %s601 = sphi 0, %s585
    $region4: #{tpu_custom_call.1} parent=1 // loop_header_branch
      %46 = sbr.rel (%p44) target = $region8
    $region5: #{tpu_custom_call.1} parent=1 // loop_body
      %s48 = ssub.s32 %s43, 1
      %s49 = ssub.s32 %s43, 2
      %s56 = sadd.s32 1, %s51
      %p57 = scmp.ge.s32.totalorder %s56, 2
      %s58 = scalar_select %p57, 0, %s56
      %s59 = sadd.s32 1, %s50
      %s60 = scalar_select %p57, %s59, %s50
      %p61 = scmp.ge.s32.totalorder %s60, 2
      %s62 = scalar_select %p61, 0, %s60
      %s63 = ssub.s32 %s50, %s62
      %p64 = scmp.eq.s32.totalorder %s63, 0
      %s66 = sadd.s32 %s65, 1
      %s67 = scalar_select %p64, %s65, %s66
      %p70 = pneg %p64
      %p71 = scmp.eq.s32.totalorder %s43, 3
      %p72 = por %p70, %p71
      %p73 = scmp.ne.s32.totalorder %s65, %s68
      %p74 = scmp.eq.s32.totalorder %s43, 0
      %p75 = por %p73, %p74
      %p76 = scmp.ne.s32.totalorder %s65, %s68
      %p77 = scmp.eq.s32.totalorder %s48, 3
      %p78 = por %p76, %p77
      %p79 = scmp.ne.s32.totalorder %s68, %s69
      %p80 = scmp.eq.s32.totalorder %s48, 0
      %p81 = por %p79, %p80
      %p82 = scmp.ne.s32.totalorder %s68, %s69
      %p83 = scmp.eq.s32.totalorder %s49, 3
      %p84 = por %p82, %p83
      %p86 = scmp.ne.s32.totalorder %s69, %s85
      %p87 = scmp.eq.s32.totalorder %s49, 0
      %p88 = por %p86, %p87
      %s89 = ssub.s32 %s50, %s62
      %p90 = scmp.eq.s32.totalorder %s89, 0
      %s92 = sadd.s32 %s91, 1
      %s93 = scalar_select %p90, %s91, %s92
      %p96 = pneg %p90
      %p97 = scmp.eq.s32.totalorder %s43, 3
      %p98 = por %p96, %p97
      %p99 = scmp.ne.s32.totalorder %s91, %s94
      %p100 = scmp.eq.s32.totalorder %s43, 0
      %p101 = por %p99, %p100
      %p102 = scmp.ne.s32.totalorder %s91, %s94
      %p103 = scmp.eq.s32.totalorder %s48, 3
      %p104 = por %p102, %p103
      %p105 = scmp.ne.s32.totalorder %s94, %s95
      %p106 = scmp.eq.s32.totalorder %s48, 0
      %p107 = por %p105, %p106
      %p108 = scmp.ne.s32.totalorder %s94, %s95
      %p109 = scmp.eq.s32.totalorder %s49, 3
      %p110 = por %p108, %p109
      %p112 = scmp.ne.s32.totalorder %s95, %s111
      %p113 = scmp.eq.s32.totalorder %s49, 0
      %p114 = por %p112, %p113
      %s116 = sadd.s32 %s115, 1
      %p119 = scmp.eq.s32.totalorder %s43, 3
      %p120 = scmp.ne.s32.totalorder %s115, %s117
      %p121 = scmp.eq.s32.totalorder %s43, 0
      %p122 = por %p120, %p121
      %p123 = scmp.ne.s32.totalorder %s115, %s117
      %p124 = scmp.eq.s32.totalorder %s48, 3
      %p125 = por %p123, %p124
      %p126 = scmp.ne.s32.totalorder %s117, %s118
      %p127 = scmp.eq.s32.totalorder %s48, 0
      %p128 = por %p126, %p127
      %p129 = scmp.ne.s32.totalorder %s117, %s118
      %p130 = scmp.eq.s32.totalorder %s49, 3
      %p131 = por %p129, %p130
      %p133 = scmp.ne.s32.totalorder %s118, %s132
      %p134 = scmp.eq.s32.totalorder %s49, 0
      %p135 = por %p133, %p134
      %s137 = sadd.s32 %s136, 1
      %p140 = scmp.eq.s32.totalorder %s43, 3
      %p141 = scmp.ne.s32.totalorder %s136, %s138
      %p142 = scmp.eq.s32.totalorder %s43, 0
      %p143 = por %p141, %p142
      %p144 = scmp.ne.s32.totalorder %s136, %s138
      %p145 = scmp.eq.s32.totalorder %s48, 3
      %p146 = por %p144, %p145
      %p147 = scmp.ne.s32.totalorder %s138, %s139
      %p148 = scmp.eq.s32.totalorder %s48, 0
      %p149 = por %p147, %p148
      %p150 = scmp.ne.s32.totalorder %s138, %s139
      %p151 = scmp.eq.s32.totalorder %s49, 3
      %p152 = por %p150, %p151
      %p154 = scmp.ne.s32.totalorder %s139, %s153
      %p155 = scmp.eq.s32.totalorder %s49, 0
      %p156 = por %p154, %p155
      %s158 = sadd.s32 %s157, 1
      %p161 = scmp.eq.s32.totalorder %s43, 3
      %p162 = scmp.ne.s32.totalorder %s157, %s159
      %p163 = scmp.eq.s32.totalorder %s43, 0
      %p164 = por %p162, %p163
      %p165 = scmp.ne.s32.totalorder %s157, %s159
      %p166 = scmp.eq.s32.totalorder %s48, 3
      %p167 = por %p165, %p166
      %p168 = scmp.ne.s32.totalorder %s159, %s160
      %p169 = scmp.eq.s32.totalorder %s48, 0
      %p170 = por %p168, %p169
      %p171 = scmp.ne.s32.totalorder %s159, %s160
      %p172 = scmp.eq.s32.totalorder %s49, 3
      %p173 = por %p171, %p172
      %p175 = scmp.ne.s32.totalorder %s160, %s174
      %p176 = scmp.eq.s32.totalorder %s49, 0
      %p177 = por %p175, %p176
      %s179 = sadd.s32 %s178, 1
      %p182 = scmp.eq.s32.totalorder %s43, 3
      %p183 = scmp.ne.s32.totalorder %s178, %s180
      %p184 = scmp.eq.s32.totalorder %s43, 0
      %p185 = por %p183, %p184
      %p186 = scmp.ne.s32.totalorder %s178, %s180
      %p187 = scmp.eq.s32.totalorder %s48, 3
      %p188 = por %p186, %p187
      %p189 = scmp.ne.s32.totalorder %s180, %s181
      %p190 = scmp.eq.s32.totalorder %s48, 0
      %p191 = por %p189, %p190
      %p192 = scmp.ne.s32.totalorder %s180, %s181
      %p193 = scmp.eq.s32.totalorder %s49, 3
      %p194 = por %p192, %p193
      %p196 = scmp.ne.s32.totalorder %s181, %s195
      %p197 = scmp.eq.s32.totalorder %s49, 0
      %p198 = por %p196, %p197
      %s200 = sadd.s32 %s199, 1
      %p203 = scmp.eq.s32.totalorder %s43, 3
      %p204 = scmp.ne.s32.totalorder %s199, %s201
      %p205 = scmp.eq.s32.totalorder %s43, 0
      %p206 = por %p204, %p205
      %p207 = scmp.ne.s32.totalorder %s199, %s201
      %p208 = scmp.eq.s32.totalorder %s48, 3
      %p209 = por %p207, %p208
      %p210 = scmp.ne.s32.totalorder %s201, %s202
      %p211 = scmp.eq.s32.totalorder %s48, 0
      %p212 = por %p210, %p211
      %p213 = scmp.ne.s32.totalorder %s201, %s202
      %p214 = scmp.eq.s32.totalorder %s49, 3
      %p215 = por %p213, %p214
      %p217 = scmp.ne.s32.totalorder %s202, %s216
      %p218 = scmp.eq.s32.totalorder %s49, 0
      %p219 = por %p217, %p218
      %s221 = sadd.s32 %s220, 1
      %p224 = scmp.eq.s32.totalorder %s43, 3
      %p225 = scmp.ne.s32.totalorder %s220, %s222
      %p226 = scmp.eq.s32.totalorder %s43, 0
      %p227 = por %p225, %p226
      %p228 = scmp.ne.s32.totalorder %s220, %s222
      %p229 = scmp.eq.s32.totalorder %s48, 3
      %p230 = por %p228, %p229
      %p231 = scmp.ne.s32.totalorder %s222, %s223
      %p232 = scmp.eq.s32.totalorder %s48, 0
      %p233 = por %p231, %p232
      %p234 = scmp.ne.s32.totalorder %s222, %s223
      %p235 = scmp.eq.s32.totalorder %s49, 3
      %p236 = por %p234, %p235
      %p238 = scmp.ne.s32.totalorder %s223, %s237
      %p239 = scmp.eq.s32.totalorder %s49, 0
      %p240 = por %p238, %p239
      %s242 = sadd.s32 %s241, 1
      %p245 = scmp.eq.s32.totalorder %s43, 3
      %p246 = scmp.ne.s32.totalorder %s241, %s243
      %p247 = scmp.eq.s32.totalorder %s43, 0
      %p248 = por %p246, %p247
      %p249 = scmp.ne.s32.totalorder %s241, %s243
      %p250 = scmp.eq.s32.totalorder %s48, 3
      %p251 = por %p249, %p250
      %p252 = scmp.ne.s32.totalorder %s243, %s244
      %p253 = scmp.eq.s32.totalorder %s48, 0
      %p254 = por %p252, %p253
      %p255 = scmp.ne.s32.totalorder %s243, %s244
      %p256 = scmp.eq.s32.totalorder %s49, 3
      %p257 = por %p255, %p256
      %p259 = scmp.ne.s32.totalorder %s244, %s258
      %p260 = scmp.eq.s32.totalorder %s49, 0
      %p261 = por %p259, %p260
      %s263 = sadd.s32 %s262, 1
      %p266 = scmp.eq.s32.totalorder %s43, 3
      %p267 = scmp.ne.s32.totalorder %s262, %s264
      %p268 = scmp.eq.s32.totalorder %s43, 0
      %p269 = por %p267, %p268
      %p270 = scmp.ne.s32.totalorder %s262, %s264
      %p271 = scmp.eq.s32.totalorder %s48, 3
      %p272 = por %p270, %p271
      %p273 = scmp.ne.s32.totalorder %s264, %s265
      %p274 = scmp.eq.s32.totalorder %s48, 0
      %p275 = por %p273, %p274
      %p276 = scmp.ne.s32.totalorder %s264, %s265
      %p277 = scmp.eq.s32.totalorder %s49, 3
      %p278 = por %p276, %p277
      %p280 = scmp.ne.s32.totalorder %s265, %s279
      %p281 = scmp.eq.s32.totalorder %s49, 0
      %p282 = por %p280, %p281
      %s284 = sadd.s32 %s283, 1
      %p287 = scmp.eq.s32.totalorder %s43, 3
      %p288 = scmp.ne.s32.totalorder %s283, %s285
      %p289 = scmp.eq.s32.totalorder %s43, 0
      %p290 = por %p288, %p289
      %p291 = scmp.ne.s32.totalorder %s283, %s285
      %p292 = scmp.eq.s32.totalorder %s48, 3
      %p293 = por %p291, %p292
      %p294 = scmp.ne.s32.totalorder %s285, %s286
      %p295 = scmp.eq.s32.totalorder %s48, 0
      %p296 = por %p294, %p295
      %p297 = scmp.ne.s32.totalorder %s285, %s286
      %p298 = scmp.eq.s32.totalorder %s49, 3
      %p299 = por %p297, %p298
      %p301 = scmp.ne.s32.totalorder %s286, %s300
      %p302 = scmp.eq.s32.totalorder %s49, 0
      %p303 = por %p301, %p302
      %s305 = sadd.s32 %s304, 1
      %p308 = scmp.eq.s32.totalorder %s43, 3
      %p309 = scmp.ne.s32.totalorder %s304, %s306
      %p310 = scmp.eq.s32.totalorder %s43, 0
      %p311 = por %p309, %p310
      %p312 = scmp.ne.s32.totalorder %s304, %s306
      %p313 = scmp.eq.s32.totalorder %s48, 3
      %p314 = por %p312, %p313
      %p315 = scmp.ne.s32.totalorder %s306, %s307
      %p316 = scmp.eq.s32.totalorder %s48, 0
      %p317 = por %p315, %p316
      %p318 = scmp.ne.s32.totalorder %s306, %s307
      %p319 = scmp.eq.s32.totalorder %s49, 3
      %p320 = por %p318, %p319
      %p322 = scmp.ne.s32.totalorder %s307, %s321
      %p323 = scmp.eq.s32.totalorder %s49, 0
      %p324 = por %p322, %p323
      %s326 = sadd.s32 %s325, 1
      %p329 = scmp.eq.s32.totalorder %s43, 3
      %p330 = scmp.ne.s32.totalorder %s325, %s327
      %p331 = scmp.eq.s32.totalorder %s43, 0
      %p332 = por %p330, %p331
      %p333 = scmp.ne.s32.totalorder %s325, %s327
      %p334 = scmp.eq.s32.totalorder %s48, 3
      %p335 = por %p333, %p334
      %p336 = scmp.ne.s32.totalorder %s327, %s328
      %p337 = scmp.eq.s32.totalorder %s48, 0
      %p338 = por %p336, %p337
      %p339 = scmp.ne.s32.totalorder %s327, %s328
      %p340 = scmp.eq.s32.totalorder %s49, 3
      %p341 = por %p339, %p340
      %p343 = scmp.ne.s32.totalorder %s328, %s342
      %p344 = scmp.eq.s32.totalorder %s49, 0
      %p345 = por %p343, %p344
      %s347 = sadd.s32 %s346, 1
      %p350 = scmp.eq.s32.totalorder %s43, 3
      %p351 = scmp.ne.s32.totalorder %s346, %s348
      %p352 = scmp.eq.s32.totalorder %s43, 0
      %p353 = por %p351, %p352
      %p354 = scmp.ne.s32.totalorder %s346, %s348
      %p355 = scmp.eq.s32.totalorder %s48, 3
      %p356 = por %p354, %p355
      %p357 = scmp.ne.s32.totalorder %s348, %s349
      %p358 = scmp.eq.s32.totalorder %s48, 0
      %p359 = por %p357, %p358
      %p360 = scmp.ne.s32.totalorder %s348, %s349
      %p361 = scmp.eq.s32.totalorder %s49, 3
      %p362 = por %p360, %p361
      %p364 = scmp.ne.s32.totalorder %s349, %s363
      %p365 = scmp.eq.s32.totalorder %s49, 0
      %p366 = por %p364, %p365
      %s368 = sadd.s32 %s367, 1
      %p371 = scmp.eq.s32.totalorder %s43, 3
      %p372 = scmp.ne.s32.totalorder %s367, %s369
      %p373 = scmp.eq.s32.totalorder %s43, 0
      %p374 = por %p372, %p373
      %p375 = scmp.ne.s32.totalorder %s367, %s369
      %p376 = scmp.eq.s32.totalorder %s48, 3
      %p377 = por %p375, %p376
      %p378 = scmp.ne.s32.totalorder %s369, %s370
      %p379 = scmp.eq.s32.totalorder %s48, 0
      %p380 = por %p378, %p379
      %p381 = scmp.ne.s32.totalorder %s369, %s370
      %p382 = scmp.eq.s32.totalorder %s49, 3
      %p383 = por %p381, %p382
      %p385 = scmp.ne.s32.totalorder %s370, %s384
      %p386 = scmp.eq.s32.totalorder %s49, 0
      %p387 = por %p385, %p386
      %s389 = sadd.s32 %s388, 1
      %p392 = scmp.eq.s32.totalorder %s43, 3
      %p393 = scmp.ne.s32.totalorder %s388, %s390
      %p394 = scmp.eq.s32.totalorder %s43, 0
      %p395 = por %p393, %p394
      %p396 = scmp.ne.s32.totalorder %s388, %s390
      %p397 = scmp.eq.s32.totalorder %s48, 3
      %p398 = por %p396, %p397
      %p399 = scmp.ne.s32.totalorder %s390, %s391
      %p400 = scmp.eq.s32.totalorder %s48, 0
      %p401 = por %p399, %p400
      %p402 = scmp.ne.s32.totalorder %s390, %s391
      %p403 = scmp.eq.s32.totalorder %s49, 3
      %p404 = por %p402, %p403
      %p406 = scmp.ne.s32.totalorder %s391, %s405
      %p407 = scmp.eq.s32.totalorder %s49, 0
      %p408 = por %p406, %p407
      %s410 = sadd.s32 %s409, 1
      %p413 = scmp.eq.s32.totalorder %s43, 3
      %p414 = scmp.ne.s32.totalorder %s409, %s411
      %p415 = scmp.eq.s32.totalorder %s43, 0
      %p416 = por %p414, %p415
      %p417 = scmp.ne.s32.totalorder %s409, %s411
      %p418 = scmp.eq.s32.totalorder %s48, 3
      %p419 = por %p417, %p418
      %p420 = scmp.ne.s32.totalorder %s411, %s412
      %p421 = scmp.eq.s32.totalorder %s48, 0
      %p422 = por %p420, %p421
      %p423 = scmp.ne.s32.totalorder %s411, %s412
      %p424 = scmp.eq.s32.totalorder %s49, 3
      %p425 = por %p423, %p424
      %p427 = scmp.ne.s32.totalorder %s412, %s426
      %p428 = scmp.eq.s32.totalorder %s49, 0
      %p429 = por %p427, %p428
      %s431 = sadd.s32 %s430, 1
      %p434 = scmp.eq.s32.totalorder %s43, 3
      %p435 = scmp.ne.s32.totalorder %s430, %s432
      %p436 = scmp.eq.s32.totalorder %s43, 0
      %p437 = por %p435, %p436
      %p438 = scmp.ne.s32.totalorder %s430, %s432
      %p439 = scmp.eq.s32.totalorder %s48, 3
      %p440 = por %p438, %p439
      %p441 = scmp.ne.s32.totalorder %s432, %s433
      %p442 = scmp.eq.s32.totalorder %s48, 0
      %p443 = por %p441, %p442
      %p444 = scmp.ne.s32.totalorder %s432, %s433
      %p445 = scmp.eq.s32.totalorder %s49, 3
      %p446 = por %p444, %p445
      %p448 = scmp.ne.s32.totalorder %s433, %s447
      %p449 = scmp.eq.s32.totalorder %s49, 0
      %p450 = por %p448, %p449
      %s452 = sadd.s32 %s451, 1
      %p455 = scmp.eq.s32.totalorder %s43, 3
      %p456 = scmp.ne.s32.totalorder %s451, %s453
      %p457 = scmp.eq.s32.totalorder %s43, 0
      %p458 = por %p456, %p457
      %p459 = scmp.ne.s32.totalorder %s451, %s453
      %p460 = scmp.eq.s32.totalorder %s48, 3
      %p461 = por %p459, %p460
      %p462 = scmp.ne.s32.totalorder %s453, %s454
      %p463 = scmp.eq.s32.totalorder %s48, 0
      %p464 = por %p462, %p463
      %p465 = scmp.ne.s32.totalorder %s453, %s454
      %p466 = scmp.eq.s32.totalorder %s49, 3
      %p467 = por %p465, %p466
      %p469 = scmp.ne.s32.totalorder %s454, %s468
      %p470 = scmp.eq.s32.totalorder %s49, 0
      %p471 = por %p469, %p470
      %s473 = sadd.s32 %s472, 1
      %p476 = scmp.eq.s32.totalorder %s43, 3
      %p477 = scmp.ne.s32.totalorder %s472, %s474
      %p478 = scmp.eq.s32.totalorder %s43, 0
      %p479 = por %p477, %p478
      %p480 = scmp.ne.s32.totalorder %s472, %s474
      %p481 = scmp.eq.s32.totalorder %s48, 3
      %p482 = por %p480, %p481
      %p483 = scmp.ne.s32.totalorder %s474, %s475
      %p484 = scmp.eq.s32.totalorder %s48, 0
      %p485 = por %p483, %p484
      %p486 = scmp.ne.s32.totalorder %s474, %s475
      %p487 = scmp.eq.s32.totalorder %s49, 3
      %p488 = por %p486, %p487
      %p490 = scmp.ne.s32.totalorder %s475, %s489
      %p491 = scmp.eq.s32.totalorder %s49, 0
      %p492 = por %p490, %p491
      %s494 = sadd.s32 %s493, 1
      %p497 = scmp.eq.s32.totalorder %s43, 3
      %p498 = scmp.ne.s32.totalorder %s493, %s495
      %p499 = scmp.eq.s32.totalorder %s43, 0
      %p500 = por %p498, %p499
      %p501 = scmp.ne.s32.totalorder %s493, %s495
      %p502 = scmp.eq.s32.totalorder %s48, 3
      %p503 = por %p501, %p502
      %p504 = scmp.ne.s32.totalorder %s495, %s496
      %p505 = scmp.eq.s32.totalorder %s48, 0
      %p506 = por %p504, %p505
      %p507 = scmp.ne.s32.totalorder %s495, %s496
      %p508 = scmp.eq.s32.totalorder %s49, 3
      %p509 = por %p507, %p508
      %p511 = scmp.ne.s32.totalorder %s496, %s510
      %p512 = scmp.eq.s32.totalorder %s49, 0
      %p513 = por %p511, %p512
      %s515 = sadd.s32 %s514, 1
      %p518 = scmp.eq.s32.totalorder %s43, 3
      %p519 = scmp.ne.s32.totalorder %s514, %s516
      %p520 = scmp.eq.s32.totalorder %s43, 0
      %p521 = por %p519, %p520
      %p522 = scmp.ne.s32.totalorder %s514, %s516
      %p523 = scmp.eq.s32.totalorder %s48, 3
      %p524 = por %p522, %p523
      %p525 = scmp.ne.s32.totalorder %s516, %s517
      %p526 = scmp.eq.s32.totalorder %s48, 0
      %p527 = por %p525, %p526
      %p528 = scmp.ne.s32.totalorder %s516, %s517
      %p529 = scmp.eq.s32.totalorder %s49, 3
      %p530 = por %p528, %p529
      %p532 = scmp.ne.s32.totalorder %s517, %s531
      %p533 = scmp.eq.s32.totalorder %s49, 0
      %p534 = por %p532, %p533
      %s536 = sadd.s32 %s535, 1
      %p539 = scmp.eq.s32.totalorder %s43, 3
      %p540 = scmp.ne.s32.totalorder %s535, %s537
      %p541 = scmp.eq.s32.totalorder %s43, 0
      %p542 = por %p540, %p541
      %p543 = scmp.ne.s32.totalorder %s535, %s537
      %p544 = scmp.eq.s32.totalorder %s48, 3
      %p545 = por %p543, %p544
      %p546 = scmp.ne.s32.totalorder %s537, %s538
      %p547 = scmp.eq.s32.totalorder %s48, 0
      %p548 = por %p546, %p547
      %p549 = scmp.ne.s32.totalorder %s537, %s538
      %p550 = scmp.eq.s32.totalorder %s49, 3
      %p551 = por %p549, %p550
      %p553 = scmp.ne.s32.totalorder %s538, %s552
      %p554 = scmp.eq.s32.totalorder %s49, 0
      %p555 = por %p553, %p554
      %s557 = sadd.s32 %s556, 1
      %p560 = scmp.eq.s32.totalorder %s43, 3
      %p561 = scmp.ne.s32.totalorder %s556, %s558
      %p562 = scmp.eq.s32.totalorder %s43, 0
      %p563 = por %p561, %p562
      %p564 = scmp.ne.s32.totalorder %s556, %s558
      %p565 = scmp.eq.s32.totalorder %s48, 3
      %p566 = por %p564, %p565
      %p567 = scmp.ne.s32.totalorder %s558, %s559
      %p568 = scmp.eq.s32.totalorder %s48, 0
      %p569 = por %p567, %p568
      %p570 = scmp.ne.s32.totalorder %s558, %s559
      %p571 = scmp.eq.s32.totalorder %s49, 3
      %p572 = por %p570, %p571
      %p574 = scmp.ne.s32.totalorder %s559, %s573
      %p575 = scmp.eq.s32.totalorder %s49, 0
      %p576 = por %p574, %p575
      %s577 = ssub.s32 %s50, %s62
      %s578 = ssub.s32 %s51, %s58
      %s579 = sor.u32 %s577, %s578
      %p580 = scmp.eq.s32.totalorder %s579, 0
      %s582 = sadd.s32 %s581, 1
      %s583 = scalar_select %p580, %s581, %s582
      %p586 = pneg %p580
      %p587 = scmp.eq.s32.totalorder %s43, 3
      %p588 = por %p586, %p587
      %p589 = scmp.ne.s32.totalorder %s581, %s584
      %p590 = scmp.eq.s32.totalorder %s43, 0
      %p591 = por %p589, %p590
      %p592 = scmp.ne.s32.totalorder %s581, %s584
      %p593 = scmp.eq.s32.totalorder %s48, 3
      %p594 = por %p592, %p593
      %p595 = scmp.ne.s32.totalorder %s584, %s585
      %p596 = scmp.eq.s32.totalorder %s48, 0
      %p597 = por %p595, %p596
      %p598 = scmp.ne.s32.totalorder %s584, %s585
      %p599 = scmp.eq.s32.totalorder %s49, 3
      %p600 = por %p598, %p599
      %p602 = scmp.ne.s32.totalorder %s585, %s601
      %p603 = scmp.eq.s32.totalorder %s49, 0
      %p604 = por %p602, %p603
      %p605 = scmp.le.s32.totalorder 1, %s43
      %p606 = scmp.lt.s32.totalorder %s43, 5
      %p607 = pnand %p605, %p606
      %p608 = pneg %p607
      // Predicated region
      $region9: #{tpu_custom_call.1} parent=5 // pred_check
        _
      $region10: #{tpu_custom_call.1} parent=5 // pred_check_branch
        %610 = sbr.rel (%p607) target = $region12
      $region11: #{tpu_custom_call.1} parent=5 // pred_region
        %s611 = ssub.s32 %s43, 1
        // Predicated region
        $region13: #{tpu_custom_call.1} parent=11 // pred_check
          %p612 = pneg %p128
        $region14: #{tpu_custom_call.1} parent=11 // pred_check_branch
          %614 = sbr.rel (%p612) target = $region16
        $region15: #{tpu_custom_call.1} parent=11 // pred_region
          %s616 = ssub.s32 1024, 1024
          %617 = vsyncadd [#allocation10], %s616
          %s618 = sshll.u32 [#allocation11], 4
          %s619 = int_to_ptr.vmem [resolvable:$true] %s618
          %624 = dma.hbm_to_vmem [thread:$0]  %s2, 1024, %s619, [#allocation10], 64, 64, 4
        $region16: #{tpu_custom_call.1} parent=11 // pred_fallthru
          _
        // Predicated region
        $region17: #{tpu_custom_call.1} parent=11 // pred_check
          %p625 = pneg %p149
        $region18: #{tpu_custom_call.1} parent=11 // pred_check_branch
          %627 = sbr.rel (%p625) target = $region20
        $region19: #{tpu_custom_call.1} parent=11 // pred_region
          _
        $region20: #{tpu_custom_call.1} parent=11 // pred_fallthru
          _
        // Predicated region
        $region21: #{tpu_custom_call.1} parent=11 // pred_check
          %p628 = pneg %p170
        $region22: #{tpu_custom_call.1} parent=11 // pred_check_branch
          %630 = sbr.rel (%p628) target = $region24
        $region23: #{tpu_custom_call.1} parent=11 // pred_region
          %s632 = ssub.s32 2048, 2048
          %633 = vsyncadd [#allocation13], %s632
          %s634 = sshll.u32 [#allocation12], 4
          %s635 = int_to_ptr.vmem [resolvable:$true] %s634
          %640 = dma.hbm_to_vmem [thread:$0]  %s4, 2048, %s635, [#allocation13], 128, 128, 8
        $region24: #{tpu_custom_call.1} parent=11 // pred_fallthru
          _
        // Predicated region
        $region25: #{tpu_custom_call.1} parent=11 // pred_check
          %p641 = pneg %p191
        $region26: #{tpu_custom_call.1} parent=11 // pred_check_branch
          %643 = sbr.rel (%p641) target = $region28
        $region27: #{tpu_custom_call.1} parent=11 // pred_region
          _
        $region28: #{tpu_custom_call.1} parent=11 // pred_fallthru
          _
        // Predicated region
        $region29: #{tpu_custom_call.1} parent=11 // pred_check
          %p644 = pneg %p212
        $region30: #{tpu_custom_call.1} parent=11 // pred_check_branch
          %646 = sbr.rel (%p644) target = $region32
        $region31: #{tpu_custom_call.1} parent=11 // pred_region
          %s648 = ssub.s32 1024, 1024
          %649 = vsyncadd [#allocation13], %s648
          %s650 = sshll.u32 [#allocation14], 4
          %s651 = int_to_ptr.vmem [resolvable:$true] %s650
          %656 = dma.hbm_to_vmem [thread:$0]  %s6, 1024, %s651, [#allocation13], 64, 64, 4
        $region32: #{tpu_custom_call.1} parent=11 // pred_fallthru
          _
        // Predicated region
        $region33: #{tpu_custom_call.1} parent=11 // pred_check
          %p657 = pneg %p233
        $region34: #{tpu_custom_call.1} parent=11 // pred_check_branch
          %659 = sbr.rel (%p657) target = $region36
        $region35: #{tpu_custom_call.1} parent=11 // pred_region
          _
        $region36: #{tpu_custom_call.1} parent=11 // pred_fallthru
          _
        // Predicated region
        $region37: #{tpu_custom_call.1} parent=11 // pred_check
          %p660 = pneg %p254
        $region38: #{tpu_custom_call.1} parent=11 // pred_check_branch
          %662 = sbr.rel (%p660) target = $region40
        $region39: #{tpu_custom_call.1} parent=11 // pred_region
          _
        $region40: #{tpu_custom_call.1} parent=11 // pred_fallthru
          _
        // Predicated region
        $region41: #{tpu_custom_call.1} parent=11 // pred_check
          %p663 = pneg %p275
        $region42: #{tpu_custom_call.1} parent=11 // pred_check_branch
          %665 = sbr.rel (%p663) target = $region44
        $region43: #{tpu_custom_call.1} parent=11 // pred_region
          _
        $region44: #{tpu_custom_call.1} parent=11 // pred_fallthru
          _
        // Predicated region
        $region45: #{tpu_custom_call.1} parent=11 // pred_check
          %p666 = pneg %p296
        $region46: #{tpu_custom_call.1} parent=11 // pred_check_branch
          %668 = sbr.rel (%p666) target = $region48
        $region47: #{tpu_custom_call.1} parent=11 // pred_region
          %s670 = ssub.s32 1024, 1024
          %671 = vsyncadd [#allocation16], %s670
          %s672 = sshll.u32 [#allocation15], 4
          %s673 = int_to_ptr.vmem [resolvable:$true] %s672
          %678 = dma.hbm_to_vmem [thread:$0]  %s10, 1024, %s673, [#allocation16], 64, 64, 4
        $region48: #{tpu_custom_call.1} parent=11 // pred_fallthru
          _
        // Predicated region
        $region49: #{tpu_custom_call.1} parent=11 // pred_check
          %p679 = pneg %p317
        $region50: #{tpu_custom_call.1} parent=11 // pred_check_branch
          %681 = sbr.rel (%p679) target = $region52
        $region51: #{tpu_custom_call.1} parent=11 // pred_region
          _
        $region52: #{tpu_custom_call.1} parent=11 // pred_fallthru
          _
        // Predicated region
        $region53: #{tpu_custom_call.1} parent=11 // pred_check
          %p682 = pneg %p338
        $region54: #{tpu_custom_call.1} parent=11 // pred_check_branch
          %684 = sbr.rel (%p682) target = $region56
        $region55: #{tpu_custom_call.1} parent=11 // pred_region
          %s686 = ssub.s32 2048, 2048
          %687 = vsyncadd [#allocation16], %s686
          %s688 = sshll.u32 [#allocation17], 4
          %s689 = int_to_ptr.vmem [resolvable:$true] %s688
          %694 = dma.hbm_to_vmem [thread:$0]  %s12, 2048, %s689, [#allocation16], 128, 128, 8
        $region56: #{tpu_custom_call.1} parent=11 // pred_fallthru
          _
        // Predicated region
        $region57: #{tpu_custom_call.1} parent=11 // pred_check
          %p695 = pneg %p359
        $region58: #{tpu_custom_call.1} parent=11 // pred_check_branch
          %697 = sbr.rel (%p695) target = $region60
        $region59: #{tpu_custom_call.1} parent=11 // pred_region
          _
        $region60: #{tpu_custom_call.1} parent=11 // pred_fallthru
          _
        // Predicated region
        $region61: #{tpu_custom_call.1} parent=11 // pred_check
          %p698 = pneg %p380
        $region62: #{tpu_custom_call.1} parent=11 // pred_check_branch
          %700 = sbr.rel (%p698) target = $region64
        $region63: #{tpu_custom_call.1} parent=11 // pred_region
          %s702 = ssub.s32 1024, 1024
          %703 = vsyncadd [#allocation19], %s702
          %s704 = sshll.u32 [#allocation18], 4
          %s705 = int_to_ptr.vmem [resolvable:$true] %s704
          %710 = dma.hbm_to_vmem [thread:$0]  %s14, 1024, %s705, [#allocation19], 64, 64, 4
        $region64: #{tpu_custom_call.1} parent=11 // pred_fallthru
          _
        // Predicated region
        $region65: #{tpu_custom_call.1} parent=11 // pred_check
          %p711 = pneg %p401
        $region66: #{tpu_custom_call.1} parent=11 // pred_check_branch
          %713 = sbr.rel (%p711) target = $region68
        $region67: #{tpu_custom_call.1} parent=11 // pred_region
          _
        $region68: #{tpu_custom_call.1} parent=11 // pred_fallthru
          _
        // Predicated region
        $region69: #{tpu_custom_call.1} parent=11 // pred_check
          %p714 = pneg %p422
        $region70: #{tpu_custom_call.1} parent=11 // pred_check_branch
          %716 = sbr.rel (%p714) target = $region72
        $region71: #{tpu_custom_call.1} parent=11 // pred_region
          _
        $region72: #{tpu_custom_call.1} parent=11 // pred_fallthru
          _
        // Predicated region
        $region73: #{tpu_custom_call.1} parent=11 // pred_check
          %p717 = pneg %p443
        $region74: #{tpu_custom_call.1} parent=11 // pred_check_branch
          %719 = sbr.rel (%p717) target = $region76
        $region75: #{tpu_custom_call.1} parent=11 // pred_region
          _
        $region76: #{tpu_custom_call.1} parent=11 // pred_fallthru
          _
        // Predicated region
        $region77: #{tpu_custom_call.1} parent=11 // pred_check
          %p720 = pneg %p464
        $region78: #{tpu_custom_call.1} parent=11 // pred_check_branch
          %722 = sbr.rel (%p720) target = $region80
        $region79: #{tpu_custom_call.1} parent=11 // pred_region
          %s724 = ssub.s32 2048, 2048
          %725 = vsyncadd [#allocation19], %s724
          %s726 = sshll.u32 [#allocation20], 4
          %s727 = int_to_ptr.vmem [resolvable:$true] %s726
          %732 = dma.hbm_to_vmem [thread:$0]  %s18, 2048, %s727, [#allocation19], 128, 128, 8
        $region80: #{tpu_custom_call.1} parent=11 // pred_fallthru
          _
        // Predicated region
        $region81: #{tpu_custom_call.1} parent=11 // pred_check
          %p733 = pneg %p485
        $region82: #{tpu_custom_call.1} parent=11 // pred_check_branch
          %735 = sbr.rel (%p733) target = $region84
        $region83: #{tpu_custom_call.1} parent=11 // pred_region
          _
        $region84: #{tpu_custom_call.1} parent=11 // pred_fallthru
          _
        // Predicated region
        $region85: #{tpu_custom_call.1} parent=11 // pred_check
          %p736 = pneg %p506
        $region86: #{tpu_custom_call.1} parent=11 // pred_check_branch
          %738 = sbr.rel (%p736) target = $region88
        $region87: #{tpu_custom_call.1} parent=11 // pred_region
          %s740 = ssub.s32 2048, 2048
          %741 = vsyncadd [#allocation22], %s740
          %s742 = sshll.u32 [#allocation21], 4
          %s743 = int_to_ptr.vmem [resolvable:$true] %s742
          %748 = dma.hbm_to_vmem [thread:$0]  %s20, 2048, %s743, [#allocation22], 64, 64, 4
        $region88: #{tpu_custom_call.1} parent=11 // pred_fallthru
          _
        // Predicated region
        $region89: #{tpu_custom_call.1} parent=11 // pred_check
          %p749 = pneg %p527
        $region90: #{tpu_custom_call.1} parent=11 // pred_check_branch
          %751 = sbr.rel (%p749) target = $region92
        $region91: #{tpu_custom_call.1} parent=11 // pred_region
          _
        $region92: #{tpu_custom_call.1} parent=11 // pred_fallthru
          _
        // Predicated region
        $region93: #{tpu_custom_call.1} parent=11 // pred_check
          %p752 = pneg %p548
        $region94: #{tpu_custom_call.1} parent=11 // pred_check_branch
          %754 = sbr.rel (%p752) target = $region96
        $region95: #{tpu_custom_call.1} parent=11 // pred_region
          _
        $region96: #{tpu_custom_call.1} parent=11 // pred_fallthru
          _
        // Predicated region
        $region97: #{tpu_custom_call.1} parent=11 // pred_check
          %p755 = pneg %p569
        $region98: #{tpu_custom_call.1} parent=11 // pred_check_branch
          %757 = sbr.rel (%p755) target = $region100
        $region99: #{tpu_custom_call.1} parent=11 // pred_region
          _
        $region100: #{tpu_custom_call.1} parent=11 // pred_fallthru
          _
      $region12: #{tpu_custom_call.1} parent=5 // pred_fallthru
        _
      %p758 = scmp.lt.s32.totalorder %s43, 4
      // Predicated region
      $region101: #{tpu_custom_call.1} parent=5 // pred_check
        %p759 = pneg %p758
      $region102: #{tpu_custom_call.1} parent=5 // pred_check_branch
        %761 = sbr.rel (%p759) target = $region104
      $region103: #{tpu_custom_call.1} parent=5 // pred_region
        // Predicated region
        $region105: #{tpu_custom_call.1} parent=103 // pred_check
          %p762 = pneg %p75
        $region106: #{tpu_custom_call.1} parent=103 // pred_check_branch
          %764 = sbr.rel (%p762) target = $region108
        $region107: #{tpu_custom_call.1} parent=103 // pred_region
          %s765 = sand.u32 %s65, 1
          %s766 = scalar_lea.sflag [#allocation7], %s765
          %s767 = sand.u32 %s65, 1
          %s768 = smul.addr %s767, 128
          %s769 = scalar_lea.vmem [#allocation6], %s768
          %s771 = ssub.s32 2048, 2048
          %772 = vsyncadd %s766, %s771
          %s773 = smul.addr %s50, 32
          %s774 = smul.addr %s773, 64
          %s775 = scalar_lea.hbm %s0, %s774
          %s776 = sshll.u32 %s769, 4
          %s777 = int_to_ptr.vmem [resolvable:$true] %s776
          %782 = dma.hbm_to_vmem [thread:$0]  %s775, 2048, %s777, %s766, 64, 64, 4
        $region108: #{tpu_custom_call.1} parent=103 // pred_fallthru
          _
        // Predicated region
        $region109: #{tpu_custom_call.1} parent=103 // pred_check
          %p783 = pneg %p101
        $region110: #{tpu_custom_call.1} parent=103 // pred_check_branch
          %785 = sbr.rel (%p783) target = $region112
        $region111: #{tpu_custom_call.1} parent=103 // pred_region
          %s786 = sand.u32 %s43, 1
          %s787 = scalar_lea.sflag [#allocation10], %s786
          %s788 = sand.u32 %s91, 1
          %s789 = smul.addr %s788, 64
          %s790 = scalar_lea.vmem [#allocation9], %s789
          %s792 = ssub.s32 1024, 1024
          %793 = vsyncadd %s787, %s792
          %s794 = smul.addr %s50, 16
          %s795 = smul.addr %s794, 64
          %s796 = scalar_lea.hbm %s1, %s795
          %s797 = sshll.u32 %s790, 4
          %s798 = int_to_ptr.vmem [resolvable:$true] %s797
          %803 = dma.hbm_to_vmem [thread:$0]  %s796, 1024, %s798, %s787, 64, 64, 4
        $region112: #{tpu_custom_call.1} parent=103 // pred_fallthru
          _
      $region104: #{tpu_custom_call.1} parent=5 // pred_fallthru
        _
      %p804 = scmp.le.s32.totalorder 1, %s43
      %p805 = scmp.lt.s32.totalorder %s43, 5
      %p806 = pnand %p804, %p805
      %p807 = pneg %p806
      // Predicated region
      $region113: #{tpu_custom_call.1} parent=5 // pred_check
        _
      $region114: #{tpu_custom_call.1} parent=5 // pred_check_branch
        %809 = sbr.rel (%p806) target = $region116
      $region115: #{tpu_custom_call.1} parent=5 // pred_region
        %s810 = ssub.s32 %s43, 1
        %s811 = sand.u32 %s68, 1
        %s812 = scalar_lea.sflag [#allocation7], %s811
        %s813 = sand.u32 %s68, 1
        %s814 = smul.addr %s813, 128
        %s815 = scalar_lea.vmem [#allocation6], %s814
        // Predicated region
        $region117: #{tpu_custom_call.1} parent=115 // pred_check
          %p816 = pneg %p81
        $region118: #{tpu_custom_call.1} parent=115 // pred_check_branch
          %818 = sbr.rel (%p816) target = $region120
        $region119: #{tpu_custom_call.1} parent=115 // pred_region
          %819 = dma.done %s812, 2048
        $region120: #{tpu_custom_call.1} parent=115 // pred_fallthru
          _
        %s820 = sand.u32 %s48, 1
        %s821 = scalar_lea.sflag [#allocation10], %s820
        %s822 = sand.u32 %s94, 1
        %s823 = smul.addr %s822, 64
        %s824 = scalar_lea.vmem [#allocation9], %s823
        // Predicated region
        $region121: #{tpu_custom_call.1} parent=115 // pred_check
          %p825 = pneg %p107
        $region122: #{tpu_custom_call.1} parent=115 // pred_check_branch
          %827 = sbr.rel (%p825) target = $region124
        $region123: #{tpu_custom_call.1} parent=115 // pred_region
          %828 = dma.done %s821, 1024
        $region124: #{tpu_custom_call.1} parent=115 // pred_fallthru
          _
        // Predicated region
        $region125: #{tpu_custom_call.1} parent=115 // pred_check
          %p829 = pneg %p128
        $region126: #{tpu_custom_call.1} parent=115 // pred_check_branch
          %831 = sbr.rel (%p829) target = $region128
        $region127: #{tpu_custom_call.1} parent=115 // pred_region
          %832 = dma.done [#allocation10], 1024
        $region128: #{tpu_custom_call.1} parent=115 // pred_fallthru
          _
        // Predicated region
        $region129: #{tpu_custom_call.1} parent=115 // pred_check
          %p833 = pneg %p170
        $region130: #{tpu_custom_call.1} parent=115 // pred_check_branch
          %835 = sbr.rel (%p833) target = $region132
        $region131: #{tpu_custom_call.1} parent=115 // pred_region
          %836 = dma.done [#allocation13], 2048
        $region132: #{tpu_custom_call.1} parent=115 // pred_fallthru
          _
        // Predicated region
        $region133: #{tpu_custom_call.1} parent=115 // pred_check
          %p837 = pneg %p212
        $region134: #{tpu_custom_call.1} parent=115 // pred_check_branch
          %839 = sbr.rel (%p837) target = $region136
        $region135: #{tpu_custom_call.1} parent=115 // pred_region
          %840 = dma.done [#allocation13], 1024
        $region136: #{tpu_custom_call.1} parent=115 // pred_fallthru
          _
        // Predicated region
        $region137: #{tpu_custom_call.1} parent=115 // pred_check
          %p841 = pneg %p296
        $region138: #{tpu_custom_call.1} parent=115 // pred_check_branch
          %843 = sbr.rel (%p841) target = $region140
        $region139: #{tpu_custom_call.1} parent=115 // pred_region
          %844 = dma.done [#allocation16], 1024
        $region140: #{tpu_custom_call.1} parent=115 // pred_fallthru
          _
        // Predicated region
        $region141: #{tpu_custom_call.1} parent=115 // pred_check
          %p845 = pneg %p338
        $region142: #{tpu_custom_call.1} parent=115 // pred_check_branch
          %847 = sbr.rel (%p845) target = $region144
        $region143: #{tpu_custom_call.1} parent=115 // pred_region
          %848 = dma.done [#allocation16], 2048
        $region144: #{tpu_custom_call.1} parent=115 // pred_fallthru
          _
        // Predicated region
        $region145: #{tpu_custom_call.1} parent=115 // pred_check
          %p849 = pneg %p380
        $region146: #{tpu_custom_call.1} parent=115 // pred_check_branch
          %851 = sbr.rel (%p849) target = $region148
        $region147: #{tpu_custom_call.1} parent=115 // pred_region
          %852 = dma.done [#allocation19], 1024
        $region148: #{tpu_custom_call.1} parent=115 // pred_fallthru
          _
        // Predicated region
        $region149: #{tpu_custom_call.1} parent=115 // pred_check
          %p853 = pneg %p464
        $region150: #{tpu_custom_call.1} parent=115 // pred_check_branch
          %855 = sbr.rel (%p853) target = $region152
        $region151: #{tpu_custom_call.1} parent=115 // pred_region
          %856 = dma.done [#allocation19], 2048
        $region152: #{tpu_custom_call.1} parent=115 // pred_fallthru
          _
        // Predicated region
        $region153: #{tpu_custom_call.1} parent=115 // pred_check
          %p857 = pneg %p506
        $region154: #{tpu_custom_call.1} parent=115 // pred_check_branch
          %859 = sbr.rel (%p857) target = $region156
        $region155: #{tpu_custom_call.1} parent=115 // pred_region
          %860 = dma.done [#allocation22], 2048
        $region156: #{tpu_custom_call.1} parent=115 // pred_fallthru
          _
        %s861 = sand.u32 %s68, 1
        %s862 = scalar_lea.sflag [#allocation7], %s861
        %s863 = sand.u32 %s68, 1
        %s864 = smul.addr %s863, 128
        %s865 = scalar_lea.vmem [#allocation6], %s864
        %p866 = pneg %p81
        %p867 = pneg %p78
        %s868 = sand.u32 %s48, 1
        %s869 = scalar_lea.sflag [#allocation10], %s868
        %s870 = sand.u32 %s94, 1
        %s871 = smul.addr %s870, 64
        %s872 = scalar_lea.vmem [#allocation9], %s871
        %p873 = pneg %p107
        %p874 = pneg %p104
        %p875 = pneg %p128
        %p876 = pneg %p125
        %p877 = pneg %p149
        %p878 = pneg %p146
        %p879 = pneg %p170
        %p880 = pneg %p167
        %p881 = pneg %p191
        %p882 = pneg %p188
        %p883 = pneg %p212
        %p884 = pneg %p209
        %p885 = pneg %p233
        %p886 = pneg %p230
        %p887 = pneg %p254
        %p888 = pneg %p251
        %p889 = pneg %p275
        %p890 = pneg %p272
        %p891 = pneg %p296
        %p892 = pneg %p293
        %p893 = pneg %p317
        %p894 = pneg %p314
        %p895 = pneg %p338
        %p896 = pneg %p335
        %p897 = pneg %p359
        %p898 = pneg %p356
        %p899 = pneg %p380
        %p900 = pneg %p377
        %p901 = pneg %p401
        %p902 = pneg %p398
        %p903 = pneg %p422
        %p904 = pneg %p419
        %p905 = pneg %p443
        %p906 = pneg %p440
        %p907 = pneg %p464
        %p908 = pneg %p461
        %p909 = pneg %p485
        %p910 = pneg %p482
        %p911 = pneg %p506
        %p912 = pneg %p503
        %p913 = pneg %p527
        %p914 = pneg %p524
        %p915 = pneg %p548
        %p916 = pneg %p545
        %p917 = pneg %p569
        %p918 = pneg %p566
        %p919 = pneg %p597
        %p920 = pneg %p594
        %s921 = sand.u32 %s584, 1
        %s922 = scalar_lea.sflag [#allocation8], %s921
        %s923 = sand.u32 %s584, 1
        %s924 = smul.addr %s923, 128
        %s925 = scalar_lea.vmem [#allocation23], %s924
        %s926 = smul.u32 16, %s53
        %p928 = scmp.eq.s32.totalorder %s53, 0
        // Predicated region
        $region157: #{tpu_custom_call.1} parent=115 // pred_check
          %p929 = pneg %p928
        $region158: #{tpu_custom_call.1} parent=115 // pred_check_branch
          %931 = sbr.rel (%p929) target = $region160
        $region159: #{tpu_custom_call.1} parent=115 // pred_region
          %v932 = vld [vmem:[%s815] sm:$0xf]
          %v933 = vld [vmem:[%s815 + $0x4] sm:$0xf]
          %v934 = vld [vmem:[%s815 + $0x8] sm:$0xf]
          %v935 = vld [vmem:[%s815 + $0xc] sm:$0xf]
          %v936 = vld [vmem:[%s815 + $0x10] sm:$0xf]
          %v937 = vld [vmem:[%s815 + $0x14] sm:$0xf]
          %v938 = vld [vmem:[%s815 + $0x18] sm:$0xf]
          %v939 = vld [vmem:[%s815 + $0x1c] sm:$0xf]
          %v940 = vld [vmem:[%s815 + $0x20] sm:$0xf]
          %v941 = vld [vmem:[%s815 + $0x24] sm:$0xf]
          %v942 = vld [vmem:[%s815 + $0x28] sm:$0xf]
          %v943 = vld [vmem:[%s815 + $0x2c] sm:$0xf]
          %v944 = vld [vmem:[%s815 + $0x30] sm:$0xf]
          %v945 = vld [vmem:[%s815 + $0x34] sm:$0xf]
          %v946 = vld [vmem:[%s815 + $0x38] sm:$0xf]
          %v947 = vld [vmem:[%s815 + $0x3c] sm:$0xf]
          %v948 = vld [vmem:[%s815 + $0x40] sm:$0xf]
          %v949 = vld [vmem:[%s815 + $0x44] sm:$0xf]
          %v950 = vld [vmem:[%s815 + $0x48] sm:$0xf]
          %v951 = vld [vmem:[%s815 + $0x4c] sm:$0xf]
          %v952 = vld [vmem:[%s815 + $0x50] sm:$0xf]
          %v953 = vld [vmem:[%s815 + $0x54] sm:$0xf]
          %v954 = vld [vmem:[%s815 + $0x58] sm:$0xf]
          %v955 = vld [vmem:[%s815 + $0x5c] sm:$0xf]
          %v956 = vld [vmem:[%s815 + $0x60] sm:$0xf]
          %v957 = vld [vmem:[%s815 + $0x64] sm:$0xf]
          %v958 = vld [vmem:[%s815 + $0x68] sm:$0xf]
          %v959 = vld [vmem:[%s815 + $0x6c] sm:$0xf]
          %v960 = vld [vmem:[%s815 + $0x70] sm:$0xf]
          %v961 = vld [vmem:[%s815 + $0x74] sm:$0xf]
          %v962 = vld [vmem:[%s815 + $0x78] sm:$0xf]
          %v963 = vld [vmem:[%s815 + $0x7c] sm:$0xf]
          %v964 = vld [vmem:[#allocation12] sm:$0xff]
          %v965 = vld [vmem:[#allocation12 + $0x8] sm:$0xff]
          %v966 = vld [vmem:[#allocation12 + $0x10] sm:$0xff]
          %v967 = vld [vmem:[#allocation12 + $0x18] sm:$0xff]
          %v968 = vld [vmem:[#allocation12 + $0x20] sm:$0xff]
          %v969 = vld [vmem:[#allocation12 + $0x28] sm:$0xff]
          %v970 = vld [vmem:[#allocation12 + $0x30] sm:$0xff]
          %v971 = vld [vmem:[#allocation12 + $0x38] sm:$0xff]
          %v972 = vld [vmem:[#allocation12 + $0x40] sm:$0xff]
          %v973 = vld [vmem:[#allocation12 + $0x48] sm:$0xff]
          %v974 = vld [vmem:[#allocation12 + $0x50] sm:$0xff]
          %v975 = vld [vmem:[#allocation12 + $0x58] sm:$0xff]
          %v976 = vld [vmem:[#allocation12 + $0x60] sm:$0xff]
          %v977 = vld [vmem:[#allocation12 + $0x68] sm:$0xff]
          %v978 = vld [vmem:[#allocation12 + $0x70] sm:$0xff]
          %v979 = vld [vmem:[#allocation12 + $0x78] sm:$0xff]
          %v980 = vld [vmem:[%s5] sm:$0x3]
          %v982 = vlaneseq
          %v983 = vshrl.u32 %v982, 7
          %v984 = vsub.s32 0, %v983
          %v985 = vrot.slane %v980, %v984
          %v986 = vlaneseq
          %v987 = vshrl.u32 %v986, 7
          %v988 = vsub.s32 1, %v987
          %v989 = vrot.slane %v980, %v988
          %v1024 = vunpack.c.l.b16 %v932
          %v1025 = vunpack.c.l.b16 %v933
          %v1026 = vunpack.c.l.b16 %v934
          %v1027 = vunpack.c.l.b16 %v935
          %v1028 = vunpack.c.l.b16 %v936
          %v1029 = vunpack.c.l.b16 %v937
          %v1030 = vunpack.c.l.b16 %v938
          %v1031 = vunpack.c.l.b16 %v939
          %v1032 = vunpack.c.l.b16 %v940
          %v1033 = vunpack.c.l.b16 %v941
          %v1034 = vunpack.c.l.b16 %v942
          %v1035 = vunpack.c.l.b16 %v943
          %v1036 = vunpack.c.l.b16 %v944
          %v1037 = vunpack.c.l.b16 %v945
          %v1038 = vunpack.c.l.b16 %v946
          %v1039 = vunpack.c.l.b16 %v947
          %v1040 = vunpack.c.l.b16 %v948
          %v1041 = vunpack.c.l.b16 %v949
          %v1042 = vunpack.c.l.b16 %v950
          %v1043 = vunpack.c.l.b16 %v951
          %v1044 = vunpack.c.l.b16 %v952
          %v1045 = vunpack.c.l.b16 %v953
          %v1046 = vunpack.c.l.b16 %v954
          %v1047 = vunpack.c.l.b16 %v955
          %v1048 = vunpack.c.l.b16 %v956
          %v1049 = vunpack.c.l.b16 %v957
          %v1050 = vunpack.c.l.b16 %v958
          %v1051 = vunpack.c.l.b16 %v959
          %v1052 = vunpack.c.l.b16 %v960
          %v1053 = vunpack.c.l.b16 %v961
          %v1054 = vunpack.c.l.b16 %v962
          %v1055 = vunpack.c.l.b16 %v963
          %v1056 = vpack.c.b16 %v1025, %v1024
          %v1057 = vpack.c.b16 %v1027, %v1026
          %v1058 = vpack.c.b16 %v1029, %v1028
          %v1059 = vpack.c.b16 %v1031, %v1030
          %v1060 = vpack.c.b16 %v1033, %v1032
          %v1061 = vpack.c.b16 %v1035, %v1034
          %v1062 = vpack.c.b16 %v1037, %v1036
          %v1063 = vpack.c.b16 %v1039, %v1038
          %v1064 = vpack.c.b16 %v1041, %v1040
          %v1065 = vpack.c.b16 %v1043, %v1042
          %v1066 = vpack.c.b16 %v1045, %v1044
          %v1067 = vpack.c.b16 %v1047, %v1046
          %v1068 = vpack.c.b16 %v1049, %v1048
          %v1069 = vpack.c.b16 %v1051, %v1050
          %v1070 = vpack.c.b16 %v1053, %v1052
          %v1071 = vpack.c.b16 %v1055, %v1054
          %v1104 = vunpack.c.l.b16 %v964
          %v1105 = vunpack.c.h.b16 %v964
          %v1106 = vunpack.c.l.b16 %v965
          %v1107 = vunpack.c.h.b16 %v965
          %v1108 = vunpack.c.l.b16 %v966
          %v1109 = vunpack.c.h.b16 %v966
          %v1110 = vunpack.c.l.b16 %v967
          %v1111 = vunpack.c.h.b16 %v967
          %v1112 = vunpack.c.l.b16 %v968
          %v1113 = vunpack.c.h.b16 %v968
          %v1114 = vunpack.c.l.b16 %v969
          %v1115 = vunpack.c.h.b16 %v969
          %v1116 = vunpack.c.l.b16 %v970
          %v1117 = vunpack.c.h.b16 %v970
          %v1118 = vunpack.c.l.b16 %v971
          %v1119 = vunpack.c.h.b16 %v971
          %v1120 = vunpack.c.l.b16 %v972
          %v1121 = vunpack.c.h.b16 %v972
          %v1122 = vunpack.c.l.b16 %v973
          %v1123 = vunpack.c.h.b16 %v973
          %v1124 = vunpack.c.l.b16 %v974
          %v1125 = vunpack.c.h.b16 %v974
          %v1126 = vunpack.c.l.b16 %v975
          %v1127 = vunpack.c.h.b16 %v975
          %v1128 = vunpack.c.l.b16 %v976
          %v1129 = vunpack.c.h.b16 %v976
          %v1130 = vunpack.c.l.b16 %v977
          %v1131 = vunpack.c.h.b16 %v977
          %v1132 = vunpack.c.l.b16 %v978
          %v1133 = vunpack.c.h.b16 %v978
          %v1134 = vunpack.c.l.b16 %v979
          %v1135 = vunpack.c.h.b16 %v979
          %v1136 = vpack.c.b16 %v1106, %v1104
          %v1137 = vpack.c.b16 %v1107, %v1105
          %v1138 = vpack.c.b16 %v1110, %v1108
          %v1139 = vpack.c.b16 %v1111, %v1109
          %v1140 = vpack.c.b16 %v1114, %v1112
          %v1141 = vpack.c.b16 %v1115, %v1113
          %v1142 = vpack.c.b16 %v1118, %v1116
          %v1143 = vpack.c.b16 %v1119, %v1117
          %v1144 = vpack.c.b16 %v1122, %v1120
          %v1145 = vpack.c.b16 %v1123, %v1121
          %v1146 = vpack.c.b16 %v1126, %v1124
          %v1147 = vpack.c.b16 %v1127, %v1125
          %v1148 = vpack.c.b16 %v1130, %v1128
          %v1149 = vpack.c.b16 %v1131, %v1129
          %v1150 = vpack.c.b16 %v1134, %v1132
          %v1151 = vpack.c.b16 %v1135, %v1133
          %1168 = vmatprep.subr.bf16.mxu0 %v1137
          %1169 = vmatpush1.bf16.msra.mxu0 %v1136
          %1170 = vmatprep.subr.bf16.mxu0 %v1139
          %1171 = vmatpush1.bf16.msra.mxu0 %v1138
          %1172 = vmatprep.subr.bf16.mxu0 %v1141
          %1173 = vmatpush1.bf16.msra.mxu0 %v1140
          %1174 = vmatprep.subr.bf16.mxu0 %v1143
          %1175 = vmatpush1.bf16.msra.mxu0 %v1142
          %1176 = vmatprep.subr.bf16.mxu0 %v1145
          %1177 = vmatpush1.bf16.msra.mxu0 %v1144
          %1178 = vmatprep.subr.bf16.mxu0 %v1147
          %1179 = vmatpush1.bf16.msra.mxu0 %v1146
          %1180 = vmatprep.subr.bf16.mxu0 %v1149
          %1181 = vmatpush1.bf16.msra.mxu0 %v1148
          %1182 = vmatprep.subr.bf16.mxu0 %v1151
          %1183 = vmatpush1.bf16.msra.mxu0 %v1150
          %1184 = vmatprep.subr.bf16.mxu0 0
          %1185 = vmatpush1.bf16.msra.mxu0 0
          %1186 = vmatprep.subr.bf16.mxu0 0
          %1187 = vmatpush1.bf16.msra.mxu0 0
          %1188 = vmatprep.subr.bf16.mxu0 0
          %1189 = vmatpush1.bf16.msra.mxu0 0
          %1190 = vmatprep.subr.bf16.mxu0 0
          %1191 = vmatpush1.bf16.msra.mxu0 0
          %1192 = vmatprep.subr.bf16.mxu0 0
          %1193 = vmatpush1.bf16.msra.mxu0 0
          %1194 = vmatprep.subr.bf16.mxu0 0
          %1195 = vmatpush1.bf16.msra.mxu0 0
          %1196 = vmatprep.subr.bf16.mxu0 0
          %1197 = vmatpush1.bf16.msra.mxu0 0
          %1198 = vmatprep.subr.bf16.mxu0 0
          %1199 = vmatpush1.bf16.msra.mxu0 0
          %1200 = vmatprep.mubr.bf16.mxu0 0
          %1201 = vmatmul.mubr.bf16.gmra.mrb[0].mxu0 %v1056
          %v1202 = vpop.f32.mrb[0].mxu0
          %v1203 = vadd.f32 %v985, %v1202
          %v1204 = vpop.f32.mrb[0].mxu0
          %v1205 = vadd.f32 %v989, %v1204
          %v1206 = vpop.f32.mrb[0].mxu0
          %v1207 = vadd.f32 %v985, %v1206
          %v1208 = vpop.f32.mrb[0].mxu0
          %v1209 = vadd.f32 %v989, %v1208
          %1210 = vmatprep.mubr.bf16.mxu0 0
          %1211 = vmatmul.mubr.bf16.gmra.mrb[0].mxu0 %v1057
          %v1212 = vpop.f32.mrb[0].mxu0
          %v1213 = vadd.f32 %v985, %v1212
          %v1214 = vpop.f32.mrb[0].mxu0
          %v1215 = vadd.f32 %v989, %v1214
          %v1216 = vpop.f32.mrb[0].mxu0
          %v1217 = vadd.f32 %v985, %v1216
          %v1218 = vpop.f32.mrb[0].mxu0
          %v1219 = vadd.f32 %v989, %v1218
          %1220 = vmatprep.mubr.bf16.mxu0 0
          %1221 = vmatmul.mubr.bf16.gmra.mrb[0].mxu0 %v1058
          %v1222 = vpop.f32.mrb[0].mxu0
          %v1223 = vadd.f32 %v985, %v1222
          %v1224 = vpop.f32.mrb[0].mxu0
          %v1225 = vadd.f32 %v989, %v1224
          %v1226 = vpop.f32.mrb[0].mxu0
          %v1227 = vadd.f32 %v985, %v1226
          %v1228 = vpop.f32.mrb[0].mxu0
          %v1229 = vadd.f32 %v989, %v1228
          %1230 = vmatprep.mubr.bf16.mxu0 0
          %1231 = vmatmul.mubr.bf16.gmra.mrb[0].mxu0 %v1059
          %v1232 = vpop.f32.mrb[0].mxu0
          %v1233 = vadd.f32 %v985, %v1232
          %v1234 = vpop.f32.mrb[0].mxu0
          %v1235 = vadd.f32 %v989, %v1234
          %v1236 = vpop.f32.mrb[0].mxu0
          %v1237 = vadd.f32 %v985, %v1236
          %v1238 = vpop.f32.mrb[0].mxu0
          %v1239 = vadd.f32 %v989, %v1238
          %1240 = vmatprep.mubr.bf16.mxu0 0
          %1241 = vmatmul.mubr.bf16.gmra.mrb[0].mxu0 %v1060
          %v1242 = vpop.f32.mrb[0].mxu0
          %v1243 = vadd.f32 %v985, %v1242
          %v1244 = vpop.f32.mrb[0].mxu0
          %v1245 = vadd.f32 %v989, %v1244
          %v1246 = vpop.f32.mrb[0].mxu0
          %v1247 = vadd.f32 %v985, %v1246
          %v1248 = vpop.f32.mrb[0].mxu0
          %v1249 = vadd.f32 %v989, %v1248
          %1250 = vmatprep.mubr.bf16.mxu0 0
          %1251 = vmatmul.mubr.bf16.gmra.mrb[0].mxu0 %v1061
          %v1252 = vpop.f32.mrb[0].mxu0
          %v1253 = vadd.f32 %v985, %v1252
          %v1254 = vpop.f32.mrb[0].mxu0
          %v1255 = vadd.f32 %v989, %v1254
          %v1256 = vpop.f32.mrb[0].mxu0
          %v1257 = vadd.f32 %v985, %v1256
          %v1258 = vpop.f32.mrb[0].mxu0
          %v1259 = vadd.f32 %v989, %v1258
          %1260 = vmatprep.mubr.bf16.mxu0 0
          %1261 = vmatmul.mubr.bf16.gmra.mrb[0].mxu0 %v1062
          %v1262 = vpop.f32.mrb[0].mxu0
          %v1263 = vadd.f32 %v985, %v1262
          %v1264 = vpop.f32.mrb[0].mxu0
          %v1265 = vadd.f32 %v989, %v1264
          %v1266 = vpop.f32.mrb[0].mxu0
          %v1267 = vadd.f32 %v985, %v1266
          %v1268 = vpop.f32.mrb[0].mxu0
          %v1269 = vadd.f32 %v989, %v1268
          %1270 = vmatprep.mubr.bf16.mxu0 0
          %1271 = vmatmul.mubr.bf16.gmra.mrb[0].mxu0 %v1063
          %v1272 = vpop.f32.mrb[0].mxu0
          %v1273 = vadd.f32 %v985, %v1272
          %v1274 = vpop.f32.mrb[0].mxu0
          %v1275 = vadd.f32 %v989, %v1274
          %v1276 = vpop.f32.mrb[0].mxu0
          %v1277 = vadd.f32 %v985, %v1276
          %v1278 = vpop.f32.mrb[0].mxu0
          %v1279 = vadd.f32 %v989, %v1278
          %1280 = vmatprep.mubr.bf16.mxu0 0
          %1281 = vmatmul.mubr.bf16.gmra.mrb[0].mxu0 %v1064
          %v1282 = vpop.f32.mrb[0].mxu0
          %v1283 = vadd.f32 %v985, %v1282
          %v1284 = vpop.f32.mrb[0].mxu0
          %v1285 = vadd.f32 %v989, %v1284
          %v1286 = vpop.f32.mrb[0].mxu0
          %v1287 = vadd.f32 %v985, %v1286
          %v1288 = vpop.f32.mrb[0].mxu0
          %v1289 = vadd.f32 %v989, %v1288
          %1290 = vmatprep.mubr.bf16.mxu0 0
          %1291 = vmatmul.mubr.bf16.gmra.mrb[0].mxu0 %v1065
          %v1292 = vpop.f32.mrb[0].mxu0
          %v1293 = vadd.f32 %v985, %v1292
          %v1294 = vpop.f32.mrb[0].mxu0
          %v1295 = vadd.f32 %v989, %v1294
          %v1296 = vpop.f32.mrb[0].mxu0
          %v1297 = vadd.f32 %v985, %v1296
          %v1298 = vpop.f32.mrb[0].mxu0
          %v1299 = vadd.f32 %v989, %v1298
          %1300 = vmatprep.mubr.bf16.mxu0 0
          %1301 = vmatmul.mubr.bf16.gmra.mrb[0].mxu0 %v1066
          %v1302 = vpop.f32.mrb[0].mxu0
          %v1303 = vadd.f32 %v985, %v1302
          %v1304 = vpop.f32.mrb[0].mxu0
          %v1305 = vadd.f32 %v989, %v1304
          %v1306 = vpop.f32.mrb[0].mxu0
          %v1307 = vadd.f32 %v985, %v1306
          %v1308 = vpop.f32.mrb[0].mxu0
          %v1309 = vadd.f32 %v989, %v1308
          %1310 = vmatprep.mubr.bf16.mxu0 0
          %1311 = vmatmul.mubr.bf16.gmra.mrb[0].mxu0 %v1067
          %v1312 = vpop.f32.mrb[0].mxu0
          %v1313 = vadd.f32 %v985, %v1312
          %v1314 = vpop.f32.mrb[0].mxu0
          %v1315 = vadd.f32 %v989, %v1314
          %v1316 = vpop.f32.mrb[0].mxu0
          %v1317 = vadd.f32 %v985, %v1316
          %v1318 = vpop.f32.mrb[0].mxu0
          %v1319 = vadd.f32 %v989, %v1318
          %1320 = vmatprep.mubr.bf16.mxu0 0
          %1321 = vmatmul.mubr.bf16.gmra.mrb[0].mxu0 %v1068
          %v1322 = vpop.f32.mrb[0].mxu0
          %v1323 = vadd.f32 %v985, %v1322
          %v1324 = vpop.f32.mrb[0].mxu0
          %v1325 = vadd.f32 %v989, %v1324
          %v1326 = vpop.f32.mrb[0].mxu0
          %v1327 = vadd.f32 %v985, %v1326
          %v1328 = vpop.f32.mrb[0].mxu0
          %v1329 = vadd.f32 %v989, %v1328
          %1330 = vmatprep.mubr.bf16.mxu0 0
          %1331 = vmatmul.mubr.bf16.gmra.mrb[0].mxu0 %v1069
          %v1332 = vpop.f32.mrb[0].mxu0
          %v1333 = vadd.f32 %v985, %v1332
          %v1334 = vpop.f32.mrb[0].mxu0
          %v1335 = vadd.f32 %v989, %v1334
          %v1336 = vpop.f32.mrb[0].mxu0
          %v1337 = vadd.f32 %v985, %v1336
          %v1338 = vpop.f32.mrb[0].mxu0
          %v1339 = vadd.f32 %v989, %v1338
          %1340 = vmatprep.mubr.bf16.mxu0 0
          %1341 = vmatmul.mubr.bf16.gmra.mrb[0].mxu0 %v1070
          %v1342 = vpop.f32.mrb[0].mxu0
          %v1343 = vadd.f32 %v985, %v1342
          %v1344 = vpop.f32.mrb[0].mxu0
          %v1345 = vadd.f32 %v989, %v1344
          %v1346 = vpop.f32.mrb[0].mxu0
          %v1347 = vadd.f32 %v985, %v1346
          %v1348 = vpop.f32.mrb[0].mxu0
          %v1349 = vadd.f32 %v989, %v1348
          %1350 = vmatprep.mubr.bf16.mxu0 0
          %1351 = vmatmul.mubr.bf16.gmra.mrb[0].mxu0 %v1071
          %v1352 = vpop.f32.mrb[0].mxu0
          %v1353 = vadd.f32 %v985, %v1352
          %v1354 = vpop.f32.mrb[0].mxu0
          %v1355 = vadd.f32 %v989, %v1354
          %v1356 = vpop.f32.mrb[0].mxu0
          %v1357 = vadd.f32 %v985, %v1356
          %v1358 = vpop.f32.mrb[0].mxu0
          %v1359 = vadd.f32 %v989, %v1358
          %1360 = vdwg.mxu0
          %v1361 = vpack.c.bf16 %v1207, %v1203
          %v1362 = vpack.c.bf16 %v1209, %v1205
          %v1363 = vpack.c.bf16 %v1217, %v1213
          %v1364 = vpack.c.bf16 %v1219, %v1215
          %v1365 = vpack.c.bf16 %v1227, %v1223
          %v1366 = vpack.c.bf16 %v1229, %v1225
          %v1367 = vpack.c.bf16 %v1237, %v1233
          %v1368 = vpack.c.bf16 %v1239, %v1235
          %v1369 = vpack.c.bf16 %v1247, %v1243
          %v1370 = vpack.c.bf16 %v1249, %v1245
          %v1371 = vpack.c.bf16 %v1257, %v1253
          %v1372 = vpack.c.bf16 %v1259, %v1255
          %v1373 = vpack.c.bf16 %v1267, %v1263
          %v1374 = vpack.c.bf16 %v1269, %v1265
          %v1375 = vpack.c.bf16 %v1277, %v1273
          %v1376 = vpack.c.bf16 %v1279, %v1275
          %v1377 = vpack.c.bf16 %v1287, %v1283
          %v1378 = vpack.c.bf16 %v1289, %v1285
          %v1379 = vpack.c.bf16 %v1297, %v1293
          %v1380 = vpack.c.bf16 %v1299, %v1295
          %v1381 = vpack.c.bf16 %v1307, %v1303
          %v1382 = vpack.c.bf16 %v1309, %v1305
          %v1383 = vpack.c.bf16 %v1317, %v1313
          %v1384 = vpack.c.bf16 %v1319, %v1315
          %v1385 = vpack.c.bf16 %v1327, %v1323
          %v1386 = vpack.c.bf16 %v1329, %v1325
          %v1387 = vpack.c.bf16 %v1337, %v1333
          %v1388 = vpack.c.bf16 %v1339, %v1335
          %v1389 = vpack.c.bf16 %v1347, %v1343
          %v1390 = vpack.c.bf16 %v1349, %v1345
          %v1391 = vpack.c.bf16 %v1357, %v1353
          %v1392 = vpack.c.bf16 %v1359, %v1355
          %1393 = vxpose.xlu0.c.b16.start [1/8] %v1361, 128
          %1394 = vxpose.xlu0.c.b16.cont [2/8] %v1363, 128
          %1395 = vxpose.xlu0.c.b16.cont [3/8] %v1365, 128
          %1396 = vxpose.xlu0.c.b16.cont [4/8] %v1367, 128
          %1397 = vxpose.xlu0.c.b16.cont [5/8] %v1369, 128
          %1398 = vxpose.xlu0.c.b16.cont [6/8] %v1371, 128
          %1399 = vxpose.xlu0.c.b16.cont [7/8] %v1373, 128
          %1400 = vxpose.xlu0.c.b16.end [8/8] %v1375, 128
          %v1401 = vpop.trf.xlu0
          %v1402 = vpop.trf.xlu0
          %v1403 = vpop.trf.xlu0
          %v1404 = vpop.trf.xlu0
          %v1405 = vpop.trf.xlu0
          %v1406 = vpop.trf.xlu0
          %v1407 = vpop.trf.xlu0
          %v1408 = vpop.trf.xlu0
          %1409 = vxpose.xlu0.c.b16.start [1/8] %v1362, 128
          %1410 = vxpose.xlu0.c.b16.cont [2/8] %v1364, 128
          %1411 = vxpose.xlu0.c.b16.cont [3/8] %v1366, 128
          %1412 = vxpose.xlu0.c.b16.cont [4/8] %v1368, 128
          %1413 = vxpose.xlu0.c.b16.cont [5/8] %v1370, 128
          %1414 = vxpose.xlu0.c.b16.cont [6/8] %v1372, 128
          %1415 = vxpose.xlu0.c.b16.cont [7/8] %v1374, 128
          %1416 = vxpose.xlu0.c.b16.end [8/8] %v1376, 128
          %v1417 = vpop.trf.xlu0
          %v1418 = vpop.trf.xlu0
          %v1419 = vpop.trf.xlu0
          %v1420 = vpop.trf.xlu0
          %v1421 = vpop.trf.xlu0
          %v1422 = vpop.trf.xlu0
          %v1423 = vpop.trf.xlu0
          %v1424 = vpop.trf.xlu0
          %1425 = vxpose.xlu0.c.b16.start [1/8] %v1377, 128
          %1426 = vxpose.xlu0.c.b16.cont [2/8] %v1379, 128
          %1427 = vxpose.xlu0.c.b16.cont [3/8] %v1381, 128
          %1428 = vxpose.xlu0.c.b16.cont [4/8] %v1383, 128
          %1429 = vxpose.xlu0.c.b16.cont [5/8] %v1385, 128
          %1430 = vxpose.xlu0.c.b16.cont [6/8] %v1387, 128
          %1431 = vxpose.xlu0.c.b16.cont [7/8] %v1389, 128
          %1432 = vxpose.xlu0.c.b16.end [8/8] %v1391, 128
          %v1433 = vpop.trf.xlu0
          %v1434 = vpop.trf.xlu0
          %v1435 = vpop.trf.xlu0
          %v1436 = vpop.trf.xlu0
          %v1437 = vpop.trf.xlu0
          %v1438 = vpop.trf.xlu0
          %v1439 = vpop.trf.xlu0
          %v1440 = vpop.trf.xlu0
          %1441 = vxpose.xlu0.c.b16.start [1/8] %v1378, 128
          %1442 = vxpose.xlu0.c.b16.cont [2/8] %v1380, 128
          %1443 = vxpose.xlu0.c.b16.cont [3/8] %v1382, 128
          %1444 = vxpose.xlu0.c.b16.cont [4/8] %v1384, 128
          %1445 = vxpose.xlu0.c.b16.cont [5/8] %v1386, 128
          %1446 = vxpose.xlu0.c.b16.cont [6/8] %v1388, 128
          %1447 = vxpose.xlu0.c.b16.cont [7/8] %v1390, 128
          %1448 = vxpose.xlu0.c.b16.end [8/8] %v1392, 128
          %v1449 = vpop.trf.xlu0
          %v1450 = vpop.trf.xlu0
          %v1451 = vpop.trf.xlu0
          %v1452 = vpop.trf.xlu0
          %v1453 = vpop.trf.xlu0
          %v1454 = vpop.trf.xlu0
          %v1455 = vpop.trf.xlu0
          %v1456 = vpop.trf.xlu0
          %1457 = vst [vmem:[#allocation2] sm:$0xff] %v1401
          %1458 = vst [vmem:[#allocation2 + $0x8] sm:$0xff] %v1433
          %1459 = vst [vmem:[#allocation2 + $0x10] sm:$0xff] %v1402
          %1460 = vst [vmem:[#allocation2 + $0x18] sm:$0xff] %v1434
          %1461 = vst [vmem:[#allocation2 + $0x20] sm:$0xff] %v1403
          %1462 = vst [vmem:[#allocation2 + $0x28] sm:$0xff] %v1435
          %1463 = vst [vmem:[#allocation2 + $0x30] sm:$0xff] %v1404
          %1464 = vst [vmem:[#allocation2 + $0x38] sm:$0xff] %v1436
          %1465 = vst [vmem:[#allocation2 + $0x40] sm:$0xff] %v1405
          %1466 = vst [vmem:[#allocation2 + $0x48] sm:$0xff] %v1437
          %1467 = vst [vmem:[#allocation2 + $0x50] sm:$0xff] %v1406
          %1468 = vst [vmem:[#allocation2 + $0x58] sm:$0xff] %v1438
          %1469 = vst [vmem:[#allocation2 + $0x60] sm:$0xff] %v1407
          %1470 = vst [vmem:[#allocation2 + $0x68] sm:$0xff] %v1439
          %1471 = vst [vmem:[#allocation2 + $0x70] sm:$0xff] %v1408
          %1472 = vst [vmem:[#allocation2 + $0x78] sm:$0xff] %v1440
          %1473 = vst [vmem:[#allocation3] sm:$0xff] %v1417
          %1474 = vst [vmem:[#allocation3 + $0x8] sm:$0xff] %v1449
          %1475 = vst [vmem:[#allocation3 + $0x10] sm:$0xff] %v1418
          %1476 = vst [vmem:[#allocation3 + $0x18] sm:$0xff] %v1450
          %1477 = vst [vmem:[#allocation3 + $0x20] sm:$0xff] %v1419
          %1478 = vst [vmem:[#allocation3 + $0x28] sm:$0xff] %v1451
          %1479 = vst [vmem:[#allocation3 + $0x30] sm:$0xff] %v1420
          %1480 = vst [vmem:[#allocation3 + $0x38] sm:$0xff] %v1452
          %1481 = vst [vmem:[#allocation3 + $0x40] sm:$0xff] %v1421
          %1482 = vst [vmem:[#allocation3 + $0x48] sm:$0xff] %v1453
          %1483 = vst [vmem:[#allocation3 + $0x50] sm:$0xff] %v1422
          %1484 = vst [vmem:[#allocation3 + $0x58] sm:$0xff] %v1454
          %1485 = vst [vmem:[#allocation3 + $0x60] sm:$0xff] %v1423
          %1486 = vst [vmem:[#allocation3 + $0x68] sm:$0xff] %v1455
          %1487 = vst [vmem:[#allocation3 + $0x70] sm:$0xff] %v1424
          %1488 = vst [vmem:[#allocation3 + $0x78] sm:$0xff] %v1456
          %v1489 = vld [vmem:[%s824] sm:$0xf]
          %v1490 = vld [vmem:[%s824 + $0x4] sm:$0xf]
          %v1491 = vld [vmem:[%s824 + $0x8] sm:$0xf]
          %v1492 = vld [vmem:[%s824 + $0xc] sm:$0xf]
          %v1493 = vld [vmem:[%s824 + $0x10] sm:$0xf]
          %v1494 = vld [vmem:[%s824 + $0x14] sm:$0xf]
          %v1495 = vld [vmem:[%s824 + $0x18] sm:$0xf]
          %v1496 = vld [vmem:[%s824 + $0x1c] sm:$0xf]
          %v1497 = vld [vmem:[%s824 + $0x20] sm:$0xf]
          %v1498 = vld [vmem:[%s824 + $0x24] sm:$0xf]
          %v1499 = vld [vmem:[%s824 + $0x28] sm:$0xf]
          %v1500 = vld [vmem:[%s824 + $0x2c] sm:$0xf]
          %v1501 = vld [vmem:[%s824 + $0x30] sm:$0xf]
          %v1502 = vld [vmem:[%s824 + $0x34] sm:$0xf]
          %v1503 = vld [vmem:[%s824 + $0x38] sm:$0xf]
          %v1504 = vld [vmem:[%s824 + $0x3c] sm:$0xf]
          %v1505 = vld [vmem:[#allocation17] sm:$0xff]
          %v1506 = vld [vmem:[#allocation17 + $0x8] sm:$0xff]
          %v1507 = vld [vmem:[#allocation17 + $0x10] sm:$0xff]
          %v1508 = vld [vmem:[#allocation17 + $0x18] sm:$0xff]
          %v1509 = vld [vmem:[#allocation17 + $0x20] sm:$0xff]
          %v1510 = vld [vmem:[#allocation17 + $0x28] sm:$0xff]
          %v1511 = vld [vmem:[#allocation17 + $0x30] sm:$0xff]
          %v1512 = vld [vmem:[#allocation17 + $0x38] sm:$0xff]
          %v1513 = vld [vmem:[#allocation17 + $0x40] sm:$0xff]
          %v1514 = vld [vmem:[#allocation17 + $0x48] sm:$0xff]
          %v1515 = vld [vmem:[#allocation17 + $0x50] sm:$0xff]
          %v1516 = vld [vmem:[#allocation17 + $0x58] sm:$0xff]
          %v1517 = vld [vmem:[#allocation17 + $0x60] sm:$0xff]
          %v1518 = vld [vmem:[#allocation17 + $0x68] sm:$0xff]
          %v1519 = vld [vmem:[#allocation17 + $0x70] sm:$0xff]
          %v1520 = vld [vmem:[#allocation17 + $0x78] sm:$0xff]
          %v1521 = vld [vmem:[%s13] sm:$0x3]
          %v1523 = vlaneseq
          %v1524 = vshrl.u32 %v1523, 7
          %v1525 = vsub.s32 0, %v1524
          %v1526 = vrot.slane %v1521, %v1525
          %v1527 = vlaneseq
          %v1528 = vshrl.u32 %v1527, 7
          %v1529 = vsub.s32 1, %v1528
          %v1530 = vrot.slane %v1521, %v1529
          %v1549 = vunpack.c.l.b16 %v1489
          %v1550 = vunpack.c.l.b16 %v1490
          %v1551 = vunpack.c.l.b16 %v1491
          %v1552 = vunpack.c.l.b16 %v1492
          %v1553 = vunpack.c.l.b16 %v1493
          %v1554 = vunpack.c.l.b16 %v1494
          %v1555 = vunpack.c.l.b16 %v1495
          %v1556 = vunpack.c.l.b16 %v1496
          %v1557 = vunpack.c.l.b16 %v1497
          %v1558 = vunpack.c.l.b16 %v1498
          %v1559 = vunpack.c.l.b16 %v1499
          %v1560 = vunpack.c.l.b16 %v1500
          %v1561 = vunpack.c.l.b16 %v1501
          %v1562 = vunpack.c.l.b16 %v1502
          %v1563 = vunpack.c.l.b16 %v1503
          %v1564 = vunpack.c.l.b16 %v1504
          %v1565 = vpack.c.b16 %v1550, %v1549
          %v1566 = vpack.c.b16 %v1552, %v1551
          %v1567 = vpack.c.b16 %v1554, %v1553
          %v1568 = vpack.c.b16 %v1556, %v1555
          %v1569 = vpack.c.b16 %v1558, %v1557
          %v1570 = vpack.c.b16 %v1560, %v1559
          %v1571 = vpack.c.b16 %v1562, %v1561
          %v1572 = vpack.c.b16 %v1564, %v1563
          %v1597 = vunpack.c.l.b16 %v1505
          %v1598 = vunpack.c.h.b16 %v1505
          %v1599 = vunpack.c.l.b16 %v1506
          %v1600 = vunpack.c.h.b16 %v1506
          %v1601 = vunpack.c.l.b16 %v1507
          %v1602 = vunpack.c.h.b16 %v1507
          %v1603 = vunpack.c.l.b16 %v1508
          %v1604 = vunpack.c.h.b16 %v1508
          %v1605 = vunpack.c.l.b16 %v1509
          %v1606 = vunpack.c.h.b16 %v1509
          %v1607 = vunpack.c.l.b16 %v1510
          %v1608 = vunpack.c.h.b16 %v1510
          %v1609 = vunpack.c.l.b16 %v1511
          %v1610 = vunpack.c.h.b16 %v1511
          %v1611 = vunpack.c.l.b16 %v1512
          %v1612 = vunpack.c.h.b16 %v1512
          %v1613 = vunpack.c.l.b16 %v1513
          %v1614 = vunpack.c.h.b16 %v1513
          %v1615 = vunpack.c.l.b16 %v1514
          %v1616 = vunpack.c.h.b16 %v1514
          %v1617 = vunpack.c.l.b16 %v1515
          %v1618 = vunpack.c.h.b16 %v1515
          %v1619 = vunpack.c.l.b16 %v1516
          %v1620 = vunpack.c.h.b16 %v1516
          %v1621 = vunpack.c.l.b16 %v1517
          %v1622 = vunpack.c.h.b16 %v1517
          %v1623 = vunpack.c.l.b16 %v1518
          %v1624 = vunpack.c.h.b16 %v1518
          %v1625 = vunpack.c.l.b16 %v1519
          %v1626 = vunpack.c.h.b16 %v1519
          %v1627 = vunpack.c.l.b16 %v1520
          %v1628 = vunpack.c.h.b16 %v1520
          %v1629 = vpack.c.b16 %v1599, %v1597
          %v1630 = vpack.c.b16 %v1600, %v1598
          %v1631 = vpack.c.b16 %v1603, %v1601
          %v1632 = vpack.c.b16 %v1604, %v1602
          %v1633 = vpack.c.b16 %v1607, %v1605
          %v1634 = vpack.c.b16 %v1608, %v1606
          %v1635 = vpack.c.b16 %v1611, %v1609
          %v1636 = vpack.c.b16 %v1612, %v1610
          %v1637 = vpack.c.b16 %v1615, %v1613
          %v1638 = vpack.c.b16 %v1616, %v1614
          %v1639 = vpack.c.b16 %v1619, %v1617
          %v1640 = vpack.c.b16 %v1620, %v1618
          %v1641 = vpack.c.b16 %v1623, %v1621
          %v1642 = vpack.c.b16 %v1624, %v1622
          %v1643 = vpack.c.b16 %v1627, %v1625
          %v1644 = vpack.c.b16 %v1628, %v1626
          %1661 = vmatprep.subr.bf16.mxu0 %v1630
          %1662 = vmatpush1.bf16.msra.mxu0 %v1629
          %1663 = vmatprep.subr.bf16.mxu0 %v1632
          %1664 = vmatpush1.bf16.msra.mxu0 %v1631
          %1665 = vmatprep.subr.bf16.mxu0 %v1634
          %1666 = vmatpush1.bf16.msra.mxu0 %v1633
          %1667 = vmatprep.subr.bf16.mxu0 %v1636
          %1668 = vmatpush1.bf16.msra.mxu0 %v1635
          %1669 = vmatprep.subr.bf16.mxu0 %v1638
          %1670 = vmatpush1.bf16.msra.mxu0 %v1637
          %1671 = vmatprep.subr.bf16.mxu0 %v1640
          %1672 = vmatpush1.bf16.msra.mxu0 %v1639
          %1673 = vmatprep.subr.bf16.mxu0 %v1642
          %1674 = vmatpush1.bf16.msra.mxu0 %v1641
          %1675 = vmatprep.subr.bf16.mxu0 %v1644
          %1676 = vmatpush1.bf16.msra.mxu0 %v1643
          %1677 = vmatprep.subr.bf16.mxu0 0
          %1678 = vmatpush1.bf16.msra.mxu0 0
          %1679 = vmatprep.subr.bf16.mxu0 0
          %1680 = vmatpush1.bf16.msra.mxu0 0
          %1681 = vmatprep.subr.bf16.mxu0 0
          %1682 = vmatpush1.bf16.msra.mxu0 0
          %1683 = vmatprep.subr.bf16.mxu0 0
          %1684 = vmatpush1.bf16.msra.mxu0 0
          %1685 = vmatprep.subr.bf16.mxu0 0
          %1686 = vmatpush1.bf16.msra.mxu0 0
          %1687 = vmatprep.subr.bf16.mxu0 0
          %1688 = vmatpush1.bf16.msra.mxu0 0
          %1689 = vmatprep.subr.bf16.mxu0 0
          %1690 = vmatpush1.bf16.msra.mxu0 0
          %1691 = vmatprep.subr.bf16.mxu0 0
          %1692 = vmatpush1.bf16.msra.mxu0 0
          %1693 = vmatprep.mubr.bf16.mxu0 0
          %1694 = vmatmul.mubr.bf16.gmra.mrb[0].mxu0 %v1565
          %v1695 = vpop.f32.mrb[0].mxu0
          %v1696 = vadd.f32 %v1526, %v1695
          %v1697 = vpop.f32.mrb[0].mxu0
          %v1698 = vadd.f32 %v1530, %v1697
          %v1699 = vpop.f32.mrb[0].mxu0
          %v1700 = vadd.f32 %v1526, %v1699
          %v1701 = vpop.f32.mrb[0].mxu0
          %v1702 = vadd.f32 %v1530, %v1701
          %1703 = vmatprep.mubr.bf16.mxu0 0
          %1704 = vmatmul.mubr.bf16.gmra.mrb[0].mxu0 %v1566
          %v1705 = vpop.f32.mrb[0].mxu0
          %v1706 = vadd.f32 %v1526, %v1705
          %v1707 = vpop.f32.mrb[0].mxu0
          %v1708 = vadd.f32 %v1530, %v1707
          %v1709 = vpop.f32.mrb[0].mxu0
          %v1710 = vadd.f32 %v1526, %v1709
          %v1711 = vpop.f32.mrb[0].mxu0
          %v1712 = vadd.f32 %v1530, %v1711
          %1713 = vmatprep.mubr.bf16.mxu0 0
          %1714 = vmatmul.mubr.bf16.gmra.mrb[0].mxu0 %v1567
          %v1715 = vpop.f32.mrb[0].mxu0
          %v1716 = vadd.f32 %v1526, %v1715
          %v1717 = vpop.f32.mrb[0].mxu0
          %v1718 = vadd.f32 %v1530, %v1717
          %v1719 = vpop.f32.mrb[0].mxu0
          %v1720 = vadd.f32 %v1526, %v1719
          %v1721 = vpop.f32.mrb[0].mxu0
          %v1722 = vadd.f32 %v1530, %v1721
          %1723 = vmatprep.mubr.bf16.mxu0 0
          %1724 = vmatmul.mubr.bf16.gmra.mrb[0].mxu0 %v1568
          %v1725 = vpop.f32.mrb[0].mxu0
          %v1726 = vadd.f32 %v1526, %v1725
          %v1727 = vpop.f32.mrb[0].mxu0
          %v1728 = vadd.f32 %v1530, %v1727
          %v1729 = vpop.f32.mrb[0].mxu0
          %v1730 = vadd.f32 %v1526, %v1729
          %v1731 = vpop.f32.mrb[0].mxu0
          %v1732 = vadd.f32 %v1530, %v1731
          %1733 = vmatprep.mubr.bf16.mxu0 0
          %1734 = vmatmul.mubr.bf16.gmra.mrb[0].mxu0 %v1569
          %v1735 = vpop.f32.mrb[0].mxu0
          %v1736 = vadd.f32 %v1526, %v1735
          %v1737 = vpop.f32.mrb[0].mxu0
          %v1738 = vadd.f32 %v1530, %v1737
          %v1739 = vpop.f32.mrb[0].mxu0
          %v1740 = vadd.f32 %v1526, %v1739
          %v1741 = vpop.f32.mrb[0].mxu0
          %v1742 = vadd.f32 %v1530, %v1741
          %1743 = vmatprep.mubr.bf16.mxu0 0
          %1744 = vmatmul.mubr.bf16.gmra.mrb[0].mxu0 %v1570
          %v1745 = vpop.f32.mrb[0].mxu0
          %v1746 = vadd.f32 %v1526, %v1745
          %v1747 = vpop.f32.mrb[0].mxu0
          %v1748 = vadd.f32 %v1530, %v1747
          %v1749 = vpop.f32.mrb[0].mxu0
          %v1750 = vadd.f32 %v1526, %v1749
          %v1751 = vpop.f32.mrb[0].mxu0
          %v1752 = vadd.f32 %v1530, %v1751
          %1753 = vmatprep.mubr.bf16.mxu0 0
          %1754 = vmatmul.mubr.bf16.gmra.mrb[0].mxu0 %v1571
          %v1755 = vpop.f32.mrb[0].mxu0
          %v1756 = vadd.f32 %v1526, %v1755
          %v1757 = vpop.f32.mrb[0].mxu0
          %v1758 = vadd.f32 %v1530, %v1757
          %v1759 = vpop.f32.mrb[0].mxu0
          %v1760 = vadd.f32 %v1526, %v1759
          %v1761 = vpop.f32.mrb[0].mxu0
          %v1762 = vadd.f32 %v1530, %v1761
          %1763 = vmatprep.mubr.bf16.mxu0 0
          %1764 = vmatmul.mubr.bf16.gmra.mrb[0].mxu0 %v1572
          %v1765 = vpop.f32.mrb[0].mxu0
          %v1766 = vadd.f32 %v1526, %v1765
          %v1767 = vpop.f32.mrb[0].mxu0
          %v1768 = vadd.f32 %v1530, %v1767
          %v1769 = vpop.f32.mrb[0].mxu0
          %v1770 = vadd.f32 %v1526, %v1769
          %v1771 = vpop.f32.mrb[0].mxu0
          %v1772 = vadd.f32 %v1530, %v1771
          %1773 = vdwg.mxu0
          %v1774 = vpack.c.bf16 %v1700, %v1696
          %v1775 = vpack.c.bf16 %v1702, %v1698
          %v1776 = vpack.c.bf16 %v1710, %v1706
          %v1777 = vpack.c.bf16 %v1712, %v1708
          %v1778 = vpack.c.bf16 %v1720, %v1716
          %v1779 = vpack.c.bf16 %v1722, %v1718
          %v1780 = vpack.c.bf16 %v1730, %v1726
          %v1781 = vpack.c.bf16 %v1732, %v1728
          %v1782 = vpack.c.bf16 %v1740, %v1736
          %v1783 = vpack.c.bf16 %v1742, %v1738
          %v1784 = vpack.c.bf16 %v1750, %v1746
          %v1785 = vpack.c.bf16 %v1752, %v1748
          %v1786 = vpack.c.bf16 %v1760, %v1756
          %v1787 = vpack.c.bf16 %v1762, %v1758
          %v1788 = vpack.c.bf16 %v1770, %v1766
          %v1789 = vpack.c.bf16 %v1772, %v1768
          %1790 = vxpose.xlu0.c.b16.start [1/8] %v1774, 128
          %1791 = vxpose.xlu0.c.b16.cont [2/8] %v1776, 128
          %1792 = vxpose.xlu0.c.b16.cont [3/8] %v1778, 128
          %1793 = vxpose.xlu0.c.b16.cont [4/8] %v1780, 128
          %1794 = vxpose.xlu0.c.b16.cont [5/8] %v1782, 128
          %1795 = vxpose.xlu0.c.b16.cont [6/8] %v1784, 128
          %1796 = vxpose.xlu0.c.b16.cont [7/8] %v1786, 128
          %1797 = vxpose.xlu0.c.b16.end [8/8] %v1788, 128
          %v1798 = vpop.trf.xlu0
          %v1799 = vpop.trf.xlu0
          %v1800 = vpop.trf.xlu0
          %v1801 = vpop.trf.xlu0
          %v1802 = vpop.trf.xlu0
          %v1803 = vpop.trf.xlu0
          %v1804 = vpop.trf.xlu0
          %v1805 = vpop.trf.xlu0
          %1806 = vxpose.xlu0.c.b16.start [1/8] %v1775, 128
          %1807 = vxpose.xlu0.c.b16.cont [2/8] %v1777, 128
          %1808 = vxpose.xlu0.c.b16.cont [3/8] %v1779, 128
          %1809 = vxpose.xlu0.c.b16.cont [4/8] %v1781, 128
          %1810 = vxpose.xlu0.c.b16.cont [5/8] %v1783, 128
          %1811 = vxpose.xlu0.c.b16.cont [6/8] %v1785, 128
          %1812 = vxpose.xlu0.c.b16.cont [7/8] %v1787, 128
          %1813 = vxpose.xlu0.c.b16.end [8/8] %v1789, 128
          %v1814 = vpop.trf.xlu0
          %v1815 = vpop.trf.xlu0
          %v1816 = vpop.trf.xlu0
          %v1817 = vpop.trf.xlu0
          %v1818 = vpop.trf.xlu0
          %v1819 = vpop.trf.xlu0
          %v1820 = vpop.trf.xlu0
          %v1821 = vpop.trf.xlu0
          %1822 = vst [vmem:[#allocation4] sm:$0xff] %v1798
          %1823 = vst [vmem:[#allocation4 + $0x8] sm:$0xff] %v1799
          %1824 = vst [vmem:[#allocation4 + $0x10] sm:$0xff] %v1800
          %1825 = vst [vmem:[#allocation4 + $0x18] sm:$0xff] %v1801
          %1826 = vst [vmem:[#allocation4 + $0x20] sm:$0xff] %v1802
          %1827 = vst [vmem:[#allocation4 + $0x28] sm:$0xff] %v1803
          %1828 = vst [vmem:[#allocation4 + $0x30] sm:$0xff] %v1804
          %1829 = vst [vmem:[#allocation4 + $0x38] sm:$0xff] %v1805
          %1830 = vst [vmem:[#allocation5] sm:$0xff] %v1814
          %1831 = vst [vmem:[#allocation5 + $0x8] sm:$0xff] %v1815
          %1832 = vst [vmem:[#allocation5 + $0x10] sm:$0xff] %v1816
          %1833 = vst [vmem:[#allocation5 + $0x18] sm:$0xff] %v1817
          %1834 = vst [vmem:[#allocation5 + $0x20] sm:$0xff] %v1818
          %1835 = vst [vmem:[#allocation5 + $0x28] sm:$0xff] %v1819
          %1836 = vst [vmem:[#allocation5 + $0x30] sm:$0xff] %v1820
          %1837 = vst [vmem:[#allocation5 + $0x38] sm:$0xff] %v1821
        $region160: #{tpu_custom_call.1} parent=115 // pred_fallthru
          _
        %s1838 = smul.u32 %s53, 128
        %s1839 = sshra.s32 %s1838, 3
        %s1840 = sand.u32 %s1838, 7
        %s1841 = smul.addr %s1839, 4
        %s1842 = scalar_lea.vmem %s815, %s1841 [#allocation6]
        %v1843 = vld [vmem:[%s1842] sm:$0xf]
        %v1844 = vld [vmem:[%s1842 + $0x4] sm:$0xf]
        %v1845 = vld [vmem:[%s1842 + $0x8] sm:$0xf]
        %v1846 = vld [vmem:[%s1842 + $0xc] sm:$0xf]
        %v1847 = vld [vmem:[%s1842 + $0x10] sm:$0xf]
        %v1848 = vld [vmem:[%s1842 + $0x14] sm:$0xf]
        %v1849 = vld [vmem:[%s1842 + $0x18] sm:$0xf]
        %v1850 = vld [vmem:[%s1842 + $0x1c] sm:$0xf]
        %v1851 = vld [vmem:[%s1842 + $0x20] sm:$0xf]
        %v1852 = vld [vmem:[%s1842 + $0x24] sm:$0xf]
        %v1853 = vld [vmem:[%s1842 + $0x28] sm:$0xf]
        %v1854 = vld [vmem:[%s1842 + $0x2c] sm:$0xf]
        %v1855 = vld [vmem:[%s1842 + $0x30] sm:$0xf]
        %v1856 = vld [vmem:[%s1842 + $0x34] sm:$0xf]
        %v1857 = vld [vmem:[%s1842 + $0x38] sm:$0xf]
        %v1858 = vld [vmem:[%s1842 + $0x3c] sm:$0xf]
        %v1859 = vunpack.c.l.bf16 %v1843
        %v1860 = vunpack.c.l.bf16 %v1844
        %v1861 = vunpack.c.l.bf16 %v1845
        %v1862 = vunpack.c.l.bf16 %v1846
        %v1863 = vunpack.c.l.bf16 %v1847
        %v1864 = vunpack.c.l.bf16 %v1848
        %v1865 = vunpack.c.l.bf16 %v1849
        %v1866 = vunpack.c.l.bf16 %v1850
        %v1867 = vunpack.c.l.bf16 %v1851
        %v1868 = vunpack.c.l.bf16 %v1852
        %v1869 = vunpack.c.l.bf16 %v1853
        %v1870 = vunpack.c.l.bf16 %v1854
        %v1871 = vunpack.c.l.bf16 %v1855
        %v1872 = vunpack.c.l.bf16 %v1856
        %v1873 = vunpack.c.l.bf16 %v1857
        %v1874 = vunpack.c.l.bf16 %v1858
        %v1875 = vld [vmem:[#allocation11] sm:$0xf]
        %v1876 = vld [vmem:[#allocation11 + $0x4] sm:$0xf]
        %v1877 = vld [vmem:[#allocation11 + $0x8] sm:$0xf]
        %v1878 = vld [vmem:[#allocation11 + $0xc] sm:$0xf]
        %v1879 = vld [vmem:[#allocation11 + $0x10] sm:$0xf]
        %v1880 = vld [vmem:[#allocation11 + $0x14] sm:$0xf]
        %v1881 = vld [vmem:[#allocation11 + $0x18] sm:$0xf]
        %v1882 = vld [vmem:[#allocation11 + $0x1c] sm:$0xf]
        %v1883 = vld [vmem:[#allocation11 + $0x20] sm:$0xf]
        %v1884 = vld [vmem:[#allocation11 + $0x24] sm:$0xf]
        %v1885 = vld [vmem:[#allocation11 + $0x28] sm:$0xf]
        %v1886 = vld [vmem:[#allocation11 + $0x2c] sm:$0xf]
        %v1887 = vld [vmem:[#allocation11 + $0x30] sm:$0xf]
        %v1888 = vld [vmem:[#allocation11 + $0x34] sm:$0xf]
        %v1889 = vld [vmem:[#allocation11 + $0x38] sm:$0xf]
        %v1890 = vld [vmem:[#allocation11 + $0x3c] sm:$0xf]
        %v1891 = vld [vmem:[%s3] sm:$0x1]
        %v1892 = vld [vmem:[#allocation14] sm:$0xf]
        %v1893 = vld [vmem:[#allocation14 + $0x4] sm:$0xf]
        %v1894 = vld [vmem:[#allocation14 + $0x8] sm:$0xf]
        %v1895 = vld [vmem:[#allocation14 + $0xc] sm:$0xf]
        %v1896 = vld [vmem:[#allocation14 + $0x10] sm:$0xf]
        %v1897 = vld [vmem:[#allocation14 + $0x14] sm:$0xf]
        %v1898 = vld [vmem:[#allocation14 + $0x18] sm:$0xf]
        %v1899 = vld [vmem:[#allocation14 + $0x1c] sm:$0xf]
        %v1900 = vld [vmem:[#allocation14 + $0x20] sm:$0xf]
        %v1901 = vld [vmem:[#allocation14 + $0x24] sm:$0xf]
        %v1902 = vld [vmem:[#allocation14 + $0x28] sm:$0xf]
        %v1903 = vld [vmem:[#allocation14 + $0x2c] sm:$0xf]
        %v1904 = vld [vmem:[#allocation14 + $0x30] sm:$0xf]
        %v1905 = vld [vmem:[#allocation14 + $0x34] sm:$0xf]
        %v1906 = vld [vmem:[#allocation14 + $0x38] sm:$0xf]
        %v1907 = vld [vmem:[#allocation14 + $0x3c] sm:$0xf]
        %v1908 = vld [vmem:[%s7] sm:$0x1]
        %v1909 = vld [vmem:[%s8] sm:$0x1]
        %v1910 = vld [vmem:[%s9] sm:$0x1]
        %v1912 = vlaneseq
        %v1913 = vshrl.u32 %v1912, 7
        %v1914 = vsub.s32 0, %v1913
        %v1915 = vrot.slane %v1891, %v1914
        %v1933 = vunpack.c.l.b16 %v1843
        %v1934 = vunpack.c.l.b16 %v1844
        %v1935 = vunpack.c.l.b16 %v1845
        %v1936 = vunpack.c.l.b16 %v1846
        %v1937 = vunpack.c.l.b16 %v1847
        %v1938 = vunpack.c.l.b16 %v1848
        %v1939 = vunpack.c.l.b16 %v1849
        %v1940 = vunpack.c.l.b16 %v1850
        %v1941 = vunpack.c.l.b16 %v1851
        %v1942 = vunpack.c.l.b16 %v1852
        %v1943 = vunpack.c.l.b16 %v1853
        %v1944 = vunpack.c.l.b16 %v1854
        %v1945 = vunpack.c.l.b16 %v1855
        %v1946 = vunpack.c.l.b16 %v1856
        %v1947 = vunpack.c.l.b16 %v1857
        %v1948 = vunpack.c.l.b16 %v1858
        %v1949 = vpack.c.b16 %v1934, %v1933
        %v1950 = vpack.c.b16 %v1936, %v1935
        %v1951 = vpack.c.b16 %v1938, %v1937
        %v1952 = vpack.c.b16 %v1940, %v1939
        %v1953 = vpack.c.b16 %v1942, %v1941
        %v1954 = vpack.c.b16 %v1944, %v1943
        %v1955 = vpack.c.b16 %v1946, %v1945
        %v1956 = vpack.c.b16 %v1948, %v1947
        %v1981 = vunpack.c.l.b16 %v1875
        %v1982 = vunpack.c.l.b16 %v1876
        %v1983 = vunpack.c.l.b16 %v1877
        %v1984 = vunpack.c.l.b16 %v1878
        %v1985 = vunpack.c.l.b16 %v1879
        %v1986 = vunpack.c.l.b16 %v1880
        %v1987 = vunpack.c.l.b16 %v1881
        %v1988 = vunpack.c.l.b16 %v1882
        %v1989 = vunpack.c.l.b16 %v1883
        %v1990 = vunpack.c.l.b16 %v1884
        %v1991 = vunpack.c.l.b16 %v1885
        %v1992 = vunpack.c.l.b16 %v1886
        %v1993 = vunpack.c.l.b16 %v1887
        %v1994 = vunpack.c.l.b16 %v1888
        %v1995 = vunpack.c.l.b16 %v1889
        %v1996 = vunpack.c.l.b16 %v1890
        %v1997 = vpack.c.b16 %v1982, %v1981
        %v1998 = vpack.c.b16 %v1984, %v1983
        %v1999 = vpack.c.b16 %v1986, %v1985
        %v2000 = vpack.c.b16 %v1988, %v1987
        %v2001 = vpack.c.b16 %v1990, %v1989
        %v2002 = vpack.c.b16 %v1992, %v1991
        %v2003 = vpack.c.b16 %v1994, %v1993
        %v2004 = vpack.c.b16 %v1996, %v1995
        %2013 = vmatprep.subr.bf16.mxu0 0
        %2014 = vmatpush1.bf16.msra.mxu0 %v1997
        %2015 = vmatprep.subr.bf16.mxu0 0
        %2016 = vmatpush1.bf16.msra.mxu0 %v1998
        %2017 = vmatprep.subr.bf16.mxu0 0
        %2018 = vmatpush1.bf16.msra.mxu0 %v1999
        %2019 = vmatprep.subr.bf16.mxu0 0
        %2020 = vmatpush1.bf16.msra.mxu0 %v2000
        %2021 = vmatprep.subr.bf16.mxu0 0
        %2022 = vmatpush1.bf16.msra.mxu0 %v2001
        %2023 = vmatprep.subr.bf16.mxu0 0
        %2024 = vmatpush1.bf16.msra.mxu0 %v2002
        %2025 = vmatprep.subr.bf16.mxu0 0
        %2026 = vmatpush1.bf16.msra.mxu0 %v2003
        %2027 = vmatprep.subr.bf16.mxu0 0
        %2028 = vmatpush1.bf16.msra.mxu0 %v2004
        %2029 = vmatprep.subr.bf16.mxu0 0
        %2030 = vmatpush1.bf16.msra.mxu0 0
        %2031 = vmatprep.subr.bf16.mxu0 0
        %2032 = vmatpush1.bf16.msra.mxu0 0
        %2033 = vmatprep.subr.bf16.mxu0 0
        %2034 = vmatpush1.bf16.msra.mxu0 0
        %2035 = vmatprep.subr.bf16.mxu0 0
        %2036 = vmatpush1.bf16.msra.mxu0 0
        %2037 = vmatprep.subr.bf16.mxu0 0
        %2038 = vmatpush1.bf16.msra.mxu0 0
        %2039 = vmatprep.subr.bf16.mxu0 0
        %2040 = vmatpush1.bf16.msra.mxu0 0
        %2041 = vmatprep.subr.bf16.mxu0 0
        %2042 = vmatpush1.bf16.msra.mxu0 0
        %2043 = vmatprep.subr.bf16.mxu0 0
        %2044 = vmatpush1.bf16.msra.mxu0 0
        %2045 = vmatprep.mubr.bf16.mxu0 0
        %2046 = vmatmul.mubr.bf16.gmra.mrb[0].mxu0 %v1949
        %v2047 = vpop.f32.mrb[0].mxu0
        %v2048 = vadd.f32 %v1915, %v2047
        %v2049 = vpop.f32.mrb[0].mxu0
        %v2050 = vpop.f32.mrb[0].mxu0
        %v2051 = vadd.f32 %v1915, %v2050
        %v2052 = vpop.f32.mrb[0].mxu0
        %2053 = vmatprep.mubr.bf16.mxu0 0
        %2054 = vmatmul.mubr.bf16.gmra.mrb[0].mxu0 %v1950
        %v2055 = vpop.f32.mrb[0].mxu0
        %v2056 = vadd.f32 %v1915, %v2055
        %v2057 = vpop.f32.mrb[0].mxu0
        %v2058 = vpop.f32.mrb[0].mxu0
        %v2059 = vadd.f32 %v1915, %v2058
        %v2060 = vpop.f32.mrb[0].mxu0
        %2061 = vmatprep.mubr.bf16.mxu0 0
        %2062 = vmatmul.mubr.bf16.gmra.mrb[0].mxu0 %v1951
        %v2063 = vpop.f32.mrb[0].mxu0
        %v2064 = vadd.f32 %v1915, %v2063
        %v2065 = vpop.f32.mrb[0].mxu0
        %v2066 = vpop.f32.mrb[0].mxu0
        %v2067 = vadd.f32 %v1915, %v2066
        %v2068 = vpop.f32.mrb[0].mxu0
        %2069 = vmatprep.mubr.bf16.mxu0 0
        %2070 = vmatmul.mubr.bf16.gmra.mrb[0].mxu0 %v1952
        %v2071 = vpop.f32.mrb[0].mxu0
        %v2072 = vadd.f32 %v1915, %v2071
        %v2073 = vpop.f32.mrb[0].mxu0
        %v2074 = vpop.f32.mrb[0].mxu0
        %v2075 = vadd.f32 %v1915, %v2074
        %v2076 = vpop.f32.mrb[0].mxu0
        %2077 = vmatprep.mubr.bf16.mxu0 0
        %2078 = vmatmul.mubr.bf16.gmra.mrb[0].mxu0 %v1953
        %v2079 = vpop.f32.mrb[0].mxu0
        %v2080 = vadd.f32 %v1915, %v2079
        %v2081 = vpop.f32.mrb[0].mxu0
        %v2082 = vpop.f32.mrb[0].mxu0
        %v2083 = vadd.f32 %v1915, %v2082
        %v2084 = vpop.f32.mrb[0].mxu0
        %2085 = vmatprep.mubr.bf16.mxu0 0
        %2086 = vmatmul.mubr.bf16.gmra.mrb[0].mxu0 %v1954
        %v2087 = vpop.f32.mrb[0].mxu0
        %v2088 = vadd.f32 %v1915, %v2087
        %v2089 = vpop.f32.mrb[0].mxu0
        %v2090 = vpop.f32.mrb[0].mxu0
        %v2091 = vadd.f32 %v1915, %v2090
        %v2092 = vpop.f32.mrb[0].mxu0
        %2093 = vmatprep.mubr.bf16.mxu0 0
        %2094 = vmatmul.mubr.bf16.gmra.mrb[0].mxu0 %v1955
        %v2095 = vpop.f32.mrb[0].mxu0
        %v2096 = vadd.f32 %v1915, %v2095
        %v2097 = vpop.f32.mrb[0].mxu0
        %v2098 = vpop.f32.mrb[0].mxu0
        %v2099 = vadd.f32 %v1915, %v2098
        %v2100 = vpop.f32.mrb[0].mxu0
        %2101 = vmatprep.mubr.bf16.mxu0 0
        %2102 = vmatmul.mubr.bf16.gmra.mrb[0].mxu0 %v1956
        %v2103 = vpop.f32.mrb[0].mxu0
        %v2104 = vadd.f32 %v1915, %v2103
        %v2105 = vpop.f32.mrb[0].mxu0
        %v2106 = vpop.f32.mrb[0].mxu0
        %v2107 = vadd.f32 %v1915, %v2106
        %v2108 = vpop.f32.mrb[0].mxu0
        %2109 = vdwg.mxu0
        %v2110 = vpack.c.bf16 %v2051, %v2048
        %v2111 = vpack.c.bf16 %v2059, %v2056
        %v2112 = vpack.c.bf16 %v2067, %v2064
        %v2113 = vpack.c.bf16 %v2075, %v2072
        %v2114 = vpack.c.bf16 %v2083, %v2080
        %v2115 = vpack.c.bf16 %v2091, %v2088
        %v2116 = vpack.c.bf16 %v2099, %v2096
        %v2117 = vpack.c.bf16 %v2107, %v2104
        %2126 = vrot.lane.b32.xlu0 %v2110, 96
        %v2127 = vpop.permute.xlu0 %2126
        %2128 = vrot.lane.b32.xlu0 %v2111, 96
        %v2129 = vpop.permute.xlu0 %2128
        %2130 = vrot.lane.b32.xlu0 %v2112, 96
        %v2131 = vpop.permute.xlu0 %2130
        %2132 = vrot.lane.b32.xlu0 %v2113, 96
        %v2133 = vpop.permute.xlu0 %2132
        %2134 = vrot.lane.b32.xlu0 %v2114, 96
        %v2135 = vpop.permute.xlu0 %2134
        %2136 = vrot.lane.b32.xlu0 %v2115, 96
        %v2137 = vpop.permute.xlu0 %2136
        %2138 = vrot.lane.b32.xlu0 %v2116, 96
        %v2139 = vpop.permute.xlu0 %2138
        %2140 = vrot.lane.b32.xlu0 %v2117, 96
        %v2141 = vpop.permute.xlu0 %2140
        %2142 = vrot.lane.b32.xlu0 %v2110, 64
        %v2143 = vpop.permute.xlu0 %2142
        %2144 = vrot.lane.b32.xlu0 %v2111, 64
        %v2145 = vpop.permute.xlu0 %2144
        %2146 = vrot.lane.b32.xlu0 %v2112, 64
        %v2147 = vpop.permute.xlu0 %2146
        %2148 = vrot.lane.b32.xlu0 %v2113, 64
        %v2149 = vpop.permute.xlu0 %2148
        %2150 = vrot.lane.b32.xlu0 %v2114, 64
        %v2151 = vpop.permute.xlu0 %2150
        %2152 = vrot.lane.b32.xlu0 %v2115, 64
        %v2153 = vpop.permute.xlu0 %2152
        %2154 = vrot.lane.b32.xlu0 %v2116, 64
        %v2155 = vpop.permute.xlu0 %2154
        %2156 = vrot.lane.b32.xlu0 %v2117, 64
        %v2157 = vpop.permute.xlu0 %2156
        %2158 = vrot.lane.b32.xlu0 %v2110, 32
        %v2159 = vpop.permute.xlu0 %2158
        %2160 = vrot.lane.b32.xlu0 %v2111, 32
        %v2161 = vpop.permute.xlu0 %2160
        %2162 = vrot.lane.b32.xlu0 %v2112, 32
        %v2163 = vpop.permute.xlu0 %2162
        %2164 = vrot.lane.b32.xlu0 %v2113, 32
        %v2165 = vpop.permute.xlu0 %2164
        %2166 = vrot.lane.b32.xlu0 %v2114, 32
        %v2167 = vpop.permute.xlu0 %2166
        %2168 = vrot.lane.b32.xlu0 %v2115, 32
        %v2169 = vpop.permute.xlu0 %2168
        %2170 = vrot.lane.b32.xlu0 %v2116, 32
        %v2171 = vpop.permute.xlu0 %2170
        %2172 = vrot.lane.b32.xlu0 %v2117, 32
        %v2173 = vpop.permute.xlu0 %2172
        %v2174 = vld [vmem:[#allocation2] sm:$0xff]
        %v2175 = vld [vmem:[#allocation2 + $0x8] sm:$0xff]
        %v2176 = vld [vmem:[#allocation2 + $0x10] sm:$0xff]
        %v2177 = vld [vmem:[#allocation2 + $0x18] sm:$0xff]
        %v2178 = vld [vmem:[#allocation2 + $0x20] sm:$0xff]
        %v2179 = vld [vmem:[#allocation2 + $0x28] sm:$0xff]
        %v2180 = vld [vmem:[#allocation2 + $0x30] sm:$0xff]
        %v2181 = vld [vmem:[#allocation2 + $0x38] sm:$0xff]
        %v2182 = vld [vmem:[#allocation2 + $0x40] sm:$0xff]
        %v2183 = vld [vmem:[#allocation2 + $0x48] sm:$0xff]
        %v2184 = vld [vmem:[#allocation2 + $0x50] sm:$0xff]
        %v2185 = vld [vmem:[#allocation2 + $0x58] sm:$0xff]
        %v2186 = vld [vmem:[#allocation2 + $0x60] sm:$0xff]
        %v2187 = vld [vmem:[#allocation2 + $0x68] sm:$0xff]
        %v2188 = vld [vmem:[#allocation2 + $0x70] sm:$0xff]
        %v2189 = vld [vmem:[#allocation2 + $0x78] sm:$0xff]
        %v2190 = vld [vmem:[#allocation3] sm:$0xff]
        %v2191 = vld [vmem:[#allocation3 + $0x8] sm:$0xff]
        %v2192 = vld [vmem:[#allocation3 + $0x10] sm:$0xff]
        %v2193 = vld [vmem:[#allocation3 + $0x18] sm:$0xff]
        %v2194 = vld [vmem:[#allocation3 + $0x20] sm:$0xff]
        %v2195 = vld [vmem:[#allocation3 + $0x28] sm:$0xff]
        %v2196 = vld [vmem:[#allocation3 + $0x30] sm:$0xff]
        %v2197 = vld [vmem:[#allocation3 + $0x38] sm:$0xff]
        %v2198 = vld [vmem:[#allocation3 + $0x40] sm:$0xff]
        %v2199 = vld [vmem:[#allocation3 + $0x48] sm:$0xff]
        %v2200 = vld [vmem:[#allocation3 + $0x50] sm:$0xff]
        %v2201 = vld [vmem:[#allocation3 + $0x58] sm:$0xff]
        %v2202 = vld [vmem:[#allocation3 + $0x60] sm:$0xff]
        %v2203 = vld [vmem:[#allocation3 + $0x68] sm:$0xff]
        %v2204 = vld [vmem:[#allocation3 + $0x70] sm:$0xff]
        %v2205 = vld [vmem:[#allocation3 + $0x78] sm:$0xff]
        %vm2206 = vcmask 261120
        %v2208 = vsel %vm2206, %v2110, 0
        %v2211 = vsel %vm2206, %v2111, 0
        %v2214 = vsel %vm2206, %v2112, 0
        %v2217 = vsel %vm2206, %v2113, 0
        %v2220 = vsel %vm2206, %v2114, 0
        %v2223 = vsel %vm2206, %v2115, 0
        %v2226 = vsel %vm2206, %v2116, 0
        %v2229 = vsel %vm2206, %v2117, 0
        %2231 = vmatprep.subr.bf16.mxu0 %v2175
        %2232 = vmatpush1.bf16.msra.mxu0 %v2174
        %2233 = vmatprep.subr.bf16.mxu0 %v2177
        %2234 = vmatpush1.bf16.msra.mxu0 %v2176
        %2235 = vmatprep.subr.bf16.mxu0 0
        %2236 = vmatpush1.bf16.msra.mxu0 0
        %2237 = vmatprep.subr.bf16.mxu0 0
        %2238 = vmatpush1.bf16.msra.mxu0 0
        %2239 = vmatprep.subr.bf16.mxu0 0
        %2240 = vmatpush1.bf16.msra.mxu0 0
        %2241 = vmatprep.subr.bf16.mxu0 0
        %2242 = vmatpush1.bf16.msra.mxu0 0
        %2243 = vmatprep.subr.bf16.mxu0 0
        %2244 = vmatpush1.bf16.msra.mxu0 0
        %2245 = vmatprep.subr.bf16.mxu0 0
        %2246 = vmatpush1.bf16.msra.mxu0 0
        %2247 = vmatprep.subr.bf16.mxu0 0
        %2248 = vmatpush1.bf16.msra.mxu0 0
        %2249 = vmatprep.subr.bf16.mxu0 0
        %2250 = vmatpush1.bf16.msra.mxu0 0
        %2251 = vmatprep.subr.bf16.mxu0 0
        %2252 = vmatpush1.bf16.msra.mxu0 0
        %2253 = vmatprep.subr.bf16.mxu0 0
        %2254 = vmatpush1.bf16.msra.mxu0 0
        %2255 = vmatprep.subr.bf16.mxu0 0
        %2256 = vmatpush1.bf16.msra.mxu0 0
        %2257 = vmatprep.subr.bf16.mxu0 0
        %2258 = vmatpush1.bf16.msra.mxu0 0
        %2259 = vmatprep.subr.bf16.mxu0 0
        %2260 = vmatpush1.bf16.msra.mxu0 0
        %2261 = vmatprep.subr.bf16.mxu0 0
        %2262 = vmatpush1.bf16.msra.mxu0 0
        %2263 = vmatprep.mubr.bf16.mxu0 0
        %2264 = vmatmul.mubr.bf16.gmra.mrb[0].mxu0 %v2208
        %v2265 = vpop.f32.mrb[0].mxu0
        %v2266 = vadd.f32 0.0, %v2265
        %v2267 = vpop.f32.mrb[0].mxu0
        %v2268 = vadd.f32 0.0, %v2267
        %v2269 = vpop.f32.mrb[0].mxu0
        %v2270 = vadd.f32 0.0, %v2269
        %v2271 = vpop.f32.mrb[0].mxu0
        %v2272 = vadd.f32 0.0, %v2271
        %2273 = vmatprep.mubr.bf16.mxu0 0
        %2274 = vmatmul.mubr.bf16.gmra.mrb[0].mxu0 %v2211
        %v2275 = vpop.f32.mrb[0].mxu0
        %v2276 = vadd.f32 0.0, %v2275
        %v2277 = vpop.f32.mrb[0].mxu0
        %v2278 = vadd.f32 0.0, %v2277
        %v2279 = vpop.f32.mrb[0].mxu0
        %v2280 = vadd.f32 0.0, %v2279
        %v2281 = vpop.f32.mrb[0].mxu0
        %v2282 = vadd.f32 0.0, %v2281
        %2283 = vmatprep.mubr.bf16.mxu0 0
        %2284 = vmatmul.mubr.bf16.gmra.mrb[0].mxu0 %v2214
        %v2285 = vpop.f32.mrb[0].mxu0
        %v2286 = vadd.f32 0.0, %v2285
        %v2287 = vpop.f32.mrb[0].mxu0
        %v2288 = vadd.f32 0.0, %v2287
        %v2289 = vpop.f32.mrb[0].mxu0
        %v2290 = vadd.f32 0.0, %v2289
        %v2291 = vpop.f32.mrb[0].mxu0
        %v2292 = vadd.f32 0.0, %v2291
        %2293 = vmatprep.mubr.bf16.mxu0 0
        %2294 = vmatmul.mubr.bf16.gmra.mrb[0].mxu0 %v2217
        %v2295 = vpop.f32.mrb[0].mxu0
        %v2296 = vadd.f32 0.0, %v2295
        %v2297 = vpop.f32.mrb[0].mxu0
        %v2298 = vadd.f32 0.0, %v2297
        %v2299 = vpop.f32.mrb[0].mxu0
        %v2300 = vadd.f32 0.0, %v2299
        %v2301 = vpop.f32.mrb[0].mxu0
        %v2302 = vadd.f32 0.0, %v2301
        %2303 = vmatprep.mubr.bf16.mxu0 0
        %2304 = vmatmul.mubr.bf16.gmra.mrb[0].mxu0 %v2220
        %v2305 = vpop.f32.mrb[0].mxu0
        %v2306 = vadd.f32 0.0, %v2305
        %v2307 = vpop.f32.mrb[0].mxu0
        %v2308 = vadd.f32 0.0, %v2307
        %v2309 = vpop.f32.mrb[0].mxu0
        %v2310 = vadd.f32 0.0, %v2309
        %v2311 = vpop.f32.mrb[0].mxu0
        %v2312 = vadd.f32 0.0, %v2311
        %2313 = vmatprep.mubr.bf16.mxu0 0
        %2314 = vmatmul.mubr.bf16.gmra.mrb[0].mxu0 %v2223
        %v2315 = vpop.f32.mrb[0].mxu0
        %v2316 = vadd.f32 0.0, %v2315
        %v2317 = vpop.f32.mrb[0].mxu0
        %v2318 = vadd.f32 0.0, %v2317
        %v2319 = vpop.f32.mrb[0].mxu0
        %v2320 = vadd.f32 0.0, %v2319
        %v2321 = vpop.f32.mrb[0].mxu0
        %v2322 = vadd.f32 0.0, %v2321
        %2323 = vmatprep.mubr.bf16.mxu0 0
        %2324 = vmatmul.mubr.bf16.gmra.mrb[0].mxu0 %v2226
        %v2325 = vpop.f32.mrb[0].mxu0
        %v2326 = vadd.f32 0.0, %v2325
        %v2327 = vpop.f32.mrb[0].mxu0
        %v2328 = vadd.f32 0.0, %v2327
        %v2329 = vpop.f32.mrb[0].mxu0
        %v2330 = vadd.f32 0.0, %v2329
        %v2331 = vpop.f32.mrb[0].mxu0
        %v2332 = vadd.f32 0.0, %v2331
        %2333 = vmatprep.mubr.bf16.mxu0 0
        %2334 = vmatmul.mubr.bf16.gmra.mrb[0].mxu0 %v2229
        %v2335 = vpop.f32.mrb[0].mxu0
        %v2336 = vadd.f32 0.0, %v2335
        %v2337 = vpop.f32.mrb[0].mxu0
        %v2338 = vadd.f32 0.0, %v2337
        %v2339 = vpop.f32.mrb[0].mxu0
        %v2340 = vadd.f32 0.0, %v2339
        %v2341 = vpop.f32.mrb[0].mxu0
        %v2342 = vadd.f32 0.0, %v2341
        %2343 = vdwg.mxu0
        %v2345 = vsel %vm2206, %v2127, 0
        %v2348 = vsel %vm2206, %v2129, 0
        %v2351 = vsel %vm2206, %v2131, 0
        %v2354 = vsel %vm2206, %v2133, 0
        %v2357 = vsel %vm2206, %v2135, 0
        %v2360 = vsel %vm2206, %v2137, 0
        %v2363 = vsel %vm2206, %v2139, 0
        %v2366 = vsel %vm2206, %v2141, 0
        %2368 = vmatprep.subr.bf16.mxu0 %v2179
        %2369 = vmatpush1.bf16.msra.mxu0 %v2178
        %2370 = vmatprep.subr.bf16.mxu0 %v2181
        %2371 = vmatpush1.bf16.msra.mxu0 %v2180
        %2372 = vmatprep.subr.bf16.mxu0 0
        %2373 = vmatpush1.bf16.msra.mxu0 0
        %2374 = vmatprep.subr.bf16.mxu0 0
        %2375 = vmatpush1.bf16.msra.mxu0 0
        %2376 = vmatprep.subr.bf16.mxu0 0
        %2377 = vmatpush1.bf16.msra.mxu0 0
        %2378 = vmatprep.subr.bf16.mxu0 0
        %2379 = vmatpush1.bf16.msra.mxu0 0
        %2380 = vmatprep.subr.bf16.mxu0 0
        %2381 = vmatpush1.bf16.msra.mxu0 0
        %2382 = vmatprep.subr.bf16.mxu0 0
        %2383 = vmatpush1.bf16.msra.mxu0 0
        %2384 = vmatprep.subr.bf16.mxu0 0
        %2385 = vmatpush1.bf16.msra.mxu0 0
        %2386 = vmatprep.subr.bf16.mxu0 0
        %2387 = vmatpush1.bf16.msra.mxu0 0
        %2388 = vmatprep.subr.bf16.mxu0 0
        %2389 = vmatpush1.bf16.msra.mxu0 0
        %2390 = vmatprep.subr.bf16.mxu0 0
        %2391 = vmatpush1.bf16.msra.mxu0 0
        %2392 = vmatprep.subr.bf16.mxu0 0
        %2393 = vmatpush1.bf16.msra.mxu0 0
        %2394 = vmatprep.subr.bf16.mxu0 0
        %2395 = vmatpush1.bf16.msra.mxu0 0
        %2396 = vmatprep.subr.bf16.mxu0 0
        %2397 = vmatpush1.bf16.msra.mxu0 0
        %2398 = vmatprep.subr.bf16.mxu0 0
        %2399 = vmatpush1.bf16.msra.mxu0 0
        %2400 = vmatprep.mubr.bf16.mxu0 0
        %2401 = vmatmul.mubr.bf16.gmra.mrb[0].mxu0 %v2345
        %v2402 = vpop.f32.mrb[0].mxu0
        %v2403 = vadd.f32 0.0, %v2402
        %v2404 = vpop.f32.mrb[0].mxu0
        %v2405 = vadd.f32 0.0, %v2404
        %v2406 = vpop.f32.mrb[0].mxu0
        %v2407 = vadd.f32 0.0, %v2406
        %v2408 = vpop.f32.mrb[0].mxu0
        %v2409 = vadd.f32 0.0, %v2408
        %2410 = vmatprep.mubr.bf16.mxu0 0
        %2411 = vmatmul.mubr.bf16.gmra.mrb[0].mxu0 %v2348
        %v2412 = vpop.f32.mrb[0].mxu0
        %v2413 = vadd.f32 0.0, %v2412
        %v2414 = vpop.f32.mrb[0].mxu0
        %v2415 = vadd.f32 0.0, %v2414
        %v2416 = vpop.f32.mrb[0].mxu0
        %v2417 = vadd.f32 0.0, %v2416
        %v2418 = vpop.f32.mrb[0].mxu0
        %v2419 = vadd.f32 0.0, %v2418
        %2420 = vmatprep.mubr.bf16.mxu0 0
        %2421 = vmatmul.mubr.bf16.gmra.mrb[0].mxu0 %v2351
        %v2422 = vpop.f32.mrb[0].mxu0
        %v2423 = vadd.f32 0.0, %v2422
        %v2424 = vpop.f32.mrb[0].mxu0
        %v2425 = vadd.f32 0.0, %v2424
        %v2426 = vpop.f32.mrb[0].mxu0
        %v2427 = vadd.f32 0.0, %v2426
        %v2428 = vpop.f32.mrb[0].mxu0
        %v2429 = vadd.f32 0.0, %v2428
        %2430 = vmatprep.mubr.bf16.mxu0 0
        %2431 = vmatmul.mubr.bf16.gmra.mrb[0].mxu0 %v2354
        %v2432 = vpop.f32.mrb[0].mxu0
        %v2433 = vadd.f32 0.0, %v2432
        %v2434 = vpop.f32.mrb[0].mxu0
        %v2435 = vadd.f32 0.0, %v2434
        %v2436 = vpop.f32.mrb[0].mxu0
        %v2437 = vadd.f32 0.0, %v2436
        %v2438 = vpop.f32.mrb[0].mxu0
        %v2439 = vadd.f32 0.0, %v2438
        %2440 = vmatprep.mubr.bf16.mxu0 0
        %2441 = vmatmul.mubr.bf16.gmra.mrb[0].mxu0 %v2357
        %v2442 = vpop.f32.mrb[0].mxu0
        %v2443 = vadd.f32 0.0, %v2442
        %v2444 = vpop.f32.mrb[0].mxu0
        %v2445 = vadd.f32 0.0, %v2444
        %v2446 = vpop.f32.mrb[0].mxu0
        %v2447 = vadd.f32 0.0, %v2446
        %v2448 = vpop.f32.mrb[0].mxu0
        %v2449 = vadd.f32 0.0, %v2448
        %2450 = vmatprep.mubr.bf16.mxu0 0
        %2451 = vmatmul.mubr.bf16.gmra.mrb[0].mxu0 %v2360
        %v2452 = vpop.f32.mrb[0].mxu0
        %v2453 = vadd.f32 0.0, %v2452
        %v2454 = vpop.f32.mrb[0].mxu0
        %v2455 = vadd.f32 0.0, %v2454
        %v2456 = vpop.f32.mrb[0].mxu0
        %v2457 = vadd.f32 0.0, %v2456
        %v2458 = vpop.f32.mrb[0].mxu0
        %v2459 = vadd.f32 0.0, %v2458
        %2460 = vmatprep.mubr.bf16.mxu0 0
        %2461 = vmatmul.mubr.bf16.gmra.mrb[0].mxu0 %v2363
        %v2462 = vpop.f32.mrb[0].mxu0
        %v2463 = vadd.f32 0.0, %v2462
        %v2464 = vpop.f32.mrb[0].mxu0
        %v2465 = vadd.f32 0.0, %v2464
        %v2466 = vpop.f32.mrb[0].mxu0
        %v2467 = vadd.f32 0.0, %v2466
        %v2468 = vpop.f32.mrb[0].mxu0
        %v2469 = vadd.f32 0.0, %v2468
        %2470 = vmatprep.mubr.bf16.mxu0 0
        %2471 = vmatmul.mubr.bf16.gmra.mrb[0].mxu0 %v2366
        %v2472 = vpop.f32.mrb[0].mxu0
        %v2473 = vadd.f32 0.0, %v2472
        %v2474 = vpop.f32.mrb[0].mxu0
        %v2475 = vadd.f32 0.0, %v2474
        %v2476 = vpop.f32.mrb[0].mxu0
        %v2477 = vadd.f32 0.0, %v2476
        %v2478 = vpop.f32.mrb[0].mxu0
        %v2479 = vadd.f32 0.0, %v2478
        %2480 = vdwg.mxu0
        %v2482 = vsel %vm2206, %v2143, 0
        %v2485 = vsel %vm2206, %v2145, 0
        %v2488 = vsel %vm2206, %v2147, 0
        %v2491 = vsel %vm2206, %v2149, 0
        %v2494 = vsel %vm2206, %v2151, 0
        %v2497 = vsel %vm2206, %v2153, 0
        %v2500 = vsel %vm2206, %v2155, 0
        %v2503 = vsel %vm2206, %v2157, 0
        %2505 = vmatprep.subr.bf16.mxu0 %v2183
        %2506 = vmatpush1.bf16.msra.mxu0 %v2182
        %2507 = vmatprep.subr.bf16.mxu0 %v2185
        %2508 = vmatpush1.bf16.msra.mxu0 %v2184
        %2509 = vmatprep.subr.bf16.mxu0 0
        %2510 = vmatpush1.bf16.msra.mxu0 0
        %2511 = vmatprep.subr.bf16.mxu0 0
        %2512 = vmatpush1.bf16.msra.mxu0 0
        %2513 = vmatprep.subr.bf16.mxu0 0
        %2514 = vmatpush1.bf16.msra.mxu0 0
        %2515 = vmatprep.subr.bf16.mxu0 0
        %2516 = vmatpush1.bf16.msra.mxu0 0
        %2517 = vmatprep.subr.bf16.mxu0 0
        %2518 = vmatpush1.bf16.msra.mxu0 0
        %2519 = vmatprep.subr.bf16.mxu0 0
        %2520 = vmatpush1.bf16.msra.mxu0 0
        %2521 = vmatprep.subr.bf16.mxu0 0
        %2522 = vmatpush1.bf16.msra.mxu0 0
        %2523 = vmatprep.subr.bf16.mxu0 0
        %2524 = vmatpush1.bf16.msra.mxu0 0
        %2525 = vmatprep.subr.bf16.mxu0 0
        %2526 = vmatpush1.bf16.msra.mxu0 0
        %2527 = vmatprep.subr.bf16.mxu0 0
        %2528 = vmatpush1.bf16.msra.mxu0 0
        %2529 = vmatprep.subr.bf16.mxu0 0
        %2530 = vmatpush1.bf16.msra.mxu0 0
        %2531 = vmatprep.subr.bf16.mxu0 0
        %2532 = vmatpush1.bf16.msra.mxu0 0
        %2533 = vmatprep.subr.bf16.mxu0 0
        %2534 = vmatpush1.bf16.msra.mxu0 0
        %2535 = vmatprep.subr.bf16.mxu0 0
        %2536 = vmatpush1.bf16.msra.mxu0 0
        %2537 = vmatprep.mubr.bf16.mxu0 0
        %2538 = vmatmul.mubr.bf16.gmra.mrb[0].mxu0 %v2482
        %v2539 = vpop.f32.mrb[0].mxu0
        %v2540 = vadd.f32 0.0, %v2539
        %v2541 = vpop.f32.mrb[0].mxu0
        %v2542 = vadd.f32 0.0, %v2541
        %v2543 = vpop.f32.mrb[0].mxu0
        %v2544 = vadd.f32 0.0, %v2543
        %v2545 = vpop.f32.mrb[0].mxu0
        %v2546 = vadd.f32 0.0, %v2545
        %2547 = vmatprep.mubr.bf16.mxu0 0
        %2548 = vmatmul.mubr.bf16.gmra.mrb[0].mxu0 %v2485
        %v2549 = vpop.f32.mrb[0].mxu0
        %v2550 = vadd.f32 0.0, %v2549
        %v2551 = vpop.f32.mrb[0].mxu0
        %v2552 = vadd.f32 0.0, %v2551
        %v2553 = vpop.f32.mrb[0].mxu0
        %v2554 = vadd.f32 0.0, %v2553
        %v2555 = vpop.f32.mrb[0].mxu0
        %v2556 = vadd.f32 0.0, %v2555
        %2557 = vmatprep.mubr.bf16.mxu0 0
        %2558 = vmatmul.mubr.bf16.gmra.mrb[0].mxu0 %v2488
        %v2559 = vpop.f32.mrb[0].mxu0
        %v2560 = vadd.f32 0.0, %v2559
        %v2561 = vpop.f32.mrb[0].mxu0
        %v2562 = vadd.f32 0.0, %v2561
        %v2563 = vpop.f32.mrb[0].mxu0
        %v2564 = vadd.f32 0.0, %v2563
        %v2565 = vpop.f32.mrb[0].mxu0
        %v2566 = vadd.f32 0.0, %v2565
        %2567 = vmatprep.mubr.bf16.mxu0 0
        %2568 = vmatmul.mubr.bf16.gmra.mrb[0].mxu0 %v2491
        %v2569 = vpop.f32.mrb[0].mxu0
        %v2570 = vadd.f32 0.0, %v2569
        %v2571 = vpop.f32.mrb[0].mxu0
        %v2572 = vadd.f32 0.0, %v2571
        %v2573 = vpop.f32.mrb[0].mxu0
        %v2574 = vadd.f32 0.0, %v2573
        %v2575 = vpop.f32.mrb[0].mxu0
        %v2576 = vadd.f32 0.0, %v2575
        %2577 = vmatprep.mubr.bf16.mxu0 0
        %2578 = vmatmul.mubr.bf16.gmra.mrb[0].mxu0 %v2494
        %v2579 = vpop.f32.mrb[0].mxu0
        %v2580 = vadd.f32 0.0, %v2579
        %v2581 = vpop.f32.mrb[0].mxu0
        %v2582 = vadd.f32 0.0, %v2581
        %v2583 = vpop.f32.mrb[0].mxu0
        %v2584 = vadd.f32 0.0, %v2583
        %v2585 = vpop.f32.mrb[0].mxu0
        %v2586 = vadd.f32 0.0, %v2585
        %2587 = vmatprep.mubr.bf16.mxu0 0
        %2588 = vmatmul.mubr.bf16.gmra.mrb[0].mxu0 %v2497
        %v2589 = vpop.f32.mrb[0].mxu0
        %v2590 = vadd.f32 0.0, %v2589
        %v2591 = vpop.f32.mrb[0].mxu0
        %v2592 = vadd.f32 0.0, %v2591
        %v2593 = vpop.f32.mrb[0].mxu0
        %v2594 = vadd.f32 0.0, %v2593
        %v2595 = vpop.f32.mrb[0].mxu0
        %v2596 = vadd.f32 0.0, %v2595
        %2597 = vmatprep.mubr.bf16.mxu0 0
        %2598 = vmatmul.mubr.bf16.gmra.mrb[0].mxu0 %v2500
        %v2599 = vpop.f32.mrb[0].mxu0
        %v2600 = vadd.f32 0.0, %v2599
        %v2601 = vpop.f32.mrb[0].mxu0
        %v2602 = vadd.f32 0.0, %v2601
        %v2603 = vpop.f32.mrb[0].mxu0
        %v2604 = vadd.f32 0.0, %v2603
        %v2605 = vpop.f32.mrb[0].mxu0
        %v2606 = vadd.f32 0.0, %v2605
        %2607 = vmatprep.mubr.bf16.mxu0 0
        %2608 = vmatmul.mubr.bf16.gmra.mrb[0].mxu0 %v2503
        %v2609 = vpop.f32.mrb[0].mxu0
        %v2610 = vadd.f32 0.0, %v2609
        %v2611 = vpop.f32.mrb[0].mxu0
        %v2612 = vadd.f32 0.0, %v2611
        %v2613 = vpop.f32.mrb[0].mxu0
        %v2614 = vadd.f32 0.0, %v2613
        %v2615 = vpop.f32.mrb[0].mxu0
        %v2616 = vadd.f32 0.0, %v2615
        %2617 = vdwg.mxu0
        %v2619 = vsel %vm2206, %v2159, 0
        %v2622 = vsel %vm2206, %v2161, 0
        %v2625 = vsel %vm2206, %v2163, 0
        %v2628 = vsel %vm2206, %v2165, 0
        %v2631 = vsel %vm2206, %v2167, 0
        %v2634 = vsel %vm2206, %v2169, 0
        %v2637 = vsel %vm2206, %v2171, 0
        %v2640 = vsel %vm2206, %v2173, 0
        %2642 = vmatprep.subr.bf16.mxu0 %v2187
        %2643 = vmatpush1.bf16.msra.mxu0 %v2186
        %2644 = vmatprep.subr.bf16.mxu0 %v2189
        %2645 = vmatpush1.bf16.msra.mxu0 %v2188
        %2646 = vmatprep.subr.bf16.mxu0 0
        %2647 = vmatpush1.bf16.msra.mxu0 0
        %2648 = vmatprep.subr.bf16.mxu0 0
        %2649 = vmatpush1.bf16.msra.mxu0 0
        %2650 = vmatprep.subr.bf16.mxu0 0
        %2651 = vmatpush1.bf16.msra.mxu0 0
        %2652 = vmatprep.subr.bf16.mxu0 0
        %2653 = vmatpush1.bf16.msra.mxu0 0
        %2654 = vmatprep.subr.bf16.mxu0 0
        %2655 = vmatpush1.bf16.msra.mxu0 0
        %2656 = vmatprep.subr.bf16.mxu0 0
        %2657 = vmatpush1.bf16.msra.mxu0 0
        %2658 = vmatprep.subr.bf16.mxu0 0
        %2659 = vmatpush1.bf16.msra.mxu0 0
        %2660 = vmatprep.subr.bf16.mxu0 0
        %2661 = vmatpush1.bf16.msra.mxu0 0
        %2662 = vmatprep.subr.bf16.mxu0 0
        %2663 = vmatpush1.bf16.msra.mxu0 0
        %2664 = vmatprep.subr.bf16.mxu0 0
        %2665 = vmatpush1.bf16.msra.mxu0 0
        %2666 = vmatprep.subr.bf16.mxu0 0
        %2667 = vmatpush1.bf16.msra.mxu0 0
        %2668 = vmatprep.subr.bf16.mxu0 0
        %2669 = vmatpush1.bf16.msra.mxu0 0
        %2670 = vmatprep.subr.bf16.mxu0 0
        %2671 = vmatpush1.bf16.msra.mxu0 0
        %2672 = vmatprep.subr.bf16.mxu0 0
        %2673 = vmatpush1.bf16.msra.mxu0 0
        %2674 = vmatprep.mubr.bf16.mxu0 0
        %2675 = vmatmul.mubr.bf16.gmra.mrb[0].mxu0 %v2619
        %v2676 = vpop.f32.mrb[0].mxu0
        %v2677 = vadd.f32 0.0, %v2676
        %v2678 = vpop.f32.mrb[0].mxu0
        %v2679 = vadd.f32 0.0, %v2678
        %v2680 = vpop.f32.mrb[0].mxu0
        %v2681 = vadd.f32 0.0, %v2680
        %v2682 = vpop.f32.mrb[0].mxu0
        %v2683 = vadd.f32 0.0, %v2682
        %2684 = vmatprep.mubr.bf16.mxu0 0
        %2685 = vmatmul.mubr.bf16.gmra.mrb[0].mxu0 %v2622
        %v2686 = vpop.f32.mrb[0].mxu0
        %v2687 = vadd.f32 0.0, %v2686
        %v2688 = vpop.f32.mrb[0].mxu0
        %v2689 = vadd.f32 0.0, %v2688
        %v2690 = vpop.f32.mrb[0].mxu0
        %v2691 = vadd.f32 0.0, %v2690
        %v2692 = vpop.f32.mrb[0].mxu0
        %v2693 = vadd.f32 0.0, %v2692
        %2694 = vmatprep.mubr.bf16.mxu0 0
        %2695 = vmatmul.mubr.bf16.gmra.mrb[0].mxu0 %v2625
        %v2696 = vpop.f32.mrb[0].mxu0
        %v2697 = vadd.f32 0.0, %v2696
        %v2698 = vpop.f32.mrb[0].mxu0
        %v2699 = vadd.f32 0.0, %v2698
        %v2700 = vpop.f32.mrb[0].mxu0
        %v2701 = vadd.f32 0.0, %v2700
        %v2702 = vpop.f32.mrb[0].mxu0
        %v2703 = vadd.f32 0.0, %v2702
        %2704 = vmatprep.mubr.bf16.mxu0 0
        %2705 = vmatmul.mubr.bf16.gmra.mrb[0].mxu0 %v2628
        %v2706 = vpop.f32.mrb[0].mxu0
        %v2707 = vadd.f32 0.0, %v2706
        %v2708 = vpop.f32.mrb[0].mxu0
        %v2709 = vadd.f32 0.0, %v2708
        %v2710 = vpop.f32.mrb[0].mxu0
        %v2711 = vadd.f32 0.0, %v2710
        %v2712 = vpop.f32.mrb[0].mxu0
        %v2713 = vadd.f32 0.0, %v2712
        %2714 = vmatprep.mubr.bf16.mxu0 0
        %2715 = vmatmul.mubr.bf16.gmra.mrb[0].mxu0 %v2631
        %v2716 = vpop.f32.mrb[0].mxu0
        %v2717 = vadd.f32 0.0, %v2716
        %v2718 = vpop.f32.mrb[0].mxu0
        %v2719 = vadd.f32 0.0, %v2718
        %v2720 = vpop.f32.mrb[0].mxu0
        %v2721 = vadd.f32 0.0, %v2720
        %v2722 = vpop.f32.mrb[0].mxu0
        %v2723 = vadd.f32 0.0, %v2722
        %2724 = vmatprep.mubr.bf16.mxu0 0
        %2725 = vmatmul.mubr.bf16.gmra.mrb[0].mxu0 %v2634
        %v2726 = vpop.f32.mrb[0].mxu0
        %v2727 = vadd.f32 0.0, %v2726
        %v2728 = vpop.f32.mrb[0].mxu0
        %v2729 = vadd.f32 0.0, %v2728
        %v2730 = vpop.f32.mrb[0].mxu0
        %v2731 = vadd.f32 0.0, %v2730
        %v2732 = vpop.f32.mrb[0].mxu0
        %v2733 = vadd.f32 0.0, %v2732
        %2734 = vmatprep.mubr.bf16.mxu0 0
        %2735 = vmatmul.mubr.bf16.gmra.mrb[0].mxu0 %v2637
        %v2736 = vpop.f32.mrb[0].mxu0
        %v2737 = vadd.f32 0.0, %v2736
        %v2738 = vpop.f32.mrb[0].mxu0
        %v2739 = vadd.f32 0.0, %v2738
        %v2740 = vpop.f32.mrb[0].mxu0
        %v2741 = vadd.f32 0.0, %v2740
        %v2742 = vpop.f32.mrb[0].mxu0
        %v2743 = vadd.f32 0.0, %v2742
        %2744 = vmatprep.mubr.bf16.mxu0 0
        %2745 = vmatmul.mubr.bf16.gmra.mrb[0].mxu0 %v2640
        %v2746 = vpop.f32.mrb[0].mxu0
        %v2747 = vadd.f32 0.0, %v2746
        %v2748 = vpop.f32.mrb[0].mxu0
        %v2749 = vadd.f32 0.0, %v2748
        %v2750 = vpop.f32.mrb[0].mxu0
        %v2751 = vadd.f32 0.0, %v2750
        %v2752 = vpop.f32.mrb[0].mxu0
        %v2753 = vadd.f32 0.0, %v2752
        %2754 = vdwg.mxu0
        %v2755 = vmax.f32 %v2266, %v2268
        %2756 = vmax.xlane.f32.xlu0 %v2755
        %v2757 = vpop.xlane.xlu0 %2756
        %v2758 = vmax.f32 %v2270, %v2272
        %2759 = vmax.xlane.f32.xlu0 %v2758
        %v2760 = vpop.xlane.xlu0 %2759
        %v2761 = vmax.f32 %v2276, %v2278
        %2762 = vmax.xlane.f32.xlu0 %v2761
        %v2763 = vpop.xlane.xlu0 %2762
        %v2764 = vmax.f32 %v2280, %v2282
        %2765 = vmax.xlane.f32.xlu0 %v2764
        %v2766 = vpop.xlane.xlu0 %2765
        %v2767 = vmax.f32 %v2286, %v2288
        %2768 = vmax.xlane.f32.xlu0 %v2767
        %v2769 = vpop.xlane.xlu0 %2768
        %v2770 = vmax.f32 %v2290, %v2292
        %2771 = vmax.xlane.f32.xlu0 %v2770
        %v2772 = vpop.xlane.xlu0 %2771
        %v2773 = vmax.f32 %v2296, %v2298
        %2774 = vmax.xlane.f32.xlu0 %v2773
        %v2775 = vpop.xlane.xlu0 %2774
        %v2776 = vmax.f32 %v2300, %v2302
        %2777 = vmax.xlane.f32.xlu0 %v2776
        %v2778 = vpop.xlane.xlu0 %2777
        %v2779 = vmax.f32 %v2306, %v2308
        %2780 = vmax.xlane.f32.xlu0 %v2779
        %v2781 = vpop.xlane.xlu0 %2780
        %v2782 = vmax.f32 %v2310, %v2312
        %2783 = vmax.xlane.f32.xlu0 %v2782
        %v2784 = vpop.xlane.xlu0 %2783
        %v2785 = vmax.f32 %v2316, %v2318
        %2786 = vmax.xlane.f32.xlu0 %v2785
        %v2787 = vpop.xlane.xlu0 %2786
        %v2788 = vmax.f32 %v2320, %v2322
        %2789 = vmax.xlane.f32.xlu0 %v2788
        %v2790 = vpop.xlane.xlu0 %2789
        %v2791 = vmax.f32 %v2326, %v2328
        %2792 = vmax.xlane.f32.xlu0 %v2791
        %v2793 = vpop.xlane.xlu0 %2792
        %v2794 = vmax.f32 %v2330, %v2332
        %2795 = vmax.xlane.f32.xlu0 %v2794
        %v2796 = vpop.xlane.xlu0 %2795
        %v2797 = vmax.f32 %v2336, %v2338
        %2798 = vmax.xlane.f32.xlu0 %v2797
        %v2799 = vpop.xlane.xlu0 %2798
        %v2800 = vmax.f32 %v2340, %v2342
        %2801 = vmax.xlane.f32.xlu0 %v2800
        %v2802 = vpop.xlane.xlu0 %2801
        %v2803 = vmax.f32 %v2403, %v2405
        %2804 = vmax.xlane.f32.xlu0 %v2803
        %v2805 = vpop.xlane.xlu0 %2804
        %v2806 = vmax.f32 %v2407, %v2409
        %2807 = vmax.xlane.f32.xlu0 %v2806
        %v2808 = vpop.xlane.xlu0 %2807
        %v2809 = vmax.f32 %v2413, %v2415
        %2810 = vmax.xlane.f32.xlu0 %v2809
        %v2811 = vpop.xlane.xlu0 %2810
        %v2812 = vmax.f32 %v2417, %v2419
        %2813 = vmax.xlane.f32.xlu0 %v2812
        %v2814 = vpop.xlane.xlu0 %2813
        %v2815 = vmax.f32 %v2423, %v2425
        %2816 = vmax.xlane.f32.xlu0 %v2815
        %v2817 = vpop.xlane.xlu0 %2816
        %v2818 = vmax.f32 %v2427, %v2429
        %2819 = vmax.xlane.f32.xlu0 %v2818
        %v2820 = vpop.xlane.xlu0 %2819
        %v2821 = vmax.f32 %v2433, %v2435
        %2822 = vmax.xlane.f32.xlu0 %v2821
        %v2823 = vpop.xlane.xlu0 %2822
        %v2824 = vmax.f32 %v2437, %v2439
        %2825 = vmax.xlane.f32.xlu0 %v2824
        %v2826 = vpop.xlane.xlu0 %2825
        %v2827 = vmax.f32 %v2443, %v2445
        %2828 = vmax.xlane.f32.xlu0 %v2827
        %v2829 = vpop.xlane.xlu0 %2828
        %v2830 = vmax.f32 %v2447, %v2449
        %2831 = vmax.xlane.f32.xlu0 %v2830
        %v2832 = vpop.xlane.xlu0 %2831
        %v2833 = vmax.f32 %v2453, %v2455
        %2834 = vmax.xlane.f32.xlu0 %v2833
        %v2835 = vpop.xlane.xlu0 %2834
        %v2836 = vmax.f32 %v2457, %v2459
        %2837 = vmax.xlane.f32.xlu0 %v2836
        %v2838 = vpop.xlane.xlu0 %2837
        %v2839 = vmax.f32 %v2463, %v2465
        %2840 = vmax.xlane.f32.xlu0 %v2839
        %v2841 = vpop.xlane.xlu0 %2840
        %v2842 = vmax.f32 %v2467, %v2469
        %2843 = vmax.xlane.f32.xlu0 %v2842
        %v2844 = vpop.xlane.xlu0 %2843
        %v2845 = vmax.f32 %v2473, %v2475
        %2846 = vmax.xlane.f32.xlu0 %v2845
        %v2847 = vpop.xlane.xlu0 %2846
        %v2848 = vmax.f32 %v2477, %v2479
        %2849 = vmax.xlane.f32.xlu0 %v2848
        %v2850 = vpop.xlane.xlu0 %2849
        %v2851 = vmax.f32 %v2540, %v2542
        %2852 = vmax.xlane.f32.xlu0 %v2851
        %v2853 = vpop.xlane.xlu0 %2852
        %v2854 = vmax.f32 %v2544, %v2546
        %2855 = vmax.xlane.f32.xlu0 %v2854
        %v2856 = vpop.xlane.xlu0 %2855
        %v2857 = vmax.f32 %v2550, %v2552
        %2858 = vmax.xlane.f32.xlu0 %v2857
        %v2859 = vpop.xlane.xlu0 %2858
        %v2860 = vmax.f32 %v2554, %v2556
        %2861 = vmax.xlane.f32.xlu0 %v2860
        %v2862 = vpop.xlane.xlu0 %2861
        %v2863 = vmax.f32 %v2560, %v2562
        %2864 = vmax.xlane.f32.xlu0 %v2863
        %v2865 = vpop.xlane.xlu0 %2864
        %v2866 = vmax.f32 %v2564, %v2566
        %2867 = vmax.xlane.f32.xlu0 %v2866
        %v2868 = vpop.xlane.xlu0 %2867
        %v2869 = vmax.f32 %v2570, %v2572
        %2870 = vmax.xlane.f32.xlu0 %v2869
        %v2871 = vpop.xlane.xlu0 %2870
        %v2872 = vmax.f32 %v2574, %v2576
        %2873 = vmax.xlane.f32.xlu0 %v2872
        %v2874 = vpop.xlane.xlu0 %2873
        %v2875 = vmax.f32 %v2580, %v2582
        %2876 = vmax.xlane.f32.xlu0 %v2875
        %v2877 = vpop.xlane.xlu0 %2876
        %v2878 = vmax.f32 %v2584, %v2586
        %2879 = vmax.xlane.f32.xlu0 %v2878
        %v2880 = vpop.xlane.xlu0 %2879
        %v2881 = vmax.f32 %v2590, %v2592
        %2882 = vmax.xlane.f32.xlu0 %v2881
        %v2883 = vpop.xlane.xlu0 %2882
        %v2884 = vmax.f32 %v2594, %v2596
        %2885 = vmax.xlane.f32.xlu0 %v2884
        %v2886 = vpop.xlane.xlu0 %2885
        %v2887 = vmax.f32 %v2600, %v2602
        %2888 = vmax.xlane.f32.xlu0 %v2887
        %v2889 = vpop.xlane.xlu0 %2888
        %v2890 = vmax.f32 %v2604, %v2606
        %2891 = vmax.xlane.f32.xlu0 %v2890
        %v2892 = vpop.xlane.xlu0 %2891
        %v2893 = vmax.f32 %v2610, %v2612
        %2894 = vmax.xlane.f32.xlu0 %v2893
        %v2895 = vpop.xlane.xlu0 %2894
        %v2896 = vmax.f32 %v2614, %v2616
        %2897 = vmax.xlane.f32.xlu0 %v2896
        %v2898 = vpop.xlane.xlu0 %2897
        %v2899 = vmax.f32 %v2677, %v2679
        %2900 = vmax.xlane.f32.xlu0 %v2899
        %v2901 = vpop.xlane.xlu0 %2900
        %v2902 = vmax.f32 %v2681, %v2683
        %2903 = vmax.xlane.f32.xlu0 %v2902
        %v2904 = vpop.xlane.xlu0 %2903
        %v2905 = vmax.f32 %v2687, %v2689
        %2906 = vmax.xlane.f32.xlu0 %v2905
        %v2907 = vpop.xlane.xlu0 %2906
        %v2908 = vmax.f32 %v2691, %v2693
        %2909 = vmax.xlane.f32.xlu0 %v2908
        %v2910 = vpop.xlane.xlu0 %2909
        %v2911 = vmax.f32 %v2697, %v2699
        %2912 = vmax.xlane.f32.xlu0 %v2911
        %v2913 = vpop.xlane.xlu0 %2912
        %v2914 = vmax.f32 %v2701, %v2703
        %2915 = vmax.xlane.f32.xlu0 %v2914
        %v2916 = vpop.xlane.xlu0 %2915
        %v2917 = vmax.f32 %v2707, %v2709
        %2918 = vmax.xlane.f32.xlu0 %v2917
        %v2919 = vpop.xlane.xlu0 %2918
        %v2920 = vmax.f32 %v2711, %v2713
        %2921 = vmax.xlane.f32.xlu0 %v2920
        %v2922 = vpop.xlane.xlu0 %2921
        %v2923 = vmax.f32 %v2717, %v2719
        %2924 = vmax.xlane.f32.xlu0 %v2923
        %v2925 = vpop.xlane.xlu0 %2924
        %v2926 = vmax.f32 %v2721, %v2723
        %2927 = vmax.xlane.f32.xlu0 %v2926
        %v2928 = vpop.xlane.xlu0 %2927
        %v2929 = vmax.f32 %v2727, %v2729
        %2930 = vmax.xlane.f32.xlu0 %v2929
        %v2931 = vpop.xlane.xlu0 %2930
        %v2932 = vmax.f32 %v2731, %v2733
        %2933 = vmax.xlane.f32.xlu0 %v2932
        %v2934 = vpop.xlane.xlu0 %2933
        %v2935 = vmax.f32 %v2737, %v2739
        %2936 = vmax.xlane.f32.xlu0 %v2935
        %v2937 = vpop.xlane.xlu0 %2936
        %v2938 = vmax.f32 %v2741, %v2743
        %2939 = vmax.xlane.f32.xlu0 %v2938
        %v2940 = vpop.xlane.xlu0 %2939
        %v2941 = vmax.f32 %v2747, %v2749
        %2942 = vmax.xlane.f32.xlu0 %v2941
        %v2943 = vpop.xlane.xlu0 %2942
        %v2944 = vmax.f32 %v2751, %v2753
        %2945 = vmax.xlane.f32.xlu0 %v2944
        %v2946 = vpop.xlane.xlu0 %2945
        %v2947 = vsub.f32 %v2266, %v2757
        %v2948 = vsub.f32 %v2268, %v2757
        %v2949 = vsub.f32 %v2270, %v2760
        %v2950 = vsub.f32 %v2272, %v2760
        %v2951 = vsub.f32 %v2276, %v2763
        %v2952 = vsub.f32 %v2278, %v2763
        %v2953 = vsub.f32 %v2280, %v2766
        %v2954 = vsub.f32 %v2282, %v2766
        %v2955 = vsub.f32 %v2286, %v2769
        %v2956 = vsub.f32 %v2288, %v2769
        %v2957 = vsub.f32 %v2290, %v2772
        %v2958 = vsub.f32 %v2292, %v2772
        %v2959 = vsub.f32 %v2296, %v2775
        %v2960 = vsub.f32 %v2298, %v2775
        %v2961 = vsub.f32 %v2300, %v2778
        %v2962 = vsub.f32 %v2302, %v2778
        %v2963 = vsub.f32 %v2306, %v2781
        %v2964 = vsub.f32 %v2308, %v2781
        %v2965 = vsub.f32 %v2310, %v2784
        %v2966 = vsub.f32 %v2312, %v2784
        %v2967 = vsub.f32 %v2316, %v2787
        %v2968 = vsub.f32 %v2318, %v2787
        %v2969 = vsub.f32 %v2320, %v2790
        %v2970 = vsub.f32 %v2322, %v2790
        %v2971 = vsub.f32 %v2326, %v2793
        %v2972 = vsub.f32 %v2328, %v2793
        %v2973 = vsub.f32 %v2330, %v2796
        %v2974 = vsub.f32 %v2332, %v2796
        %v2975 = vsub.f32 %v2336, %v2799
        %v2976 = vsub.f32 %v2338, %v2799
        %v2977 = vsub.f32 %v2340, %v2802
        %v2978 = vsub.f32 %v2342, %v2802
        %v2979 = vsub.f32 %v2403, %v2805
        %v2980 = vsub.f32 %v2405, %v2805
        %v2981 = vsub.f32 %v2407, %v2808
        %v2982 = vsub.f32 %v2409, %v2808
        %v2983 = vsub.f32 %v2413, %v2811
        %v2984 = vsub.f32 %v2415, %v2811
        %v2985 = vsub.f32 %v2417, %v2814
        %v2986 = vsub.f32 %v2419, %v2814
        %v2987 = vsub.f32 %v2423, %v2817
        %v2988 = vsub.f32 %v2425, %v2817
        %v2989 = vsub.f32 %v2427, %v2820
        %v2990 = vsub.f32 %v2429, %v2820
        %v2991 = vsub.f32 %v2433, %v2823
        %v2992 = vsub.f32 %v2435, %v2823
        %v2993 = vsub.f32 %v2437, %v2826
        %v2994 = vsub.f32 %v2439, %v2826
        %v2995 = vsub.f32 %v2443, %v2829
        %v2996 = vsub.f32 %v2445, %v2829
        %v2997 = vsub.f32 %v2447, %v2832
        %v2998 = vsub.f32 %v2449, %v2832
        %v2999 = vsub.f32 %v2453, %v2835
        %v3000 = vsub.f32 %v2455, %v2835
        %v3001 = vsub.f32 %v2457, %v2838
        %v3002 = vsub.f32 %v2459, %v2838
        %v3003 = vsub.f32 %v2463, %v2841
        %v3004 = vsub.f32 %v2465, %v2841
        %v3005 = vsub.f32 %v2467, %v2844
        %v3006 = vsub.f32 %v2469, %v2844
        %v3007 = vsub.f32 %v2473, %v2847
        %v3008 = vsub.f32 %v2475, %v2847
        %v3009 = vsub.f32 %v2477, %v2850
        %v3010 = vsub.f32 %v2479, %v2850
        %v3011 = vsub.f32 %v2540, %v2853
        %v3012 = vsub.f32 %v2542, %v2853
        %v3013 = vsub.f32 %v2544, %v2856
        %v3014 = vsub.f32 %v2546, %v2856
        %v3015 = vsub.f32 %v2550, %v2859
        %v3016 = vsub.f32 %v2552, %v2859
        %v3017 = vsub.f32 %v2554, %v2862
        %v3018 = vsub.f32 %v2556, %v2862
        %v3019 = vsub.f32 %v2560, %v2865
        %v3020 = vsub.f32 %v2562, %v2865
        %v3021 = vsub.f32 %v2564, %v2868
        %v3022 = vsub.f32 %v2566, %v2868
        %v3023 = vsub.f32 %v2570, %v2871
        %v3024 = vsub.f32 %v2572, %v2871
        %v3025 = vsub.f32 %v2574, %v2874
        %v3026 = vsub.f32 %v2576, %v2874
        %v3027 = vsub.f32 %v2580, %v2877
        %v3028 = vsub.f32 %v2582, %v2877
        %v3029 = vsub.f32 %v2584, %v2880
        %v3030 = vsub.f32 %v2586, %v2880
        %v3031 = vsub.f32 %v2590, %v2883
        %v3032 = vsub.f32 %v2592, %v2883
        %v3033 = vsub.f32 %v2594, %v2886
        %v3034 = vsub.f32 %v2596, %v2886
        %v3035 = vsub.f32 %v2600, %v2889
        %v3036 = vsub.f32 %v2602, %v2889
        %v3037 = vsub.f32 %v2604, %v2892
        %v3038 = vsub.f32 %v2606, %v2892
        %v3039 = vsub.f32 %v2610, %v2895
        %v3040 = vsub.f32 %v2612, %v2895
        %v3041 = vsub.f32 %v2614, %v2898
        %v3042 = vsub.f32 %v2616, %v2898
        %v3043 = vsub.f32 %v2677, %v2901
        %v3044 = vsub.f32 %v2679, %v2901
        %v3045 = vsub.f32 %v2681, %v2904
        %v3046 = vsub.f32 %v2683, %v2904
        %v3047 = vsub.f32 %v2687, %v2907
        %v3048 = vsub.f32 %v2689, %v2907
        %v3049 = vsub.f32 %v2691, %v2910
        %v3050 = vsub.f32 %v2693, %v2910
        %v3051 = vsub.f32 %v2697, %v2913
        %v3052 = vsub.f32 %v2699, %v2913
        %v3053 = vsub.f32 %v2701, %v2916
        %v3054 = vsub.f32 %v2703, %v2916
        %v3055 = vsub.f32 %v2707, %v2919
        %v3056 = vsub.f32 %v2709, %v2919
        %v3057 = vsub.f32 %v2711, %v2922
        %v3058 = vsub.f32 %v2713, %v2922
        %v3059 = vsub.f32 %v2717, %v2925
        %v3060 = vsub.f32 %v2719, %v2925
        %v3061 = vsub.f32 %v2721, %v2928
        %v3062 = vsub.f32 %v2723, %v2928
        %v3063 = vsub.f32 %v2727, %v2931
        %v3064 = vsub.f32 %v2729, %v2931
        %v3065 = vsub.f32 %v2731, %v2934
        %v3066 = vsub.f32 %v2733, %v2934
        %v3067 = vsub.f32 %v2737, %v2937
        %v3068 = vsub.f32 %v2739, %v2937
        %v3069 = vsub.f32 %v2741, %v2940
        %v3070 = vsub.f32 %v2743, %v2940
        %v3071 = vsub.f32 %v2747, %v2943
        %v3072 = vsub.f32 %v2749, %v2943
        %v3073 = vsub.f32 %v2751, %v2946
        %v3074 = vsub.f32 %v2753, %v2946
        %v3075 = vmul.f32 %v2947, 1.442695
        %v3076 = vpow.pop %v3075
        %v3077 = vmul.f32 %v2948, 1.442695
        %v3078 = vpow.pop %v3077
        %v3079 = vmul.f32 %v2949, 1.442695
        %v3080 = vpow.pop %v3079
        %v3081 = vmul.f32 %v2950, 1.442695
        %v3082 = vpow.pop %v3081
        %v3083 = vmul.f32 %v2951, 1.442695
        %v3084 = vpow.pop %v3083
        %v3085 = vmul.f32 %v2952, 1.442695
        %v3086 = vpow.pop %v3085
        %v3087 = vmul.f32 %v2953, 1.442695
        %v3088 = vpow.pop %v3087
        %v3089 = vmul.f32 %v2954, 1.442695
        %v3090 = vpow.pop %v3089
        %v3091 = vmul.f32 %v2955, 1.442695
        %v3092 = vpow.pop %v3091
        %v3093 = vmul.f32 %v2956, 1.442695
        %v3094 = vpow.pop %v3093
        %v3095 = vmul.f32 %v2957, 1.442695
        %v3096 = vpow.pop %v3095
        %v3097 = vmul.f32 %v2958, 1.442695
        %v3098 = vpow.pop %v3097
        %v3099 = vmul.f32 %v2959, 1.442695
        %v3100 = vpow.pop %v3099
        %v3101 = vmul.f32 %v2960, 1.442695
        %v3102 = vpow.pop %v3101
        %v3103 = vmul.f32 %v2961, 1.442695
        %v3104 = vpow.pop %v3103
        %v3105 = vmul.f32 %v2962, 1.442695
        %v3106 = vpow.pop %v3105
        %v3107 = vmul.f32 %v2963, 1.442695
        %v3108 = vpow.pop %v3107
        %v3109 = vmul.f32 %v2964, 1.442695
        %v3110 = vpow.pop %v3109
        %v3111 = vmul.f32 %v2965, 1.442695
        %v3112 = vpow.pop %v3111
        %v3113 = vmul.f32 %v2966, 1.442695
        %v3114 = vpow.pop %v3113
        %v3115 = vmul.f32 %v2967, 1.442695
        %v3116 = vpow.pop %v3115
        %v3117 = vmul.f32 %v2968, 1.442695
        %v3118 = vpow.pop %v3117
        %v3119 = vmul.f32 %v2969, 1.442695
        %v3120 = vpow.pop %v3119
        %v3121 = vmul.f32 %v2970, 1.442695
        %v3122 = vpow.pop %v3121
        %v3123 = vmul.f32 %v2971, 1.442695
        %v3124 = vpow.pop %v3123
        %v3125 = vmul.f32 %v2972, 1.442695
        %v3126 = vpow.pop %v3125
        %v3127 = vmul.f32 %v2973, 1.442695
        %v3128 = vpow.pop %v3127
        %v3129 = vmul.f32 %v2974, 1.442695
        %v3130 = vpow.pop %v3129
        %v3131 = vmul.f32 %v2975, 1.442695
        %v3132 = vpow.pop %v3131
        %v3133 = vmul.f32 %v2976, 1.442695
        %v3134 = vpow.pop %v3133
        %v3135 = vmul.f32 %v2977, 1.442695
        %v3136 = vpow.pop %v3135
        %v3137 = vmul.f32 %v2978, 1.442695
        %v3138 = vpow.pop %v3137
        %v3139 = vmul.f32 %v2979, 1.442695
        %v3140 = vpow.pop %v3139
        %v3141 = vmul.f32 %v2980, 1.442695
        %v3142 = vpow.pop %v3141
        %v3143 = vmul.f32 %v2981, 1.442695
        %v3144 = vpow.pop %v3143
        %v3145 = vmul.f32 %v2982, 1.442695
        %v3146 = vpow.pop %v3145
        %v3147 = vmul.f32 %v2983, 1.442695
        %v3148 = vpow.pop %v3147
        %v3149 = vmul.f32 %v2984, 1.442695
        %v3150 = vpow.pop %v3149
        %v3151 = vmul.f32 %v2985, 1.442695
        %v3152 = vpow.pop %v3151
        %v3153 = vmul.f32 %v2986, 1.442695
        %v3154 = vpow.pop %v3153
        %v3155 = vmul.f32 %v2987, 1.442695
        %v3156 = vpow.pop %v3155
        %v3157 = vmul.f32 %v2988, 1.442695
        %v3158 = vpow.pop %v3157
        %v3159 = vmul.f32 %v2989, 1.442695
        %v3160 = vpow.pop %v3159
        %v3161 = vmul.f32 %v2990, 1.442695
        %v3162 = vpow.pop %v3161
        %v3163 = vmul.f32 %v2991, 1.442695
        %v3164 = vpow.pop %v3163
        %v3165 = vmul.f32 %v2992, 1.442695
        %v3166 = vpow.pop %v3165
        %v3167 = vmul.f32 %v2993, 1.442695
        %v3168 = vpow.pop %v3167
        %v3169 = vmul.f32 %v2994, 1.442695
        %v3170 = vpow.pop %v3169
        %v3171 = vmul.f32 %v2995, 1.442695
        %v3172 = vpow.pop %v3171
        %v3173 = vmul.f32 %v2996, 1.442695
        %v3174 = vpow.pop %v3173
        %v3175 = vmul.f32 %v2997, 1.442695
        %v3176 = vpow.pop %v3175
        %v3177 = vmul.f32 %v2998, 1.442695
        %v3178 = vpow.pop %v3177
        %v3179 = vmul.f32 %v2999, 1.442695
        %v3180 = vpow.pop %v3179
        %v3181 = vmul.f32 %v3000, 1.442695
        %v3182 = vpow.pop %v3181
        %v3183 = vmul.f32 %v3001, 1.442695
        %v3184 = vpow.pop %v3183
        %v3185 = vmul.f32 %v3002, 1.442695
        %v3186 = vpow.pop %v3185
        %v3187 = vmul.f32 %v3003, 1.442695
        %v3188 = vpow.pop %v3187
        %v3189 = vmul.f32 %v3004, 1.442695
        %v3190 = vpow.pop %v3189
        %v3191 = vmul.f32 %v3005, 1.442695
        %v3192 = vpow.pop %v3191
        %v3193 = vmul.f32 %v3006, 1.442695
        %v3194 = vpow.pop %v3193
        %v3195 = vmul.f32 %v3007, 1.442695
        %v3196 = vpow.pop %v3195
        %v3197 = vmul.f32 %v3008, 1.442695
        %v3198 = vpow.pop %v3197
        %v3199 = vmul.f32 %v3009, 1.442695
        %v3200 = vpow.pop %v3199
        %v3201 = vmul.f32 %v3010, 1.442695
        %v3202 = vpow.pop %v3201
        %v3203 = vmul.f32 %v3011, 1.442695
        %v3204 = vpow.pop %v3203
        %v3205 = vmul.f32 %v3012, 1.442695
        %v3206 = vpow.pop %v3205
        %v3207 = vmul.f32 %v3013, 1.442695
        %v3208 = vpow.pop %v3207
        %v3209 = vmul.f32 %v3014, 1.442695
        %v3210 = vpow.pop %v3209
        %v3211 = vmul.f32 %v3015, 1.442695
        %v3212 = vpow.pop %v3211
        %v3213 = vmul.f32 %v3016, 1.442695
        %v3214 = vpow.pop %v3213
        %v3215 = vmul.f32 %v3017, 1.442695
        %v3216 = vpow.pop %v3215
        %v3217 = vmul.f32 %v3018, 1.442695
        %v3218 = vpow.pop %v3217
        %v3219 = vmul.f32 %v3019, 1.442695
        %v3220 = vpow.pop %v3219
        %v3221 = vmul.f32 %v3020, 1.442695
        %v3222 = vpow.pop %v3221
        %v3223 = vmul.f32 %v3021, 1.442695
        %v3224 = vpow.pop %v3223
        %v3225 = vmul.f32 %v3022, 1.442695
        %v3226 = vpow.pop %v3225
        %v3227 = vmul.f32 %v3023, 1.442695
        %v3228 = vpow.pop %v3227
        %v3229 = vmul.f32 %v3024, 1.442695
        %v3230 = vpow.pop %v3229
        %v3231 = vmul.f32 %v3025, 1.442695
        %v3232 = vpow.pop %v3231
        %v3233 = vmul.f32 %v3026, 1.442695
        %v3234 = vpow.pop %v3233
        %v3235 = vmul.f32 %v3027, 1.442695
        %v3236 = vpow.pop %v3235
        %v3237 = vmul.f32 %v3028, 1.442695
        %v3238 = vpow.pop %v3237
        %v3239 = vmul.f32 %v3029, 1.442695
        %v3240 = vpow.pop %v3239
        %v3241 = vmul.f32 %v3030, 1.442695
        %v3242 = vpow.pop %v3241
        %v3243 = vmul.f32 %v3031, 1.442695
        %v3244 = vpow.pop %v3243
        %v3245 = vmul.f32 %v3032, 1.442695
        %v3246 = vpow.pop %v3245
        %v3247 = vmul.f32 %v3033, 1.442695
        %v3248 = vpow.pop %v3247
        %v3249 = vmul.f32 %v3034, 1.442695
        %v3250 = vpow.pop %v3249
        %v3251 = vmul.f32 %v3035, 1.442695
        %v3252 = vpow.pop %v3251
        %v3253 = vmul.f32 %v3036, 1.442695
        %v3254 = vpow.pop %v3253
        %v3255 = vmul.f32 %v3037, 1.442695
        %v3256 = vpow.pop %v3255
        %v3257 = vmul.f32 %v3038, 1.442695
        %v3258 = vpow.pop %v3257
        %v3259 = vmul.f32 %v3039, 1.442695
        %v3260 = vpow.pop %v3259
        %v3261 = vmul.f32 %v3040, 1.442695
        %v3262 = vpow.pop %v3261
        %v3263 = vmul.f32 %v3041, 1.442695
        %v3264 = vpow.pop %v3263
        %v3265 = vmul.f32 %v3042, 1.442695
        %v3266 = vpow.pop %v3265
        %v3267 = vmul.f32 %v3043, 1.442695
        %v3268 = vpow.pop %v3267
        %v3269 = vmul.f32 %v3044, 1.442695
        %v3270 = vpow.pop %v3269
        %v3271 = vmul.f32 %v3045, 1.442695
        %v3272 = vpow.pop %v3271
        %v3273 = vmul.f32 %v3046, 1.442695
        %v3274 = vpow.pop %v3273
        %v3275 = vmul.f32 %v3047, 1.442695
        %v3276 = vpow.pop %v3275
        %v3277 = vmul.f32 %v3048, 1.442695
        %v3278 = vpow.pop %v3277
        %v3279 = vmul.f32 %v3049, 1.442695
        %v3280 = vpow.pop %v3279
        %v3281 = vmul.f32 %v3050, 1.442695
        %v3282 = vpow.pop %v3281
        %v3283 = vmul.f32 %v3051, 1.442695
        %v3284 = vpow.pop %v3283
        %v3285 = vmul.f32 %v3052, 1.442695
        %v3286 = vpow.pop %v3285
        %v3287 = vmul.f32 %v3053, 1.442695
        %v3288 = vpow.pop %v3287
        %v3289 = vmul.f32 %v3054, 1.442695
        %v3290 = vpow.pop %v3289
        %v3291 = vmul.f32 %v3055, 1.442695
        %v3292 = vpow.pop %v3291
        %v3293 = vmul.f32 %v3056, 1.442695
        %v3294 = vpow.pop %v3293
        %v3295 = vmul.f32 %v3057, 1.442695
        %v3296 = vpow.pop %v3295
        %v3297 = vmul.f32 %v3058, 1.442695
        %v3298 = vpow.pop %v3297
        %v3299 = vmul.f32 %v3059, 1.442695
        %v3300 = vpow.pop %v3299
        %v3301 = vmul.f32 %v3060, 1.442695
        %v3302 = vpow.pop %v3301
        %v3303 = vmul.f32 %v3061, 1.442695
        %v3304 = vpow.pop %v3303
        %v3305 = vmul.f32 %v3062, 1.442695
        %v3306 = vpow.pop %v3305
        %v3307 = vmul.f32 %v3063, 1.442695
        %v3308 = vpow.pop %v3307
        %v3309 = vmul.f32 %v3064, 1.442695
        %v3310 = vpow.pop %v3309
        %v3311 = vmul.f32 %v3065, 1.442695
        %v3312 = vpow.pop %v3311
        %v3313 = vmul.f32 %v3066, 1.442695
        %v3314 = vpow.pop %v3313
        %v3315 = vmul.f32 %v3067, 1.442695
        %v3316 = vpow.pop %v3315
        %v3317 = vmul.f32 %v3068, 1.442695
        %v3318 = vpow.pop %v3317
        %v3319 = vmul.f32 %v3069, 1.442695
        %v3320 = vpow.pop %v3319
        %v3321 = vmul.f32 %v3070, 1.442695
        %v3322 = vpow.pop %v3321
        %v3323 = vmul.f32 %v3071, 1.442695
        %v3324 = vpow.pop %v3323
        %v3325 = vmul.f32 %v3072, 1.442695
        %v3326 = vpow.pop %v3325
        %v3327 = vmul.f32 %v3073, 1.442695
        %v3328 = vpow.pop %v3327
        %v3329 = vmul.f32 %v3074, 1.442695
        %v3330 = vpow.pop %v3329
        %v3331 = vadd.f32 %v3076, %v3078
        %3332 = vadd.xlane.f32.xlu0 %v3331
        %v3333 = vpop.xlane.xlu0 %3332
        %v3334 = vadd.f32 %v3080, %v3082
        %3335 = vadd.xlane.f32.xlu0 %v3334
        %v3336 = vpop.xlane.xlu0 %3335
        %v3337 = vadd.f32 %v3084, %v3086
        %3338 = vadd.xlane.f32.xlu0 %v3337
        %v3339 = vpop.xlane.xlu0 %3338
        %v3340 = vadd.f32 %v3088, %v3090
        %3341 = vadd.xlane.f32.xlu0 %v3340
        %v3342 = vpop.xlane.xlu0 %3341
        %v3343 = vadd.f32 %v3092, %v3094
        %3344 = vadd.xlane.f32.xlu0 %v3343
        %v3345 = vpop.xlane.xlu0 %3344
        %v3346 = vadd.f32 %v3096, %v3098
        %3347 = vadd.xlane.f32.xlu0 %v3346
        %v3348 = vpop.xlane.xlu0 %3347
        %v3349 = vadd.f32 %v3100, %v3102
        %3350 = vadd.xlane.f32.xlu0 %v3349
        %v3351 = vpop.xlane.xlu0 %3350
        %v3352 = vadd.f32 %v3104, %v3106
        %3353 = vadd.xlane.f32.xlu0 %v3352
        %v3354 = vpop.xlane.xlu0 %3353
        %v3355 = vadd.f32 %v3108, %v3110
        %3356 = vadd.xlane.f32.xlu0 %v3355
        %v3357 = vpop.xlane.xlu0 %3356
        %v3358 = vadd.f32 %v3112, %v3114
        %3359 = vadd.xlane.f32.xlu0 %v3358
        %v3360 = vpop.xlane.xlu0 %3359
        %v3361 = vadd.f32 %v3116, %v3118
        %3362 = vadd.xlane.f32.xlu0 %v3361
        %v3363 = vpop.xlane.xlu0 %3362
        %v3364 = vadd.f32 %v3120, %v3122
        %3365 = vadd.xlane.f32.xlu0 %v3364
        %v3366 = vpop.xlane.xlu0 %3365
        %v3367 = vadd.f32 %v3124, %v3126
        %3368 = vadd.xlane.f32.xlu0 %v3367
        %v3369 = vpop.xlane.xlu0 %3368
        %v3370 = vadd.f32 %v3128, %v3130
        %3371 = vadd.xlane.f32.xlu0 %v3370
        %v3372 = vpop.xlane.xlu0 %3371
        %v3373 = vadd.f32 %v3132, %v3134
        %3374 = vadd.xlane.f32.xlu0 %v3373
        %v3375 = vpop.xlane.xlu0 %3374
        %v3376 = vadd.f32 %v3136, %v3138
        %3377 = vadd.xlane.f32.xlu0 %v3376
        %v3378 = vpop.xlane.xlu0 %3377
        %v3379 = vadd.f32 %v3140, %v3142
        %3380 = vadd.xlane.f32.xlu0 %v3379
        %v3381 = vpop.xlane.xlu0 %3380
        %v3382 = vadd.f32 %v3144, %v3146
        %3383 = vadd.xlane.f32.xlu0 %v3382
        %v3384 = vpop.xlane.xlu0 %3383
        %v3385 = vadd.f32 %v3148, %v3150
        %3386 = vadd.xlane.f32.xlu0 %v3385
        %v3387 = vpop.xlane.xlu0 %3386
        %v3388 = vadd.f32 %v3152, %v3154
        %3389 = vadd.xlane.f32.xlu0 %v3388
        %v3390 = vpop.xlane.xlu0 %3389
        %v3391 = vadd.f32 %v3156, %v3158
        %3392 = vadd.xlane.f32.xlu0 %v3391
        %v3393 = vpop.xlane.xlu0 %3392
        %v3394 = vadd.f32 %v3160, %v3162
        %3395 = vadd.xlane.f32.xlu0 %v3394
        %v3396 = vpop.xlane.xlu0 %3395
        %v3397 = vadd.f32 %v3164, %v3166
        %3398 = vadd.xlane.f32.xlu0 %v3397
        %v3399 = vpop.xlane.xlu0 %3398
        %v3400 = vadd.f32 %v3168, %v3170
        %3401 = vadd.xlane.f32.xlu0 %v3400
        %v3402 = vpop.xlane.xlu0 %3401
        %v3403 = vadd.f32 %v3172, %v3174
        %3404 = vadd.xlane.f32.xlu0 %v3403
        %v3405 = vpop.xlane.xlu0 %3404
        %v3406 = vadd.f32 %v3176, %v3178
        %3407 = vadd.xlane.f32.xlu0 %v3406
        %v3408 = vpop.xlane.xlu0 %3407
        %v3409 = vadd.f32 %v3180, %v3182
        %3410 = vadd.xlane.f32.xlu0 %v3409
        %v3411 = vpop.xlane.xlu0 %3410
        %v3412 = vadd.f32 %v3184, %v3186
        %3413 = vadd.xlane.f32.xlu0 %v3412
        %v3414 = vpop.xlane.xlu0 %3413
        %v3415 = vadd.f32 %v3188, %v3190
        %3416 = vadd.xlane.f32.xlu0 %v3415
        %v3417 = vpop.xlane.xlu0 %3416
        %v3418 = vadd.f32 %v3192, %v3194
        %3419 = vadd.xlane.f32.xlu0 %v3418
        %v3420 = vpop.xlane.xlu0 %3419
        %v3421 = vadd.f32 %v3196, %v3198
        %3422 = vadd.xlane.f32.xlu0 %v3421
        %v3423 = vpop.xlane.xlu0 %3422
        %v3424 = vadd.f32 %v3200, %v3202
        %3425 = vadd.xlane.f32.xlu0 %v3424
        %v3426 = vpop.xlane.xlu0 %3425
        %v3427 = vadd.f32 %v3204, %v3206
        %3428 = vadd.xlane.f32.xlu0 %v3427
        %v3429 = vpop.xlane.xlu0 %3428
        %v3430 = vadd.f32 %v3208, %v3210
        %3431 = vadd.xlane.f32.xlu0 %v3430
        %v3432 = vpop.xlane.xlu0 %3431
        %v3433 = vadd.f32 %v3212, %v3214
        %3434 = vadd.xlane.f32.xlu0 %v3433
        %v3435 = vpop.xlane.xlu0 %3434
        %v3436 = vadd.f32 %v3216, %v3218
        %3437 = vadd.xlane.f32.xlu0 %v3436
        %v3438 = vpop.xlane.xlu0 %3437
        %v3439 = vadd.f32 %v3220, %v3222
        %3440 = vadd.xlane.f32.xlu0 %v3439
        %v3441 = vpop.xlane.xlu0 %3440
        %v3442 = vadd.f32 %v3224, %v3226
        %3443 = vadd.xlane.f32.xlu0 %v3442
        %v3444 = vpop.xlane.xlu0 %3443
        %v3445 = vadd.f32 %v3228, %v3230
        %3446 = vadd.xlane.f32.xlu0 %v3445
        %v3447 = vpop.xlane.xlu0 %3446
        %v3448 = vadd.f32 %v3232, %v3234
        %3449 = vadd.xlane.f32.xlu0 %v3448
        %v3450 = vpop.xlane.xlu0 %3449
        %v3451 = vadd.f32 %v3236, %v3238
        %3452 = vadd.xlane.f32.xlu0 %v3451
        %v3453 = vpop.xlane.xlu0 %3452
        %v3454 = vadd.f32 %v3240, %v3242
        %3455 = vadd.xlane.f32.xlu0 %v3454
        %v3456 = vpop.xlane.xlu0 %3455
        %v3457 = vadd.f32 %v3244, %v3246
        %3458 = vadd.xlane.f32.xlu0 %v3457
        %v3459 = vpop.xlane.xlu0 %3458
        %v3460 = vadd.f32 %v3248, %v3250
        %3461 = vadd.xlane.f32.xlu0 %v3460
        %v3462 = vpop.xlane.xlu0 %3461
        %v3463 = vadd.f32 %v3252, %v3254
        %3464 = vadd.xlane.f32.xlu0 %v3463
        %v3465 = vpop.xlane.xlu0 %3464
        %v3466 = vadd.f32 %v3256, %v3258
        %3467 = vadd.xlane.f32.xlu0 %v3466
        %v3468 = vpop.xlane.xlu0 %3467
        %v3469 = vadd.f32 %v3260, %v3262
        %3470 = vadd.xlane.f32.xlu0 %v3469
        %v3471 = vpop.xlane.xlu0 %3470
        %v3472 = vadd.f32 %v3264, %v3266
        %3473 = vadd.xlane.f32.xlu0 %v3472
        %v3474 = vpop.xlane.xlu0 %3473
        %v3475 = vadd.f32 %v3268, %v3270
        %3476 = vadd.xlane.f32.xlu0 %v3475
        %v3477 = vpop.xlane.xlu0 %3476
        %v3478 = vadd.f32 %v3272, %v3274
        %3479 = vadd.xlane.f32.xlu0 %v3478
        %v3480 = vpop.xlane.xlu0 %3479
        %v3481 = vadd.f32 %v3276, %v3278
        %3482 = vadd.xlane.f32.xlu0 %v3481
        %v3483 = vpop.xlane.xlu0 %3482
        %v3484 = vadd.f32 %v3280, %v3282
        %3485 = vadd.xlane.f32.xlu0 %v3484
        %v3486 = vpop.xlane.xlu0 %3485
        %v3487 = vadd.f32 %v3284, %v3286
        %3488 = vadd.xlane.f32.xlu0 %v3487
        %v3489 = vpop.xlane.xlu0 %3488
        %v3490 = vadd.f32 %v3288, %v3290
        %3491 = vadd.xlane.f32.xlu0 %v3490
        %v3492 = vpop.xlane.xlu0 %3491
        %v3493 = vadd.f32 %v3292, %v3294
        %3494 = vadd.xlane.f32.xlu0 %v3493
        %v3495 = vpop.xlane.xlu0 %3494
        %v3496 = vadd.f32 %v3296, %v3298
        %3497 = vadd.xlane.f32.xlu0 %v3496
        %v3498 = vpop.xlane.xlu0 %3497
        %v3499 = vadd.f32 %v3300, %v3302
        %3500 = vadd.xlane.f32.xlu0 %v3499
        %v3501 = vpop.xlane.xlu0 %3500
        %v3502 = vadd.f32 %v3304, %v3306
        %3503 = vadd.xlane.f32.xlu0 %v3502
        %v3504 = vpop.xlane.xlu0 %3503
        %v3505 = vadd.f32 %v3308, %v3310
        %3506 = vadd.xlane.f32.xlu0 %v3505
        %v3507 = vpop.xlane.xlu0 %3506
        %v3508 = vadd.f32 %v3312, %v3314
        %3509 = vadd.xlane.f32.xlu0 %v3508
        %v3510 = vpop.xlane.xlu0 %3509
        %v3511 = vadd.f32 %v3316, %v3318
        %3512 = vadd.xlane.f32.xlu0 %v3511
        %v3513 = vpop.xlane.xlu0 %3512
        %v3514 = vadd.f32 %v3320, %v3322
        %3515 = vadd.xlane.f32.xlu0 %v3514
        %v3516 = vpop.xlane.xlu0 %3515
        %v3517 = vadd.f32 %v3324, %v3326
        %3518 = vadd.xlane.f32.xlu0 %v3517
        %v3519 = vpop.xlane.xlu0 %3518
        %v3520 = vadd.f32 %v3328, %v3330
        %3521 = vadd.xlane.f32.xlu0 %v3520
        %v3522 = vpop.xlane.xlu0 %3521
        %v3523 = vrcp.pop %v3333
        %v3524 = vrcp.pop %v3336
        %v3525 = vrcp.pop %v3339
        %v3526 = vrcp.pop %v3342
        %v3527 = vrcp.pop %v3345
        %v3528 = vrcp.pop %v3348
        %v3529 = vrcp.pop %v3351
        %v3530 = vrcp.pop %v3354
        %v3531 = vrcp.pop %v3357
        %v3532 = vrcp.pop %v3360
        %v3533 = vrcp.pop %v3363
        %v3534 = vrcp.pop %v3366
        %v3535 = vrcp.pop %v3369
        %v3536 = vrcp.pop %v3372
        %v3537 = vrcp.pop %v3375
        %v3538 = vrcp.pop %v3378
        %v3539 = vrcp.pop %v3381
        %v3540 = vrcp.pop %v3384
        %v3541 = vrcp.pop %v3387
        %v3542 = vrcp.pop %v3390
        %v3543 = vrcp.pop %v3393
        %v3544 = vrcp.pop %v3396
        %v3545 = vrcp.pop %v3399
        %v3546 = vrcp.pop %v3402
        %v3547 = vrcp.pop %v3405
        %v3548 = vrcp.pop %v3408
        %v3549 = vrcp.pop %v3411
        %v3550 = vrcp.pop %v3414
        %v3551 = vrcp.pop %v3417
        %v3552 = vrcp.pop %v3420
        %v3553 = vrcp.pop %v3423
        %v3554 = vrcp.pop %v3426
        %v3555 = vrcp.pop %v3429
        %v3556 = vrcp.pop %v3432
        %v3557 = vrcp.pop %v3435
        %v3558 = vrcp.pop %v3438
        %v3559 = vrcp.pop %v3441
        %v3560 = vrcp.pop %v3444
        %v3561 = vrcp.pop %v3447
        %v3562 = vrcp.pop %v3450
        %v3563 = vrcp.pop %v3453
        %v3564 = vrcp.pop %v3456
        %v3565 = vrcp.pop %v3459
        %v3566 = vrcp.pop %v3462
        %v3567 = vrcp.pop %v3465
        %v3568 = vrcp.pop %v3468
        %v3569 = vrcp.pop %v3471
        %v3570 = vrcp.pop %v3474
        %v3571 = vrcp.pop %v3477
        %v3572 = vrcp.pop %v3480
        %v3573 = vrcp.pop %v3483
        %v3574 = vrcp.pop %v3486
        %v3575 = vrcp.pop %v3489
        %v3576 = vrcp.pop %v3492
        %v3577 = vrcp.pop %v3495
        %v3578 = vrcp.pop %v3498
        %v3579 = vrcp.pop %v3501
        %v3580 = vrcp.pop %v3504
        %v3581 = vrcp.pop %v3507
        %v3582 = vrcp.pop %v3510
        %v3583 = vrcp.pop %v3513
        %v3584 = vrcp.pop %v3516
        %v3585 = vrcp.pop %v3519
        %v3586 = vrcp.pop %v3522
        %v3587 = vmul.f32 %v3076, %v3523
        %v3588 = vmul.f32 %v3078, %v3523
        %v3589 = vmul.f32 %v3080, %v3524
        %v3590 = vmul.f32 %v3082, %v3524
        %v3591 = vmul.f32 %v3084, %v3525
        %v3592 = vmul.f32 %v3086, %v3525
        %v3593 = vmul.f32 %v3088, %v3526
        %v3594 = vmul.f32 %v3090, %v3526
        %v3595 = vmul.f32 %v3092, %v3527
        %v3596 = vmul.f32 %v3094, %v3527
        %v3597 = vmul.f32 %v3096, %v3528
        %v3598 = vmul.f32 %v3098, %v3528
        %v3599 = vmul.f32 %v3100, %v3529
        %v3600 = vmul.f32 %v3102, %v3529
        %v3601 = vmul.f32 %v3104, %v3530
        %v3602 = vmul.f32 %v3106, %v3530
        %v3603 = vmul.f32 %v3108, %v3531
        %v3604 = vmul.f32 %v3110, %v3531
        %v3605 = vmul.f32 %v3112, %v3532
        %v3606 = vmul.f32 %v3114, %v3532
        %v3607 = vmul.f32 %v3116, %v3533
        %v3608 = vmul.f32 %v3118, %v3533
        %v3609 = vmul.f32 %v3120, %v3534
        %v3610 = vmul.f32 %v3122, %v3534
        %v3611 = vmul.f32 %v3124, %v3535
        %v3612 = vmul.f32 %v3126, %v3535
        %v3613 = vmul.f32 %v3128, %v3536
        %v3614 = vmul.f32 %v3130, %v3536
        %v3615 = vmul.f32 %v3132, %v3537
        %v3616 = vmul.f32 %v3134, %v3537
        %v3617 = vmul.f32 %v3136, %v3538
        %v3618 = vmul.f32 %v3138, %v3538
        %v3619 = vmul.f32 %v3140, %v3539
        %v3620 = vmul.f32 %v3142, %v3539
        %v3621 = vmul.f32 %v3144, %v3540
        %v3622 = vmul.f32 %v3146, %v3540
        %v3623 = vmul.f32 %v3148, %v3541
        %v3624 = vmul.f32 %v3150, %v3541
        %v3625 = vmul.f32 %v3152, %v3542
        %v3626 = vmul.f32 %v3154, %v3542
        %v3627 = vmul.f32 %v3156, %v3543
        %v3628 = vmul.f32 %v3158, %v3543
        %v3629 = vmul.f32 %v3160, %v3544
        %v3630 = vmul.f32 %v3162, %v3544
        %v3631 = vmul.f32 %v3164, %v3545
        %v3632 = vmul.f32 %v3166, %v3545
        %v3633 = vmul.f32 %v3168, %v3546
        %v3634 = vmul.f32 %v3170, %v3546
        %v3635 = vmul.f32 %v3172, %v3547
        %v3636 = vmul.f32 %v3174, %v3547
        %v3637 = vmul.f32 %v3176, %v3548
        %v3638 = vmul.f32 %v3178, %v3548
        %v3639 = vmul.f32 %v3180, %v3549
        %v3640 = vmul.f32 %v3182, %v3549
        %v3641 = vmul.f32 %v3184, %v3550
        %v3642 = vmul.f32 %v3186, %v3550
        %v3643 = vmul.f32 %v3188, %v3551
        %v3644 = vmul.f32 %v3190, %v3551
        %v3645 = vmul.f32 %v3192, %v3552
        %v3646 = vmul.f32 %v3194, %v3552
        %v3647 = vmul.f32 %v3196, %v3553
        %v3648 = vmul.f32 %v3198, %v3553
        %v3649 = vmul.f32 %v3200, %v3554
        %v3650 = vmul.f32 %v3202, %v3554
        %v3651 = vmul.f32 %v3204, %v3555
        %v3652 = vmul.f32 %v3206, %v3555
        %v3653 = vmul.f32 %v3208, %v3556
        %v3654 = vmul.f32 %v3210, %v3556
        %v3655 = vmul.f32 %v3212, %v3557
        %v3656 = vmul.f32 %v3214, %v3557
        %v3657 = vmul.f32 %v3216, %v3558
        %v3658 = vmul.f32 %v3218, %v3558
        %v3659 = vmul.f32 %v3220, %v3559
        %v3660 = vmul.f32 %v3222, %v3559
        %v3661 = vmul.f32 %v3224, %v3560
        %v3662 = vmul.f32 %v3226, %v3560
        %v3663 = vmul.f32 %v3228, %v3561
        %v3664 = vmul.f32 %v3230, %v3561
        %v3665 = vmul.f32 %v3232, %v3562
        %v3666 = vmul.f32 %v3234, %v3562
        %v3667 = vmul.f32 %v3236, %v3563
        %v3668 = vmul.f32 %v3238, %v3563
        %v3669 = vmul.f32 %v3240, %v3564
        %v3670 = vmul.f32 %v3242, %v3564
        %v3671 = vmul.f32 %v3244, %v3565
        %v3672 = vmul.f32 %v3246, %v3565
        %v3673 = vmul.f32 %v3248, %v3566
        %v3674 = vmul.f32 %v3250, %v3566
        %v3675 = vmul.f32 %v3252, %v3567
        %v3676 = vmul.f32 %v3254, %v3567
        %v3677 = vmul.f32 %v3256, %v3568
        %v3678 = vmul.f32 %v3258, %v3568
        %v3679 = vmul.f32 %v3260, %v3569
        %v3680 = vmul.f32 %v3262, %v3569
        %v3681 = vmul.f32 %v3264, %v3570
        %v3682 = vmul.f32 %v3266, %v3570
        %v3683 = vmul.f32 %v3268, %v3571
        %v3684 = vmul.f32 %v3270, %v3571
        %v3685 = vmul.f32 %v3272, %v3572
        %v3686 = vmul.f32 %v3274, %v3572
        %v3687 = vmul.f32 %v3276, %v3573
        %v3688 = vmul.f32 %v3278, %v3573
        %v3689 = vmul.f32 %v3280, %v3574
        %v3690 = vmul.f32 %v3282, %v3574
        %v3691 = vmul.f32 %v3284, %v3575
        %v3692 = vmul.f32 %v3286, %v3575
        %v3693 = vmul.f32 %v3288, %v3576
        %v3694 = vmul.f32 %v3290, %v3576
        %v3695 = vmul.f32 %v3292, %v3577
        %v3696 = vmul.f32 %v3294, %v3577
        %v3697 = vmul.f32 %v3296, %v3578
        %v3698 = vmul.f32 %v3298, %v3578
        %v3699 = vmul.f32 %v3300, %v3579
        %v3700 = vmul.f32 %v3302, %v3579
        %v3701 = vmul.f32 %v3304, %v3580
        %v3702 = vmul.f32 %v3306, %v3580
        %v3703 = vmul.f32 %v3308, %v3581
        %v3704 = vmul.f32 %v3310, %v3581
        %v3705 = vmul.f32 %v3312, %v3582
        %v3706 = vmul.f32 %v3314, %v3582
        %v3707 = vmul.f32 %v3316, %v3583
        %v3708 = vmul.f32 %v3318, %v3583
        %v3709 = vmul.f32 %v3320, %v3584
        %v3710 = vmul.f32 %v3322, %v3584
        %v3711 = vmul.f32 %v3324, %v3585
        %v3712 = vmul.f32 %v3326, %v3585
        %v3713 = vmul.f32 %v3328, %v3586
        %v3714 = vmul.f32 %v3330, %v3586
        %v3715 = vpack.c.bf16 %v3589, %v3587
        %v3716 = vpack.c.bf16 %v3590, %v3588
        %v3717 = vpack.c.bf16 %v3593, %v3591
        %v3718 = vpack.c.bf16 %v3594, %v3592
        %v3719 = vpack.c.bf16 %v3597, %v3595
        %v3720 = vpack.c.bf16 %v3598, %v3596
        %v3721 = vpack.c.bf16 %v3601, %v3599
        %v3722 = vpack.c.bf16 %v3602, %v3600
        %v3723 = vpack.c.bf16 %v3605, %v3603
        %v3724 = vpack.c.bf16 %v3606, %v3604
        %v3725 = vpack.c.bf16 %v3609, %v3607
        %v3726 = vpack.c.bf16 %v3610, %v3608
        %v3727 = vpack.c.bf16 %v3613, %v3611
        %v3728 = vpack.c.bf16 %v3614, %v3612
        %v3729 = vpack.c.bf16 %v3617, %v3615
        %v3730 = vpack.c.bf16 %v3618, %v3616
        %v3731 = vpack.c.bf16 %v3621, %v3619
        %v3732 = vpack.c.bf16 %v3622, %v3620
        %v3733 = vpack.c.bf16 %v3625, %v3623
        %v3734 = vpack.c.bf16 %v3626, %v3624
        %v3735 = vpack.c.bf16 %v3629, %v3627
        %v3736 = vpack.c.bf16 %v3630, %v3628
        %v3737 = vpack.c.bf16 %v3633, %v3631
        %v3738 = vpack.c.bf16 %v3634, %v3632
        %v3739 = vpack.c.bf16 %v3637, %v3635
        %v3740 = vpack.c.bf16 %v3638, %v3636
        %v3741 = vpack.c.bf16 %v3641, %v3639
        %v3742 = vpack.c.bf16 %v3642, %v3640
        %v3743 = vpack.c.bf16 %v3645, %v3643
        %v3744 = vpack.c.bf16 %v3646, %v3644
        %v3745 = vpack.c.bf16 %v3649, %v3647
        %v3746 = vpack.c.bf16 %v3650, %v3648
        %v3747 = vpack.c.bf16 %v3653, %v3651
        %v3748 = vpack.c.bf16 %v3654, %v3652
        %v3749 = vpack.c.bf16 %v3657, %v3655
        %v3750 = vpack.c.bf16 %v3658, %v3656
        %v3751 = vpack.c.bf16 %v3661, %v3659
        %v3752 = vpack.c.bf16 %v3662, %v3660
        %v3753 = vpack.c.bf16 %v3665, %v3663
        %v3754 = vpack.c.bf16 %v3666, %v3664
        %v3755 = vpack.c.bf16 %v3669, %v3667
        %v3756 = vpack.c.bf16 %v3670, %v3668
        %v3757 = vpack.c.bf16 %v3673, %v3671
        %v3758 = vpack.c.bf16 %v3674, %v3672
        %v3759 = vpack.c.bf16 %v3677, %v3675
        %v3760 = vpack.c.bf16 %v3678, %v3676
        %v3761 = vpack.c.bf16 %v3681, %v3679
        %v3762 = vpack.c.bf16 %v3682, %v3680
        %v3763 = vpack.c.bf16 %v3685, %v3683
        %v3764 = vpack.c.bf16 %v3686, %v3684
        %v3765 = vpack.c.bf16 %v3689, %v3687
        %v3766 = vpack.c.bf16 %v3690, %v3688
        %v3767 = vpack.c.bf16 %v3693, %v3691
        %v3768 = vpack.c.bf16 %v3694, %v3692
        %v3769 = vpack.c.bf16 %v3697, %v3695
        %v3770 = vpack.c.bf16 %v3698, %v3696
        %v3771 = vpack.c.bf16 %v3701, %v3699
        %v3772 = vpack.c.bf16 %v3702, %v3700
        %v3773 = vpack.c.bf16 %v3705, %v3703
        %v3774 = vpack.c.bf16 %v3706, %v3704
        %v3775 = vpack.c.bf16 %v3709, %v3707
        %v3776 = vpack.c.bf16 %v3710, %v3708
        %v3777 = vpack.c.bf16 %v3713, %v3711
        %v3778 = vpack.c.bf16 %v3714, %v3712
        %3779 = vmatprep.subr.bf16.mxu0 %v2191
        %3780 = vmatpush1.bf16.xpose.msra.mxu0 %v2190
        %3781 = vmatprep.subr.bf16.mxu0 %v2193
        %3782 = vmatpush1.bf16.xpose.msra.mxu0 %v2192
        %3783 = vmatprep.subr.bf16.mxu0 0
        %3784 = vmatpush1.bf16.xpose.msra.mxu0 0
        %3785 = vmatprep.subr.bf16.mxu0 0
        %3786 = vmatpush1.bf16.xpose.msra.mxu0 0
        %3787 = vmatprep.subr.bf16.mxu0 0
        %3788 = vmatpush1.bf16.xpose.msra.mxu0 0
        %3789 = vmatprep.subr.bf16.mxu0 0
        %3790 = vmatpush1.bf16.xpose.msra.mxu0 0
        %3791 = vmatprep.subr.bf16.mxu0 0
        %3792 = vmatpush1.bf16.xpose.msra.mxu0 0
        %3793 = vmatprep.subr.bf16.mxu0 0
        %3794 = vmatpush1.bf16.xpose.msra.mxu0 0
        %3795 = vmatprep.subr.bf16.mxu0 0
        %3796 = vmatpush1.bf16.xpose.msra.mxu0 0
        %3797 = vmatprep.subr.bf16.mxu0 0
        %3798 = vmatpush1.bf16.xpose.msra.mxu0 0
        %3799 = vmatprep.subr.bf16.mxu0 0
        %3800 = vmatpush1.bf16.xpose.msra.mxu0 0
        %3801 = vmatprep.subr.bf16.mxu0 0
        %3802 = vmatpush1.bf16.xpose.msra.mxu0 0
        %3803 = vmatprep.subr.bf16.mxu0 0
        %3804 = vmatpush1.bf16.xpose.msra.mxu0 0
        %3805 = vmatprep.subr.bf16.mxu0 0
        %3806 = vmatpush1.bf16.xpose.msra.mxu0 0
        %3807 = vmatprep.subr.bf16.mxu0 0
        %3808 = vmatpush1.bf16.xpose.msra.mxu0 0
        %3809 = vmatprep.subr.bf16.mxu0 0
        %3810 = vmatpush1.bf16.xpose.msra.mxu0 0
        %3811 = vmatprep.mubr.bf16.mxu0 %v3716
        %3812 = vmatmul.mubr.bf16.gmra.mrb[0].mxu0 %v3715
        %v3813 = vpop.f32.mrb[0].mxu0
        %v3814 = vadd.f32 0.0, %v3813
        %v3815 = vpop.f32.mrb[0].mxu0
        %v3816 = vpop.f32.mrb[0].mxu0
        %v3817 = vadd.f32 0.0, %v3816
        %v3818 = vpop.f32.mrb[0].mxu0
        %3819 = vmatprep.mubr.bf16.mxu0 %v3718
        %3820 = vmatmul.mubr.bf16.gmra.mrb[0].mxu0 %v3717
        %v3821 = vpop.f32.mrb[0].mxu0
        %v3822 = vadd.f32 0.0, %v3821
        %v3823 = vpop.f32.mrb[0].mxu0
        %v3824 = vpop.f32.mrb[0].mxu0
        %v3825 = vadd.f32 0.0, %v3824
        %v3826 = vpop.f32.mrb[0].mxu0
        %3827 = vmatprep.mubr.bf16.mxu0 %v3720
        %3828 = vmatmul.mubr.bf16.gmra.mrb[0].mxu0 %v3719
        %v3829 = vpop.f32.mrb[0].mxu0
        %v3830 = vadd.f32 0.0, %v3829
        %v3831 = vpop.f32.mrb[0].mxu0
        %v3832 = vpop.f32.mrb[0].mxu0
        %v3833 = vadd.f32 0.0, %v3832
        %v3834 = vpop.f32.mrb[0].mxu0
        %3835 = vmatprep.mubr.bf16.mxu0 %v3722
        %3836 = vmatmul.mubr.bf16.gmra.mrb[0].mxu0 %v3721
        %v3837 = vpop.f32.mrb[0].mxu0
        %v3838 = vadd.f32 0.0, %v3837
        %v3839 = vpop.f32.mrb[0].mxu0
        %v3840 = vpop.f32.mrb[0].mxu0
        %v3841 = vadd.f32 0.0, %v3840
        %v3842 = vpop.f32.mrb[0].mxu0
        %3843 = vmatprep.mubr.bf16.mxu0 %v3724
        %3844 = vmatmul.mubr.bf16.gmra.mrb[0].mxu0 %v3723
        %v3845 = vpop.f32.mrb[0].mxu0
        %v3846 = vadd.f32 0.0, %v3845
        %v3847 = vpop.f32.mrb[0].mxu0
        %v3848 = vpop.f32.mrb[0].mxu0
        %v3849 = vadd.f32 0.0, %v3848
        %v3850 = vpop.f32.mrb[0].mxu0
        %3851 = vmatprep.mubr.bf16.mxu0 %v3726
        %3852 = vmatmul.mubr.bf16.gmra.mrb[0].mxu0 %v3725
        %v3853 = vpop.f32.mrb[0].mxu0
        %v3854 = vadd.f32 0.0, %v3853
        %v3855 = vpop.f32.mrb[0].mxu0
        %v3856 = vpop.f32.mrb[0].mxu0
        %v3857 = vadd.f32 0.0, %v3856
        %v3858 = vpop.f32.mrb[0].mxu0
        %3859 = vmatprep.mubr.bf16.mxu0 %v3728
        %3860 = vmatmul.mubr.bf16.gmra.mrb[0].mxu0 %v3727
        %v3861 = vpop.f32.mrb[0].mxu0
        %v3862 = vadd.f32 0.0, %v3861
        %v3863 = vpop.f32.mrb[0].mxu0
        %v3864 = vpop.f32.mrb[0].mxu0
        %v3865 = vadd.f32 0.0, %v3864
        %v3866 = vpop.f32.mrb[0].mxu0
        %3867 = vmatprep.mubr.bf16.mxu0 %v3730
        %3868 = vmatmul.mubr.bf16.gmra.mrb[0].mxu0 %v3729
        %v3869 = vpop.f32.mrb[0].mxu0
        %v3870 = vadd.f32 0.0, %v3869
        %v3871 = vpop.f32.mrb[0].mxu0
        %v3872 = vpop.f32.mrb[0].mxu0
        %v3873 = vadd.f32 0.0, %v3872
        %v3874 = vpop.f32.mrb[0].mxu0
        %3875 = vdwg.mxu0
        %3876 = vmatprep.subr.bf16.mxu0 %v2195
        %3877 = vmatpush1.bf16.xpose.msra.mxu0 %v2194
        %3878 = vmatprep.subr.bf16.mxu0 %v2197
        %3879 = vmatpush1.bf16.xpose.msra.mxu0 %v2196
        %3880 = vmatprep.subr.bf16.mxu0 0
        %3881 = vmatpush1.bf16.xpose.msra.mxu0 0
        %3882 = vmatprep.subr.bf16.mxu0 0
        %3883 = vmatpush1.bf16.xpose.msra.mxu0 0
        %3884 = vmatprep.subr.bf16.mxu0 0
        %3885 = vmatpush1.bf16.xpose.msra.mxu0 0
        %3886 = vmatprep.subr.bf16.mxu0 0
        %3887 = vmatpush1.bf16.xpose.msra.mxu0 0
        %3888 = vmatprep.subr.bf16.mxu0 0
        %3889 = vmatpush1.bf16.xpose.msra.mxu0 0
        %3890 = vmatprep.subr.bf16.mxu0 0
        %3891 = vmatpush1.bf16.xpose.msra.mxu0 0
        %3892 = vmatprep.subr.bf16.mxu0 0
        %3893 = vmatpush1.bf16.xpose.msra.mxu0 0
        %3894 = vmatprep.subr.bf16.mxu0 0
        %3895 = vmatpush1.bf16.xpose.msra.mxu0 0
        %3896 = vmatprep.subr.bf16.mxu0 0
        %3897 = vmatpush1.bf16.xpose.msra.mxu0 0
        %3898 = vmatprep.subr.bf16.mxu0 0
        %3899 = vmatpush1.bf16.xpose.msra.mxu0 0
        %3900 = vmatprep.subr.bf16.mxu0 0
        %3901 = vmatpush1.bf16.xpose.msra.mxu0 0
        %3902 = vmatprep.subr.bf16.mxu0 0
        %3903 = vmatpush1.bf16.xpose.msra.mxu0 0
        %3904 = vmatprep.subr.bf16.mxu0 0
        %3905 = vmatpush1.bf16.xpose.msra.mxu0 0
        %3906 = vmatprep.subr.bf16.mxu0 0
        %3907 = vmatpush1.bf16.xpose.msra.mxu0 0
        %3908 = vmatprep.mubr.bf16.mxu0 %v3732
        %3909 = vmatmul.mubr.bf16.gmra.mrb[0].mxu0 %v3731
        %v3910 = vpop.f32.mrb[0].mxu0
        %v3911 = vadd.f32 0.0, %v3910
        %v3912 = vpop.f32.mrb[0].mxu0
        %v3913 = vpop.f32.mrb[0].mxu0
        %v3914 = vadd.f32 0.0, %v3913
        %v3915 = vpop.f32.mrb[0].mxu0
        %3916 = vmatprep.mubr.bf16.mxu0 %v3734
        %3917 = vmatmul.mubr.bf16.gmra.mrb[0].mxu0 %v3733
        %v3918 = vpop.f32.mrb[0].mxu0
        %v3919 = vadd.f32 0.0, %v3918
        %v3920 = vpop.f32.mrb[0].mxu0
        %v3921 = vpop.f32.mrb[0].mxu0
        %v3922 = vadd.f32 0.0, %v3921
        %v3923 = vpop.f32.mrb[0].mxu0
        %3924 = vmatprep.mubr.bf16.mxu0 %v3736
        %3925 = vmatmul.mubr.bf16.gmra.mrb[0].mxu0 %v3735
        %v3926 = vpop.f32.mrb[0].mxu0
        %v3927 = vadd.f32 0.0, %v3926
        %v3928 = vpop.f32.mrb[0].mxu0
        %v3929 = vpop.f32.mrb[0].mxu0
        %v3930 = vadd.f32 0.0, %v3929
        %v3931 = vpop.f32.mrb[0].mxu0
        %3932 = vmatprep.mubr.bf16.mxu0 %v3738
        %3933 = vmatmul.mubr.bf16.gmra.mrb[0].mxu0 %v3737
        %v3934 = vpop.f32.mrb[0].mxu0
        %v3935 = vadd.f32 0.0, %v3934
        %v3936 = vpop.f32.mrb[0].mxu0
        %v3937 = vpop.f32.mrb[0].mxu0
        %v3938 = vadd.f32 0.0, %v3937
        %v3939 = vpop.f32.mrb[0].mxu0
        %3940 = vmatprep.mubr.bf16.mxu0 %v3740
        %3941 = vmatmul.mubr.bf16.gmra.mrb[0].mxu0 %v3739
        %v3942 = vpop.f32.mrb[0].mxu0
        %v3943 = vadd.f32 0.0, %v3942
        %v3944 = vpop.f32.mrb[0].mxu0
        %v3945 = vpop.f32.mrb[0].mxu0
        %v3946 = vadd.f32 0.0, %v3945
        %v3947 = vpop.f32.mrb[0].mxu0
        %3948 = vmatprep.mubr.bf16.mxu0 %v3742
        %3949 = vmatmul.mubr.bf16.gmra.mrb[0].mxu0 %v3741
        %v3950 = vpop.f32.mrb[0].mxu0
        %v3951 = vadd.f32 0.0, %v3950
        %v3952 = vpop.f32.mrb[0].mxu0
        %v3953 = vpop.f32.mrb[0].mxu0
        %v3954 = vadd.f32 0.0, %v3953
        %v3955 = vpop.f32.mrb[0].mxu0
        %3956 = vmatprep.mubr.bf16.mxu0 %v3744
        %3957 = vmatmul.mubr.bf16.gmra.mrb[0].mxu0 %v3743
        %v3958 = vpop.f32.mrb[0].mxu0
        %v3959 = vadd.f32 0.0, %v3958
        %v3960 = vpop.f32.mrb[0].mxu0
        %v3961 = vpop.f32.mrb[0].mxu0
        %v3962 = vadd.f32 0.0, %v3961
        %v3963 = vpop.f32.mrb[0].mxu0
        %3964 = vmatprep.mubr.bf16.mxu0 %v3746
        %3965 = vmatmul.mubr.bf16.gmra.mrb[0].mxu0 %v3745
        %v3966 = vpop.f32.mrb[0].mxu0
        %v3967 = vadd.f32 0.0, %v3966
        %v3968 = vpop.f32.mrb[0].mxu0
        %v3969 = vpop.f32.mrb[0].mxu0
        %v3970 = vadd.f32 0.0, %v3969
        %v3971 = vpop.f32.mrb[0].mxu0
        %3972 = vdwg.mxu0
        %3973 = vmatprep.subr.bf16.mxu0 %v2199
        %3974 = vmatpush1.bf16.xpose.msra.mxu0 %v2198
        %3975 = vmatprep.subr.bf16.mxu0 %v2201
        %3976 = vmatpush1.bf16.xpose.msra.mxu0 %v2200
        %3977 = vmatprep.subr.bf16.mxu0 0
        %3978 = vmatpush1.bf16.xpose.msra.mxu0 0
        %3979 = vmatprep.subr.bf16.mxu0 0
        %3980 = vmatpush1.bf16.xpose.msra.mxu0 0
        %3981 = vmatprep.subr.bf16.mxu0 0
        %3982 = vmatpush1.bf16.xpose.msra.mxu0 0
        %3983 = vmatprep.subr.bf16.mxu0 0
        %3984 = vmatpush1.bf16.xpose.msra.mxu0 0
        %3985 = vmatprep.subr.bf16.mxu0 0
        %3986 = vmatpush1.bf16.xpose.msra.mxu0 0
        %3987 = vmatprep.subr.bf16.mxu0 0
        %3988 = vmatpush1.bf16.xpose.msra.mxu0 0
        %3989 = vmatprep.subr.bf16.mxu0 0
        %3990 = vmatpush1.bf16.xpose.msra.mxu0 0
        %3991 = vmatprep.subr.bf16.mxu0 0
        %3992 = vmatpush1.bf16.xpose.msra.mxu0 0
        %3993 = vmatprep.subr.bf16.mxu0 0
        %3994 = vmatpush1.bf16.xpose.msra.mxu0 0
        %3995 = vmatprep.subr.bf16.mxu0 0
        %3996 = vmatpush1.bf16.xpose.msra.mxu0 0
        %3997 = vmatprep.subr.bf16.mxu0 0
        %3998 = vmatpush1.bf16.xpose.msra.mxu0 0
        %3999 = vmatprep.subr.bf16.mxu0 0
        %4000 = vmatpush1.bf16.xpose.msra.mxu0 0
        %4001 = vmatprep.subr.bf16.mxu0 0
        %4002 = vmatpush1.bf16.xpose.msra.mxu0 0
        %4003 = vmatprep.subr.bf16.mxu0 0
        %4004 = vmatpush1.bf16.xpose.msra.mxu0 0
        %4005 = vmatprep.mubr.bf16.mxu0 %v3748
        %4006 = vmatmul.mubr.bf16.gmra.mrb[0].mxu0 %v3747
        %v4007 = vpop.f32.mrb[0].mxu0
        %v4008 = vadd.f32 0.0, %v4007
        %v4009 = vpop.f32.mrb[0].mxu0
        %v4010 = vpop.f32.mrb[0].mxu0
        %v4011 = vadd.f32 0.0, %v4010
        %v4012 = vpop.f32.mrb[0].mxu0
        %4013 = vmatprep.mubr.bf16.mxu0 %v3750
        %4014 = vmatmul.mubr.bf16.gmra.mrb[0].mxu0 %v3749
        %v4015 = vpop.f32.mrb[0].mxu0
        %v4016 = vadd.f32 0.0, %v4015
        %v4017 = vpop.f32.mrb[0].mxu0
        %v4018 = vpop.f32.mrb[0].mxu0
        %v4019 = vadd.f32 0.0, %v4018
        %v4020 = vpop.f32.mrb[0].mxu0
        %4021 = vmatprep.mubr.bf16.mxu0 %v3752
        %4022 = vmatmul.mubr.bf16.gmra.mrb[0].mxu0 %v3751
        %v4023 = vpop.f32.mrb[0].mxu0
        %v4024 = vadd.f32 0.0, %v4023
        %v4025 = vpop.f32.mrb[0].mxu0
        %v4026 = vpop.f32.mrb[0].mxu0
        %v4027 = vadd.f32 0.0, %v4026
        %v4028 = vpop.f32.mrb[0].mxu0
        %4029 = vmatprep.mubr.bf16.mxu0 %v3754
        %4030 = vmatmul.mubr.bf16.gmra.mrb[0].mxu0 %v3753
        %v4031 = vpop.f32.mrb[0].mxu0
        %v4032 = vadd.f32 0.0, %v4031
        %v4033 = vpop.f32.mrb[0].mxu0
        %v4034 = vpop.f32.mrb[0].mxu0
        %v4035 = vadd.f32 0.0, %v4034
        %v4036 = vpop.f32.mrb[0].mxu0
        %4037 = vmatprep.mubr.bf16.mxu0 %v3756
        %4038 = vmatmul.mubr.bf16.gmra.mrb[0].mxu0 %v3755
        %v4039 = vpop.f32.mrb[0].mxu0
        %v4040 = vadd.f32 0.0, %v4039
        %v4041 = vpop.f32.mrb[0].mxu0
        %v4042 = vpop.f32.mrb[0].mxu0
        %v4043 = vadd.f32 0.0, %v4042
        %v4044 = vpop.f32.mrb[0].mxu0
        %4045 = vmatprep.mubr.bf16.mxu0 %v3758
        %4046 = vmatmul.mubr.bf16.gmra.mrb[0].mxu0 %v3757
        %v4047 = vpop.f32.mrb[0].mxu0
        %v4048 = vadd.f32 0.0, %v4047
        %v4049 = vpop.f32.mrb[0].mxu0
        %v4050 = vpop.f32.mrb[0].mxu0
        %v4051 = vadd.f32 0.0, %v4050
        %v4052 = vpop.f32.mrb[0].mxu0
        %4053 = vmatprep.mubr.bf16.mxu0 %v3760
        %4054 = vmatmul.mubr.bf16.gmra.mrb[0].mxu0 %v3759
        %v4055 = vpop.f32.mrb[0].mxu0
        %v4056 = vadd.f32 0.0, %v4055
        %v4057 = vpop.f32.mrb[0].mxu0
        %v4058 = vpop.f32.mrb[0].mxu0
        %v4059 = vadd.f32 0.0, %v4058
        %v4060 = vpop.f32.mrb[0].mxu0
        %4061 = vmatprep.mubr.bf16.mxu0 %v3762
        %4062 = vmatmul.mubr.bf16.gmra.mrb[0].mxu0 %v3761
        %v4063 = vpop.f32.mrb[0].mxu0
        %v4064 = vadd.f32 0.0, %v4063
        %v4065 = vpop.f32.mrb[0].mxu0
        %v4066 = vpop.f32.mrb[0].mxu0
        %v4067 = vadd.f32 0.0, %v4066
        %v4068 = vpop.f32.mrb[0].mxu0
        %4069 = vdwg.mxu0
        %4070 = vmatprep.subr.bf16.mxu0 %v2203
        %4071 = vmatpush1.bf16.xpose.msra.mxu0 %v2202
        %4072 = vmatprep.subr.bf16.mxu0 %v2205
        %4073 = vmatpush1.bf16.xpose.msra.mxu0 %v2204
        %4074 = vmatprep.subr.bf16.mxu0 0
        %4075 = vmatpush1.bf16.xpose.msra.mxu0 0
        %4076 = vmatprep.subr.bf16.mxu0 0
        %4077 = vmatpush1.bf16.xpose.msra.mxu0 0
        %4078 = vmatprep.subr.bf16.mxu0 0
        %4079 = vmatpush1.bf16.xpose.msra.mxu0 0
        %4080 = vmatprep.subr.bf16.mxu0 0
        %4081 = vmatpush1.bf16.xpose.msra.mxu0 0
        %4082 = vmatprep.subr.bf16.mxu0 0
        %4083 = vmatpush1.bf16.xpose.msra.mxu0 0
        %4084 = vmatprep.subr.bf16.mxu0 0
        %4085 = vmatpush1.bf16.xpose.msra.mxu0 0
        %4086 = vmatprep.subr.bf16.mxu0 0
        %4087 = vmatpush1.bf16.xpose.msra.mxu0 0
        %4088 = vmatprep.subr.bf16.mxu0 0
        %4089 = vmatpush1.bf16.xpose.msra.mxu0 0
        %4090 = vmatprep.subr.bf16.mxu0 0
        %4091 = vmatpush1.bf16.xpose.msra.mxu0 0
        %4092 = vmatprep.subr.bf16.mxu0 0
        %4093 = vmatpush1.bf16.xpose.msra.mxu0 0
        %4094 = vmatprep.subr.bf16.mxu0 0
        %4095 = vmatpush1.bf16.xpose.msra.mxu0 0
        %4096 = vmatprep.subr.bf16.mxu0 0
        %4097 = vmatpush1.bf16.xpose.msra.mxu0 0
        %4098 = vmatprep.subr.bf16.mxu0 0
        %4099 = vmatpush1.bf16.xpose.msra.mxu0 0
        %4100 = vmatprep.subr.bf16.mxu0 0
        %4101 = vmatpush1.bf16.xpose.msra.mxu0 0
        %4102 = vmatprep.mubr.bf16.mxu0 %v3764
        %4103 = vmatmul.mubr.bf16.gmra.mrb[0].mxu0 %v3763
        %v4104 = vpop.f32.mrb[0].mxu0
        %v4105 = vadd.f32 0.0, %v4104
        %v4106 = vpop.f32.mrb[0].mxu0
        %v4107 = vpop.f32.mrb[0].mxu0
        %v4108 = vadd.f32 0.0, %v4107
        %v4109 = vpop.f32.mrb[0].mxu0
        %4110 = vmatprep.mubr.bf16.mxu0 %v3766
        %4111 = vmatmul.mubr.bf16.gmra.mrb[0].mxu0 %v3765
        %v4112 = vpop.f32.mrb[0].mxu0
        %v4113 = vadd.f32 0.0, %v4112
        %v4114 = vpop.f32.mrb[0].mxu0
        %v4115 = vpop.f32.mrb[0].mxu0
        %v4116 = vadd.f32 0.0, %v4115
        %v4117 = vpop.f32.mrb[0].mxu0
        %4118 = vmatprep.mubr.bf16.mxu0 %v3768
        %4119 = vmatmul.mubr.bf16.gmra.mrb[0].mxu0 %v3767
        %v4120 = vpop.f32.mrb[0].mxu0
        %v4121 = vadd.f32 0.0, %v4120
        %v4122 = vpop.f32.mrb[0].mxu0
        %v4123 = vpop.f32.mrb[0].mxu0
        %v4124 = vadd.f32 0.0, %v4123
        %v4125 = vpop.f32.mrb[0].mxu0
        %4126 = vmatprep.mubr.bf16.mxu0 %v3770
        %4127 = vmatmul.mubr.bf16.gmra.mrb[0].mxu0 %v3769
        %v4128 = vpop.f32.mrb[0].mxu0
        %v4129 = vadd.f32 0.0, %v4128
        %v4130 = vpop.f32.mrb[0].mxu0
        %v4131 = vpop.f32.mrb[0].mxu0
        %v4132 = vadd.f32 0.0, %v4131
        %v4133 = vpop.f32.mrb[0].mxu0
        %4134 = vmatprep.mubr.bf16.mxu0 %v3772
        %4135 = vmatmul.mubr.bf16.gmra.mrb[0].mxu0 %v3771
        %v4136 = vpop.f32.mrb[0].mxu0
        %v4137 = vadd.f32 0.0, %v4136
        %v4138 = vpop.f32.mrb[0].mxu0
        %v4139 = vpop.f32.mrb[0].mxu0
        %v4140 = vadd.f32 0.0, %v4139
        %v4141 = vpop.f32.mrb[0].mxu0
        %4142 = vmatprep.mubr.bf16.mxu0 %v3774
        %4143 = vmatmul.mubr.bf16.gmra.mrb[0].mxu0 %v3773
        %v4144 = vpop.f32.mrb[0].mxu0
        %v4145 = vadd.f32 0.0, %v4144
        %v4146 = vpop.f32.mrb[0].mxu0
        %v4147 = vpop.f32.mrb[0].mxu0
        %v4148 = vadd.f32 0.0, %v4147
        %v4149 = vpop.f32.mrb[0].mxu0
        %4150 = vmatprep.mubr.bf16.mxu0 %v3776
        %4151 = vmatmul.mubr.bf16.gmra.mrb[0].mxu0 %v3775
        %v4152 = vpop.f32.mrb[0].mxu0
        %v4153 = vadd.f32 0.0, %v4152
        %v4154 = vpop.f32.mrb[0].mxu0
        %v4155 = vpop.f32.mrb[0].mxu0
        %v4156 = vadd.f32 0.0, %v4155
        %v4157 = vpop.f32.mrb[0].mxu0
        %4158 = vmatprep.mubr.bf16.mxu0 %v3778
        %4159 = vmatmul.mubr.bf16.gmra.mrb[0].mxu0 %v3777
        %v4160 = vpop.f32.mrb[0].mxu0
        %v4161 = vadd.f32 0.0, %v4160
        %v4162 = vpop.f32.mrb[0].mxu0
        %v4163 = vpop.f32.mrb[0].mxu0
        %v4164 = vadd.f32 0.0, %v4163
        %v4165 = vpop.f32.mrb[0].mxu0
        %4166 = vdwg.mxu0
        %4183 = vrot.lane.b32.xlu0 %v3911, 32
        %v4184 = vpop.permute.xlu0 %4183
        %4185 = vrot.lane.b32.xlu0 %v3914, 32
        %v4186 = vpop.permute.xlu0 %4185
        %4187 = vrot.lane.b32.xlu0 %v3919, 32
        %v4188 = vpop.permute.xlu0 %4187
        %4189 = vrot.lane.b32.xlu0 %v3922, 32
        %v4190 = vpop.permute.xlu0 %4189
        %4191 = vrot.lane.b32.xlu0 %v3927, 32
        %v4192 = vpop.permute.xlu0 %4191
        %4193 = vrot.lane.b32.xlu0 %v3930, 32
        %v4194 = vpop.permute.xlu0 %4193
        %4195 = vrot.lane.b32.xlu0 %v3935, 32
        %v4196 = vpop.permute.xlu0 %4195
        %4197 = vrot.lane.b32.xlu0 %v3938, 32
        %v4198 = vpop.permute.xlu0 %4197
        %4199 = vrot.lane.b32.xlu0 %v3943, 32
        %v4200 = vpop.permute.xlu0 %4199
        %4201 = vrot.lane.b32.xlu0 %v3946, 32
        %v4202 = vpop.permute.xlu0 %4201
        %4203 = vrot.lane.b32.xlu0 %v3951, 32
        %v4204 = vpop.permute.xlu0 %4203
        %4205 = vrot.lane.b32.xlu0 %v3954, 32
        %v4206 = vpop.permute.xlu0 %4205
        %4207 = vrot.lane.b32.xlu0 %v3959, 32
        %v4208 = vpop.permute.xlu0 %4207
        %4209 = vrot.lane.b32.xlu0 %v3962, 32
        %v4210 = vpop.permute.xlu0 %4209
        %4211 = vrot.lane.b32.xlu0 %v3967, 32
        %v4212 = vpop.permute.xlu0 %4211
        %4213 = vrot.lane.b32.xlu0 %v3970, 32
        %v4214 = vpop.permute.xlu0 %4213
        %4247 = vrot.lane.b32.xlu0 %v4008, 64
        %v4248 = vpop.permute.xlu0 %4247
        %4249 = vrot.lane.b32.xlu0 %v4011, 64
        %v4250 = vpop.permute.xlu0 %4249
        %4251 = vrot.lane.b32.xlu0 %v4016, 64
        %v4252 = vpop.permute.xlu0 %4251
        %4253 = vrot.lane.b32.xlu0 %v4019, 64
        %v4254 = vpop.permute.xlu0 %4253
        %4255 = vrot.lane.b32.xlu0 %v4024, 64
        %v4256 = vpop.permute.xlu0 %4255
        %4257 = vrot.lane.b32.xlu0 %v4027, 64
        %v4258 = vpop.permute.xlu0 %4257
        %4259 = vrot.lane.b32.xlu0 %v4032, 64
        %v4260 = vpop.permute.xlu0 %4259
        %4261 = vrot.lane.b32.xlu0 %v4035, 64
        %v4262 = vpop.permute.xlu0 %4261
        %4263 = vrot.lane.b32.xlu0 %v4040, 64
        %v4264 = vpop.permute.xlu0 %4263
        %4265 = vrot.lane.b32.xlu0 %v4043, 64
        %v4266 = vpop.permute.xlu0 %4265
        %4267 = vrot.lane.b32.xlu0 %v4048, 64
        %v4268 = vpop.permute.xlu0 %4267
        %4269 = vrot.lane.b32.xlu0 %v4051, 64
        %v4270 = vpop.permute.xlu0 %4269
        %4271 = vrot.lane.b32.xlu0 %v4056, 64
        %v4272 = vpop.permute.xlu0 %4271
        %4273 = vrot.lane.b32.xlu0 %v4059, 64
        %v4274 = vpop.permute.xlu0 %4273
        %4275 = vrot.lane.b32.xlu0 %v4064, 64
        %v4276 = vpop.permute.xlu0 %4275
        %4277 = vrot.lane.b32.xlu0 %v4067, 64
        %v4278 = vpop.permute.xlu0 %4277
        %4311 = vrot.lane.b32.xlu0 %v4105, 96
        %v4312 = vpop.permute.xlu0 %4311
        %4313 = vrot.lane.b32.xlu0 %v4108, 96
        %v4314 = vpop.permute.xlu0 %4313
        %4315 = vrot.lane.b32.xlu0 %v4113, 96
        %v4316 = vpop.permute.xlu0 %4315
        %4317 = vrot.lane.b32.xlu0 %v4116, 96
        %v4318 = vpop.permute.xlu0 %4317
        %4319 = vrot.lane.b32.xlu0 %v4121, 96
        %v4320 = vpop.permute.xlu0 %4319
        %4321 = vrot.lane.b32.xlu0 %v4124, 96
        %v4322 = vpop.permute.xlu0 %4321
        %4323 = vrot.lane.b32.xlu0 %v4129, 96
        %v4324 = vpop.permute.xlu0 %4323
        %4325 = vrot.lane.b32.xlu0 %v4132, 96
        %v4326 = vpop.permute.xlu0 %4325
        %4327 = vrot.lane.b32.xlu0 %v4137, 96
        %v4328 = vpop.permute.xlu0 %4327
        %4329 = vrot.lane.b32.xlu0 %v4140, 96
        %v4330 = vpop.permute.xlu0 %4329
        %4331 = vrot.lane.b32.xlu0 %v4145, 96
        %v4332 = vpop.permute.xlu0 %4331
        %4333 = vrot.lane.b32.xlu0 %v4148, 96
        %v4334 = vpop.permute.xlu0 %4333
        %4335 = vrot.lane.b32.xlu0 %v4153, 96
        %v4336 = vpop.permute.xlu0 %4335
        %4337 = vrot.lane.b32.xlu0 %v4156, 96
        %v4338 = vpop.permute.xlu0 %4337
        %4339 = vrot.lane.b32.xlu0 %v4161, 96
        %v4340 = vpop.permute.xlu0 %4339
        %4341 = vrot.lane.b32.xlu0 %v4164, 96
        %v4342 = vpop.permute.xlu0 %4341
        %v4359 = vsel %vm2206, %v3814, %v4184
        %v4360 = vsel %vm2206, %v3817, %v4186
        %v4361 = vsel %vm2206, %v3822, %v4188
        %v4362 = vsel %vm2206, %v3825, %v4190
        %v4363 = vsel %vm2206, %v3830, %v4192
        %v4364 = vsel %vm2206, %v3833, %v4194
        %v4365 = vsel %vm2206, %v3838, %v4196
        %v4366 = vsel %vm2206, %v3841, %v4198
        %v4367 = vsel %vm2206, %v3846, %v4200
        %v4368 = vsel %vm2206, %v3849, %v4202
        %v4369 = vsel %vm2206, %v3854, %v4204
        %v4370 = vsel %vm2206, %v3857, %v4206
        %v4371 = vsel %vm2206, %v3862, %v4208
        %v4372 = vsel %vm2206, %v3865, %v4210
        %v4373 = vsel %vm2206, %v3870, %v4212
        %v4374 = vsel %vm2206, %v3873, %v4214
        %vm4375 = vcmask 523264
        %v4376 = vsel %vm4375, %v4359, %v4248
        %v4377 = vsel %vm4375, %v4360, %v4250
        %v4378 = vsel %vm4375, %v4361, %v4252
        %v4379 = vsel %vm4375, %v4362, %v4254
        %v4380 = vsel %vm4375, %v4363, %v4256
        %v4381 = vsel %vm4375, %v4364, %v4258
        %v4382 = vsel %vm4375, %v4365, %v4260
        %v4383 = vsel %vm4375, %v4366, %v4262
        %v4384 = vsel %vm4375, %v4367, %v4264
        %v4385 = vsel %vm4375, %v4368, %v4266
        %v4386 = vsel %vm4375, %v4369, %v4268
        %v4387 = vsel %vm4375, %v4370, %v4270
        %v4388 = vsel %vm4375, %v4371, %v4272
        %v4389 = vsel %vm4375, %v4372, %v4274
        %v4390 = vsel %vm4375, %v4373, %v4276
        %v4391 = vsel %vm4375, %v4374, %v4278
        %vm4392 = vcmask 785408
        %v4393 = vsel %vm4392, %v4376, %v4312
        %v4394 = vsel %vm4392, %v4377, %v4314
        %v4395 = vsel %vm4392, %v4378, %v4316
        %v4396 = vsel %vm4392, %v4379, %v4318
        %v4397 = vsel %vm4392, %v4380, %v4320
        %v4398 = vsel %vm4392, %v4381, %v4322
        %v4399 = vsel %vm4392, %v4382, %v4324
        %v4400 = vsel %vm4392, %v4383, %v4326
        %v4401 = vsel %vm4392, %v4384, %v4328
        %v4402 = vsel %vm4392, %v4385, %v4330
        %v4403 = vsel %vm4392, %v4386, %v4332
        %v4404 = vsel %vm4392, %v4387, %v4334
        %v4405 = vsel %vm4392, %v4388, %v4336
        %v4406 = vsel %vm4392, %v4389, %v4338
        %v4407 = vsel %vm4392, %v4390, %v4340
        %v4408 = vsel %vm4392, %v4391, %v4342
        %v4409 = vpack.c.bf16 %v4394, %v4393
        %v4410 = vpack.c.bf16 %v4396, %v4395
        %v4411 = vpack.c.bf16 %v4398, %v4397
        %v4412 = vpack.c.bf16 %v4400, %v4399
        %v4413 = vpack.c.bf16 %v4402, %v4401
        %v4414 = vpack.c.bf16 %v4404, %v4403
        %v4415 = vpack.c.bf16 %v4406, %v4405
        %v4416 = vpack.c.bf16 %v4408, %v4407
        %v4418 = vlaneseq
        %v4419 = vshrl.u32 %v4418, 7
        %v4420 = vsub.s32 0, %v4419
        %v4421 = vrot.slane %v1908, %v4420
        %v4439 = vunpack.c.l.b16 %v1892
        %v4440 = vunpack.c.l.b16 %v1893
        %v4441 = vunpack.c.l.b16 %v1894
        %v4442 = vunpack.c.l.b16 %v1895
        %v4443 = vunpack.c.l.b16 %v1896
        %v4444 = vunpack.c.l.b16 %v1897
        %v4445 = vunpack.c.l.b16 %v1898
        %v4446 = vunpack.c.l.b16 %v1899
        %v4447 = vunpack.c.l.b16 %v1900
        %v4448 = vunpack.c.l.b16 %v1901
        %v4449 = vunpack.c.l.b16 %v1902
        %v4450 = vunpack.c.l.b16 %v1903
        %v4451 = vunpack.c.l.b16 %v1904
        %v4452 = vunpack.c.l.b16 %v1905
        %v4453 = vunpack.c.l.b16 %v1906
        %v4454 = vunpack.c.l.b16 %v1907
        %v4455 = vpack.c.b16 %v4440, %v4439
        %v4456 = vpack.c.b16 %v4442, %v4441
        %v4457 = vpack.c.b16 %v4444, %v4443
        %v4458 = vpack.c.b16 %v4446, %v4445
        %v4459 = vpack.c.b16 %v4448, %v4447
        %v4460 = vpack.c.b16 %v4450, %v4449
        %v4461 = vpack.c.b16 %v4452, %v4451
        %v4462 = vpack.c.b16 %v4454, %v4453
        %4471 = vmatprep.subr.bf16.mxu0 0
        %4472 = vmatpush1.bf16.msra.mxu0 %v4455
        %4473 = vmatprep.subr.bf16.mxu0 0
        %4474 = vmatpush1.bf16.msra.mxu0 %v4456
        %4475 = vmatprep.subr.bf16.mxu0 0
        %4476 = vmatpush1.bf16.msra.mxu0 %v4457
        %4477 = vmatprep.subr.bf16.mxu0 0
        %4478 = vmatpush1.bf16.msra.mxu0 %v4458
        %4479 = vmatprep.subr.bf16.mxu0 0
        %4480 = vmatpush1.bf16.msra.mxu0 %v4459
        %4481 = vmatprep.subr.bf16.mxu0 0
        %4482 = vmatpush1.bf16.msra.mxu0 %v4460
        %4483 = vmatprep.subr.bf16.mxu0 0
        %4484 = vmatpush1.bf16.msra.mxu0 %v4461
        %4485 = vmatprep.subr.bf16.mxu0 0
        %4486 = vmatpush1.bf16.msra.mxu0 %v4462
        %4487 = vmatprep.subr.bf16.mxu0 0
        %4488 = vmatpush1.bf16.msra.mxu0 0
        %4489 = vmatprep.subr.bf16.mxu0 0
        %4490 = vmatpush1.bf16.msra.mxu0 0
        %4491 = vmatprep.subr.bf16.mxu0 0
        %4492 = vmatpush1.bf16.msra.mxu0 0
        %4493 = vmatprep.subr.bf16.mxu0 0
        %4494 = vmatpush1.bf16.msra.mxu0 0
        %4495 = vmatprep.subr.bf16.mxu0 0
        %4496 = vmatpush1.bf16.msra.mxu0 0
        %4497 = vmatprep.subr.bf16.mxu0 0
        %4498 = vmatpush1.bf16.msra.mxu0 0
        %4499 = vmatprep.subr.bf16.mxu0 0
        %4500 = vmatpush1.bf16.msra.mxu0 0
        %4501 = vmatprep.subr.bf16.mxu0 0
        %4502 = vmatpush1.bf16.msra.mxu0 0
        %4503 = vmatprep.mubr.bf16.mxu0 0
        %4504 = vmatmul.mubr.bf16.gmra.mrb[0].mxu0 %v4409
        %v4505 = vpop.f32.mrb[0].mxu0
        %v4506 = vadd.f32 %v4421, %v4505
        %v4507 = vpop.f32.mrb[0].mxu0
        %v4508 = vpop.f32.mrb[0].mxu0
        %v4509 = vadd.f32 %v4421, %v4508
        %v4510 = vpop.f32.mrb[0].mxu0
        %4511 = vmatprep.mubr.bf16.mxu0 0
        %4512 = vmatmul.mubr.bf16.gmra.mrb[0].mxu0 %v4410
        %v4513 = vpop.f32.mrb[0].mxu0
        %v4514 = vadd.f32 %v4421, %v4513
        %v4515 = vpop.f32.mrb[0].mxu0
        %v4516 = vpop.f32.mrb[0].mxu0
        %v4517 = vadd.f32 %v4421, %v4516
        %v4518 = vpop.f32.mrb[0].mxu0
        %4519 = vmatprep.mubr.bf16.mxu0 0
        %4520 = vmatmul.mubr.bf16.gmra.mrb[0].mxu0 %v4411
        %v4521 = vpop.f32.mrb[0].mxu0
        %v4522 = vadd.f32 %v4421, %v4521
        %v4523 = vpop.f32.mrb[0].mxu0
        %v4524 = vpop.f32.mrb[0].mxu0
        %v4525 = vadd.f32 %v4421, %v4524
        %v4526 = vpop.f32.mrb[0].mxu0
        %4527 = vmatprep.mubr.bf16.mxu0 0
        %4528 = vmatmul.mubr.bf16.gmra.mrb[0].mxu0 %v4412
        %v4529 = vpop.f32.mrb[0].mxu0
        %v4530 = vadd.f32 %v4421, %v4529
        %v4531 = vpop.f32.mrb[0].mxu0
        %v4532 = vpop.f32.mrb[0].mxu0
        %v4533 = vadd.f32 %v4421, %v4532
        %v4534 = vpop.f32.mrb[0].mxu0
        %4535 = vmatprep.mubr.bf16.mxu0 0
        %4536 = vmatmul.mubr.bf16.gmra.mrb[0].mxu0 %v4413
        %v4537 = vpop.f32.mrb[0].mxu0
        %v4538 = vadd.f32 %v4421, %v4537
        %v4539 = vpop.f32.mrb[0].mxu0
        %v4540 = vpop.f32.mrb[0].mxu0
        %v4541 = vadd.f32 %v4421, %v4540
        %v4542 = vpop.f32.mrb[0].mxu0
        %4543 = vmatprep.mubr.bf16.mxu0 0
        %4544 = vmatmul.mubr.bf16.gmra.mrb[0].mxu0 %v4414
        %v4545 = vpop.f32.mrb[0].mxu0
        %v4546 = vadd.f32 %v4421, %v4545
        %v4547 = vpop.f32.mrb[0].mxu0
        %v4548 = vpop.f32.mrb[0].mxu0
        %v4549 = vadd.f32 %v4421, %v4548
        %v4550 = vpop.f32.mrb[0].mxu0
        %4551 = vmatprep.mubr.bf16.mxu0 0
        %4552 = vmatmul.mubr.bf16.gmra.mrb[0].mxu0 %v4415
        %v4553 = vpop.f32.mrb[0].mxu0
        %v4554 = vadd.f32 %v4421, %v4553
        %v4555 = vpop.f32.mrb[0].mxu0
        %v4556 = vpop.f32.mrb[0].mxu0
        %v4557 = vadd.f32 %v4421, %v4556
        %v4558 = vpop.f32.mrb[0].mxu0
        %4559 = vmatprep.mubr.bf16.mxu0 0
        %4560 = vmatmul.mubr.bf16.gmra.mrb[0].mxu0 %v4416
        %v4561 = vpop.f32.mrb[0].mxu0
        %v4562 = vadd.f32 %v4421, %v4561
        %v4563 = vpop.f32.mrb[0].mxu0
        %v4564 = vpop.f32.mrb[0].mxu0
        %v4565 = vadd.f32 %v4421, %v4564
        %v4566 = vpop.f32.mrb[0].mxu0
        %4567 = vdwg.mxu0
        %v4568 = vadd.f32 %v4506, %v1859
        %v4569 = vadd.f32 %v4509, %v1860
        %v4570 = vadd.f32 %v4514, %v1861
        %v4571 = vadd.f32 %v4517, %v1862
        %v4572 = vadd.f32 %v4522, %v1863
        %v4573 = vadd.f32 %v4525, %v1864
        %v4574 = vadd.f32 %v4530, %v1865
        %v4575 = vadd.f32 %v4533, %v1866
        %v4576 = vadd.f32 %v4538, %v1867
        %v4577 = vadd.f32 %v4541, %v1868
        %v4578 = vadd.f32 %v4546, %v1869
        %v4579 = vadd.f32 %v4549, %v1870
        %v4580 = vadd.f32 %v4554, %v1871
        %v4581 = vadd.f32 %v4557, %v1872
        %v4582 = vadd.f32 %v4562, %v1873
        %v4583 = vadd.f32 %v4565, %v1874
        %4584 = vadd.xlane.f32.xlu0 %v4568
        %v4585 = vpop.xlane.xlu0 %4584
        %4586 = vadd.xlane.f32.xlu0 %v4569
        %v4587 = vpop.xlane.xlu0 %4586
        %4588 = vadd.xlane.f32.xlu0 %v4570
        %v4589 = vpop.xlane.xlu0 %4588
        %4590 = vadd.xlane.f32.xlu0 %v4571
        %v4591 = vpop.xlane.xlu0 %4590
        %4592 = vadd.xlane.f32.xlu0 %v4572
        %v4593 = vpop.xlane.xlu0 %4592
        %4594 = vadd.xlane.f32.xlu0 %v4573
        %v4595 = vpop.xlane.xlu0 %4594
        %4596 = vadd.xlane.f32.xlu0 %v4574
        %v4597 = vpop.xlane.xlu0 %4596
        %4598 = vadd.xlane.f32.xlu0 %v4575
        %v4599 = vpop.xlane.xlu0 %4598
        %4600 = vadd.xlane.f32.xlu0 %v4576
        %v4601 = vpop.xlane.xlu0 %4600
        %4602 = vadd.xlane.f32.xlu0 %v4577
        %v4603 = vpop.xlane.xlu0 %4602
        %4604 = vadd.xlane.f32.xlu0 %v4578
        %v4605 = vpop.xlane.xlu0 %4604
        %4606 = vadd.xlane.f32.xlu0 %v4579
        %v4607 = vpop.xlane.xlu0 %4606
        %4608 = vadd.xlane.f32.xlu0 %v4580
        %v4609 = vpop.xlane.xlu0 %4608
        %4610 = vadd.xlane.f32.xlu0 %v4581
        %v4611 = vpop.xlane.xlu0 %4610
        %4612 = vadd.xlane.f32.xlu0 %v4582
        %v4613 = vpop.xlane.xlu0 %4612
        %4614 = vadd.xlane.f32.xlu0 %v4583
        %v4615 = vpop.xlane.xlu0 %4614
        %v4616 = vrcp.pop 128.0
        %v4617 = vmul.f32 %v4585, %v4616
        %v4618 = vmul.f32 %v4587, %v4616
        %v4619 = vmul.f32 %v4589, %v4616
        %v4620 = vmul.f32 %v4591, %v4616
        %v4621 = vmul.f32 %v4593, %v4616
        %v4622 = vmul.f32 %v4595, %v4616
        %v4623 = vmul.f32 %v4597, %v4616
        %v4624 = vmul.f32 %v4599, %v4616
        %v4625 = vmul.f32 %v4601, %v4616
        %v4626 = vmul.f32 %v4603, %v4616
        %v4627 = vmul.f32 %v4605, %v4616
        %v4628 = vmul.f32 %v4607, %v4616
        %v4629 = vmul.f32 %v4609, %v4616
        %v4630 = vmul.f32 %v4611, %v4616
        %v4631 = vmul.f32 %v4613, %v4616
        %v4632 = vmul.f32 %v4615, %v4616
        %v4633 = vsub.f32 %v4568, %v4617
        %v4634 = vsub.f32 %v4569, %v4618
        %v4635 = vsub.f32 %v4570, %v4619
        %v4636 = vsub.f32 %v4571, %v4620
        %v4637 = vsub.f32 %v4572, %v4621
        %v4638 = vsub.f32 %v4573, %v4622
        %v4639 = vsub.f32 %v4574, %v4623
        %v4640 = vsub.f32 %v4575, %v4624
        %v4641 = vsub.f32 %v4576, %v4625
        %v4642 = vsub.f32 %v4577, %v4626
        %v4643 = vsub.f32 %v4578, %v4627
        %v4644 = vsub.f32 %v4579, %v4628
        %v4645 = vsub.f32 %v4580, %v4629
        %v4646 = vsub.f32 %v4581, %v4630
        %v4647 = vsub.f32 %v4582, %v4631
        %v4648 = vsub.f32 %v4583, %v4632
        %v4649 = vmul.f32 %v4633, %v4633
        %v4650 = vmul.f32 %v4634, %v4634
        %v4651 = vmul.f32 %v4635, %v4635
        %v4652 = vmul.f32 %v4636, %v4636
        %v4653 = vmul.f32 %v4637, %v4637
        %v4654 = vmul.f32 %v4638, %v4638
        %v4655 = vmul.f32 %v4639, %v4639
        %v4656 = vmul.f32 %v4640, %v4640
        %v4657 = vmul.f32 %v4641, %v4641
        %v4658 = vmul.f32 %v4642, %v4642
        %v4659 = vmul.f32 %v4643, %v4643
        %v4660 = vmul.f32 %v4644, %v4644
        %v4661 = vmul.f32 %v4645, %v4645
        %v4662 = vmul.f32 %v4646, %v4646
        %v4663 = vmul.f32 %v4647, %v4647
        %v4664 = vmul.f32 %v4648, %v4648
        %4665 = vadd.xlane.f32.xlu0 %v4649
        %v4666 = vpop.xlane.xlu0 %4665
        %4667 = vadd.xlane.f32.xlu0 %v4650
        %v4668 = vpop.xlane.xlu0 %4667
        %4669 = vadd.xlane.f32.xlu0 %v4651
        %v4670 = vpop.xlane.xlu0 %4669
        %4671 = vadd.xlane.f32.xlu0 %v4652
        %v4672 = vpop.xlane.xlu0 %4671
        %4673 = vadd.xlane.f32.xlu0 %v4653
        %v4674 = vpop.xlane.xlu0 %4673
        %4675 = vadd.xlane.f32.xlu0 %v4654
        %v4676 = vpop.xlane.xlu0 %4675
        %4677 = vadd.xlane.f32.xlu0 %v4655
        %v4678 = vpop.xlane.xlu0 %4677
        %4679 = vadd.xlane.f32.xlu0 %v4656
        %v4680 = vpop.xlane.xlu0 %4679
        %4681 = vadd.xlane.f32.xlu0 %v4657
        %v4682 = vpop.xlane.xlu0 %4681
        %4683 = vadd.xlane.f32.xlu0 %v4658
        %v4684 = vpop.xlane.xlu0 %4683
        %4685 = vadd.xlane.f32.xlu0 %v4659
        %v4686 = vpop.xlane.xlu0 %4685
        %4687 = vadd.xlane.f32.xlu0 %v4660
        %v4688 = vpop.xlane.xlu0 %4687
        %4689 = vadd.xlane.f32.xlu0 %v4661
        %v4690 = vpop.xlane.xlu0 %4689
        %4691 = vadd.xlane.f32.xlu0 %v4662
        %v4692 = vpop.xlane.xlu0 %4691
        %4693 = vadd.xlane.f32.xlu0 %v4663
        %v4694 = vpop.xlane.xlu0 %4693
        %4695 = vadd.xlane.f32.xlu0 %v4664
        %v4696 = vpop.xlane.xlu0 %4695
        %v4697 = vmul.f32 %v4666, %v4616
        %v4698 = vmul.f32 %v4668, %v4616
        %v4699 = vmul.f32 %v4670, %v4616
        %v4700 = vmul.f32 %v4672, %v4616
        %v4701 = vmul.f32 %v4674, %v4616
        %v4702 = vmul.f32 %v4676, %v4616
        %v4703 = vmul.f32 %v4678, %v4616
        %v4704 = vmul.f32 %v4680, %v4616
        %v4705 = vmul.f32 %v4682, %v4616
        %v4706 = vmul.f32 %v4684, %v4616
        %v4707 = vmul.f32 %v4686, %v4616
        %v4708 = vmul.f32 %v4688, %v4616
        %v4709 = vmul.f32 %v4690, %v4616
        %v4710 = vmul.f32 %v4692, %v4616
        %v4711 = vmul.f32 %v4694, %v4616
        %v4712 = vmul.f32 %v4696, %v4616
        %v4713 = vadd.f32 %v4697, 1e-06
        %v4714 = vadd.f32 %v4698, 1e-06
        %v4715 = vadd.f32 %v4699, 1e-06
        %v4716 = vadd.f32 %v4700, 1e-06
        %v4717 = vadd.f32 %v4701, 1e-06
        %v4718 = vadd.f32 %v4702, 1e-06
        %v4719 = vadd.f32 %v4703, 1e-06
        %v4720 = vadd.f32 %v4704, 1e-06
        %v4721 = vadd.f32 %v4705, 1e-06
        %v4722 = vadd.f32 %v4706, 1e-06
        %v4723 = vadd.f32 %v4707, 1e-06
        %v4724 = vadd.f32 %v4708, 1e-06
        %v4725 = vadd.f32 %v4709, 1e-06
        %v4726 = vadd.f32 %v4710, 1e-06
        %v4727 = vadd.f32 %v4711, 1e-06
        %v4728 = vadd.f32 %v4712, 1e-06
        %v4729 = vrsqrt.pop %v4713
        %v4730 = vrsqrt.pop %v4714
        %v4731 = vrsqrt.pop %v4715
        %v4732 = vrsqrt.pop %v4716
        %v4733 = vrsqrt.pop %v4717
        %v4734 = vrsqrt.pop %v4718
        %v4735 = vrsqrt.pop %v4719
        %v4736 = vrsqrt.pop %v4720
        %v4737 = vrsqrt.pop %v4721
        %v4738 = vrsqrt.pop %v4722
        %v4739 = vrsqrt.pop %v4723
        %v4740 = vrsqrt.pop %v4724
        %v4741 = vrsqrt.pop %v4725
        %v4742 = vrsqrt.pop %v4726
        %v4743 = vrsqrt.pop %v4727
        %v4744 = vrsqrt.pop %v4728
        %v4745 = vmul.f32 %v4633, %v4729
        %v4746 = vmul.f32 %v4634, %v4730
        %v4747 = vmul.f32 %v4635, %v4731
        %v4748 = vmul.f32 %v4636, %v4732
        %v4749 = vmul.f32 %v4637, %v4733
        %v4750 = vmul.f32 %v4638, %v4734
        %v4751 = vmul.f32 %v4639, %v4735
        %v4752 = vmul.f32 %v4640, %v4736
        %v4753 = vmul.f32 %v4641, %v4737
        %v4754 = vmul.f32 %v4642, %v4738
        %v4755 = vmul.f32 %v4643, %v4739
        %v4756 = vmul.f32 %v4644, %v4740
        %v4757 = vmul.f32 %v4645, %v4741
        %v4758 = vmul.f32 %v4646, %v4742
        %v4759 = vmul.f32 %v4647, %v4743
        %v4760 = vmul.f32 %v4648, %v4744
        %v4762 = vlaneseq
        %v4763 = vshrl.u32 %v4762, 7
        %v4764 = vsub.s32 0, %v4763
        %v4765 = vrot.slane %v1909, %v4764
        %v4767 = vmul.f32 %v4745, %v4765
        %v4768 = vmul.f32 %v4746, %v4765
        %v4769 = vmul.f32 %v4747, %v4765
        %v4770 = vmul.f32 %v4748, %v4765
        %v4771 = vmul.f32 %v4749, %v4765
        %v4772 = vmul.f32 %v4750, %v4765
        %v4773 = vmul.f32 %v4751, %v4765
        %v4774 = vmul.f32 %v4752, %v4765
        %v4775 = vmul.f32 %v4753, %v4765
        %v4776 = vmul.f32 %v4754, %v4765
        %v4777 = vmul.f32 %v4755, %v4765
        %v4778 = vmul.f32 %v4756, %v4765
        %v4779 = vmul.f32 %v4757, %v4765
        %v4780 = vmul.f32 %v4758, %v4765
        %v4781 = vmul.f32 %v4759, %v4765
        %v4782 = vmul.f32 %v4760, %v4765
        %v4784 = vlaneseq
        %v4785 = vshrl.u32 %v4784, 7
        %v4786 = vsub.s32 0, %v4785
        %v4787 = vrot.slane %v1910, %v4786
        %v4789 = vadd.f32 %v4767, %v4787
        %v4790 = vadd.f32 %v4768, %v4787
        %v4791 = vadd.f32 %v4769, %v4787
        %v4792 = vadd.f32 %v4770, %v4787
        %v4793 = vadd.f32 %v4771, %v4787
        %v4794 = vadd.f32 %v4772, %v4787
        %v4795 = vadd.f32 %v4773, %v4787
        %v4796 = vadd.f32 %v4774, %v4787
        %v4797 = vadd.f32 %v4775, %v4787
        %v4798 = vadd.f32 %v4776, %v4787
        %v4799 = vadd.f32 %v4777, %v4787
        %v4800 = vadd.f32 %v4778, %v4787
        %v4801 = vadd.f32 %v4779, %v4787
        %v4802 = vadd.f32 %v4780, %v4787
        %v4803 = vadd.f32 %v4781, %v4787
        %v4804 = vadd.f32 %v4782, %v4787
        %v4805 = vld [vmem:[#allocation15] sm:$0xf]
        %v4806 = vld [vmem:[#allocation15 + $0x4] sm:$0xf]
        %v4807 = vld [vmem:[#allocation15 + $0x8] sm:$0xf]
        %v4808 = vld [vmem:[#allocation15 + $0xc] sm:$0xf]
        %v4809 = vld [vmem:[#allocation15 + $0x10] sm:$0xf]
        %v4810 = vld [vmem:[#allocation15 + $0x14] sm:$0xf]
        %v4811 = vld [vmem:[#allocation15 + $0x18] sm:$0xf]
        %v4812 = vld [vmem:[#allocation15 + $0x1c] sm:$0xf]
        %v4813 = vld [vmem:[#allocation15 + $0x20] sm:$0xf]
        %v4814 = vld [vmem:[#allocation15 + $0x24] sm:$0xf]
        %v4815 = vld [vmem:[#allocation15 + $0x28] sm:$0xf]
        %v4816 = vld [vmem:[#allocation15 + $0x2c] sm:$0xf]
        %v4817 = vld [vmem:[#allocation15 + $0x30] sm:$0xf]
        %v4818 = vld [vmem:[#allocation15 + $0x34] sm:$0xf]
        %v4819 = vld [vmem:[#allocation15 + $0x38] sm:$0xf]
        %v4820 = vld [vmem:[#allocation15 + $0x3c] sm:$0xf]
        %v4821 = vld [vmem:[%s11] sm:$0x1]
        %v4822 = vld [vmem:[#allocation18] sm:$0xf]
        %v4823 = vld [vmem:[#allocation18 + $0x4] sm:$0xf]
        %v4824 = vld [vmem:[#allocation18 + $0x8] sm:$0xf]
        %v4825 = vld [vmem:[#allocation18 + $0xc] sm:$0xf]
        %v4826 = vld [vmem:[#allocation18 + $0x10] sm:$0xf]
        %v4827 = vld [vmem:[#allocation18 + $0x14] sm:$0xf]
        %v4828 = vld [vmem:[#allocation18 + $0x18] sm:$0xf]
        %v4829 = vld [vmem:[#allocation18 + $0x1c] sm:$0xf]
        %v4830 = vld [vmem:[#allocation18 + $0x20] sm:$0xf]
        %v4831 = vld [vmem:[#allocation18 + $0x24] sm:$0xf]
        %v4832 = vld [vmem:[#allocation18 + $0x28] sm:$0xf]
        %v4833 = vld [vmem:[#allocation18 + $0x2c] sm:$0xf]
        %v4834 = vld [vmem:[#allocation18 + $0x30] sm:$0xf]
        %v4835 = vld [vmem:[#allocation18 + $0x34] sm:$0xf]
        %v4836 = vld [vmem:[#allocation18 + $0x38] sm:$0xf]
        %v4837 = vld [vmem:[#allocation18 + $0x3c] sm:$0xf]
        %v4838 = vld [vmem:[%s15] sm:$0x1]
        %v4839 = vld [vmem:[%s16] sm:$0x1]
        %v4840 = vld [vmem:[%s17] sm:$0x1]
        %v4841 = vpack.c.bf16 %v4790, %v4789
        %v4842 = vpack.c.bf16 %v4792, %v4791
        %v4843 = vpack.c.bf16 %v4794, %v4793
        %v4844 = vpack.c.bf16 %v4796, %v4795
        %v4845 = vpack.c.bf16 %v4798, %v4797
        %v4846 = vpack.c.bf16 %v4800, %v4799
        %v4847 = vpack.c.bf16 %v4802, %v4801
        %v4848 = vpack.c.bf16 %v4804, %v4803
        %v4850 = vlaneseq
        %v4851 = vshrl.u32 %v4850, 7
        %v4852 = vsub.s32 0, %v4851
        %v4853 = vrot.slane %v4821, %v4852
        %v4871 = vunpack.c.l.b16 %v4805
        %v4872 = vunpack.c.l.b16 %v4806
        %v4873 = vunpack.c.l.b16 %v4807
        %v4874 = vunpack.c.l.b16 %v4808
        %v4875 = vunpack.c.l.b16 %v4809
        %v4876 = vunpack.c.l.b16 %v4810
        %v4877 = vunpack.c.l.b16 %v4811
        %v4878 = vunpack.c.l.b16 %v4812
        %v4879 = vunpack.c.l.b16 %v4813
        %v4880 = vunpack.c.l.b16 %v4814
        %v4881 = vunpack.c.l.b16 %v4815
        %v4882 = vunpack.c.l.b16 %v4816
        %v4883 = vunpack.c.l.b16 %v4817
        %v4884 = vunpack.c.l.b16 %v4818
        %v4885 = vunpack.c.l.b16 %v4819
        %v4886 = vunpack.c.l.b16 %v4820
        %v4887 = vpack.c.b16 %v4872, %v4871
        %v4888 = vpack.c.b16 %v4874, %v4873
        %v4889 = vpack.c.b16 %v4876, %v4875
        %v4890 = vpack.c.b16 %v4878, %v4877
        %v4891 = vpack.c.b16 %v4880, %v4879
        %v4892 = vpack.c.b16 %v4882, %v4881
        %v4893 = vpack.c.b16 %v4884, %v4883
        %v4894 = vpack.c.b16 %v4886, %v4885
        %4903 = vmatprep.subr.bf16.mxu0 0
        %4904 = vmatpush1.bf16.msra.mxu0 %v4887
        %4905 = vmatprep.subr.bf16.mxu0 0
        %4906 = vmatpush1.bf16.msra.mxu0 %v4888
        %4907 = vmatprep.subr.bf16.mxu0 0
        %4908 = vmatpush1.bf16.msra.mxu0 %v4889
        %4909 = vmatprep.subr.bf16.mxu0 0
        %4910 = vmatpush1.bf16.msra.mxu0 %v4890
        %4911 = vmatprep.subr.bf16.mxu0 0
        %4912 = vmatpush1.bf16.msra.mxu0 %v4891
        %4913 = vmatprep.subr.bf16.mxu0 0
        %4914 = vmatpush1.bf16.msra.mxu0 %v4892
        %4915 = vmatprep.subr.bf16.mxu0 0
        %4916 = vmatpush1.bf16.msra.mxu0 %v4893
        %4917 = vmatprep.subr.bf16.mxu0 0
        %4918 = vmatpush1.bf16.msra.mxu0 %v4894
        %4919 = vmatprep.subr.bf16.mxu0 0
        %4920 = vmatpush1.bf16.msra.mxu0 0
        %4921 = vmatprep.subr.bf16.mxu0 0
        %4922 = vmatpush1.bf16.msra.mxu0 0
        %4923 = vmatprep.subr.bf16.mxu0 0
        %4924 = vmatpush1.bf16.msra.mxu0 0
        %4925 = vmatprep.subr.bf16.mxu0 0
        %4926 = vmatpush1.bf16.msra.mxu0 0
        %4927 = vmatprep.subr.bf16.mxu0 0
        %4928 = vmatpush1.bf16.msra.mxu0 0
        %4929 = vmatprep.subr.bf16.mxu0 0
        %4930 = vmatpush1.bf16.msra.mxu0 0
        %4931 = vmatprep.subr.bf16.mxu0 0
        %4932 = vmatpush1.bf16.msra.mxu0 0
        %4933 = vmatprep.subr.bf16.mxu0 0
        %4934 = vmatpush1.bf16.msra.mxu0 0
        %4935 = vmatprep.mubr.bf16.mxu0 0
        %4936 = vmatmul.mubr.bf16.gmra.mrb[0].mxu0 %v4841
        %v4937 = vpop.f32.mrb[0].mxu0
        %v4938 = vadd.f32 %v4853, %v4937
        %v4939 = vpop.f32.mrb[0].mxu0
        %v4940 = vpop.f32.mrb[0].mxu0
        %v4941 = vadd.f32 %v4853, %v4940
        %v4942 = vpop.f32.mrb[0].mxu0
        %4943 = vmatprep.mubr.bf16.mxu0 0
        %4944 = vmatmul.mubr.bf16.gmra.mrb[0].mxu0 %v4842
        %v4945 = vpop.f32.mrb[0].mxu0
        %v4946 = vadd.f32 %v4853, %v4945
        %v4947 = vpop.f32.mrb[0].mxu0
        %v4948 = vpop.f32.mrb[0].mxu0
        %v4949 = vadd.f32 %v4853, %v4948
        %v4950 = vpop.f32.mrb[0].mxu0
        %4951 = vmatprep.mubr.bf16.mxu0 0
        %4952 = vmatmul.mubr.bf16.gmra.mrb[0].mxu0 %v4843
        %v4953 = vpop.f32.mrb[0].mxu0
        %v4954 = vadd.f32 %v4853, %v4953
        %v4955 = vpop.f32.mrb[0].mxu0
        %v4956 = vpop.f32.mrb[0].mxu0
        %v4957 = vadd.f32 %v4853, %v4956
        %v4958 = vpop.f32.mrb[0].mxu0
        %4959 = vmatprep.mubr.bf16.mxu0 0
        %4960 = vmatmul.mubr.bf16.gmra.mrb[0].mxu0 %v4844
        %v4961 = vpop.f32.mrb[0].mxu0
        %v4962 = vadd.f32 %v4853, %v4961
        %v4963 = vpop.f32.mrb[0].mxu0
        %v4964 = vpop.f32.mrb[0].mxu0
        %v4965 = vadd.f32 %v4853, %v4964
        %v4966 = vpop.f32.mrb[0].mxu0
        %4967 = vmatprep.mubr.bf16.mxu0 0
        %4968 = vmatmul.mubr.bf16.gmra.mrb[0].mxu0 %v4845
        %v4969 = vpop.f32.mrb[0].mxu0
        %v4970 = vadd.f32 %v4853, %v4969
        %v4971 = vpop.f32.mrb[0].mxu0
        %v4972 = vpop.f32.mrb[0].mxu0
        %v4973 = vadd.f32 %v4853, %v4972
        %v4974 = vpop.f32.mrb[0].mxu0
        %4975 = vmatprep.mubr.bf16.mxu0 0
        %4976 = vmatmul.mubr.bf16.gmra.mrb[0].mxu0 %v4846
        %v4977 = vpop.f32.mrb[0].mxu0
        %v4978 = vadd.f32 %v4853, %v4977
        %v4979 = vpop.f32.mrb[0].mxu0
        %v4980 = vpop.f32.mrb[0].mxu0
        %v4981 = vadd.f32 %v4853, %v4980
        %v4982 = vpop.f32.mrb[0].mxu0
        %4983 = vmatprep.mubr.bf16.mxu0 0
        %4984 = vmatmul.mubr.bf16.gmra.mrb[0].mxu0 %v4847
        %v4985 = vpop.f32.mrb[0].mxu0
        %v4986 = vadd.f32 %v4853, %v4985
        %v4987 = vpop.f32.mrb[0].mxu0
        %v4988 = vpop.f32.mrb[0].mxu0
        %v4989 = vadd.f32 %v4853, %v4988
        %v4990 = vpop.f32.mrb[0].mxu0
        %4991 = vmatprep.mubr.bf16.mxu0 0
        %4992 = vmatmul.mubr.bf16.gmra.mrb[0].mxu0 %v4848
        %v4993 = vpop.f32.mrb[0].mxu0
        %v4994 = vadd.f32 %v4853, %v4993
        %v4995 = vpop.f32.mrb[0].mxu0
        %v4996 = vpop.f32.mrb[0].mxu0
        %v4997 = vadd.f32 %v4853, %v4996
        %v4998 = vpop.f32.mrb[0].mxu0
        %4999 = vdwg.mxu0
        %v5000 = vpack.c.bf16 %v4941, %v4938
        %v5001 = vpack.c.bf16 %v4949, %v4946
        %v5002 = vpack.c.bf16 %v4957, %v4954
        %v5003 = vpack.c.bf16 %v4965, %v4962
        %v5004 = vpack.c.bf16 %v4973, %v4970
        %v5005 = vpack.c.bf16 %v4981, %v4978
        %v5006 = vpack.c.bf16 %v4989, %v4986
        %v5007 = vpack.c.bf16 %v4997, %v4994
        %5016 = vrot.lane.b32.xlu0 %v5000, 96
        %v5017 = vpop.permute.xlu0 %5016
        %5018 = vrot.lane.b32.xlu0 %v5001, 96
        %v5019 = vpop.permute.xlu0 %5018
        %5020 = vrot.lane.b32.xlu0 %v5002, 96
        %v5021 = vpop.permute.xlu0 %5020
        %5022 = vrot.lane.b32.xlu0 %v5003, 96
        %v5023 = vpop.permute.xlu0 %5022
        %5024 = vrot.lane.b32.xlu0 %v5004, 96
        %v5025 = vpop.permute.xlu0 %5024
        %5026 = vrot.lane.b32.xlu0 %v5005, 96
        %v5027 = vpop.permute.xlu0 %5026
        %5028 = vrot.lane.b32.xlu0 %v5006, 96
        %v5029 = vpop.permute.xlu0 %5028
        %5030 = vrot.lane.b32.xlu0 %v5007, 96
        %v5031 = vpop.permute.xlu0 %5030
        %5032 = vrot.lane.b32.xlu0 %v5000, 64
        %v5033 = vpop.permute.xlu0 %5032
        %5034 = vrot.lane.b32.xlu0 %v5001, 64
        %v5035 = vpop.permute.xlu0 %5034
        %5036 = vrot.lane.b32.xlu0 %v5002, 64
        %v5037 = vpop.permute.xlu0 %5036
        %5038 = vrot.lane.b32.xlu0 %v5003, 64
        %v5039 = vpop.permute.xlu0 %5038
        %5040 = vrot.lane.b32.xlu0 %v5004, 64
        %v5041 = vpop.permute.xlu0 %5040
        %5042 = vrot.lane.b32.xlu0 %v5005, 64
        %v5043 = vpop.permute.xlu0 %5042
        %5044 = vrot.lane.b32.xlu0 %v5006, 64
        %v5045 = vpop.permute.xlu0 %5044
        %5046 = vrot.lane.b32.xlu0 %v5007, 64
        %v5047 = vpop.permute.xlu0 %5046
        %5048 = vrot.lane.b32.xlu0 %v5000, 32
        %v5049 = vpop.permute.xlu0 %5048
        %5050 = vrot.lane.b32.xlu0 %v5001, 32
        %v5051 = vpop.permute.xlu0 %5050
        %5052 = vrot.lane.b32.xlu0 %v5002, 32
        %v5053 = vpop.permute.xlu0 %5052
        %5054 = vrot.lane.b32.xlu0 %v5003, 32
        %v5055 = vpop.permute.xlu0 %5054
        %5056 = vrot.lane.b32.xlu0 %v5004, 32
        %v5057 = vpop.permute.xlu0 %5056
        %5058 = vrot.lane.b32.xlu0 %v5005, 32
        %v5059 = vpop.permute.xlu0 %5058
        %5060 = vrot.lane.b32.xlu0 %v5006, 32
        %v5061 = vpop.permute.xlu0 %5060
        %5062 = vrot.lane.b32.xlu0 %v5007, 32
        %v5063 = vpop.permute.xlu0 %5062
        %v5064 = vld [vmem:[#allocation4] sm:$0xff]
        %v5065 = vld [vmem:[#allocation4 + $0x8] sm:$0xff]
        %v5066 = vld [vmem:[#allocation4 + $0x10] sm:$0xff]
        %v5067 = vld [vmem:[#allocation4 + $0x18] sm:$0xff]
        %v5068 = vld [vmem:[#allocation4 + $0x20] sm:$0xff]
        %v5069 = vld [vmem:[#allocation4 + $0x28] sm:$0xff]
        %v5070 = vld [vmem:[#allocation4 + $0x30] sm:$0xff]
        %v5071 = vld [vmem:[#allocation4 + $0x38] sm:$0xff]
        %v5072 = vld [vmem:[#allocation5] sm:$0xff]
        %v5073 = vld [vmem:[#allocation5 + $0x8] sm:$0xff]
        %v5074 = vld [vmem:[#allocation5 + $0x10] sm:$0xff]
        %v5075 = vld [vmem:[#allocation5 + $0x18] sm:$0xff]
        %v5076 = vld [vmem:[#allocation5 + $0x20] sm:$0xff]
        %v5077 = vld [vmem:[#allocation5 + $0x28] sm:$0xff]
        %v5078 = vld [vmem:[#allocation5 + $0x30] sm:$0xff]
        %v5079 = vld [vmem:[#allocation5 + $0x38] sm:$0xff]
        %v5081 = vsel %vm2206, %v5000, 0
        %v5084 = vsel %vm2206, %v5001, 0
        %v5087 = vsel %vm2206, %v5002, 0
        %v5090 = vsel %vm2206, %v5003, 0
        %v5093 = vsel %vm2206, %v5004, 0
        %v5096 = vsel %vm2206, %v5005, 0
        %v5099 = vsel %vm2206, %v5006, 0
        %v5102 = vsel %vm2206, %v5007, 0
        %5104 = vmatprep.subr.bf16.mxu0 0
        %5105 = vmatpush1.bf16.msra.mxu0 %v5064
        %5106 = vmatprep.subr.bf16.mxu0 0
        %5107 = vmatpush1.bf16.msra.mxu0 %v5065
        %5108 = vmatprep.subr.bf16.mxu0 0
        %5109 = vmatpush1.bf16.msra.mxu0 0
        %5110 = vmatprep.subr.bf16.mxu0 0
        %5111 = vmatpush1.bf16.msra.mxu0 0
        %5112 = vmatprep.subr.bf16.mxu0 0
        %5113 = vmatpush1.bf16.msra.mxu0 0
        %5114 = vmatprep.subr.bf16.mxu0 0
        %5115 = vmatpush1.bf16.msra.mxu0 0
        %5116 = vmatprep.subr.bf16.mxu0 0
        %5117 = vmatpush1.bf16.msra.mxu0 0
        %5118 = vmatprep.subr.bf16.mxu0 0
        %5119 = vmatpush1.bf16.msra.mxu0 0
        %5120 = vmatprep.subr.bf16.mxu0 0
        %5121 = vmatpush1.bf16.msra.mxu0 0
        %5122 = vmatprep.subr.bf16.mxu0 0
        %5123 = vmatpush1.bf16.msra.mxu0 0
        %5124 = vmatprep.subr.bf16.mxu0 0
        %5125 = vmatpush1.bf16.msra.mxu0 0
        %5126 = vmatprep.subr.bf16.mxu0 0
        %5127 = vmatpush1.bf16.msra.mxu0 0
        %5128 = vmatprep.subr.bf16.mxu0 0
        %5129 = vmatpush1.bf16.msra.mxu0 0
        %5130 = vmatprep.subr.bf16.mxu0 0
        %5131 = vmatpush1.bf16.msra.mxu0 0
        %5132 = vmatprep.subr.bf16.mxu0 0
        %5133 = vmatpush1.bf16.msra.mxu0 0
        %5134 = vmatprep.subr.bf16.mxu0 0
        %5135 = vmatpush1.bf16.msra.mxu0 0
        %5136 = vmatprep.mubr.bf16.mxu0 0
        %5137 = vmatmul.mubr.bf16.gmra.mrb[0].mxu0 %v5081
        %v5138 = vpop.f32.mrb[0].mxu0
        %v5139 = vadd.f32 0.0, %v5138
        %v5140 = vpop.f32.mrb[0].mxu0
        %v5141 = vpop.f32.mrb[0].mxu0
        %v5142 = vadd.f32 0.0, %v5141
        %v5143 = vpop.f32.mrb[0].mxu0
        %5144 = vmatprep.mubr.bf16.mxu0 0
        %5145 = vmatmul.mubr.bf16.gmra.mrb[0].mxu0 %v5084
        %v5146 = vpop.f32.mrb[0].mxu0
        %v5147 = vadd.f32 0.0, %v5146
        %v5148 = vpop.f32.mrb[0].mxu0
        %v5149 = vpop.f32.mrb[0].mxu0
        %v5150 = vadd.f32 0.0, %v5149
        %v5151 = vpop.f32.mrb[0].mxu0
        %5152 = vmatprep.mubr.bf16.mxu0 0
        %5153 = vmatmul.mubr.bf16.gmra.mrb[0].mxu0 %v5087
        %v5154 = vpop.f32.mrb[0].mxu0
        %v5155 = vadd.f32 0.0, %v5154
        %v5156 = vpop.f32.mrb[0].mxu0
        %v5157 = vpop.f32.mrb[0].mxu0
        %v5158 = vadd.f32 0.0, %v5157
        %v5159 = vpop.f32.mrb[0].mxu0
        %5160 = vmatprep.mubr.bf16.mxu0 0
        %5161 = vmatmul.mubr.bf16.gmra.mrb[0].mxu0 %v5090
        %v5162 = vpop.f32.mrb[0].mxu0
        %v5163 = vadd.f32 0.0, %v5162
        %v5164 = vpop.f32.mrb[0].mxu0
        %v5165 = vpop.f32.mrb[0].mxu0
        %v5166 = vadd.f32 0.0, %v5165
        %v5167 = vpop.f32.mrb[0].mxu0
        %5168 = vmatprep.mubr.bf16.mxu0 0
        %5169 = vmatmul.mubr.bf16.gmra.mrb[0].mxu0 %v5093
        %v5170 = vpop.f32.mrb[0].mxu0
        %v5171 = vadd.f32 0.0, %v5170
        %v5172 = vpop.f32.mrb[0].mxu0
        %v5173 = vpop.f32.mrb[0].mxu0
        %v5174 = vadd.f32 0.0, %v5173
        %v5175 = vpop.f32.mrb[0].mxu0
        %5176 = vmatprep.mubr.bf16.mxu0 0
        %5177 = vmatmul.mubr.bf16.gmra.mrb[0].mxu0 %v5096
        %v5178 = vpop.f32.mrb[0].mxu0
        %v5179 = vadd.f32 0.0, %v5178
        %v5180 = vpop.f32.mrb[0].mxu0
        %v5181 = vpop.f32.mrb[0].mxu0
        %v5182 = vadd.f32 0.0, %v5181
        %v5183 = vpop.f32.mrb[0].mxu0
        %5184 = vmatprep.mubr.bf16.mxu0 0
        %5185 = vmatmul.mubr.bf16.gmra.mrb[0].mxu0 %v5099
        %v5186 = vpop.f32.mrb[0].mxu0
        %v5187 = vadd.f32 0.0, %v5186
        %v5188 = vpop.f32.mrb[0].mxu0
        %v5189 = vpop.f32.mrb[0].mxu0
        %v5190 = vadd.f32 0.0, %v5189
        %v5191 = vpop.f32.mrb[0].mxu0
        %5192 = vmatprep.mubr.bf16.mxu0 0
        %5193 = vmatmul.mubr.bf16.gmra.mrb[0].mxu0 %v5102
        %v5194 = vpop.f32.mrb[0].mxu0
        %v5195 = vadd.f32 0.0, %v5194
        %v5196 = vpop.f32.mrb[0].mxu0
        %v5197 = vpop.f32.mrb[0].mxu0
        %v5198 = vadd.f32 0.0, %v5197
        %v5199 = vpop.f32.mrb[0].mxu0
        %5200 = vdwg.mxu0
        %v5202 = vsel %vm2206, %v5017, 0
        %v5205 = vsel %vm2206, %v5019, 0
        %v5208 = vsel %vm2206, %v5021, 0
        %v5211 = vsel %vm2206, %v5023, 0
        %v5214 = vsel %vm2206, %v5025, 0
        %v5217 = vsel %vm2206, %v5027, 0
        %v5220 = vsel %vm2206, %v5029, 0
        %v5223 = vsel %vm2206, %v5031, 0
        %5225 = vmatprep.subr.bf16.mxu0 0
        %5226 = vmatpush1.bf16.msra.mxu0 %v5066
        %5227 = vmatprep.subr.bf16.mxu0 0
        %5228 = vmatpush1.bf16.msra.mxu0 %v5067
        %5229 = vmatprep.subr.bf16.mxu0 0
        %5230 = vmatpush1.bf16.msra.mxu0 0
        %5231 = vmatprep.subr.bf16.mxu0 0
        %5232 = vmatpush1.bf16.msra.mxu0 0
        %5233 = vmatprep.subr.bf16.mxu0 0
        %5234 = vmatpush1.bf16.msra.mxu0 0
        %5235 = vmatprep.subr.bf16.mxu0 0
        %5236 = vmatpush1.bf16.msra.mxu0 0
        %5237 = vmatprep.subr.bf16.mxu0 0
        %5238 = vmatpush1.bf16.msra.mxu0 0
        %5239 = vmatprep.subr.bf16.mxu0 0
        %5240 = vmatpush1.bf16.msra.mxu0 0
        %5241 = vmatprep.subr.bf16.mxu0 0
        %5242 = vmatpush1.bf16.msra.mxu0 0
        %5243 = vmatprep.subr.bf16.mxu0 0
        %5244 = vmatpush1.bf16.msra.mxu0 0
        %5245 = vmatprep.subr.bf16.mxu0 0
        %5246 = vmatpush1.bf16.msra.mxu0 0
        %5247 = vmatprep.subr.bf16.mxu0 0
        %5248 = vmatpush1.bf16.msra.mxu0 0
        %5249 = vmatprep.subr.bf16.mxu0 0
        %5250 = vmatpush1.bf16.msra.mxu0 0
        %5251 = vmatprep.subr.bf16.mxu0 0
        %5252 = vmatpush1.bf16.msra.mxu0 0
        %5253 = vmatprep.subr.bf16.mxu0 0
        %5254 = vmatpush1.bf16.msra.mxu0 0
        %5255 = vmatprep.subr.bf16.mxu0 0
        %5256 = vmatpush1.bf16.msra.mxu0 0
        %5257 = vmatprep.mubr.bf16.mxu0 0
        %5258 = vmatmul.mubr.bf16.gmra.mrb[0].mxu0 %v5202
        %v5259 = vpop.f32.mrb[0].mxu0
        %v5260 = vadd.f32 0.0, %v5259
        %v5261 = vpop.f32.mrb[0].mxu0
        %v5262 = vpop.f32.mrb[0].mxu0
        %v5263 = vadd.f32 0.0, %v5262
        %v5264 = vpop.f32.mrb[0].mxu0
        %5265 = vmatprep.mubr.bf16.mxu0 0
        %5266 = vmatmul.mubr.bf16.gmra.mrb[0].mxu0 %v5205
        %v5267 = vpop.f32.mrb[0].mxu0
        %v5268 = vadd.f32 0.0, %v5267
        %v5269 = vpop.f32.mrb[0].mxu0
        %v5270 = vpop.f32.mrb[0].mxu0
        %v5271 = vadd.f32 0.0, %v5270
        %v5272 = vpop.f32.mrb[0].mxu0
        %5273 = vmatprep.mubr.bf16.mxu0 0
        %5274 = vmatmul.mubr.bf16.gmra.mrb[0].mxu0 %v5208
        %v5275 = vpop.f32.mrb[0].mxu0
        %v5276 = vadd.f32 0.0, %v5275
        %v5277 = vpop.f32.mrb[0].mxu0
        %v5278 = vpop.f32.mrb[0].mxu0
        %v5279 = vadd.f32 0.0, %v5278
        %v5280 = vpop.f32.mrb[0].mxu0
        %5281 = vmatprep.mubr.bf16.mxu0 0
        %5282 = vmatmul.mubr.bf16.gmra.mrb[0].mxu0 %v5211
        %v5283 = vpop.f32.mrb[0].mxu0
        %v5284 = vadd.f32 0.0, %v5283
        %v5285 = vpop.f32.mrb[0].mxu0
        %v5286 = vpop.f32.mrb[0].mxu0
        %v5287 = vadd.f32 0.0, %v5286
        %v5288 = vpop.f32.mrb[0].mxu0
        %5289 = vmatprep.mubr.bf16.mxu0 0
        %5290 = vmatmul.mubr.bf16.gmra.mrb[0].mxu0 %v5214
        %v5291 = vpop.f32.mrb[0].mxu0
        %v5292 = vadd.f32 0.0, %v5291
        %v5293 = vpop.f32.mrb[0].mxu0
        %v5294 = vpop.f32.mrb[0].mxu0
        %v5295 = vadd.f32 0.0, %v5294
        %v5296 = vpop.f32.mrb[0].mxu0
        %5297 = vmatprep.mubr.bf16.mxu0 0
        %5298 = vmatmul.mubr.bf16.gmra.mrb[0].mxu0 %v5217
        %v5299 = vpop.f32.mrb[0].mxu0
        %v5300 = vadd.f32 0.0, %v5299
        %v5301 = vpop.f32.mrb[0].mxu0
        %v5302 = vpop.f32.mrb[0].mxu0
        %v5303 = vadd.f32 0.0, %v5302
        %v5304 = vpop.f32.mrb[0].mxu0
        %5305 = vmatprep.mubr.bf16.mxu0 0
        %5306 = vmatmul.mubr.bf16.gmra.mrb[0].mxu0 %v5220
        %v5307 = vpop.f32.mrb[0].mxu0
        %v5308 = vadd.f32 0.0, %v5307
        %v5309 = vpop.f32.mrb[0].mxu0
        %v5310 = vpop.f32.mrb[0].mxu0
        %v5311 = vadd.f32 0.0, %v5310
        %v5312 = vpop.f32.mrb[0].mxu0
        %5313 = vmatprep.mubr.bf16.mxu0 0
        %5314 = vmatmul.mubr.bf16.gmra.mrb[0].mxu0 %v5223
        %v5315 = vpop.f32.mrb[0].mxu0
        %v5316 = vadd.f32 0.0, %v5315
        %v5317 = vpop.f32.mrb[0].mxu0
        %v5318 = vpop.f32.mrb[0].mxu0
        %v5319 = vadd.f32 0.0, %v5318
        %v5320 = vpop.f32.mrb[0].mxu0
        %5321 = vdwg.mxu0
        %v5323 = vsel %vm2206, %v5033, 0
        %v5326 = vsel %vm2206, %v5035, 0
        %v5329 = vsel %vm2206, %v5037, 0
        %v5332 = vsel %vm2206, %v5039, 0
        %v5335 = vsel %vm2206, %v5041, 0
        %v5338 = vsel %vm2206, %v5043, 0
        %v5341 = vsel %vm2206, %v5045, 0
        %v5344 = vsel %vm2206, %v5047, 0
        %5346 = vmatprep.subr.bf16.mxu0 0
        %5347 = vmatpush1.bf16.msra.mxu0 %v5068
        %5348 = vmatprep.subr.bf16.mxu0 0
        %5349 = vmatpush1.bf16.msra.mxu0 %v5069
        %5350 = vmatprep.subr.bf16.mxu0 0
        %5351 = vmatpush1.bf16.msra.mxu0 0
        %5352 = vmatprep.subr.bf16.mxu0 0
        %5353 = vmatpush1.bf16.msra.mxu0 0
        %5354 = vmatprep.subr.bf16.mxu0 0
        %5355 = vmatpush1.bf16.msra.mxu0 0
        %5356 = vmatprep.subr.bf16.mxu0 0
        %5357 = vmatpush1.bf16.msra.mxu0 0
        %5358 = vmatprep.subr.bf16.mxu0 0
        %5359 = vmatpush1.bf16.msra.mxu0 0
        %5360 = vmatprep.subr.bf16.mxu0 0
        %5361 = vmatpush1.bf16.msra.mxu0 0
        %5362 = vmatprep.subr.bf16.mxu0 0
        %5363 = vmatpush1.bf16.msra.mxu0 0
        %5364 = vmatprep.subr.bf16.mxu0 0
        %5365 = vmatpush1.bf16.msra.mxu0 0
        %5366 = vmatprep.subr.bf16.mxu0 0
        %5367 = vmatpush1.bf16.msra.mxu0 0
        %5368 = vmatprep.subr.bf16.mxu0 0
        %5369 = vmatpush1.bf16.msra.mxu0 0
        %5370 = vmatprep.subr.bf16.mxu0 0
        %5371 = vmatpush1.bf16.msra.mxu0 0
        %5372 = vmatprep.subr.bf16.mxu0 0
        %5373 = vmatpush1.bf16.msra.mxu0 0
        %5374 = vmatprep.subr.bf16.mxu0 0
        %5375 = vmatpush1.bf16.msra.mxu0 0
        %5376 = vmatprep.subr.bf16.mxu0 0
        %5377 = vmatpush1.bf16.msra.mxu0 0
        %5378 = vmatprep.mubr.bf16.mxu0 0
        %5379 = vmatmul.mubr.bf16.gmra.mrb[0].mxu0 %v5323
        %v5380 = vpop.f32.mrb[0].mxu0
        %v5381 = vadd.f32 0.0, %v5380
        %v5382 = vpop.f32.mrb[0].mxu0
        %v5383 = vpop.f32.mrb[0].mxu0
        %v5384 = vadd.f32 0.0, %v5383
        %v5385 = vpop.f32.mrb[0].mxu0
        %5386 = vmatprep.mubr.bf16.mxu0 0
        %5387 = vmatmul.mubr.bf16.gmra.mrb[0].mxu0 %v5326
        %v5388 = vpop.f32.mrb[0].mxu0
        %v5389 = vadd.f32 0.0, %v5388
        %v5390 = vpop.f32.mrb[0].mxu0
        %v5391 = vpop.f32.mrb[0].mxu0
        %v5392 = vadd.f32 0.0, %v5391
        %v5393 = vpop.f32.mrb[0].mxu0
        %5394 = vmatprep.mubr.bf16.mxu0 0
        %5395 = vmatmul.mubr.bf16.gmra.mrb[0].mxu0 %v5329
        %v5396 = vpop.f32.mrb[0].mxu0
        %v5397 = vadd.f32 0.0, %v5396
        %v5398 = vpop.f32.mrb[0].mxu0
        %v5399 = vpop.f32.mrb[0].mxu0
        %v5400 = vadd.f32 0.0, %v5399
        %v5401 = vpop.f32.mrb[0].mxu0
        %5402 = vmatprep.mubr.bf16.mxu0 0
        %5403 = vmatmul.mubr.bf16.gmra.mrb[0].mxu0 %v5332
        %v5404 = vpop.f32.mrb[0].mxu0
        %v5405 = vadd.f32 0.0, %v5404
        %v5406 = vpop.f32.mrb[0].mxu0
        %v5407 = vpop.f32.mrb[0].mxu0
        %v5408 = vadd.f32 0.0, %v5407
        %v5409 = vpop.f32.mrb[0].mxu0
        %5410 = vmatprep.mubr.bf16.mxu0 0
        %5411 = vmatmul.mubr.bf16.gmra.mrb[0].mxu0 %v5335
        %v5412 = vpop.f32.mrb[0].mxu0
        %v5413 = vadd.f32 0.0, %v5412
        %v5414 = vpop.f32.mrb[0].mxu0
        %v5415 = vpop.f32.mrb[0].mxu0
        %v5416 = vadd.f32 0.0, %v5415
        %v5417 = vpop.f32.mrb[0].mxu0
        %5418 = vmatprep.mubr.bf16.mxu0 0
        %5419 = vmatmul.mubr.bf16.gmra.mrb[0].mxu0 %v5338
        %v5420 = vpop.f32.mrb[0].mxu0
        %v5421 = vadd.f32 0.0, %v5420
        %v5422 = vpop.f32.mrb[0].mxu0
        %v5423 = vpop.f32.mrb[0].mxu0
        %v5424 = vadd.f32 0.0, %v5423
        %v5425 = vpop.f32.mrb[0].mxu0
        %5426 = vmatprep.mubr.bf16.mxu0 0
        %5427 = vmatmul.mubr.bf16.gmra.mrb[0].mxu0 %v5341
        %v5428 = vpop.f32.mrb[0].mxu0
        %v5429 = vadd.f32 0.0, %v5428
        %v5430 = vpop.f32.mrb[0].mxu0
        %v5431 = vpop.f32.mrb[0].mxu0
        %v5432 = vadd.f32 0.0, %v5431
        %v5433 = vpop.f32.mrb[0].mxu0
        %5434 = vmatprep.mubr.bf16.mxu0 0
        %5435 = vmatmul.mubr.bf16.gmra.mrb[0].mxu0 %v5344
        %v5436 = vpop.f32.mrb[0].mxu0
        %v5437 = vadd.f32 0.0, %v5436
        %v5438 = vpop.f32.mrb[0].mxu0
        %v5439 = vpop.f32.mrb[0].mxu0
        %v5440 = vadd.f32 0.0, %v5439
        %v5441 = vpop.f32.mrb[0].mxu0
        %5442 = vdwg.mxu0
        %v5444 = vsel %vm2206, %v5049, 0
        %v5447 = vsel %vm2206, %v5051, 0
        %v5450 = vsel %vm2206, %v5053, 0
        %v5453 = vsel %vm2206, %v5055, 0
        %v5456 = vsel %vm2206, %v5057, 0
        %v5459 = vsel %vm2206, %v5059, 0
        %v5462 = vsel %vm2206, %v5061, 0
        %v5465 = vsel %vm2206, %v5063, 0
        %5467 = vmatprep.subr.bf16.mxu0 0
        %5468 = vmatpush1.bf16.msra.mxu0 %v5070
        %5469 = vmatprep.subr.bf16.mxu0 0
        %5470 = vmatpush1.bf16.msra.mxu0 %v5071
        %5471 = vmatprep.subr.bf16.mxu0 0
        %5472 = vmatpush1.bf16.msra.mxu0 0
        %5473 = vmatprep.subr.bf16.mxu0 0
        %5474 = vmatpush1.bf16.msra.mxu0 0
        %5475 = vmatprep.subr.bf16.mxu0 0
        %5476 = vmatpush1.bf16.msra.mxu0 0
        %5477 = vmatprep.subr.bf16.mxu0 0
        %5478 = vmatpush1.bf16.msra.mxu0 0
        %5479 = vmatprep.subr.bf16.mxu0 0
        %5480 = vmatpush1.bf16.msra.mxu0 0
        %5481 = vmatprep.subr.bf16.mxu0 0
        %5482 = vmatpush1.bf16.msra.mxu0 0
        %5483 = vmatprep.subr.bf16.mxu0 0
        %5484 = vmatpush1.bf16.msra.mxu0 0
        %5485 = vmatprep.subr.bf16.mxu0 0
        %5486 = vmatpush1.bf16.msra.mxu0 0
        %5487 = vmatprep.subr.bf16.mxu0 0
        %5488 = vmatpush1.bf16.msra.mxu0 0
        %5489 = vmatprep.subr.bf16.mxu0 0
        %5490 = vmatpush1.bf16.msra.mxu0 0
        %5491 = vmatprep.subr.bf16.mxu0 0
        %5492 = vmatpush1.bf16.msra.mxu0 0
        %5493 = vmatprep.subr.bf16.mxu0 0
        %5494 = vmatpush1.bf16.msra.mxu0 0
        %5495 = vmatprep.subr.bf16.mxu0 0
        %5496 = vmatpush1.bf16.msra.mxu0 0
        %5497 = vmatprep.subr.bf16.mxu0 0
        %5498 = vmatpush1.bf16.msra.mxu0 0
        %5499 = vmatprep.mubr.bf16.mxu0 0
        %5500 = vmatmul.mubr.bf16.gmra.mrb[0].mxu0 %v5444
        %v5501 = vpop.f32.mrb[0].mxu0
        %v5502 = vadd.f32 0.0, %v5501
        %v5503 = vpop.f32.mrb[0].mxu0
        %v5504 = vpop.f32.mrb[0].mxu0
        %v5505 = vadd.f32 0.0, %v5504
        %v5506 = vpop.f32.mrb[0].mxu0
        %5507 = vmatprep.mubr.bf16.mxu0 0
        %5508 = vmatmul.mubr.bf16.gmra.mrb[0].mxu0 %v5447
        %v5509 = vpop.f32.mrb[0].mxu0
        %v5510 = vadd.f32 0.0, %v5509
        %v5511 = vpop.f32.mrb[0].mxu0
        %v5512 = vpop.f32.mrb[0].mxu0
        %v5513 = vadd.f32 0.0, %v5512
        %v5514 = vpop.f32.mrb[0].mxu0
        %5515 = vmatprep.mubr.bf16.mxu0 0
        %5516 = vmatmul.mubr.bf16.gmra.mrb[0].mxu0 %v5450
        %v5517 = vpop.f32.mrb[0].mxu0
        %v5518 = vadd.f32 0.0, %v5517
        %v5519 = vpop.f32.mrb[0].mxu0
        %v5520 = vpop.f32.mrb[0].mxu0
        %v5521 = vadd.f32 0.0, %v5520
        %v5522 = vpop.f32.mrb[0].mxu0
        %5523 = vmatprep.mubr.bf16.mxu0 0
        %5524 = vmatmul.mubr.bf16.gmra.mrb[0].mxu0 %v5453
        %v5525 = vpop.f32.mrb[0].mxu0
        %v5526 = vadd.f32 0.0, %v5525
        %v5527 = vpop.f32.mrb[0].mxu0
        %v5528 = vpop.f32.mrb[0].mxu0
        %v5529 = vadd.f32 0.0, %v5528
        %v5530 = vpop.f32.mrb[0].mxu0
        %5531 = vmatprep.mubr.bf16.mxu0 0
        %5532 = vmatmul.mubr.bf16.gmra.mrb[0].mxu0 %v5456
        %v5533 = vpop.f32.mrb[0].mxu0
        %v5534 = vadd.f32 0.0, %v5533
        %v5535 = vpop.f32.mrb[0].mxu0
        %v5536 = vpop.f32.mrb[0].mxu0
        %v5537 = vadd.f32 0.0, %v5536
        %v5538 = vpop.f32.mrb[0].mxu0
        %5539 = vmatprep.mubr.bf16.mxu0 0
        %5540 = vmatmul.mubr.bf16.gmra.mrb[0].mxu0 %v5459
        %v5541 = vpop.f32.mrb[0].mxu0
        %v5542 = vadd.f32 0.0, %v5541
        %v5543 = vpop.f32.mrb[0].mxu0
        %v5544 = vpop.f32.mrb[0].mxu0
        %v5545 = vadd.f32 0.0, %v5544
        %v5546 = vpop.f32.mrb[0].mxu0
        %5547 = vmatprep.mubr.bf16.mxu0 0
        %5548 = vmatmul.mubr.bf16.gmra.mrb[0].mxu0 %v5462
        %v5549 = vpop.f32.mrb[0].mxu0
        %v5550 = vadd.f32 0.0, %v5549
        %v5551 = vpop.f32.mrb[0].mxu0
        %v5552 = vpop.f32.mrb[0].mxu0
        %v5553 = vadd.f32 0.0, %v5552
        %v5554 = vpop.f32.mrb[0].mxu0
        %5555 = vmatprep.mubr.bf16.mxu0 0
        %5556 = vmatmul.mubr.bf16.gmra.mrb[0].mxu0 %v5465
        %v5557 = vpop.f32.mrb[0].mxu0
        %v5558 = vadd.f32 0.0, %v5557
        %v5559 = vpop.f32.mrb[0].mxu0
        %v5560 = vpop.f32.mrb[0].mxu0
        %v5561 = vadd.f32 0.0, %v5560
        %v5562 = vpop.f32.mrb[0].mxu0
        %5563 = vdwg.mxu0
        %5564 = vmax.xlane.f32.xlu0 %v5139
        %v5565 = vpop.xlane.xlu0 %5564
        %5566 = vmax.xlane.f32.xlu0 %v5142
        %v5567 = vpop.xlane.xlu0 %5566
        %5568 = vmax.xlane.f32.xlu0 %v5147
        %v5569 = vpop.xlane.xlu0 %5568
        %5570 = vmax.xlane.f32.xlu0 %v5150
        %v5571 = vpop.xlane.xlu0 %5570
        %5572 = vmax.xlane.f32.xlu0 %v5155
        %v5573 = vpop.xlane.xlu0 %5572
        %5574 = vmax.xlane.f32.xlu0 %v5158
        %v5575 = vpop.xlane.xlu0 %5574
        %5576 = vmax.xlane.f32.xlu0 %v5163
        %v5577 = vpop.xlane.xlu0 %5576
        %5578 = vmax.xlane.f32.xlu0 %v5166
        %v5579 = vpop.xlane.xlu0 %5578
        %5580 = vmax.xlane.f32.xlu0 %v5171
        %v5581 = vpop.xlane.xlu0 %5580
        %5582 = vmax.xlane.f32.xlu0 %v5174
        %v5583 = vpop.xlane.xlu0 %5582
        %5584 = vmax.xlane.f32.xlu0 %v5179
        %v5585 = vpop.xlane.xlu0 %5584
        %5586 = vmax.xlane.f32.xlu0 %v5182
        %v5587 = vpop.xlane.xlu0 %5586
        %5588 = vmax.xlane.f32.xlu0 %v5187
        %v5589 = vpop.xlane.xlu0 %5588
        %5590 = vmax.xlane.f32.xlu0 %v5190
        %v5591 = vpop.xlane.xlu0 %5590
        %5592 = vmax.xlane.f32.xlu0 %v5195
        %v5593 = vpop.xlane.xlu0 %5592
        %5594 = vmax.xlane.f32.xlu0 %v5198
        %v5595 = vpop.xlane.xlu0 %5594
        %5596 = vmax.xlane.f32.xlu0 %v5260
        %v5597 = vpop.xlane.xlu0 %5596
        %5598 = vmax.xlane.f32.xlu0 %v5263
        %v5599 = vpop.xlane.xlu0 %5598
        %5600 = vmax.xlane.f32.xlu0 %v5268
        %v5601 = vpop.xlane.xlu0 %5600
        %5602 = vmax.xlane.f32.xlu0 %v5271
        %v5603 = vpop.xlane.xlu0 %5602
        %5604 = vmax.xlane.f32.xlu0 %v5276
        %v5605 = vpop.xlane.xlu0 %5604
        %5606 = vmax.xlane.f32.xlu0 %v5279
        %v5607 = vpop.xlane.xlu0 %5606
        %5608 = vmax.xlane.f32.xlu0 %v5284
        %v5609 = vpop.xlane.xlu0 %5608
        %5610 = vmax.xlane.f32.xlu0 %v5287
        %v5611 = vpop.xlane.xlu0 %5610
        %5612 = vmax.xlane.f32.xlu0 %v5292
        %v5613 = vpop.xlane.xlu0 %5612
        %5614 = vmax.xlane.f32.xlu0 %v5295
        %v5615 = vpop.xlane.xlu0 %5614
        %5616 = vmax.xlane.f32.xlu0 %v5300
        %v5617 = vpop.xlane.xlu0 %5616
        %5618 = vmax.xlane.f32.xlu0 %v5303
        %v5619 = vpop.xlane.xlu0 %5618
        %5620 = vmax.xlane.f32.xlu0 %v5308
        %v5621 = vpop.xlane.xlu0 %5620
        %5622 = vmax.xlane.f32.xlu0 %v5311
        %v5623 = vpop.xlane.xlu0 %5622
        %5624 = vmax.xlane.f32.xlu0 %v5316
        %v5625 = vpop.xlane.xlu0 %5624
        %5626 = vmax.xlane.f32.xlu0 %v5319
        %v5627 = vpop.xlane.xlu0 %5626
        %5628 = vmax.xlane.f32.xlu0 %v5381
        %v5629 = vpop.xlane.xlu0 %5628
        %5630 = vmax.xlane.f32.xlu0 %v5384
        %v5631 = vpop.xlane.xlu0 %5630
        %5632 = vmax.xlane.f32.xlu0 %v5389
        %v5633 = vpop.xlane.xlu0 %5632
        %5634 = vmax.xlane.f32.xlu0 %v5392
        %v5635 = vpop.xlane.xlu0 %5634
        %5636 = vmax.xlane.f32.xlu0 %v5397
        %v5637 = vpop.xlane.xlu0 %5636
        %5638 = vmax.xlane.f32.xlu0 %v5400
        %v5639 = vpop.xlane.xlu0 %5638
        %5640 = vmax.xlane.f32.xlu0 %v5405
        %v5641 = vpop.xlane.xlu0 %5640
        %5642 = vmax.xlane.f32.xlu0 %v5408
        %v5643 = vpop.xlane.xlu0 %5642
        %5644 = vmax.xlane.f32.xlu0 %v5413
        %v5645 = vpop.xlane.xlu0 %5644
        %5646 = vmax.xlane.f32.xlu0 %v5416
        %v5647 = vpop.xlane.xlu0 %5646
        %5648 = vmax.xlane.f32.xlu0 %v5421
        %v5649 = vpop.xlane.xlu0 %5648
        %5650 = vmax.xlane.f32.xlu0 %v5424
        %v5651 = vpop.xlane.xlu0 %5650
        %5652 = vmax.xlane.f32.xlu0 %v5429
        %v5653 = vpop.xlane.xlu0 %5652
        %5654 = vmax.xlane.f32.xlu0 %v5432
        %v5655 = vpop.xlane.xlu0 %5654
        %5656 = vmax.xlane.f32.xlu0 %v5437
        %v5657 = vpop.xlane.xlu0 %5656
        %5658 = vmax.xlane.f32.xlu0 %v5440
        %v5659 = vpop.xlane.xlu0 %5658
        %5660 = vmax.xlane.f32.xlu0 %v5502
        %v5661 = vpop.xlane.xlu0 %5660
        %5662 = vmax.xlane.f32.xlu0 %v5505
        %v5663 = vpop.xlane.xlu0 %5662
        %5664 = vmax.xlane.f32.xlu0 %v5510
        %v5665 = vpop.xlane.xlu0 %5664
        %5666 = vmax.xlane.f32.xlu0 %v5513
        %v5667 = vpop.xlane.xlu0 %5666
        %5668 = vmax.xlane.f32.xlu0 %v5518
        %v5669 = vpop.xlane.xlu0 %5668
        %5670 = vmax.xlane.f32.xlu0 %v5521
        %v5671 = vpop.xlane.xlu0 %5670
        %5672 = vmax.xlane.f32.xlu0 %v5526
        %v5673 = vpop.xlane.xlu0 %5672
        %5674 = vmax.xlane.f32.xlu0 %v5529
        %v5675 = vpop.xlane.xlu0 %5674
        %5676 = vmax.xlane.f32.xlu0 %v5534
        %v5677 = vpop.xlane.xlu0 %5676
        %5678 = vmax.xlane.f32.xlu0 %v5537
        %v5679 = vpop.xlane.xlu0 %5678
        %5680 = vmax.xlane.f32.xlu0 %v5542
        %v5681 = vpop.xlane.xlu0 %5680
        %5682 = vmax.xlane.f32.xlu0 %v5545
        %v5683 = vpop.xlane.xlu0 %5682
        %5684 = vmax.xlane.f32.xlu0 %v5550
        %v5685 = vpop.xlane.xlu0 %5684
        %5686 = vmax.xlane.f32.xlu0 %v5553
        %v5687 = vpop.xlane.xlu0 %5686
        %5688 = vmax.xlane.f32.xlu0 %v5558
        %v5689 = vpop.xlane.xlu0 %5688
        %5690 = vmax.xlane.f32.xlu0 %v5561
        %v5691 = vpop.xlane.xlu0 %5690
        %v5692 = vsub.f32 %v5139, %v5565
        %v5693 = vsub.f32 %v5142, %v5567
        %v5694 = vsub.f32 %v5147, %v5569
        %v5695 = vsub.f32 %v5150, %v5571
        %v5696 = vsub.f32 %v5155, %v5573
        %v5697 = vsub.f32 %v5158, %v5575
        %v5698 = vsub.f32 %v5163, %v5577
        %v5699 = vsub.f32 %v5166, %v5579
        %v5700 = vsub.f32 %v5171, %v5581
        %v5701 = vsub.f32 %v5174, %v5583
        %v5702 = vsub.f32 %v5179, %v5585
        %v5703 = vsub.f32 %v5182, %v5587
        %v5704 = vsub.f32 %v5187, %v5589
        %v5705 = vsub.f32 %v5190, %v5591
        %v5706 = vsub.f32 %v5195, %v5593
        %v5707 = vsub.f32 %v5198, %v5595
        %v5708 = vsub.f32 %v5260, %v5597
        %v5709 = vsub.f32 %v5263, %v5599
        %v5710 = vsub.f32 %v5268, %v5601
        %v5711 = vsub.f32 %v5271, %v5603
        %v5712 = vsub.f32 %v5276, %v5605
        %v5713 = vsub.f32 %v5279, %v5607
        %v5714 = vsub.f32 %v5284, %v5609
        %v5715 = vsub.f32 %v5287, %v5611
        %v5716 = vsub.f32 %v5292, %v5613
        %v5717 = vsub.f32 %v5295, %v5615
        %v5718 = vsub.f32 %v5300, %v5617
        %v5719 = vsub.f32 %v5303, %v5619
        %v5720 = vsub.f32 %v5308, %v5621
        %v5721 = vsub.f32 %v5311, %v5623
        %v5722 = vsub.f32 %v5316, %v5625
        %v5723 = vsub.f32 %v5319, %v5627
        %v5724 = vsub.f32 %v5381, %v5629
        %v5725 = vsub.f32 %v5384, %v5631
        %v5726 = vsub.f32 %v5389, %v5633
        %v5727 = vsub.f32 %v5392, %v5635
        %v5728 = vsub.f32 %v5397, %v5637
        %v5729 = vsub.f32 %v5400, %v5639
        %v5730 = vsub.f32 %v5405, %v5641
        %v5731 = vsub.f32 %v5408, %v5643
        %v5732 = vsub.f32 %v5413, %v5645
        %v5733 = vsub.f32 %v5416, %v5647
        %v5734 = vsub.f32 %v5421, %v5649
        %v5735 = vsub.f32 %v5424, %v5651
        %v5736 = vsub.f32 %v5429, %v5653
        %v5737 = vsub.f32 %v5432, %v5655
        %v5738 = vsub.f32 %v5437, %v5657
        %v5739 = vsub.f32 %v5440, %v5659
        %v5740 = vsub.f32 %v5502, %v5661
        %v5741 = vsub.f32 %v5505, %v5663
        %v5742 = vsub.f32 %v5510, %v5665
        %v5743 = vsub.f32 %v5513, %v5667
        %v5744 = vsub.f32 %v5518, %v5669
        %v5745 = vsub.f32 %v5521, %v5671
        %v5746 = vsub.f32 %v5526, %v5673
        %v5747 = vsub.f32 %v5529, %v5675
        %v5748 = vsub.f32 %v5534, %v5677
        %v5749 = vsub.f32 %v5537, %v5679
        %v5750 = vsub.f32 %v5542, %v5681
        %v5751 = vsub.f32 %v5545, %v5683
        %v5752 = vsub.f32 %v5550, %v5685
        %v5753 = vsub.f32 %v5553, %v5687
        %v5754 = vsub.f32 %v5558, %v5689
        %v5755 = vsub.f32 %v5561, %v5691
        %v5756 = vmul.f32 %v5692, 1.442695
        %v5757 = vpow.pop %v5756
        %v5758 = vmul.f32 %v5693, 1.442695
        %v5759 = vpow.pop %v5758
        %v5760 = vmul.f32 %v5694, 1.442695
        %v5761 = vpow.pop %v5760
        %v5762 = vmul.f32 %v5695, 1.442695
        %v5763 = vpow.pop %v5762
        %v5764 = vmul.f32 %v5696, 1.442695
        %v5765 = vpow.pop %v5764
        %v5766 = vmul.f32 %v5697, 1.442695
        %v5767 = vpow.pop %v5766
        %v5768 = vmul.f32 %v5698, 1.442695
        %v5769 = vpow.pop %v5768
        %v5770 = vmul.f32 %v5699, 1.442695
        %v5771 = vpow.pop %v5770
        %v5772 = vmul.f32 %v5700, 1.442695
        %v5773 = vpow.pop %v5772
        %v5774 = vmul.f32 %v5701, 1.442695
        %v5775 = vpow.pop %v5774
        %v5776 = vmul.f32 %v5702, 1.442695
        %v5777 = vpow.pop %v5776
        %v5778 = vmul.f32 %v5703, 1.442695
        %v5779 = vpow.pop %v5778
        %v5780 = vmul.f32 %v5704, 1.442695
        %v5781 = vpow.pop %v5780
        %v5782 = vmul.f32 %v5705, 1.442695
        %v5783 = vpow.pop %v5782
        %v5784 = vmul.f32 %v5706, 1.442695
        %v5785 = vpow.pop %v5784
        %v5786 = vmul.f32 %v5707, 1.442695
        %v5787 = vpow.pop %v5786
        %v5788 = vmul.f32 %v5708, 1.442695
        %v5789 = vpow.pop %v5788
        %v5790 = vmul.f32 %v5709, 1.442695
        %v5791 = vpow.pop %v5790
        %v5792 = vmul.f32 %v5710, 1.442695
        %v5793 = vpow.pop %v5792
        %v5794 = vmul.f32 %v5711, 1.442695
        %v5795 = vpow.pop %v5794
        %v5796 = vmul.f32 %v5712, 1.442695
        %v5797 = vpow.pop %v5796
        %v5798 = vmul.f32 %v5713, 1.442695
        %v5799 = vpow.pop %v5798
        %v5800 = vmul.f32 %v5714, 1.442695
        %v5801 = vpow.pop %v5800
        %v5802 = vmul.f32 %v5715, 1.442695
        %v5803 = vpow.pop %v5802
        %v5804 = vmul.f32 %v5716, 1.442695
        %v5805 = vpow.pop %v5804
        %v5806 = vmul.f32 %v5717, 1.442695
        %v5807 = vpow.pop %v5806
        %v5808 = vmul.f32 %v5718, 1.442695
        %v5809 = vpow.pop %v5808
        %v5810 = vmul.f32 %v5719, 1.442695
        %v5811 = vpow.pop %v5810
        %v5812 = vmul.f32 %v5720, 1.442695
        %v5813 = vpow.pop %v5812
        %v5814 = vmul.f32 %v5721, 1.442695
        %v5815 = vpow.pop %v5814
        %v5816 = vmul.f32 %v5722, 1.442695
        %v5817 = vpow.pop %v5816
        %v5818 = vmul.f32 %v5723, 1.442695
        %v5819 = vpow.pop %v5818
        %v5820 = vmul.f32 %v5724, 1.442695
        %v5821 = vpow.pop %v5820
        %v5822 = vmul.f32 %v5725, 1.442695
        %v5823 = vpow.pop %v5822
        %v5824 = vmul.f32 %v5726, 1.442695
        %v5825 = vpow.pop %v5824
        %v5826 = vmul.f32 %v5727, 1.442695
        %v5827 = vpow.pop %v5826
        %v5828 = vmul.f32 %v5728, 1.442695
        %v5829 = vpow.pop %v5828
        %v5830 = vmul.f32 %v5729, 1.442695
        %v5831 = vpow.pop %v5830
        %v5832 = vmul.f32 %v5730, 1.442695
        %v5833 = vpow.pop %v5832
        %v5834 = vmul.f32 %v5731, 1.442695
        %v5835 = vpow.pop %v5834
        %v5836 = vmul.f32 %v5732, 1.442695
        %v5837 = vpow.pop %v5836
        %v5838 = vmul.f32 %v5733, 1.442695
        %v5839 = vpow.pop %v5838
        %v5840 = vmul.f32 %v5734, 1.442695
        %v5841 = vpow.pop %v5840
        %v5842 = vmul.f32 %v5735, 1.442695
        %v5843 = vpow.pop %v5842
        %v5844 = vmul.f32 %v5736, 1.442695
        %v5845 = vpow.pop %v5844
        %v5846 = vmul.f32 %v5737, 1.442695
        %v5847 = vpow.pop %v5846
        %v5848 = vmul.f32 %v5738, 1.442695
        %v5849 = vpow.pop %v5848
        %v5850 = vmul.f32 %v5739, 1.442695
        %v5851 = vpow.pop %v5850
        %v5852 = vmul.f32 %v5740, 1.442695
        %v5853 = vpow.pop %v5852
        %v5854 = vmul.f32 %v5741, 1.442695
        %v5855 = vpow.pop %v5854
        %v5856 = vmul.f32 %v5742, 1.442695
        %v5857 = vpow.pop %v5856
        %v5858 = vmul.f32 %v5743, 1.442695
        %v5859 = vpow.pop %v5858
        %v5860 = vmul.f32 %v5744, 1.442695
        %v5861 = vpow.pop %v5860
        %v5862 = vmul.f32 %v5745, 1.442695
        %v5863 = vpow.pop %v5862
        %v5864 = vmul.f32 %v5746, 1.442695
        %v5865 = vpow.pop %v5864
        %v5866 = vmul.f32 %v5747, 1.442695
        %v5867 = vpow.pop %v5866
        %v5868 = vmul.f32 %v5748, 1.442695
        %v5869 = vpow.pop %v5868
        %v5870 = vmul.f32 %v5749, 1.442695
        %v5871 = vpow.pop %v5870
        %v5872 = vmul.f32 %v5750, 1.442695
        %v5873 = vpow.pop %v5872
        %v5874 = vmul.f32 %v5751, 1.442695
        %v5875 = vpow.pop %v5874
        %v5876 = vmul.f32 %v5752, 1.442695
        %v5877 = vpow.pop %v5876
        %v5878 = vmul.f32 %v5753, 1.442695
        %v5879 = vpow.pop %v5878
        %v5880 = vmul.f32 %v5754, 1.442695
        %v5881 = vpow.pop %v5880
        %v5882 = vmul.f32 %v5755, 1.442695
        %v5883 = vpow.pop %v5882
        %5884 = vadd.xlane.f32.xlu0 %v5757
        %v5885 = vpop.xlane.xlu0 %5884
        %5886 = vadd.xlane.f32.xlu0 %v5759
        %v5887 = vpop.xlane.xlu0 %5886
        %5888 = vadd.xlane.f32.xlu0 %v5761
        %v5889 = vpop.xlane.xlu0 %5888
        %5890 = vadd.xlane.f32.xlu0 %v5763
        %v5891 = vpop.xlane.xlu0 %5890
        %5892 = vadd.xlane.f32.xlu0 %v5765
        %v5893 = vpop.xlane.xlu0 %5892
        %5894 = vadd.xlane.f32.xlu0 %v5767
        %v5895 = vpop.xlane.xlu0 %5894
        %5896 = vadd.xlane.f32.xlu0 %v5769
        %v5897 = vpop.xlane.xlu0 %5896
        %5898 = vadd.xlane.f32.xlu0 %v5771
        %v5899 = vpop.xlane.xlu0 %5898
        %5900 = vadd.xlane.f32.xlu0 %v5773
        %v5901 = vpop.xlane.xlu0 %5900
        %5902 = vadd.xlane.f32.xlu0 %v5775
        %v5903 = vpop.xlane.xlu0 %5902
        %5904 = vadd.xlane.f32.xlu0 %v5777
        %v5905 = vpop.xlane.xlu0 %5904
        %5906 = vadd.xlane.f32.xlu0 %v5779
        %v5907 = vpop.xlane.xlu0 %5906
        %5908 = vadd.xlane.f32.xlu0 %v5781
        %v5909 = vpop.xlane.xlu0 %5908
        %5910 = vadd.xlane.f32.xlu0 %v5783
        %v5911 = vpop.xlane.xlu0 %5910
        %5912 = vadd.xlane.f32.xlu0 %v5785
        %v5913 = vpop.xlane.xlu0 %5912
        %5914 = vadd.xlane.f32.xlu0 %v5787
        %v5915 = vpop.xlane.xlu0 %5914
        %5916 = vadd.xlane.f32.xlu0 %v5789
        %v5917 = vpop.xlane.xlu0 %5916
        %5918 = vadd.xlane.f32.xlu0 %v5791
        %v5919 = vpop.xlane.xlu0 %5918
        %5920 = vadd.xlane.f32.xlu0 %v5793
        %v5921 = vpop.xlane.xlu0 %5920
        %5922 = vadd.xlane.f32.xlu0 %v5795
        %v5923 = vpop.xlane.xlu0 %5922
        %5924 = vadd.xlane.f32.xlu0 %v5797
        %v5925 = vpop.xlane.xlu0 %5924
        %5926 = vadd.xlane.f32.xlu0 %v5799
        %v5927 = vpop.xlane.xlu0 %5926
        %5928 = vadd.xlane.f32.xlu0 %v5801
        %v5929 = vpop.xlane.xlu0 %5928
        %5930 = vadd.xlane.f32.xlu0 %v5803
        %v5931 = vpop.xlane.xlu0 %5930
        %5932 = vadd.xlane.f32.xlu0 %v5805
        %v5933 = vpop.xlane.xlu0 %5932
        %5934 = vadd.xlane.f32.xlu0 %v5807
        %v5935 = vpop.xlane.xlu0 %5934
        %5936 = vadd.xlane.f32.xlu0 %v5809
        %v5937 = vpop.xlane.xlu0 %5936
        %5938 = vadd.xlane.f32.xlu0 %v5811
        %v5939 = vpop.xlane.xlu0 %5938
        %5940 = vadd.xlane.f32.xlu0 %v5813
        %v5941 = vpop.xlane.xlu0 %5940
        %5942 = vadd.xlane.f32.xlu0 %v5815
        %v5943 = vpop.xlane.xlu0 %5942
        %5944 = vadd.xlane.f32.xlu0 %v5817
        %v5945 = vpop.xlane.xlu0 %5944
        %5946 = vadd.xlane.f32.xlu0 %v5819
        %v5947 = vpop.xlane.xlu0 %5946
        %5948 = vadd.xlane.f32.xlu0 %v5821
        %v5949 = vpop.xlane.xlu0 %5948
        %5950 = vadd.xlane.f32.xlu0 %v5823
        %v5951 = vpop.xlane.xlu0 %5950
        %5952 = vadd.xlane.f32.xlu0 %v5825
        %v5953 = vpop.xlane.xlu0 %5952
        %5954 = vadd.xlane.f32.xlu0 %v5827
        %v5955 = vpop.xlane.xlu0 %5954
        %5956 = vadd.xlane.f32.xlu0 %v5829
        %v5957 = vpop.xlane.xlu0 %5956
        %5958 = vadd.xlane.f32.xlu0 %v5831
        %v5959 = vpop.xlane.xlu0 %5958
        %5960 = vadd.xlane.f32.xlu0 %v5833
        %v5961 = vpop.xlane.xlu0 %5960
        %5962 = vadd.xlane.f32.xlu0 %v5835
        %v5963 = vpop.xlane.xlu0 %5962
        %5964 = vadd.xlane.f32.xlu0 %v5837
        %v5965 = vpop.xlane.xlu0 %5964
        %5966 = vadd.xlane.f32.xlu0 %v5839
        %v5967 = vpop.xlane.xlu0 %5966
        %5968 = vadd.xlane.f32.xlu0 %v5841
        %v5969 = vpop.xlane.xlu0 %5968
        %5970 = vadd.xlane.f32.xlu0 %v5843
        %v5971 = vpop.xlane.xlu0 %5970
        %5972 = vadd.xlane.f32.xlu0 %v5845
        %v5973 = vpop.xlane.xlu0 %5972
        %5974 = vadd.xlane.f32.xlu0 %v5847
        %v5975 = vpop.xlane.xlu0 %5974
        %5976 = vadd.xlane.f32.xlu0 %v5849
        %v5977 = vpop.xlane.xlu0 %5976
        %5978 = vadd.xlane.f32.xlu0 %v5851
        %v5979 = vpop.xlane.xlu0 %5978
        %5980 = vadd.xlane.f32.xlu0 %v5853
        %v5981 = vpop.xlane.xlu0 %5980
        %5982 = vadd.xlane.f32.xlu0 %v5855
        %v5983 = vpop.xlane.xlu0 %5982
        %5984 = vadd.xlane.f32.xlu0 %v5857
        %v5985 = vpop.xlane.xlu0 %5984
        %5986 = vadd.xlane.f32.xlu0 %v5859
        %v5987 = vpop.xlane.xlu0 %5986
        %5988 = vadd.xlane.f32.xlu0 %v5861
        %v5989 = vpop.xlane.xlu0 %5988
        %5990 = vadd.xlane.f32.xlu0 %v5863
        %v5991 = vpop.xlane.xlu0 %5990
        %5992 = vadd.xlane.f32.xlu0 %v5865
        %v5993 = vpop.xlane.xlu0 %5992
        %5994 = vadd.xlane.f32.xlu0 %v5867
        %v5995 = vpop.xlane.xlu0 %5994
        %5996 = vadd.xlane.f32.xlu0 %v5869
        %v5997 = vpop.xlane.xlu0 %5996
        %5998 = vadd.xlane.f32.xlu0 %v5871
        %v5999 = vpop.xlane.xlu0 %5998
        %6000 = vadd.xlane.f32.xlu0 %v5873
        %v6001 = vpop.xlane.xlu0 %6000
        %6002 = vadd.xlane.f32.xlu0 %v5875
        %v6003 = vpop.xlane.xlu0 %6002
        %6004 = vadd.xlane.f32.xlu0 %v5877
        %v6005 = vpop.xlane.xlu0 %6004
        %6006 = vadd.xlane.f32.xlu0 %v5879
        %v6007 = vpop.xlane.xlu0 %6006
        %6008 = vadd.xlane.f32.xlu0 %v5881
        %v6009 = vpop.xlane.xlu0 %6008
        %6010 = vadd.xlane.f32.xlu0 %v5883
        %v6011 = vpop.xlane.xlu0 %6010
        %v6012 = vrcp.pop %v5885
        %v6013 = vrcp.pop %v5887
        %v6014 = vrcp.pop %v5889
        %v6015 = vrcp.pop %v5891
        %v6016 = vrcp.pop %v5893
        %v6017 = vrcp.pop %v5895
        %v6018 = vrcp.pop %v5897
        %v6019 = vrcp.pop %v5899
        %v6020 = vrcp.pop %v5901
        %v6021 = vrcp.pop %v5903
        %v6022 = vrcp.pop %v5905
        %v6023 = vrcp.pop %v5907
        %v6024 = vrcp.pop %v5909
        %v6025 = vrcp.pop %v5911
        %v6026 = vrcp.pop %v5913
        %v6027 = vrcp.pop %v5915
        %v6028 = vrcp.pop %v5917
        %v6029 = vrcp.pop %v5919
        %v6030 = vrcp.pop %v5921
        %v6031 = vrcp.pop %v5923
        %v6032 = vrcp.pop %v5925
        %v6033 = vrcp.pop %v5927
        %v6034 = vrcp.pop %v5929
        %v6035 = vrcp.pop %v5931
        %v6036 = vrcp.pop %v5933
        %v6037 = vrcp.pop %v5935
        %v6038 = vrcp.pop %v5937
        %v6039 = vrcp.pop %v5939
        %v6040 = vrcp.pop %v5941
        %v6041 = vrcp.pop %v5943
        %v6042 = vrcp.pop %v5945
        %v6043 = vrcp.pop %v5947
        %v6044 = vrcp.pop %v5949
        %v6045 = vrcp.pop %v5951
        %v6046 = vrcp.pop %v5953
        %v6047 = vrcp.pop %v5955
        %v6048 = vrcp.pop %v5957
        %v6049 = vrcp.pop %v5959
        %v6050 = vrcp.pop %v5961
        %v6051 = vrcp.pop %v5963
        %v6052 = vrcp.pop %v5965
        %v6053 = vrcp.pop %v5967
        %v6054 = vrcp.pop %v5969
        %v6055 = vrcp.pop %v5971
        %v6056 = vrcp.pop %v5973
        %v6057 = vrcp.pop %v5975
        %v6058 = vrcp.pop %v5977
        %v6059 = vrcp.pop %v5979
        %v6060 = vrcp.pop %v5981
        %v6061 = vrcp.pop %v5983
        %v6062 = vrcp.pop %v5985
        %v6063 = vrcp.pop %v5987
        %v6064 = vrcp.pop %v5989
        %v6065 = vrcp.pop %v5991
        %v6066 = vrcp.pop %v5993
        %v6067 = vrcp.pop %v5995
        %v6068 = vrcp.pop %v5997
        %v6069 = vrcp.pop %v5999
        %v6070 = vrcp.pop %v6001
        %v6071 = vrcp.pop %v6003
        %v6072 = vrcp.pop %v6005
        %v6073 = vrcp.pop %v6007
        %v6074 = vrcp.pop %v6009
        %v6075 = vrcp.pop %v6011
        %v6076 = vmul.f32 %v5757, %v6012
        %v6077 = vmul.f32 %v5759, %v6013
        %v6078 = vmul.f32 %v5761, %v6014
        %v6079 = vmul.f32 %v5763, %v6015
        %v6080 = vmul.f32 %v5765, %v6016
        %v6081 = vmul.f32 %v5767, %v6017
        %v6082 = vmul.f32 %v5769, %v6018
        %v6083 = vmul.f32 %v5771, %v6019
        %v6084 = vmul.f32 %v5773, %v6020
        %v6085 = vmul.f32 %v5775, %v6021
        %v6086 = vmul.f32 %v5777, %v6022
        %v6087 = vmul.f32 %v5779, %v6023
        %v6088 = vmul.f32 %v5781, %v6024
        %v6089 = vmul.f32 %v5783, %v6025
        %v6090 = vmul.f32 %v5785, %v6026
        %v6091 = vmul.f32 %v5787, %v6027
        %v6092 = vmul.f32 %v5789, %v6028
        %v6093 = vmul.f32 %v5791, %v6029
        %v6094 = vmul.f32 %v5793, %v6030
        %v6095 = vmul.f32 %v5795, %v6031
        %v6096 = vmul.f32 %v5797, %v6032
        %v6097 = vmul.f32 %v5799, %v6033
        %v6098 = vmul.f32 %v5801, %v6034
        %v6099 = vmul.f32 %v5803, %v6035
        %v6100 = vmul.f32 %v5805, %v6036
        %v6101 = vmul.f32 %v5807, %v6037
        %v6102 = vmul.f32 %v5809, %v6038
        %v6103 = vmul.f32 %v5811, %v6039
        %v6104 = vmul.f32 %v5813, %v6040
        %v6105 = vmul.f32 %v5815, %v6041
        %v6106 = vmul.f32 %v5817, %v6042
        %v6107 = vmul.f32 %v5819, %v6043
        %v6108 = vmul.f32 %v5821, %v6044
        %v6109 = vmul.f32 %v5823, %v6045
        %v6110 = vmul.f32 %v5825, %v6046
        %v6111 = vmul.f32 %v5827, %v6047
        %v6112 = vmul.f32 %v5829, %v6048
        %v6113 = vmul.f32 %v5831, %v6049
        %v6114 = vmul.f32 %v5833, %v6050
        %v6115 = vmul.f32 %v5835, %v6051
        %v6116 = vmul.f32 %v5837, %v6052
        %v6117 = vmul.f32 %v5839, %v6053
        %v6118 = vmul.f32 %v5841, %v6054
        %v6119 = vmul.f32 %v5843, %v6055
        %v6120 = vmul.f32 %v5845, %v6056
        %v6121 = vmul.f32 %v5847, %v6057
        %v6122 = vmul.f32 %v5849, %v6058
        %v6123 = vmul.f32 %v5851, %v6059
        %v6124 = vmul.f32 %v5853, %v6060
        %v6125 = vmul.f32 %v5855, %v6061
        %v6126 = vmul.f32 %v5857, %v6062
        %v6127 = vmul.f32 %v5859, %v6063
        %v6128 = vmul.f32 %v5861, %v6064
        %v6129 = vmul.f32 %v5863, %v6065
        %v6130 = vmul.f32 %v5865, %v6066
        %v6131 = vmul.f32 %v5867, %v6067
        %v6132 = vmul.f32 %v5869, %v6068
        %v6133 = vmul.f32 %v5871, %v6069
        %v6134 = vmul.f32 %v5873, %v6070
        %v6135 = vmul.f32 %v5875, %v6071
        %v6136 = vmul.f32 %v5877, %v6072
        %v6137 = vmul.f32 %v5879, %v6073
        %v6138 = vmul.f32 %v5881, %v6074
        %v6139 = vmul.f32 %v5883, %v6075
        %v6140 = vpack.c.bf16 %v6077, %v6076
        %v6141 = vpack.c.bf16 %v6079, %v6078
        %v6142 = vpack.c.bf16 %v6081, %v6080
        %v6143 = vpack.c.bf16 %v6083, %v6082
        %v6144 = vpack.c.bf16 %v6085, %v6084
        %v6145 = vpack.c.bf16 %v6087, %v6086
        %v6146 = vpack.c.bf16 %v6089, %v6088
        %v6147 = vpack.c.bf16 %v6091, %v6090
        %v6148 = vpack.c.bf16 %v6093, %v6092
        %v6149 = vpack.c.bf16 %v6095, %v6094
        %v6150 = vpack.c.bf16 %v6097, %v6096
        %v6151 = vpack.c.bf16 %v6099, %v6098
        %v6152 = vpack.c.bf16 %v6101, %v6100
        %v6153 = vpack.c.bf16 %v6103, %v6102
        %v6154 = vpack.c.bf16 %v6105, %v6104
        %v6155 = vpack.c.bf16 %v6107, %v6106
        %v6156 = vpack.c.bf16 %v6109, %v6108
        %v6157 = vpack.c.bf16 %v6111, %v6110
        %v6158 = vpack.c.bf16 %v6113, %v6112
        %v6159 = vpack.c.bf16 %v6115, %v6114
        %v6160 = vpack.c.bf16 %v6117, %v6116
        %v6161 = vpack.c.bf16 %v6119, %v6118
        %v6162 = vpack.c.bf16 %v6121, %v6120
        %v6163 = vpack.c.bf16 %v6123, %v6122
        %v6164 = vpack.c.bf16 %v6125, %v6124
        %v6165 = vpack.c.bf16 %v6127, %v6126
        %v6166 = vpack.c.bf16 %v6129, %v6128
        %v6167 = vpack.c.bf16 %v6131, %v6130
        %v6168 = vpack.c.bf16 %v6133, %v6132
        %v6169 = vpack.c.bf16 %v6135, %v6134
        %v6170 = vpack.c.bf16 %v6137, %v6136
        %v6171 = vpack.c.bf16 %v6139, %v6138
        %6172 = vmatprep.subr.bf16.mxu0 0
        %6173 = vmatpush1.bf16.xpose.msra.mxu0 %v5072
        %6174 = vmatprep.subr.bf16.mxu0 0
        %6175 = vmatpush1.bf16.xpose.msra.mxu0 %v5073
        %6176 = vmatprep.subr.bf16.mxu0 0
        %6177 = vmatpush1.bf16.xpose.msra.mxu0 0
        %6178 = vmatprep.subr.bf16.mxu0 0
        %6179 = vmatpush1.bf16.xpose.msra.mxu0 0
        %6180 = vmatprep.subr.bf16.mxu0 0
        %6181 = vmatpush1.bf16.xpose.msra.mxu0 0
        %6182 = vmatprep.subr.bf16.mxu0 0
        %6183 = vmatpush1.bf16.xpose.msra.mxu0 0
        %6184 = vmatprep.subr.bf16.mxu0 0
        %6185 = vmatpush1.bf16.xpose.msra.mxu0 0
        %6186 = vmatprep.subr.bf16.mxu0 0
        %6187 = vmatpush1.bf16.xpose.msra.mxu0 0
        %6188 = vmatprep.subr.bf16.mxu0 0
        %6189 = vmatpush1.bf16.xpose.msra.mxu0 0
        %6190 = vmatprep.subr.bf16.mxu0 0
        %6191 = vmatpush1.bf16.xpose.msra.mxu0 0
        %6192 = vmatprep.subr.bf16.mxu0 0
        %6193 = vmatpush1.bf16.xpose.msra.mxu0 0
        %6194 = vmatprep.subr.bf16.mxu0 0
        %6195 = vmatpush1.bf16.xpose.msra.mxu0 0
        %6196 = vmatprep.subr.bf16.mxu0 0
        %6197 = vmatpush1.bf16.xpose.msra.mxu0 0
        %6198 = vmatprep.subr.bf16.mxu0 0
        %6199 = vmatpush1.bf16.xpose.msra.mxu0 0
        %6200 = vmatprep.subr.bf16.mxu0 0
        %6201 = vmatpush1.bf16.xpose.msra.mxu0 0
        %6202 = vmatprep.subr.bf16.mxu0 0
        %6203 = vmatpush1.bf16.xpose.msra.mxu0 0
        %6204 = vmatprep.mubr.bf16.mxu0 0
        %6205 = vmatmul.mubr.bf16.gmra.mrb[0].mxu0 %v6140
        %v6206 = vpop.f32.mrb[0].mxu0
        %v6207 = vadd.f32 0.0, %v6206
        %v6208 = vpop.f32.mrb[0].mxu0
        %v6209 = vpop.f32.mrb[0].mxu0
        %v6210 = vadd.f32 0.0, %v6209
        %v6211 = vpop.f32.mrb[0].mxu0
        %6212 = vmatprep.mubr.bf16.mxu0 0
        %6213 = vmatmul.mubr.bf16.gmra.mrb[0].mxu0 %v6141
        %v6214 = vpop.f32.mrb[0].mxu0
        %v6215 = vadd.f32 0.0, %v6214
        %v6216 = vpop.f32.mrb[0].mxu0
        %v6217 = vpop.f32.mrb[0].mxu0
        %v6218 = vadd.f32 0.0, %v6217
        %v6219 = vpop.f32.mrb[0].mxu0
        %6220 = vmatprep.mubr.bf16.mxu0 0
        %6221 = vmatmul.mubr.bf16.gmra.mrb[0].mxu0 %v6142
        %v6222 = vpop.f32.mrb[0].mxu0
        %v6223 = vadd.f32 0.0, %v6222
        %v6224 = vpop.f32.mrb[0].mxu0
        %v6225 = vpop.f32.mrb[0].mxu0
        %v6226 = vadd.f32 0.0, %v6225
        %v6227 = vpop.f32.mrb[0].mxu0
        %6228 = vmatprep.mubr.bf16.mxu0 0
        %6229 = vmatmul.mubr.bf16.gmra.mrb[0].mxu0 %v6143
        %v6230 = vpop.f32.mrb[0].mxu0
        %v6231 = vadd.f32 0.0, %v6230
        %v6232 = vpop.f32.mrb[0].mxu0
        %v6233 = vpop.f32.mrb[0].mxu0
        %v6234 = vadd.f32 0.0, %v6233
        %v6235 = vpop.f32.mrb[0].mxu0
        %6236 = vmatprep.mubr.bf16.mxu0 0
        %6237 = vmatmul.mubr.bf16.gmra.mrb[0].mxu0 %v6144
        %v6238 = vpop.f32.mrb[0].mxu0
        %v6239 = vadd.f32 0.0, %v6238
        %v6240 = vpop.f32.mrb[0].mxu0
        %v6241 = vpop.f32.mrb[0].mxu0
        %v6242 = vadd.f32 0.0, %v6241
        %v6243 = vpop.f32.mrb[0].mxu0
        %6244 = vmatprep.mubr.bf16.mxu0 0
        %6245 = vmatmul.mubr.bf16.gmra.mrb[0].mxu0 %v6145
        %v6246 = vpop.f32.mrb[0].mxu0
        %v6247 = vadd.f32 0.0, %v6246
        %v6248 = vpop.f32.mrb[0].mxu0
        %v6249 = vpop.f32.mrb[0].mxu0
        %v6250 = vadd.f32 0.0, %v6249
        %v6251 = vpop.f32.mrb[0].mxu0
        %6252 = vmatprep.mubr.bf16.mxu0 0
        %6253 = vmatmul.mubr.bf16.gmra.mrb[0].mxu0 %v6146
        %v6254 = vpop.f32.mrb[0].mxu0
        %v6255 = vadd.f32 0.0, %v6254
        %v6256 = vpop.f32.mrb[0].mxu0
        %v6257 = vpop.f32.mrb[0].mxu0
        %v6258 = vadd.f32 0.0, %v6257
        %v6259 = vpop.f32.mrb[0].mxu0
        %6260 = vmatprep.mubr.bf16.mxu0 0
        %6261 = vmatmul.mubr.bf16.gmra.mrb[0].mxu0 %v6147
        %v6262 = vpop.f32.mrb[0].mxu0
        %v6263 = vadd.f32 0.0, %v6262
        %v6264 = vpop.f32.mrb[0].mxu0
        %v6265 = vpop.f32.mrb[0].mxu0
        %v6266 = vadd.f32 0.0, %v6265
        %v6267 = vpop.f32.mrb[0].mxu0
        %6268 = vdwg.mxu0
        %6269 = vmatprep.subr.bf16.mxu0 0
        %6270 = vmatpush1.bf16.xpose.msra.mxu0 %v5074
        %6271 = vmatprep.subr.bf16.mxu0 0
        %6272 = vmatpush1.bf16.xpose.msra.mxu0 %v5075
        %6273 = vmatprep.subr.bf16.mxu0 0
        %6274 = vmatpush1.bf16.xpose.msra.mxu0 0
        %6275 = vmatprep.subr.bf16.mxu0 0
        %6276 = vmatpush1.bf16.xpose.msra.mxu0 0
        %6277 = vmatprep.subr.bf16.mxu0 0
        %6278 = vmatpush1.bf16.xpose.msra.mxu0 0
        %6279 = vmatprep.subr.bf16.mxu0 0
        %6280 = vmatpush1.bf16.xpose.msra.mxu0 0
        %6281 = vmatprep.subr.bf16.mxu0 0
        %6282 = vmatpush1.bf16.xpose.msra.mxu0 0
        %6283 = vmatprep.subr.bf16.mxu0 0
        %6284 = vmatpush1.bf16.xpose.msra.mxu0 0
        %6285 = vmatprep.subr.bf16.mxu0 0
        %6286 = vmatpush1.bf16.xpose.msra.mxu0 0
        %6287 = vmatprep.subr.bf16.mxu0 0
        %6288 = vmatpush1.bf16.xpose.msra.mxu0 0
        %6289 = vmatprep.subr.bf16.mxu0 0
        %6290 = vmatpush1.bf16.xpose.msra.mxu0 0
        %6291 = vmatprep.subr.bf16.mxu0 0
        %6292 = vmatpush1.bf16.xpose.msra.mxu0 0
        %6293 = vmatprep.subr.bf16.mxu0 0
        %6294 = vmatpush1.bf16.xpose.msra.mxu0 0
        %6295 = vmatprep.subr.bf16.mxu0 0
        %6296 = vmatpush1.bf16.xpose.msra.mxu0 0
        %6297 = vmatprep.subr.bf16.mxu0 0
        %6298 = vmatpush1.bf16.xpose.msra.mxu0 0
        %6299 = vmatprep.subr.bf16.mxu0 0
        %6300 = vmatpush1.bf16.xpose.msra.mxu0 0
        %6301 = vmatprep.mubr.bf16.mxu0 0
        %6302 = vmatmul.mubr.bf16.gmra.mrb[0].mxu0 %v6148
        %v6303 = vpop.f32.mrb[0].mxu0
        %v6304 = vadd.f32 0.0, %v6303
        %v6305 = vpop.f32.mrb[0].mxu0
        %v6306 = vpop.f32.mrb[0].mxu0
        %v6307 = vadd.f32 0.0, %v6306
        %v6308 = vpop.f32.mrb[0].mxu0
        %6309 = vmatprep.mubr.bf16.mxu0 0
        %6310 = vmatmul.mubr.bf16.gmra.mrb[0].mxu0 %v6149
        %v6311 = vpop.f32.mrb[0].mxu0
        %v6312 = vadd.f32 0.0, %v6311
        %v6313 = vpop.f32.mrb[0].mxu0
        %v6314 = vpop.f32.mrb[0].mxu0
        %v6315 = vadd.f32 0.0, %v6314
        %v6316 = vpop.f32.mrb[0].mxu0
        %6317 = vmatprep.mubr.bf16.mxu0 0
        %6318 = vmatmul.mubr.bf16.gmra.mrb[0].mxu0 %v6150
        %v6319 = vpop.f32.mrb[0].mxu0
        %v6320 = vadd.f32 0.0, %v6319
        %v6321 = vpop.f32.mrb[0].mxu0
        %v6322 = vpop.f32.mrb[0].mxu0
        %v6323 = vadd.f32 0.0, %v6322
        %v6324 = vpop.f32.mrb[0].mxu0
        %6325 = vmatprep.mubr.bf16.mxu0 0
        %6326 = vmatmul.mubr.bf16.gmra.mrb[0].mxu0 %v6151
        %v6327 = vpop.f32.mrb[0].mxu0
        %v6328 = vadd.f32 0.0, %v6327
        %v6329 = vpop.f32.mrb[0].mxu0
        %v6330 = vpop.f32.mrb[0].mxu0
        %v6331 = vadd.f32 0.0, %v6330
        %v6332 = vpop.f32.mrb[0].mxu0
        %6333 = vmatprep.mubr.bf16.mxu0 0
        %6334 = vmatmul.mubr.bf16.gmra.mrb[0].mxu0 %v6152
        %v6335 = vpop.f32.mrb[0].mxu0
        %v6336 = vadd.f32 0.0, %v6335
        %v6337 = vpop.f32.mrb[0].mxu0
        %v6338 = vpop.f32.mrb[0].mxu0
        %v6339 = vadd.f32 0.0, %v6338
        %v6340 = vpop.f32.mrb[0].mxu0
        %6341 = vmatprep.mubr.bf16.mxu0 0
        %6342 = vmatmul.mubr.bf16.gmra.mrb[0].mxu0 %v6153
        %v6343 = vpop.f32.mrb[0].mxu0
        %v6344 = vadd.f32 0.0, %v6343
        %v6345 = vpop.f32.mrb[0].mxu0
        %v6346 = vpop.f32.mrb[0].mxu0
        %v6347 = vadd.f32 0.0, %v6346
        %v6348 = vpop.f32.mrb[0].mxu0
        %6349 = vmatprep.mubr.bf16.mxu0 0
        %6350 = vmatmul.mubr.bf16.gmra.mrb[0].mxu0 %v6154
        %v6351 = vpop.f32.mrb[0].mxu0
        %v6352 = vadd.f32 0.0, %v6351
        %v6353 = vpop.f32.mrb[0].mxu0
        %v6354 = vpop.f32.mrb[0].mxu0
        %v6355 = vadd.f32 0.0, %v6354
        %v6356 = vpop.f32.mrb[0].mxu0
        %6357 = vmatprep.mubr.bf16.mxu0 0
        %6358 = vmatmul.mubr.bf16.gmra.mrb[0].mxu0 %v6155
        %v6359 = vpop.f32.mrb[0].mxu0
        %v6360 = vadd.f32 0.0, %v6359
        %v6361 = vpop.f32.mrb[0].mxu0
        %v6362 = vpop.f32.mrb[0].mxu0
        %v6363 = vadd.f32 0.0, %v6362
        %v6364 = vpop.f32.mrb[0].mxu0
        %6365 = vdwg.mxu0
        %6366 = vmatprep.subr.bf16.mxu0 0
        %6367 = vmatpush1.bf16.xpose.msra.mxu0 %v5076
        %6368 = vmatprep.subr.bf16.mxu0 0
        %6369 = vmatpush1.bf16.xpose.msra.mxu0 %v5077
        %6370 = vmatprep.subr.bf16.mxu0 0
        %6371 = vmatpush1.bf16.xpose.msra.mxu0 0
        %6372 = vmatprep.subr.bf16.mxu0 0
        %6373 = vmatpush1.bf16.xpose.msra.mxu0 0
        %6374 = vmatprep.subr.bf16.mxu0 0
        %6375 = vmatpush1.bf16.xpose.msra.mxu0 0
        %6376 = vmatprep.subr.bf16.mxu0 0
        %6377 = vmatpush1.bf16.xpose.msra.mxu0 0
        %6378 = vmatprep.subr.bf16.mxu0 0
        %6379 = vmatpush1.bf16.xpose.msra.mxu0 0
        %6380 = vmatprep.subr.bf16.mxu0 0
        %6381 = vmatpush1.bf16.xpose.msra.mxu0 0
        %6382 = vmatprep.subr.bf16.mxu0 0
        %6383 = vmatpush1.bf16.xpose.msra.mxu0 0
        %6384 = vmatprep.subr.bf16.mxu0 0
        %6385 = vmatpush1.bf16.xpose.msra.mxu0 0
        %6386 = vmatprep.subr.bf16.mxu0 0
        %6387 = vmatpush1.bf16.xpose.msra.mxu0 0
        %6388 = vmatprep.subr.bf16.mxu0 0
        %6389 = vmatpush1.bf16.xpose.msra.mxu0 0
        %6390 = vmatprep.subr.bf16.mxu0 0
        %6391 = vmatpush1.bf16.xpose.msra.mxu0 0
        %6392 = vmatprep.subr.bf16.mxu0 0
        %6393 = vmatpush1.bf16.xpose.msra.mxu0 0
        %6394 = vmatprep.subr.bf16.mxu0 0
        %6395 = vmatpush1.bf16.xpose.msra.mxu0 0
        %6396 = vmatprep.subr.bf16.mxu0 0
        %6397 = vmatpush1.bf16.xpose.msra.mxu0 0
        %6398 = vmatprep.mubr.bf16.mxu0 0
        %6399 = vmatmul.mubr.bf16.gmra.mrb[0].mxu0 %v6156
        %v6400 = vpop.f32.mrb[0].mxu0
        %v6401 = vadd.f32 0.0, %v6400
        %v6402 = vpop.f32.mrb[0].mxu0
        %v6403 = vpop.f32.mrb[0].mxu0
        %v6404 = vadd.f32 0.0, %v6403
        %v6405 = vpop.f32.mrb[0].mxu0
        %6406 = vmatprep.mubr.bf16.mxu0 0
        %6407 = vmatmul.mubr.bf16.gmra.mrb[0].mxu0 %v6157
        %v6408 = vpop.f32.mrb[0].mxu0
        %v6409 = vadd.f32 0.0, %v6408
        %v6410 = vpop.f32.mrb[0].mxu0
        %v6411 = vpop.f32.mrb[0].mxu0
        %v6412 = vadd.f32 0.0, %v6411
        %v6413 = vpop.f32.mrb[0].mxu0
        %6414 = vmatprep.mubr.bf16.mxu0 0
        %6415 = vmatmul.mubr.bf16.gmra.mrb[0].mxu0 %v6158
        %v6416 = vpop.f32.mrb[0].mxu0
        %v6417 = vadd.f32 0.0, %v6416
        %v6418 = vpop.f32.mrb[0].mxu0
        %v6419 = vpop.f32.mrb[0].mxu0
        %v6420 = vadd.f32 0.0, %v6419
        %v6421 = vpop.f32.mrb[0].mxu0
        %6422 = vmatprep.mubr.bf16.mxu0 0
        %6423 = vmatmul.mubr.bf16.gmra.mrb[0].mxu0 %v6159
        %v6424 = vpop.f32.mrb[0].mxu0
        %v6425 = vadd.f32 0.0, %v6424
        %v6426 = vpop.f32.mrb[0].mxu0
        %v6427 = vpop.f32.mrb[0].mxu0
        %v6428 = vadd.f32 0.0, %v6427
        %v6429 = vpop.f32.mrb[0].mxu0
        %6430 = vmatprep.mubr.bf16.mxu0 0
        %6431 = vmatmul.mubr.bf16.gmra.mrb[0].mxu0 %v6160
        %v6432 = vpop.f32.mrb[0].mxu0
        %v6433 = vadd.f32 0.0, %v6432
        %v6434 = vpop.f32.mrb[0].mxu0
        %v6435 = vpop.f32.mrb[0].mxu0
        %v6436 = vadd.f32 0.0, %v6435
        %v6437 = vpop.f32.mrb[0].mxu0
        %6438 = vmatprep.mubr.bf16.mxu0 0
        %6439 = vmatmul.mubr.bf16.gmra.mrb[0].mxu0 %v6161
        %v6440 = vpop.f32.mrb[0].mxu0
        %v6441 = vadd.f32 0.0, %v6440
        %v6442 = vpop.f32.mrb[0].mxu0
        %v6443 = vpop.f32.mrb[0].mxu0
        %v6444 = vadd.f32 0.0, %v6443
        %v6445 = vpop.f32.mrb[0].mxu0
        %6446 = vmatprep.mubr.bf16.mxu0 0
        %6447 = vmatmul.mubr.bf16.gmra.mrb[0].mxu0 %v6162
        %v6448 = vpop.f32.mrb[0].mxu0
        %v6449 = vadd.f32 0.0, %v6448
        %v6450 = vpop.f32.mrb[0].mxu0
        %v6451 = vpop.f32.mrb[0].mxu0
        %v6452 = vadd.f32 0.0, %v6451
        %v6453 = vpop.f32.mrb[0].mxu0
        %6454 = vmatprep.mubr.bf16.mxu0 0
        %6455 = vmatmul.mubr.bf16.gmra.mrb[0].mxu0 %v6163
        %v6456 = vpop.f32.mrb[0].mxu0
        %v6457 = vadd.f32 0.0, %v6456
        %v6458 = vpop.f32.mrb[0].mxu0
        %v6459 = vpop.f32.mrb[0].mxu0
        %v6460 = vadd.f32 0.0, %v6459
        %v6461 = vpop.f32.mrb[0].mxu0
        %6462 = vdwg.mxu0
        %6463 = vmatprep.subr.bf16.mxu0 0
        %6464 = vmatpush1.bf16.xpose.msra.mxu0 %v5078
        %6465 = vmatprep.subr.bf16.mxu0 0
        %6466 = vmatpush1.bf16.xpose.msra.mxu0 %v5079
        %6467 = vmatprep.subr.bf16.mxu0 0
        %6468 = vmatpush1.bf16.xpose.msra.mxu0 0
        %6469 = vmatprep.subr.bf16.mxu0 0
        %6470 = vmatpush1.bf16.xpose.msra.mxu0 0
        %6471 = vmatprep.subr.bf16.mxu0 0
        %6472 = vmatpush1.bf16.xpose.msra.mxu0 0
        %6473 = vmatprep.subr.bf16.mxu0 0
        %6474 = vmatpush1.bf16.xpose.msra.mxu0 0
        %6475 = vmatprep.subr.bf16.mxu0 0
        %6476 = vmatpush1.bf16.xpose.msra.mxu0 0
        %6477 = vmatprep.subr.bf16.mxu0 0
        %6478 = vmatpush1.bf16.xpose.msra.mxu0 0
        %6479 = vmatprep.subr.bf16.mxu0 0
        %6480 = vmatpush1.bf16.xpose.msra.mxu0 0
        %6481 = vmatprep.subr.bf16.mxu0 0
        %6482 = vmatpush1.bf16.xpose.msra.mxu0 0
        %6483 = vmatprep.subr.bf16.mxu0 0
        %6484 = vmatpush1.bf16.xpose.msra.mxu0 0
        %6485 = vmatprep.subr.bf16.mxu0 0
        %6486 = vmatpush1.bf16.xpose.msra.mxu0 0
        %6487 = vmatprep.subr.bf16.mxu0 0
        %6488 = vmatpush1.bf16.xpose.msra.mxu0 0
        %6489 = vmatprep.subr.bf16.mxu0 0
        %6490 = vmatpush1.bf16.xpose.msra.mxu0 0
        %6491 = vmatprep.subr.bf16.mxu0 0
        %6492 = vmatpush1.bf16.xpose.msra.mxu0 0
        %6493 = vmatprep.subr.bf16.mxu0 0
        %6494 = vmatpush1.bf16.xpose.msra.mxu0 0
        %6495 = vmatprep.mubr.bf16.mxu0 0
        %6496 = vmatmul.mubr.bf16.gmra.mrb[0].mxu0 %v6164
        %v6497 = vpop.f32.mrb[0].mxu0
        %v6498 = vadd.f32 0.0, %v6497
        %v6499 = vpop.f32.mrb[0].mxu0
        %v6500 = vpop.f32.mrb[0].mxu0
        %v6501 = vadd.f32 0.0, %v6500
        %v6502 = vpop.f32.mrb[0].mxu0
        %6503 = vmatprep.mubr.bf16.mxu0 0
        %6504 = vmatmul.mubr.bf16.gmra.mrb[0].mxu0 %v6165
        %v6505 = vpop.f32.mrb[0].mxu0
        %v6506 = vadd.f32 0.0, %v6505
        %v6507 = vpop.f32.mrb[0].mxu0
        %v6508 = vpop.f32.mrb[0].mxu0
        %v6509 = vadd.f32 0.0, %v6508
        %v6510 = vpop.f32.mrb[0].mxu0
        %6511 = vmatprep.mubr.bf16.mxu0 0
        %6512 = vmatmul.mubr.bf16.gmra.mrb[0].mxu0 %v6166
        %v6513 = vpop.f32.mrb[0].mxu0
        %v6514 = vadd.f32 0.0, %v6513
        %v6515 = vpop.f32.mrb[0].mxu0
        %v6516 = vpop.f32.mrb[0].mxu0
        %v6517 = vadd.f32 0.0, %v6516
        %v6518 = vpop.f32.mrb[0].mxu0
        %6519 = vmatprep.mubr.bf16.mxu0 0
        %6520 = vmatmul.mubr.bf16.gmra.mrb[0].mxu0 %v6167
        %v6521 = vpop.f32.mrb[0].mxu0
        %v6522 = vadd.f32 0.0, %v6521
        %v6523 = vpop.f32.mrb[0].mxu0
        %v6524 = vpop.f32.mrb[0].mxu0
        %v6525 = vadd.f32 0.0, %v6524
        %v6526 = vpop.f32.mrb[0].mxu0
        %6527 = vmatprep.mubr.bf16.mxu0 0
        %6528 = vmatmul.mubr.bf16.gmra.mrb[0].mxu0 %v6168
        %v6529 = vpop.f32.mrb[0].mxu0
        %v6530 = vadd.f32 0.0, %v6529
        %v6531 = vpop.f32.mrb[0].mxu0
        %v6532 = vpop.f32.mrb[0].mxu0
        %v6533 = vadd.f32 0.0, %v6532
        %v6534 = vpop.f32.mrb[0].mxu0
        %6535 = vmatprep.mubr.bf16.mxu0 0
        %6536 = vmatmul.mubr.bf16.gmra.mrb[0].mxu0 %v6169
        %v6537 = vpop.f32.mrb[0].mxu0
        %v6538 = vadd.f32 0.0, %v6537
        %v6539 = vpop.f32.mrb[0].mxu0
        %v6540 = vpop.f32.mrb[0].mxu0
        %v6541 = vadd.f32 0.0, %v6540
        %v6542 = vpop.f32.mrb[0].mxu0
        %6543 = vmatprep.mubr.bf16.mxu0 0
        %6544 = vmatmul.mubr.bf16.gmra.mrb[0].mxu0 %v6170
        %v6545 = vpop.f32.mrb[0].mxu0
        %v6546 = vadd.f32 0.0, %v6545
        %v6547 = vpop.f32.mrb[0].mxu0
        %v6548 = vpop.f32.mrb[0].mxu0
        %v6549 = vadd.f32 0.0, %v6548
        %v6550 = vpop.f32.mrb[0].mxu0
        %6551 = vmatprep.mubr.bf16.mxu0 0
        %6552 = vmatmul.mubr.bf16.gmra.mrb[0].mxu0 %v6171
        %v6553 = vpop.f32.mrb[0].mxu0
        %v6554 = vadd.f32 0.0, %v6553
        %v6555 = vpop.f32.mrb[0].mxu0
        %v6556 = vpop.f32.mrb[0].mxu0
        %v6557 = vadd.f32 0.0, %v6556
        %v6558 = vpop.f32.mrb[0].mxu0
        %6559 = vdwg.mxu0
        %6576 = vrot.lane.b32.xlu0 %v6304, 32
        %v6577 = vpop.permute.xlu0 %6576
        %6578 = vrot.lane.b32.xlu0 %v6307, 32
        %v6579 = vpop.permute.xlu0 %6578
        %6580 = vrot.lane.b32.xlu0 %v6312, 32
        %v6581 = vpop.permute.xlu0 %6580
        %6582 = vrot.lane.b32.xlu0 %v6315, 32
        %v6583 = vpop.permute.xlu0 %6582
        %6584 = vrot.lane.b32.xlu0 %v6320, 32
        %v6585 = vpop.permute.xlu0 %6584
        %6586 = vrot.lane.b32.xlu0 %v6323, 32
        %v6587 = vpop.permute.xlu0 %6586
        %6588 = vrot.lane.b32.xlu0 %v6328, 32
        %v6589 = vpop.permute.xlu0 %6588
        %6590 = vrot.lane.b32.xlu0 %v6331, 32
        %v6591 = vpop.permute.xlu0 %6590
        %6592 = vrot.lane.b32.xlu0 %v6336, 32
        %v6593 = vpop.permute.xlu0 %6592
        %6594 = vrot.lane.b32.xlu0 %v6339, 32
        %v6595 = vpop.permute.xlu0 %6594
        %6596 = vrot.lane.b32.xlu0 %v6344, 32
        %v6597 = vpop.permute.xlu0 %6596
        %6598 = vrot.lane.b32.xlu0 %v6347, 32
        %v6599 = vpop.permute.xlu0 %6598
        %6600 = vrot.lane.b32.xlu0 %v6352, 32
        %v6601 = vpop.permute.xlu0 %6600
        %6602 = vrot.lane.b32.xlu0 %v6355, 32
        %v6603 = vpop.permute.xlu0 %6602
        %6604 = vrot.lane.b32.xlu0 %v6360, 32
        %v6605 = vpop.permute.xlu0 %6604
        %6606 = vrot.lane.b32.xlu0 %v6363, 32
        %v6607 = vpop.permute.xlu0 %6606
        %6640 = vrot.lane.b32.xlu0 %v6401, 64
        %v6641 = vpop.permute.xlu0 %6640
        %6642 = vrot.lane.b32.xlu0 %v6404, 64
        %v6643 = vpop.permute.xlu0 %6642
        %6644 = vrot.lane.b32.xlu0 %v6409, 64
        %v6645 = vpop.permute.xlu0 %6644
        %6646 = vrot.lane.b32.xlu0 %v6412, 64
        %v6647 = vpop.permute.xlu0 %6646
        %6648 = vrot.lane.b32.xlu0 %v6417, 64
        %v6649 = vpop.permute.xlu0 %6648
        %6650 = vrot.lane.b32.xlu0 %v6420, 64
        %v6651 = vpop.permute.xlu0 %6650
        %6652 = vrot.lane.b32.xlu0 %v6425, 64
        %v6653 = vpop.permute.xlu0 %6652
        %6654 = vrot.lane.b32.xlu0 %v6428, 64
        %v6655 = vpop.permute.xlu0 %6654
        %6656 = vrot.lane.b32.xlu0 %v6433, 64
        %v6657 = vpop.permute.xlu0 %6656
        %6658 = vrot.lane.b32.xlu0 %v6436, 64
        %v6659 = vpop.permute.xlu0 %6658
        %6660 = vrot.lane.b32.xlu0 %v6441, 64
        %v6661 = vpop.permute.xlu0 %6660
        %6662 = vrot.lane.b32.xlu0 %v6444, 64
        %v6663 = vpop.permute.xlu0 %6662
        %6664 = vrot.lane.b32.xlu0 %v6449, 64
        %v6665 = vpop.permute.xlu0 %6664
        %6666 = vrot.lane.b32.xlu0 %v6452, 64
        %v6667 = vpop.permute.xlu0 %6666
        %6668 = vrot.lane.b32.xlu0 %v6457, 64
        %v6669 = vpop.permute.xlu0 %6668
        %6670 = vrot.lane.b32.xlu0 %v6460, 64
        %v6671 = vpop.permute.xlu0 %6670
        %6704 = vrot.lane.b32.xlu0 %v6498, 96
        %v6705 = vpop.permute.xlu0 %6704
        %6706 = vrot.lane.b32.xlu0 %v6501, 96
        %v6707 = vpop.permute.xlu0 %6706
        %6708 = vrot.lane.b32.xlu0 %v6506, 96
        %v6709 = vpop.permute.xlu0 %6708
        %6710 = vrot.lane.b32.xlu0 %v6509, 96
        %v6711 = vpop.permute.xlu0 %6710
        %6712 = vrot.lane.b32.xlu0 %v6514, 96
        %v6713 = vpop.permute.xlu0 %6712
        %6714 = vrot.lane.b32.xlu0 %v6517, 96
        %v6715 = vpop.permute.xlu0 %6714
        %6716 = vrot.lane.b32.xlu0 %v6522, 96
        %v6717 = vpop.permute.xlu0 %6716
        %6718 = vrot.lane.b32.xlu0 %v6525, 96
        %v6719 = vpop.permute.xlu0 %6718
        %6720 = vrot.lane.b32.xlu0 %v6530, 96
        %v6721 = vpop.permute.xlu0 %6720
        %6722 = vrot.lane.b32.xlu0 %v6533, 96
        %v6723 = vpop.permute.xlu0 %6722
        %6724 = vrot.lane.b32.xlu0 %v6538, 96
        %v6725 = vpop.permute.xlu0 %6724
        %6726 = vrot.lane.b32.xlu0 %v6541, 96
        %v6727 = vpop.permute.xlu0 %6726
        %6728 = vrot.lane.b32.xlu0 %v6546, 96
        %v6729 = vpop.permute.xlu0 %6728
        %6730 = vrot.lane.b32.xlu0 %v6549, 96
        %v6731 = vpop.permute.xlu0 %6730
        %6732 = vrot.lane.b32.xlu0 %v6554, 96
        %v6733 = vpop.permute.xlu0 %6732
        %6734 = vrot.lane.b32.xlu0 %v6557, 96
        %v6735 = vpop.permute.xlu0 %6734
        %v6752 = vsel %vm2206, %v6207, %v6577
        %v6753 = vsel %vm2206, %v6210, %v6579
        %v6754 = vsel %vm2206, %v6215, %v6581
        %v6755 = vsel %vm2206, %v6218, %v6583
        %v6756 = vsel %vm2206, %v6223, %v6585
        %v6757 = vsel %vm2206, %v6226, %v6587
        %v6758 = vsel %vm2206, %v6231, %v6589
        %v6759 = vsel %vm2206, %v6234, %v6591
        %v6760 = vsel %vm2206, %v6239, %v6593
        %v6761 = vsel %vm2206, %v6242, %v6595
        %v6762 = vsel %vm2206, %v6247, %v6597
        %v6763 = vsel %vm2206, %v6250, %v6599
        %v6764 = vsel %vm2206, %v6255, %v6601
        %v6765 = vsel %vm2206, %v6258, %v6603
        %v6766 = vsel %vm2206, %v6263, %v6605
        %v6767 = vsel %vm2206, %v6266, %v6607
        %v6768 = vsel %vm4375, %v6752, %v6641
        %v6769 = vsel %vm4375, %v6753, %v6643
        %v6770 = vsel %vm4375, %v6754, %v6645
        %v6771 = vsel %vm4375, %v6755, %v6647
        %v6772 = vsel %vm4375, %v6756, %v6649
        %v6773 = vsel %vm4375, %v6757, %v6651
        %v6774 = vsel %vm4375, %v6758, %v6653
        %v6775 = vsel %vm4375, %v6759, %v6655
        %v6776 = vsel %vm4375, %v6760, %v6657
        %v6777 = vsel %vm4375, %v6761, %v6659
        %v6778 = vsel %vm4375, %v6762, %v6661
        %v6779 = vsel %vm4375, %v6763, %v6663
        %v6780 = vsel %vm4375, %v6764, %v6665
        %v6781 = vsel %vm4375, %v6765, %v6667
        %v6782 = vsel %vm4375, %v6766, %v6669
        %v6783 = vsel %vm4375, %v6767, %v6671
        %v6784 = vsel %vm4392, %v6768, %v6705
        %v6785 = vsel %vm4392, %v6769, %v6707
        %v6786 = vsel %vm4392, %v6770, %v6709
        %v6787 = vsel %vm4392, %v6771, %v6711
        %v6788 = vsel %vm4392, %v6772, %v6713
        %v6789 = vsel %vm4392, %v6773, %v6715
        %v6790 = vsel %vm4392, %v6774, %v6717
        %v6791 = vsel %vm4392, %v6775, %v6719
        %v6792 = vsel %vm4392, %v6776, %v6721
        %v6793 = vsel %vm4392, %v6777, %v6723
        %v6794 = vsel %vm4392, %v6778, %v6725
        %v6795 = vsel %vm4392, %v6779, %v6727
        %v6796 = vsel %vm4392, %v6780, %v6729
        %v6797 = vsel %vm4392, %v6781, %v6731
        %v6798 = vsel %vm4392, %v6782, %v6733
        %v6799 = vsel %vm4392, %v6783, %v6735
        %v6800 = vpack.c.bf16 %v6785, %v6784
        %v6801 = vpack.c.bf16 %v6787, %v6786
        %v6802 = vpack.c.bf16 %v6789, %v6788
        %v6803 = vpack.c.bf16 %v6791, %v6790
        %v6804 = vpack.c.bf16 %v6793, %v6792
        %v6805 = vpack.c.bf16 %v6795, %v6794
        %v6806 = vpack.c.bf16 %v6797, %v6796
        %v6807 = vpack.c.bf16 %v6799, %v6798
        %v6809 = vlaneseq
        %v6810 = vshrl.u32 %v6809, 7
        %v6811 = vsub.s32 0, %v6810
        %v6812 = vrot.slane %v4838, %v6811
        %v6830 = vunpack.c.l.b16 %v4822
        %v6831 = vunpack.c.l.b16 %v4823
        %v6832 = vunpack.c.l.b16 %v4824
        %v6833 = vunpack.c.l.b16 %v4825
        %v6834 = vunpack.c.l.b16 %v4826
        %v6835 = vunpack.c.l.b16 %v4827
        %v6836 = vunpack.c.l.b16 %v4828
        %v6837 = vunpack.c.l.b16 %v4829
        %v6838 = vunpack.c.l.b16 %v4830
        %v6839 = vunpack.c.l.b16 %v4831
        %v6840 = vunpack.c.l.b16 %v4832
        %v6841 = vunpack.c.l.b16 %v4833
        %v6842 = vunpack.c.l.b16 %v4834
        %v6843 = vunpack.c.l.b16 %v4835
        %v6844 = vunpack.c.l.b16 %v4836
        %v6845 = vunpack.c.l.b16 %v4837
        %v6846 = vpack.c.b16 %v6831, %v6830
        %v6847 = vpack.c.b16 %v6833, %v6832
        %v6848 = vpack.c.b16 %v6835, %v6834
        %v6849 = vpack.c.b16 %v6837, %v6836
        %v6850 = vpack.c.b16 %v6839, %v6838
        %v6851 = vpack.c.b16 %v6841, %v6840
        %v6852 = vpack.c.b16 %v6843, %v6842
        %v6853 = vpack.c.b16 %v6845, %v6844
        %6862 = vmatprep.subr.bf16.mxu0 0
        %6863 = vmatpush1.bf16.msra.mxu0 %v6846
        %6864 = vmatprep.subr.bf16.mxu0 0
        %6865 = vmatpush1.bf16.msra.mxu0 %v6847
        %6866 = vmatprep.subr.bf16.mxu0 0
        %6867 = vmatpush1.bf16.msra.mxu0 %v6848
        %6868 = vmatprep.subr.bf16.mxu0 0
        %6869 = vmatpush1.bf16.msra.mxu0 %v6849
        %6870 = vmatprep.subr.bf16.mxu0 0
        %6871 = vmatpush1.bf16.msra.mxu0 %v6850
        %6872 = vmatprep.subr.bf16.mxu0 0
        %6873 = vmatpush1.bf16.msra.mxu0 %v6851
        %6874 = vmatprep.subr.bf16.mxu0 0
        %6875 = vmatpush1.bf16.msra.mxu0 %v6852
        %6876 = vmatprep.subr.bf16.mxu0 0
        %6877 = vmatpush1.bf16.msra.mxu0 %v6853
        %6878 = vmatprep.subr.bf16.mxu0 0
        %6879 = vmatpush1.bf16.msra.mxu0 0
        %6880 = vmatprep.subr.bf16.mxu0 0
        %6881 = vmatpush1.bf16.msra.mxu0 0
        %6882 = vmatprep.subr.bf16.mxu0 0
        %6883 = vmatpush1.bf16.msra.mxu0 0
        %6884 = vmatprep.subr.bf16.mxu0 0
        %6885 = vmatpush1.bf16.msra.mxu0 0
        %6886 = vmatprep.subr.bf16.mxu0 0
        %6887 = vmatpush1.bf16.msra.mxu0 0
        %6888 = vmatprep.subr.bf16.mxu0 0
        %6889 = vmatpush1.bf16.msra.mxu0 0
        %6890 = vmatprep.subr.bf16.mxu0 0
        %6891 = vmatpush1.bf16.msra.mxu0 0
        %6892 = vmatprep.subr.bf16.mxu0 0
        %6893 = vmatpush1.bf16.msra.mxu0 0
        %6894 = vmatprep.mubr.bf16.mxu0 0
        %6895 = vmatmul.mubr.bf16.gmra.mrb[0].mxu0 %v6800
        %v6896 = vpop.f32.mrb[0].mxu0
        %v6897 = vadd.f32 %v6812, %v6896
        %v6898 = vpop.f32.mrb[0].mxu0
        %v6899 = vpop.f32.mrb[0].mxu0
        %v6900 = vadd.f32 %v6812, %v6899
        %v6901 = vpop.f32.mrb[0].mxu0
        %6902 = vmatprep.mubr.bf16.mxu0 0
        %6903 = vmatmul.mubr.bf16.gmra.mrb[0].mxu0 %v6801
        %v6904 = vpop.f32.mrb[0].mxu0
        %v6905 = vadd.f32 %v6812, %v6904
        %v6906 = vpop.f32.mrb[0].mxu0
        %v6907 = vpop.f32.mrb[0].mxu0
        %v6908 = vadd.f32 %v6812, %v6907
        %v6909 = vpop.f32.mrb[0].mxu0
        %6910 = vmatprep.mubr.bf16.mxu0 0
        %6911 = vmatmul.mubr.bf16.gmra.mrb[0].mxu0 %v6802
        %v6912 = vpop.f32.mrb[0].mxu0
        %v6913 = vadd.f32 %v6812, %v6912
        %v6914 = vpop.f32.mrb[0].mxu0
        %v6915 = vpop.f32.mrb[0].mxu0
        %v6916 = vadd.f32 %v6812, %v6915
        %v6917 = vpop.f32.mrb[0].mxu0
        %6918 = vmatprep.mubr.bf16.mxu0 0
        %6919 = vmatmul.mubr.bf16.gmra.mrb[0].mxu0 %v6803
        %v6920 = vpop.f32.mrb[0].mxu0
        %v6921 = vadd.f32 %v6812, %v6920
        %v6922 = vpop.f32.mrb[0].mxu0
        %v6923 = vpop.f32.mrb[0].mxu0
        %v6924 = vadd.f32 %v6812, %v6923
        %v6925 = vpop.f32.mrb[0].mxu0
        %6926 = vmatprep.mubr.bf16.mxu0 0
        %6927 = vmatmul.mubr.bf16.gmra.mrb[0].mxu0 %v6804
        %v6928 = vpop.f32.mrb[0].mxu0
        %v6929 = vadd.f32 %v6812, %v6928
        %v6930 = vpop.f32.mrb[0].mxu0
        %v6931 = vpop.f32.mrb[0].mxu0
        %v6932 = vadd.f32 %v6812, %v6931
        %v6933 = vpop.f32.mrb[0].mxu0
        %6934 = vmatprep.mubr.bf16.mxu0 0
        %6935 = vmatmul.mubr.bf16.gmra.mrb[0].mxu0 %v6805
        %v6936 = vpop.f32.mrb[0].mxu0
        %v6937 = vadd.f32 %v6812, %v6936
        %v6938 = vpop.f32.mrb[0].mxu0
        %v6939 = vpop.f32.mrb[0].mxu0
        %v6940 = vadd.f32 %v6812, %v6939
        %v6941 = vpop.f32.mrb[0].mxu0
        %6942 = vmatprep.mubr.bf16.mxu0 0
        %6943 = vmatmul.mubr.bf16.gmra.mrb[0].mxu0 %v6806
        %v6944 = vpop.f32.mrb[0].mxu0
        %v6945 = vadd.f32 %v6812, %v6944
        %v6946 = vpop.f32.mrb[0].mxu0
        %v6947 = vpop.f32.mrb[0].mxu0
        %v6948 = vadd.f32 %v6812, %v6947
        %v6949 = vpop.f32.mrb[0].mxu0
        %6950 = vmatprep.mubr.bf16.mxu0 0
        %6951 = vmatmul.mubr.bf16.gmra.mrb[0].mxu0 %v6807
        %v6952 = vpop.f32.mrb[0].mxu0
        %v6953 = vadd.f32 %v6812, %v6952
        %v6954 = vpop.f32.mrb[0].mxu0
        %v6955 = vpop.f32.mrb[0].mxu0
        %v6956 = vadd.f32 %v6812, %v6955
        %v6957 = vpop.f32.mrb[0].mxu0
        %6958 = vdwg.mxu0
        %v6959 = vadd.f32 %v6897, %v4789
        %v6960 = vadd.f32 %v6900, %v4790
        %v6961 = vadd.f32 %v6905, %v4791
        %v6962 = vadd.f32 %v6908, %v4792
        %v6963 = vadd.f32 %v6913, %v4793
        %v6964 = vadd.f32 %v6916, %v4794
        %v6965 = vadd.f32 %v6921, %v4795
        %v6966 = vadd.f32 %v6924, %v4796
        %v6967 = vadd.f32 %v6929, %v4797
        %v6968 = vadd.f32 %v6932, %v4798
        %v6969 = vadd.f32 %v6937, %v4799
        %v6970 = vadd.f32 %v6940, %v4800
        %v6971 = vadd.f32 %v6945, %v4801
        %v6972 = vadd.f32 %v6948, %v4802
        %v6973 = vadd.f32 %v6953, %v4803
        %v6974 = vadd.f32 %v6956, %v4804
        %6975 = vadd.xlane.f32.xlu0 %v6959
        %v6976 = vpop.xlane.xlu0 %6975
        %6977 = vadd.xlane.f32.xlu0 %v6960
        %v6978 = vpop.xlane.xlu0 %6977
        %6979 = vadd.xlane.f32.xlu0 %v6961
        %v6980 = vpop.xlane.xlu0 %6979
        %6981 = vadd.xlane.f32.xlu0 %v6962
        %v6982 = vpop.xlane.xlu0 %6981
        %6983 = vadd.xlane.f32.xlu0 %v6963
        %v6984 = vpop.xlane.xlu0 %6983
        %6985 = vadd.xlane.f32.xlu0 %v6964
        %v6986 = vpop.xlane.xlu0 %6985
        %6987 = vadd.xlane.f32.xlu0 %v6965
        %v6988 = vpop.xlane.xlu0 %6987
        %6989 = vadd.xlane.f32.xlu0 %v6966
        %v6990 = vpop.xlane.xlu0 %6989
        %6991 = vadd.xlane.f32.xlu0 %v6967
        %v6992 = vpop.xlane.xlu0 %6991
        %6993 = vadd.xlane.f32.xlu0 %v6968
        %v6994 = vpop.xlane.xlu0 %6993
        %6995 = vadd.xlane.f32.xlu0 %v6969
        %v6996 = vpop.xlane.xlu0 %6995
        %6997 = vadd.xlane.f32.xlu0 %v6970
        %v6998 = vpop.xlane.xlu0 %6997
        %6999 = vadd.xlane.f32.xlu0 %v6971
        %v7000 = vpop.xlane.xlu0 %6999
        %7001 = vadd.xlane.f32.xlu0 %v6972
        %v7002 = vpop.xlane.xlu0 %7001
        %7003 = vadd.xlane.f32.xlu0 %v6973
        %v7004 = vpop.xlane.xlu0 %7003
        %7005 = vadd.xlane.f32.xlu0 %v6974
        %v7006 = vpop.xlane.xlu0 %7005
        %v7007 = vmul.f32 %v6976, %v4616
        %v7008 = vmul.f32 %v6978, %v4616
        %v7009 = vmul.f32 %v6980, %v4616
        %v7010 = vmul.f32 %v6982, %v4616
        %v7011 = vmul.f32 %v6984, %v4616
        %v7012 = vmul.f32 %v6986, %v4616
        %v7013 = vmul.f32 %v6988, %v4616
        %v7014 = vmul.f32 %v6990, %v4616
        %v7015 = vmul.f32 %v6992, %v4616
        %v7016 = vmul.f32 %v6994, %v4616
        %v7017 = vmul.f32 %v6996, %v4616
        %v7018 = vmul.f32 %v6998, %v4616
        %v7019 = vmul.f32 %v7000, %v4616
        %v7020 = vmul.f32 %v7002, %v4616
        %v7021 = vmul.f32 %v7004, %v4616
        %v7022 = vmul.f32 %v7006, %v4616
        %v7023 = vsub.f32 %v6959, %v7007
        %v7024 = vsub.f32 %v6960, %v7008
        %v7025 = vsub.f32 %v6961, %v7009
        %v7026 = vsub.f32 %v6962, %v7010
        %v7027 = vsub.f32 %v6963, %v7011
        %v7028 = vsub.f32 %v6964, %v7012
        %v7029 = vsub.f32 %v6965, %v7013
        %v7030 = vsub.f32 %v6966, %v7014
        %v7031 = vsub.f32 %v6967, %v7015
        %v7032 = vsub.f32 %v6968, %v7016
        %v7033 = vsub.f32 %v6969, %v7017
        %v7034 = vsub.f32 %v6970, %v7018
        %v7035 = vsub.f32 %v6971, %v7019
        %v7036 = vsub.f32 %v6972, %v7020
        %v7037 = vsub.f32 %v6973, %v7021
        %v7038 = vsub.f32 %v6974, %v7022
        %v7039 = vmul.f32 %v7023, %v7023
        %v7040 = vmul.f32 %v7024, %v7024
        %v7041 = vmul.f32 %v7025, %v7025
        %v7042 = vmul.f32 %v7026, %v7026
        %v7043 = vmul.f32 %v7027, %v7027
        %v7044 = vmul.f32 %v7028, %v7028
        %v7045 = vmul.f32 %v7029, %v7029
        %v7046 = vmul.f32 %v7030, %v7030
        %v7047 = vmul.f32 %v7031, %v7031
        %v7048 = vmul.f32 %v7032, %v7032
        %v7049 = vmul.f32 %v7033, %v7033
        %v7050 = vmul.f32 %v7034, %v7034
        %v7051 = vmul.f32 %v7035, %v7035
        %v7052 = vmul.f32 %v7036, %v7036
        %v7053 = vmul.f32 %v7037, %v7037
        %v7054 = vmul.f32 %v7038, %v7038
        %7055 = vadd.xlane.f32.xlu0 %v7039
        %v7056 = vpop.xlane.xlu0 %7055
        %7057 = vadd.xlane.f32.xlu0 %v7040
        %v7058 = vpop.xlane.xlu0 %7057
        %7059 = vadd.xlane.f32.xlu0 %v7041
        %v7060 = vpop.xlane.xlu0 %7059
        %7061 = vadd.xlane.f32.xlu0 %v7042
        %v7062 = vpop.xlane.xlu0 %7061
        %7063 = vadd.xlane.f32.xlu0 %v7043
        %v7064 = vpop.xlane.xlu0 %7063
        %7065 = vadd.xlane.f32.xlu0 %v7044
        %v7066 = vpop.xlane.xlu0 %7065
        %7067 = vadd.xlane.f32.xlu0 %v7045
        %v7068 = vpop.xlane.xlu0 %7067
        %7069 = vadd.xlane.f32.xlu0 %v7046
        %v7070 = vpop.xlane.xlu0 %7069
        %7071 = vadd.xlane.f32.xlu0 %v7047
        %v7072 = vpop.xlane.xlu0 %7071
        %7073 = vadd.xlane.f32.xlu0 %v7048
        %v7074 = vpop.xlane.xlu0 %7073
        %7075 = vadd.xlane.f32.xlu0 %v7049
        %v7076 = vpop.xlane.xlu0 %7075
        %7077 = vadd.xlane.f32.xlu0 %v7050
        %v7078 = vpop.xlane.xlu0 %7077
        %7079 = vadd.xlane.f32.xlu0 %v7051
        %v7080 = vpop.xlane.xlu0 %7079
        %7081 = vadd.xlane.f32.xlu0 %v7052
        %v7082 = vpop.xlane.xlu0 %7081
        %7083 = vadd.xlane.f32.xlu0 %v7053
        %v7084 = vpop.xlane.xlu0 %7083
        %7085 = vadd.xlane.f32.xlu0 %v7054
        %v7086 = vpop.xlane.xlu0 %7085
        %v7087 = vmul.f32 %v7056, %v4616
        %v7088 = vmul.f32 %v7058, %v4616
        %v7089 = vmul.f32 %v7060, %v4616
        %v7090 = vmul.f32 %v7062, %v4616
        %v7091 = vmul.f32 %v7064, %v4616
        %v7092 = vmul.f32 %v7066, %v4616
        %v7093 = vmul.f32 %v7068, %v4616
        %v7094 = vmul.f32 %v7070, %v4616
        %v7095 = vmul.f32 %v7072, %v4616
        %v7096 = vmul.f32 %v7074, %v4616
        %v7097 = vmul.f32 %v7076, %v4616
        %v7098 = vmul.f32 %v7078, %v4616
        %v7099 = vmul.f32 %v7080, %v4616
        %v7100 = vmul.f32 %v7082, %v4616
        %v7101 = vmul.f32 %v7084, %v4616
        %v7102 = vmul.f32 %v7086, %v4616
        %v7103 = vadd.f32 %v7087, 1e-06
        %v7104 = vadd.f32 %v7088, 1e-06
        %v7105 = vadd.f32 %v7089, 1e-06
        %v7106 = vadd.f32 %v7090, 1e-06
        %v7107 = vadd.f32 %v7091, 1e-06
        %v7108 = vadd.f32 %v7092, 1e-06
        %v7109 = vadd.f32 %v7093, 1e-06
        %v7110 = vadd.f32 %v7094, 1e-06
        %v7111 = vadd.f32 %v7095, 1e-06
        %v7112 = vadd.f32 %v7096, 1e-06
        %v7113 = vadd.f32 %v7097, 1e-06
        %v7114 = vadd.f32 %v7098, 1e-06
        %v7115 = vadd.f32 %v7099, 1e-06
        %v7116 = vadd.f32 %v7100, 1e-06
        %v7117 = vadd.f32 %v7101, 1e-06
        %v7118 = vadd.f32 %v7102, 1e-06
        %v7119 = vrsqrt.pop %v7103
        %v7120 = vrsqrt.pop %v7104
        %v7121 = vrsqrt.pop %v7105
        %v7122 = vrsqrt.pop %v7106
        %v7123 = vrsqrt.pop %v7107
        %v7124 = vrsqrt.pop %v7108
        %v7125 = vrsqrt.pop %v7109
        %v7126 = vrsqrt.pop %v7110
        %v7127 = vrsqrt.pop %v7111
        %v7128 = vrsqrt.pop %v7112
        %v7129 = vrsqrt.pop %v7113
        %v7130 = vrsqrt.pop %v7114
        %v7131 = vrsqrt.pop %v7115
        %v7132 = vrsqrt.pop %v7116
        %v7133 = vrsqrt.pop %v7117
        %v7134 = vrsqrt.pop %v7118
        %v7135 = vmul.f32 %v7023, %v7119
        %v7136 = vmul.f32 %v7024, %v7120
        %v7137 = vmul.f32 %v7025, %v7121
        %v7138 = vmul.f32 %v7026, %v7122
        %v7139 = vmul.f32 %v7027, %v7123
        %v7140 = vmul.f32 %v7028, %v7124
        %v7141 = vmul.f32 %v7029, %v7125
        %v7142 = vmul.f32 %v7030, %v7126
        %v7143 = vmul.f32 %v7031, %v7127
        %v7144 = vmul.f32 %v7032, %v7128
        %v7145 = vmul.f32 %v7033, %v7129
        %v7146 = vmul.f32 %v7034, %v7130
        %v7147 = vmul.f32 %v7035, %v7131
        %v7148 = vmul.f32 %v7036, %v7132
        %v7149 = vmul.f32 %v7037, %v7133
        %v7150 = vmul.f32 %v7038, %v7134
        %v7152 = vlaneseq
        %v7153 = vshrl.u32 %v7152, 7
        %v7154 = vsub.s32 0, %v7153
        %v7155 = vrot.slane %v4839, %v7154
        %v7157 = vmul.f32 %v7135, %v7155
        %v7158 = vmul.f32 %v7136, %v7155
        %v7159 = vmul.f32 %v7137, %v7155
        %v7160 = vmul.f32 %v7138, %v7155
        %v7161 = vmul.f32 %v7139, %v7155
        %v7162 = vmul.f32 %v7140, %v7155
        %v7163 = vmul.f32 %v7141, %v7155
        %v7164 = vmul.f32 %v7142, %v7155
        %v7165 = vmul.f32 %v7143, %v7155
        %v7166 = vmul.f32 %v7144, %v7155
        %v7167 = vmul.f32 %v7145, %v7155
        %v7168 = vmul.f32 %v7146, %v7155
        %v7169 = vmul.f32 %v7147, %v7155
        %v7170 = vmul.f32 %v7148, %v7155
        %v7171 = vmul.f32 %v7149, %v7155
        %v7172 = vmul.f32 %v7150, %v7155
        %v7174 = vlaneseq
        %v7175 = vshrl.u32 %v7174, 7
        %v7176 = vsub.s32 0, %v7175
        %v7177 = vrot.slane %v4840, %v7176
        %v7179 = vadd.f32 %v7157, %v7177
        %v7180 = vadd.f32 %v7158, %v7177
        %v7181 = vadd.f32 %v7159, %v7177
        %v7182 = vadd.f32 %v7160, %v7177
        %v7183 = vadd.f32 %v7161, %v7177
        %v7184 = vadd.f32 %v7162, %v7177
        %v7185 = vadd.f32 %v7163, %v7177
        %v7186 = vadd.f32 %v7164, %v7177
        %v7187 = vadd.f32 %v7165, %v7177
        %v7188 = vadd.f32 %v7166, %v7177
        %v7189 = vadd.f32 %v7167, %v7177
        %v7190 = vadd.f32 %v7168, %v7177
        %v7191 = vadd.f32 %v7169, %v7177
        %v7192 = vadd.f32 %v7170, %v7177
        %v7193 = vadd.f32 %v7171, %v7177
        %v7194 = vadd.f32 %v7172, %v7177
        %v7195 = vpack.c.bf16 %v7180, %v7179
        %v7196 = vpack.c.bf16 %v7182, %v7181
        %v7197 = vpack.c.bf16 %v7184, %v7183
        %v7198 = vpack.c.bf16 %v7186, %v7185
        %v7199 = vpack.c.bf16 %v7188, %v7187
        %v7200 = vpack.c.bf16 %v7190, %v7189
        %v7201 = vpack.c.bf16 %v7192, %v7191
        %v7202 = vpack.c.bf16 %v7194, %v7193
        %v7203 = vld [vmem:[#allocation20] sm:$0xff]
        %v7204 = vld [vmem:[#allocation20 + $0x8] sm:$0xff]
        %v7205 = vld [vmem:[#allocation20 + $0x10] sm:$0xff]
        %v7206 = vld [vmem:[#allocation20 + $0x18] sm:$0xff]
        %v7207 = vld [vmem:[#allocation20 + $0x20] sm:$0xff]
        %v7208 = vld [vmem:[#allocation20 + $0x28] sm:$0xff]
        %v7209 = vld [vmem:[#allocation20 + $0x30] sm:$0xff]
        %v7210 = vld [vmem:[#allocation20 + $0x38] sm:$0xff]
        %v7211 = vld [vmem:[#allocation20 + $0x40] sm:$0xff]
        %v7212 = vld [vmem:[#allocation20 + $0x48] sm:$0xff]
        %v7213 = vld [vmem:[#allocation20 + $0x50] sm:$0xff]
        %v7214 = vld [vmem:[#allocation20 + $0x58] sm:$0xff]
        %v7215 = vld [vmem:[#allocation20 + $0x60] sm:$0xff]
        %v7216 = vld [vmem:[#allocation20 + $0x68] sm:$0xff]
        %v7217 = vld [vmem:[#allocation20 + $0x70] sm:$0xff]
        %v7218 = vld [vmem:[#allocation20 + $0x78] sm:$0xff]
        %v7219 = vld [vmem:[%s19] sm:$0x3]
        %v7221 = vlaneseq
        %v7222 = vshrl.u32 %v7221, 7
        %v7223 = vsub.s32 0, %v7222
        %v7224 = vrot.slane %v7219, %v7223
        %v7225 = vlaneseq
        %v7226 = vshrl.u32 %v7225, 7
        %v7227 = vsub.s32 1, %v7226
        %v7228 = vrot.slane %v7219, %v7227
        %v7247 = vunpack.c.l.b16 %v7203
        %v7248 = vunpack.c.h.b16 %v7203
        %v7249 = vunpack.c.l.b16 %v7204
        %v7250 = vunpack.c.h.b16 %v7204
        %v7251 = vunpack.c.l.b16 %v7205
        %v7252 = vunpack.c.h.b16 %v7205
        %v7253 = vunpack.c.l.b16 %v7206
        %v7254 = vunpack.c.h.b16 %v7206
        %v7255 = vunpack.c.l.b16 %v7207
        %v7256 = vunpack.c.h.b16 %v7207
        %v7257 = vunpack.c.l.b16 %v7208
        %v7258 = vunpack.c.h.b16 %v7208
        %v7259 = vunpack.c.l.b16 %v7209
        %v7260 = vunpack.c.h.b16 %v7209
        %v7261 = vunpack.c.l.b16 %v7210
        %v7262 = vunpack.c.h.b16 %v7210
        %v7263 = vunpack.c.l.b16 %v7211
        %v7264 = vunpack.c.h.b16 %v7211
        %v7265 = vunpack.c.l.b16 %v7212
        %v7266 = vunpack.c.h.b16 %v7212
        %v7267 = vunpack.c.l.b16 %v7213
        %v7268 = vunpack.c.h.b16 %v7213
        %v7269 = vunpack.c.l.b16 %v7214
        %v7270 = vunpack.c.h.b16 %v7214
        %v7271 = vunpack.c.l.b16 %v7215
        %v7272 = vunpack.c.h.b16 %v7215
        %v7273 = vunpack.c.l.b16 %v7216
        %v7274 = vunpack.c.h.b16 %v7216
        %v7275 = vunpack.c.l.b16 %v7217
        %v7276 = vunpack.c.h.b16 %v7217
        %v7277 = vunpack.c.l.b16 %v7218
        %v7278 = vunpack.c.h.b16 %v7218
        %v7279 = vpack.c.b16 %v7249, %v7247
        %v7280 = vpack.c.b16 %v7250, %v7248
        %v7281 = vpack.c.b16 %v7253, %v7251
        %v7282 = vpack.c.b16 %v7254, %v7252
        %v7283 = vpack.c.b16 %v7257, %v7255
        %v7284 = vpack.c.b16 %v7258, %v7256
        %v7285 = vpack.c.b16 %v7261, %v7259
        %v7286 = vpack.c.b16 %v7262, %v7260
        %v7287 = vpack.c.b16 %v7265, %v7263
        %v7288 = vpack.c.b16 %v7266, %v7264
        %v7289 = vpack.c.b16 %v7269, %v7267
        %v7290 = vpack.c.b16 %v7270, %v7268
        %v7291 = vpack.c.b16 %v7273, %v7271
        %v7292 = vpack.c.b16 %v7274, %v7272
        %v7293 = vpack.c.b16 %v7277, %v7275
        %v7294 = vpack.c.b16 %v7278, %v7276
        %7311 = vmatprep.subr.bf16.mxu0 %v7280
        %7312 = vmatpush1.bf16.msra.mxu0 %v7279
        %7313 = vmatprep.subr.bf16.mxu0 %v7282
        %7314 = vmatpush1.bf16.msra.mxu0 %v7281
        %7315 = vmatprep.subr.bf16.mxu0 %v7284
        %7316 = vmatpush1.bf16.msra.mxu0 %v7283
        %7317 = vmatprep.subr.bf16.mxu0 %v7286
        %7318 = vmatpush1.bf16.msra.mxu0 %v7285
        %7319 = vmatprep.subr.bf16.mxu0 %v7288
        %7320 = vmatpush1.bf16.msra.mxu0 %v7287
        %7321 = vmatprep.subr.bf16.mxu0 %v7290
        %7322 = vmatpush1.bf16.msra.mxu0 %v7289
        %7323 = vmatprep.subr.bf16.mxu0 %v7292
        %7324 = vmatpush1.bf16.msra.mxu0 %v7291
        %7325 = vmatprep.subr.bf16.mxu0 %v7294
        %7326 = vmatpush1.bf16.msra.mxu0 %v7293
        %7327 = vmatprep.subr.bf16.mxu0 0
        %7328 = vmatpush1.bf16.msra.mxu0 0
        %7329 = vmatprep.subr.bf16.mxu0 0
        %7330 = vmatpush1.bf16.msra.mxu0 0
        %7331 = vmatprep.subr.bf16.mxu0 0
        %7332 = vmatpush1.bf16.msra.mxu0 0
        %7333 = vmatprep.subr.bf16.mxu0 0
        %7334 = vmatpush1.bf16.msra.mxu0 0
        %7335 = vmatprep.subr.bf16.mxu0 0
        %7336 = vmatpush1.bf16.msra.mxu0 0
        %7337 = vmatprep.subr.bf16.mxu0 0
        %7338 = vmatpush1.bf16.msra.mxu0 0
        %7339 = vmatprep.subr.bf16.mxu0 0
        %7340 = vmatpush1.bf16.msra.mxu0 0
        %7341 = vmatprep.subr.bf16.mxu0 0
        %7342 = vmatpush1.bf16.msra.mxu0 0
        %7343 = vmatprep.mubr.bf16.mxu0 0
        %7344 = vmatmul.mubr.bf16.gmra.mrb[0].mxu0 %v7195
        %v7345 = vpop.f32.mrb[0].mxu0
        %v7346 = vadd.f32 %v7224, %v7345
        %v7347 = vpop.f32.mrb[0].mxu0
        %v7348 = vadd.f32 %v7228, %v7347
        %v7349 = vpop.f32.mrb[0].mxu0
        %v7350 = vadd.f32 %v7224, %v7349
        %v7351 = vpop.f32.mrb[0].mxu0
        %v7352 = vadd.f32 %v7228, %v7351
        %7353 = vmatprep.mubr.bf16.mxu0 0
        %7354 = vmatmul.mubr.bf16.gmra.mrb[0].mxu0 %v7196
        %v7355 = vpop.f32.mrb[0].mxu0
        %v7356 = vadd.f32 %v7224, %v7355
        %v7357 = vpop.f32.mrb[0].mxu0
        %v7358 = vadd.f32 %v7228, %v7357
        %v7359 = vpop.f32.mrb[0].mxu0
        %v7360 = vadd.f32 %v7224, %v7359
        %v7361 = vpop.f32.mrb[0].mxu0
        %v7362 = vadd.f32 %v7228, %v7361
        %7363 = vmatprep.mubr.bf16.mxu0 0
        %7364 = vmatmul.mubr.bf16.gmra.mrb[0].mxu0 %v7197
        %v7365 = vpop.f32.mrb[0].mxu0
        %v7366 = vadd.f32 %v7224, %v7365
        %v7367 = vpop.f32.mrb[0].mxu0
        %v7368 = vadd.f32 %v7228, %v7367
        %v7369 = vpop.f32.mrb[0].mxu0
        %v7370 = vadd.f32 %v7224, %v7369
        %v7371 = vpop.f32.mrb[0].mxu0
        %v7372 = vadd.f32 %v7228, %v7371
        %7373 = vmatprep.mubr.bf16.mxu0 0
        %7374 = vmatmul.mubr.bf16.gmra.mrb[0].mxu0 %v7198
        %v7375 = vpop.f32.mrb[0].mxu0
        %v7376 = vadd.f32 %v7224, %v7375
        %v7377 = vpop.f32.mrb[0].mxu0
        %v7378 = vadd.f32 %v7228, %v7377
        %v7379 = vpop.f32.mrb[0].mxu0
        %v7380 = vadd.f32 %v7224, %v7379
        %v7381 = vpop.f32.mrb[0].mxu0
        %v7382 = vadd.f32 %v7228, %v7381
        %7383 = vmatprep.mubr.bf16.mxu0 0
        %7384 = vmatmul.mubr.bf16.gmra.mrb[0].mxu0 %v7199
        %v7385 = vpop.f32.mrb[0].mxu0
        %v7386 = vadd.f32 %v7224, %v7385
        %v7387 = vpop.f32.mrb[0].mxu0
        %v7388 = vadd.f32 %v7228, %v7387
        %v7389 = vpop.f32.mrb[0].mxu0
        %v7390 = vadd.f32 %v7224, %v7389
        %v7391 = vpop.f32.mrb[0].mxu0
        %v7392 = vadd.f32 %v7228, %v7391
        %7393 = vmatprep.mubr.bf16.mxu0 0
        %7394 = vmatmul.mubr.bf16.gmra.mrb[0].mxu0 %v7200
        %v7395 = vpop.f32.mrb[0].mxu0
        %v7396 = vadd.f32 %v7224, %v7395
        %v7397 = vpop.f32.mrb[0].mxu0
        %v7398 = vadd.f32 %v7228, %v7397
        %v7399 = vpop.f32.mrb[0].mxu0
        %v7400 = vadd.f32 %v7224, %v7399
        %v7401 = vpop.f32.mrb[0].mxu0
        %v7402 = vadd.f32 %v7228, %v7401
        %7403 = vmatprep.mubr.bf16.mxu0 0
        %7404 = vmatmul.mubr.bf16.gmra.mrb[0].mxu0 %v7201
        %v7405 = vpop.f32.mrb[0].mxu0
        %v7406 = vadd.f32 %v7224, %v7405
        %v7407 = vpop.f32.mrb[0].mxu0
        %v7408 = vadd.f32 %v7228, %v7407
        %v7409 = vpop.f32.mrb[0].mxu0
        %v7410 = vadd.f32 %v7224, %v7409
        %v7411 = vpop.f32.mrb[0].mxu0
        %v7412 = vadd.f32 %v7228, %v7411
        %7413 = vmatprep.mubr.bf16.mxu0 0
        %7414 = vmatmul.mubr.bf16.gmra.mrb[0].mxu0 %v7202
        %v7415 = vpop.f32.mrb[0].mxu0
        %v7416 = vadd.f32 %v7224, %v7415
        %v7417 = vpop.f32.mrb[0].mxu0
        %v7418 = vadd.f32 %v7228, %v7417
        %v7419 = vpop.f32.mrb[0].mxu0
        %v7420 = vadd.f32 %v7224, %v7419
        %v7421 = vpop.f32.mrb[0].mxu0
        %v7422 = vadd.f32 %v7228, %v7421
        %7423 = vdwg.mxu0
        %v7424 = vmax.f32 %v7346, 0.0
        %v7425 = vmax.f32 %v7348, 0.0
        %v7426 = vmax.f32 %v7350, 0.0
        %v7427 = vmax.f32 %v7352, 0.0
        %v7428 = vmax.f32 %v7356, 0.0
        %v7429 = vmax.f32 %v7358, 0.0
        %v7430 = vmax.f32 %v7360, 0.0
        %v7431 = vmax.f32 %v7362, 0.0
        %v7432 = vmax.f32 %v7366, 0.0
        %v7433 = vmax.f32 %v7368, 0.0
        %v7434 = vmax.f32 %v7370, 0.0
        %v7435 = vmax.f32 %v7372, 0.0
        %v7436 = vmax.f32 %v7376, 0.0
        %v7437 = vmax.f32 %v7378, 0.0
        %v7438 = vmax.f32 %v7380, 0.0
        %v7439 = vmax.f32 %v7382, 0.0
        %v7440 = vmax.f32 %v7386, 0.0
        %v7441 = vmax.f32 %v7388, 0.0
        %v7442 = vmax.f32 %v7390, 0.0
        %v7443 = vmax.f32 %v7392, 0.0
        %v7444 = vmax.f32 %v7396, 0.0
        %v7445 = vmax.f32 %v7398, 0.0
        %v7446 = vmax.f32 %v7400, 0.0
        %v7447 = vmax.f32 %v7402, 0.0
        %v7448 = vmax.f32 %v7406, 0.0
        %v7449 = vmax.f32 %v7408, 0.0
        %v7450 = vmax.f32 %v7410, 0.0
        %v7451 = vmax.f32 %v7412, 0.0
        %v7452 = vmax.f32 %v7416, 0.0
        %v7453 = vmax.f32 %v7418, 0.0
        %v7454 = vmax.f32 %v7420, 0.0
        %v7455 = vmax.f32 %v7422, 0.0
        %v7456 = vpack.c.bf16 %v7426, %v7424
        %v7457 = vpack.c.bf16 %v7427, %v7425
        %v7458 = vpack.c.bf16 %v7430, %v7428
        %v7459 = vpack.c.bf16 %v7431, %v7429
        %v7460 = vpack.c.bf16 %v7434, %v7432
        %v7461 = vpack.c.bf16 %v7435, %v7433
        %v7462 = vpack.c.bf16 %v7438, %v7436
        %v7463 = vpack.c.bf16 %v7439, %v7437
        %v7464 = vpack.c.bf16 %v7442, %v7440
        %v7465 = vpack.c.bf16 %v7443, %v7441
        %v7466 = vpack.c.bf16 %v7446, %v7444
        %v7467 = vpack.c.bf16 %v7447, %v7445
        %v7468 = vpack.c.bf16 %v7450, %v7448
        %v7469 = vpack.c.bf16 %v7451, %v7449
        %v7470 = vpack.c.bf16 %v7454, %v7452
        %v7471 = vpack.c.bf16 %v7455, %v7453
        %v7472 = vld [vmem:[#allocation21] sm:$0xf]
        %v7473 = vld [vmem:[#allocation21 + $0x4] sm:$0xf]
        %v7474 = vld [vmem:[#allocation21 + $0x8] sm:$0xf]
        %v7475 = vld [vmem:[#allocation21 + $0xc] sm:$0xf]
        %v7476 = vld [vmem:[#allocation21 + $0x10] sm:$0xf]
        %v7477 = vld [vmem:[#allocation21 + $0x14] sm:$0xf]
        %v7478 = vld [vmem:[#allocation21 + $0x18] sm:$0xf]
        %v7479 = vld [vmem:[#allocation21 + $0x1c] sm:$0xf]
        %v7480 = vld [vmem:[#allocation21 + $0x20] sm:$0xf]
        %v7481 = vld [vmem:[#allocation21 + $0x24] sm:$0xf]
        %v7482 = vld [vmem:[#allocation21 + $0x28] sm:$0xf]
        %v7483 = vld [vmem:[#allocation21 + $0x2c] sm:$0xf]
        %v7484 = vld [vmem:[#allocation21 + $0x30] sm:$0xf]
        %v7485 = vld [vmem:[#allocation21 + $0x34] sm:$0xf]
        %v7486 = vld [vmem:[#allocation21 + $0x38] sm:$0xf]
        %v7487 = vld [vmem:[#allocation21 + $0x3c] sm:$0xf]
        %v7488 = vld [vmem:[#allocation21 + $0x40] sm:$0xf]
        %v7489 = vld [vmem:[#allocation21 + $0x44] sm:$0xf]
        %v7490 = vld [vmem:[#allocation21 + $0x48] sm:$0xf]
        %v7491 = vld [vmem:[#allocation21 + $0x4c] sm:$0xf]
        %v7492 = vld [vmem:[#allocation21 + $0x50] sm:$0xf]
        %v7493 = vld [vmem:[#allocation21 + $0x54] sm:$0xf]
        %v7494 = vld [vmem:[#allocation21 + $0x58] sm:$0xf]
        %v7495 = vld [vmem:[#allocation21 + $0x5c] sm:$0xf]
        %v7496 = vld [vmem:[#allocation21 + $0x60] sm:$0xf]
        %v7497 = vld [vmem:[#allocation21 + $0x64] sm:$0xf]
        %v7498 = vld [vmem:[#allocation21 + $0x68] sm:$0xf]
        %v7499 = vld [vmem:[#allocation21 + $0x6c] sm:$0xf]
        %v7500 = vld [vmem:[#allocation21 + $0x70] sm:$0xf]
        %v7501 = vld [vmem:[#allocation21 + $0x74] sm:$0xf]
        %v7502 = vld [vmem:[#allocation21 + $0x78] sm:$0xf]
        %v7503 = vld [vmem:[#allocation21 + $0x7c] sm:$0xf]
        %v7504 = vld [vmem:[%s21] sm:$0x1]
        %v7506 = vlaneseq
        %v7507 = vshrl.u32 %v7506, 7
        %v7508 = vsub.s32 0, %v7507
        %v7509 = vrot.slane %v7504, %v7508
        %v7543 = vunpack.c.l.b16 %v7472
        %v7544 = vunpack.c.l.b16 %v7473
        %v7545 = vunpack.c.l.b16 %v7474
        %v7546 = vunpack.c.l.b16 %v7475
        %v7547 = vunpack.c.l.b16 %v7476
        %v7548 = vunpack.c.l.b16 %v7477
        %v7549 = vunpack.c.l.b16 %v7478
        %v7550 = vunpack.c.l.b16 %v7479
        %v7551 = vunpack.c.l.b16 %v7480
        %v7552 = vunpack.c.l.b16 %v7481
        %v7553 = vunpack.c.l.b16 %v7482
        %v7554 = vunpack.c.l.b16 %v7483
        %v7555 = vunpack.c.l.b16 %v7484
        %v7556 = vunpack.c.l.b16 %v7485
        %v7557 = vunpack.c.l.b16 %v7486
        %v7558 = vunpack.c.l.b16 %v7487
        %v7559 = vunpack.c.l.b16 %v7488
        %v7560 = vunpack.c.l.b16 %v7489
        %v7561 = vunpack.c.l.b16 %v7490
        %v7562 = vunpack.c.l.b16 %v7491
        %v7563 = vunpack.c.l.b16 %v7492
        %v7564 = vunpack.c.l.b16 %v7493
        %v7565 = vunpack.c.l.b16 %v7494
        %v7566 = vunpack.c.l.b16 %v7495
        %v7567 = vunpack.c.l.b16 %v7496
        %v7568 = vunpack.c.l.b16 %v7497
        %v7569 = vunpack.c.l.b16 %v7498
        %v7570 = vunpack.c.l.b16 %v7499
        %v7571 = vunpack.c.l.b16 %v7500
        %v7572 = vunpack.c.l.b16 %v7501
        %v7573 = vunpack.c.l.b16 %v7502
        %v7574 = vunpack.c.l.b16 %v7503
        %v7575 = vpack.c.b16 %v7544, %v7543
        %v7576 = vpack.c.b16 %v7546, %v7545
        %v7577 = vpack.c.b16 %v7548, %v7547
        %v7578 = vpack.c.b16 %v7550, %v7549
        %v7579 = vpack.c.b16 %v7552, %v7551
        %v7580 = vpack.c.b16 %v7554, %v7553
        %v7581 = vpack.c.b16 %v7556, %v7555
        %v7582 = vpack.c.b16 %v7558, %v7557
        %v7583 = vpack.c.b16 %v7560, %v7559
        %v7584 = vpack.c.b16 %v7562, %v7561
        %v7585 = vpack.c.b16 %v7564, %v7563
        %v7586 = vpack.c.b16 %v7566, %v7565
        %v7587 = vpack.c.b16 %v7568, %v7567
        %v7588 = vpack.c.b16 %v7570, %v7569
        %v7589 = vpack.c.b16 %v7572, %v7571
        %v7590 = vpack.c.b16 %v7574, %v7573
        %7607 = vmatprep.subr.bf16.mxu0 0
        %7608 = vmatpush1.bf16.msra.mxu0 %v7575
        %7609 = vmatprep.subr.bf16.mxu0 0
        %7610 = vmatpush1.bf16.msra.mxu0 %v7576
        %7611 = vmatprep.subr.bf16.mxu0 0
        %7612 = vmatpush1.bf16.msra.mxu0 %v7577
        %7613 = vmatprep.subr.bf16.mxu0 0
        %7614 = vmatpush1.bf16.msra.mxu0 %v7578
        %7615 = vmatprep.subr.bf16.mxu0 0
        %7616 = vmatpush1.bf16.msra.mxu0 %v7579
        %7617 = vmatprep.subr.bf16.mxu0 0
        %7618 = vmatpush1.bf16.msra.mxu0 %v7580
        %7619 = vmatprep.subr.bf16.mxu0 0
        %7620 = vmatpush1.bf16.msra.mxu0 %v7581
        %7621 = vmatprep.subr.bf16.mxu0 0
        %7622 = vmatpush1.bf16.msra.mxu0 %v7582
        %7623 = vmatprep.subr.bf16.mxu0 0
        %7624 = vmatpush1.bf16.msra.mxu0 %v7583
        %7625 = vmatprep.subr.bf16.mxu0 0
        %7626 = vmatpush1.bf16.msra.mxu0 %v7584
        %7627 = vmatprep.subr.bf16.mxu0 0
        %7628 = vmatpush1.bf16.msra.mxu0 %v7585
        %7629 = vmatprep.subr.bf16.mxu0 0
        %7630 = vmatpush1.bf16.msra.mxu0 %v7586
        %7631 = vmatprep.subr.bf16.mxu0 0
        %7632 = vmatpush1.bf16.msra.mxu0 %v7587
        %7633 = vmatprep.subr.bf16.mxu0 0
        %7634 = vmatpush1.bf16.msra.mxu0 %v7588
        %7635 = vmatprep.subr.bf16.mxu0 0
        %7636 = vmatpush1.bf16.msra.mxu0 %v7589
        %7637 = vmatprep.subr.bf16.mxu0 0
        %7638 = vmatpush1.bf16.msra.mxu0 %v7590
        %7639 = vmatprep.mubr.bf16.mxu0 %v7457
        %7640 = vmatmul.mubr.bf16.gmra.mrb[0].mxu0 %v7456
        %v7641 = vpop.f32.mrb[0].mxu0
        %v7642 = vadd.f32 %v7509, %v7641
        %v7643 = vpop.f32.mrb[0].mxu0
        %v7644 = vpop.f32.mrb[0].mxu0
        %v7645 = vadd.f32 %v7509, %v7644
        %v7646 = vpop.f32.mrb[0].mxu0
        %7647 = vmatprep.mubr.bf16.mxu0 %v7459
        %7648 = vmatmul.mubr.bf16.gmra.mrb[0].mxu0 %v7458
        %v7649 = vpop.f32.mrb[0].mxu0
        %v7650 = vadd.f32 %v7509, %v7649
        %v7651 = vpop.f32.mrb[0].mxu0
        %v7652 = vpop.f32.mrb[0].mxu0
        %v7653 = vadd.f32 %v7509, %v7652
        %v7654 = vpop.f32.mrb[0].mxu0
        %7655 = vmatprep.mubr.bf16.mxu0 %v7461
        %7656 = vmatmul.mubr.bf16.gmra.mrb[0].mxu0 %v7460
        %v7657 = vpop.f32.mrb[0].mxu0
        %v7658 = vadd.f32 %v7509, %v7657
        %v7659 = vpop.f32.mrb[0].mxu0
        %v7660 = vpop.f32.mrb[0].mxu0
        %v7661 = vadd.f32 %v7509, %v7660
        %v7662 = vpop.f32.mrb[0].mxu0
        %7663 = vmatprep.mubr.bf16.mxu0 %v7463
        %7664 = vmatmul.mubr.bf16.gmra.mrb[0].mxu0 %v7462
        %v7665 = vpop.f32.mrb[0].mxu0
        %v7666 = vadd.f32 %v7509, %v7665
        %v7667 = vpop.f32.mrb[0].mxu0
        %v7668 = vpop.f32.mrb[0].mxu0
        %v7669 = vadd.f32 %v7509, %v7668
        %v7670 = vpop.f32.mrb[0].mxu0
        %7671 = vmatprep.mubr.bf16.mxu0 %v7465
        %7672 = vmatmul.mubr.bf16.gmra.mrb[0].mxu0 %v7464
        %v7673 = vpop.f32.mrb[0].mxu0
        %v7674 = vadd.f32 %v7509, %v7673
        %v7675 = vpop.f32.mrb[0].mxu0
        %v7676 = vpop.f32.mrb[0].mxu0
        %v7677 = vadd.f32 %v7509, %v7676
        %v7678 = vpop.f32.mrb[0].mxu0
        %7679 = vmatprep.mubr.bf16.mxu0 %v7467
        %7680 = vmatmul.mubr.bf16.gmra.mrb[0].mxu0 %v7466
        %v7681 = vpop.f32.mrb[0].mxu0
        %v7682 = vadd.f32 %v7509, %v7681
        %v7683 = vpop.f32.mrb[0].mxu0
        %v7684 = vpop.f32.mrb[0].mxu0
        %v7685 = vadd.f32 %v7509, %v7684
        %v7686 = vpop.f32.mrb[0].mxu0
        %7687 = vmatprep.mubr.bf16.mxu0 %v7469
        %7688 = vmatmul.mubr.bf16.gmra.mrb[0].mxu0 %v7468
        %v7689 = vpop.f32.mrb[0].mxu0
        %v7690 = vadd.f32 %v7509, %v7689
        %v7691 = vpop.f32.mrb[0].mxu0
        %v7692 = vpop.f32.mrb[0].mxu0
        %v7693 = vadd.f32 %v7509, %v7692
        %v7694 = vpop.f32.mrb[0].mxu0
        %7695 = vmatprep.mubr.bf16.mxu0 %v7471
        %7696 = vmatmul.mubr.bf16.gmra.mrb[0].mxu0 %v7470
        %v7697 = vpop.f32.mrb[0].mxu0
        %v7698 = vadd.f32 %v7509, %v7697
        %v7699 = vpop.f32.mrb[0].mxu0
        %v7700 = vpop.f32.mrb[0].mxu0
        %v7701 = vadd.f32 %v7509, %v7700
        %v7702 = vpop.f32.mrb[0].mxu0
        %7703 = vdwg.mxu0
        %v7704 = vadd.f32 %v7642, %v7179
        %v7705 = vadd.f32 %v7645, %v7180
        %v7706 = vadd.f32 %v7650, %v7181
        %v7707 = vadd.f32 %v7653, %v7182
        %v7708 = vadd.f32 %v7658, %v7183
        %v7709 = vadd.f32 %v7661, %v7184
        %v7710 = vadd.f32 %v7666, %v7185
        %v7711 = vadd.f32 %v7669, %v7186
        %v7712 = vadd.f32 %v7674, %v7187
        %v7713 = vadd.f32 %v7677, %v7188
        %v7714 = vadd.f32 %v7682, %v7189
        %v7715 = vadd.f32 %v7685, %v7190
        %v7716 = vadd.f32 %v7690, %v7191
        %v7717 = vadd.f32 %v7693, %v7192
        %v7718 = vadd.f32 %v7698, %v7193
        %v7719 = vadd.f32 %v7701, %v7194
        %v7720 = vld [vmem:[%s22] sm:$0x1]
        %v7721 = vld [vmem:[%s23] sm:$0x1]
        %7722 = vadd.xlane.f32.xlu0 %v7704
        %v7723 = vpop.xlane.xlu0 %7722
        %7724 = vadd.xlane.f32.xlu0 %v7705
        %v7725 = vpop.xlane.xlu0 %7724
        %7726 = vadd.xlane.f32.xlu0 %v7706
        %v7727 = vpop.xlane.xlu0 %7726
        %7728 = vadd.xlane.f32.xlu0 %v7707
        %v7729 = vpop.xlane.xlu0 %7728
        %7730 = vadd.xlane.f32.xlu0 %v7708
        %v7731 = vpop.xlane.xlu0 %7730
        %7732 = vadd.xlane.f32.xlu0 %v7709
        %v7733 = vpop.xlane.xlu0 %7732
        %7734 = vadd.xlane.f32.xlu0 %v7710
        %v7735 = vpop.xlane.xlu0 %7734
        %7736 = vadd.xlane.f32.xlu0 %v7711
        %v7737 = vpop.xlane.xlu0 %7736
        %7738 = vadd.xlane.f32.xlu0 %v7712
        %v7739 = vpop.xlane.xlu0 %7738
        %7740 = vadd.xlane.f32.xlu0 %v7713
        %v7741 = vpop.xlane.xlu0 %7740
        %7742 = vadd.xlane.f32.xlu0 %v7714
        %v7743 = vpop.xlane.xlu0 %7742
        %7744 = vadd.xlane.f32.xlu0 %v7715
        %v7745 = vpop.xlane.xlu0 %7744
        %7746 = vadd.xlane.f32.xlu0 %v7716
        %v7747 = vpop.xlane.xlu0 %7746
        %7748 = vadd.xlane.f32.xlu0 %v7717
        %v7749 = vpop.xlane.xlu0 %7748
        %7750 = vadd.xlane.f32.xlu0 %v7718
        %v7751 = vpop.xlane.xlu0 %7750
        %7752 = vadd.xlane.f32.xlu0 %v7719
        %v7753 = vpop.xlane.xlu0 %7752
        %v7754 = vmul.f32 %v7723, %v4616
        %v7755 = vmul.f32 %v7725, %v4616
        %v7756 = vmul.f32 %v7727, %v4616
        %v7757 = vmul.f32 %v7729, %v4616
        %v7758 = vmul.f32 %v7731, %v4616
        %v7759 = vmul.f32 %v7733, %v4616
        %v7760 = vmul.f32 %v7735, %v4616
        %v7761 = vmul.f32 %v7737, %v4616
        %v7762 = vmul.f32 %v7739, %v4616
        %v7763 = vmul.f32 %v7741, %v4616
        %v7764 = vmul.f32 %v7743, %v4616
        %v7765 = vmul.f32 %v7745, %v4616
        %v7766 = vmul.f32 %v7747, %v4616
        %v7767 = vmul.f32 %v7749, %v4616
        %v7768 = vmul.f32 %v7751, %v4616
        %v7769 = vmul.f32 %v7753, %v4616
        %v7770 = vsub.f32 %v7704, %v7754
        %v7771 = vsub.f32 %v7705, %v7755
        %v7772 = vsub.f32 %v7706, %v7756
        %v7773 = vsub.f32 %v7707, %v7757
        %v7774 = vsub.f32 %v7708, %v7758
        %v7775 = vsub.f32 %v7709, %v7759
        %v7776 = vsub.f32 %v7710, %v7760
        %v7777 = vsub.f32 %v7711, %v7761
        %v7778 = vsub.f32 %v7712, %v7762
        %v7779 = vsub.f32 %v7713, %v7763
        %v7780 = vsub.f32 %v7714, %v7764
        %v7781 = vsub.f32 %v7715, %v7765
        %v7782 = vsub.f32 %v7716, %v7766
        %v7783 = vsub.f32 %v7717, %v7767
        %v7784 = vsub.f32 %v7718, %v7768
        %v7785 = vsub.f32 %v7719, %v7769
        %v7786 = vmul.f32 %v7770, %v7770
        %v7787 = vmul.f32 %v7771, %v7771
        %v7788 = vmul.f32 %v7772, %v7772
        %v7789 = vmul.f32 %v7773, %v7773
        %v7790 = vmul.f32 %v7774, %v7774
        %v7791 = vmul.f32 %v7775, %v7775
        %v7792 = vmul.f32 %v7776, %v7776
        %v7793 = vmul.f32 %v7777, %v7777
        %v7794 = vmul.f32 %v7778, %v7778
        %v7795 = vmul.f32 %v7779, %v7779
        %v7796 = vmul.f32 %v7780, %v7780
        %v7797 = vmul.f32 %v7781, %v7781
        %v7798 = vmul.f32 %v7782, %v7782
        %v7799 = vmul.f32 %v7783, %v7783
        %v7800 = vmul.f32 %v7784, %v7784
        %v7801 = vmul.f32 %v7785, %v7785
        %7802 = vadd.xlane.f32.xlu0 %v7786
        %v7803 = vpop.xlane.xlu0 %7802
        %7804 = vadd.xlane.f32.xlu0 %v7787
        %v7805 = vpop.xlane.xlu0 %7804
        %7806 = vadd.xlane.f32.xlu0 %v7788
        %v7807 = vpop.xlane.xlu0 %7806
        %7808 = vadd.xlane.f32.xlu0 %v7789
        %v7809 = vpop.xlane.xlu0 %7808
        %7810 = vadd.xlane.f32.xlu0 %v7790
        %v7811 = vpop.xlane.xlu0 %7810
        %7812 = vadd.xlane.f32.xlu0 %v7791
        %v7813 = vpop.xlane.xlu0 %7812
        %7814 = vadd.xlane.f32.xlu0 %v7792
        %v7815 = vpop.xlane.xlu0 %7814
        %7816 = vadd.xlane.f32.xlu0 %v7793
        %v7817 = vpop.xlane.xlu0 %7816
        %7818 = vadd.xlane.f32.xlu0 %v7794
        %v7819 = vpop.xlane.xlu0 %7818
        %7820 = vadd.xlane.f32.xlu0 %v7795
        %v7821 = vpop.xlane.xlu0 %7820
        %7822 = vadd.xlane.f32.xlu0 %v7796
        %v7823 = vpop.xlane.xlu0 %7822
        %7824 = vadd.xlane.f32.xlu0 %v7797
        %v7825 = vpop.xlane.xlu0 %7824
        %7826 = vadd.xlane.f32.xlu0 %v7798
        %v7827 = vpop.xlane.xlu0 %7826
        %7828 = vadd.xlane.f32.xlu0 %v7799
        %v7829 = vpop.xlane.xlu0 %7828
        %7830 = vadd.xlane.f32.xlu0 %v7800
        %v7831 = vpop.xlane.xlu0 %7830
        %7832 = vadd.xlane.f32.xlu0 %v7801
        %v7833 = vpop.xlane.xlu0 %7832
        %v7834 = vmul.f32 %v7803, %v4616
        %v7835 = vmul.f32 %v7805, %v4616
        %v7836 = vmul.f32 %v7807, %v4616
        %v7837 = vmul.f32 %v7809, %v4616
        %v7838 = vmul.f32 %v7811, %v4616
        %v7839 = vmul.f32 %v7813, %v4616
        %v7840 = vmul.f32 %v7815, %v4616
        %v7841 = vmul.f32 %v7817, %v4616
        %v7842 = vmul.f32 %v7819, %v4616
        %v7843 = vmul.f32 %v7821, %v4616
        %v7844 = vmul.f32 %v7823, %v4616
        %v7845 = vmul.f32 %v7825, %v4616
        %v7846 = vmul.f32 %v7827, %v4616
        %v7847 = vmul.f32 %v7829, %v4616
        %v7848 = vmul.f32 %v7831, %v4616
        %v7849 = vmul.f32 %v7833, %v4616
        %v7850 = vadd.f32 %v7834, 1e-06
        %v7851 = vadd.f32 %v7835, 1e-06
        %v7852 = vadd.f32 %v7836, 1e-06
        %v7853 = vadd.f32 %v7837, 1e-06
        %v7854 = vadd.f32 %v7838, 1e-06
        %v7855 = vadd.f32 %v7839, 1e-06
        %v7856 = vadd.f32 %v7840, 1e-06
        %v7857 = vadd.f32 %v7841, 1e-06
        %v7858 = vadd.f32 %v7842, 1e-06
        %v7859 = vadd.f32 %v7843, 1e-06
        %v7860 = vadd.f32 %v7844, 1e-06
        %v7861 = vadd.f32 %v7845, 1e-06
        %v7862 = vadd.f32 %v7846, 1e-06
        %v7863 = vadd.f32 %v7847, 1e-06
        %v7864 = vadd.f32 %v7848, 1e-06
        %v7865 = vadd.f32 %v7849, 1e-06
        %v7866 = vrsqrt.pop %v7850
        %v7867 = vrsqrt.pop %v7851
        %v7868 = vrsqrt.pop %v7852
        %v7869 = vrsqrt.pop %v7853
        %v7870 = vrsqrt.pop %v7854
        %v7871 = vrsqrt.pop %v7855
        %v7872 = vrsqrt.pop %v7856
        %v7873 = vrsqrt.pop %v7857
        %v7874 = vrsqrt.pop %v7858
        %v7875 = vrsqrt.pop %v7859
        %v7876 = vrsqrt.pop %v7860
        %v7877 = vrsqrt.pop %v7861
        %v7878 = vrsqrt.pop %v7862
        %v7879 = vrsqrt.pop %v7863
        %v7880 = vrsqrt.pop %v7864
        %v7881 = vrsqrt.pop %v7865
        %v7882 = vmul.f32 %v7770, %v7866
        %v7883 = vmul.f32 %v7771, %v7867
        %v7884 = vmul.f32 %v7772, %v7868
        %v7885 = vmul.f32 %v7773, %v7869
        %v7886 = vmul.f32 %v7774, %v7870
        %v7887 = vmul.f32 %v7775, %v7871
        %v7888 = vmul.f32 %v7776, %v7872
        %v7889 = vmul.f32 %v7777, %v7873
        %v7890 = vmul.f32 %v7778, %v7874
        %v7891 = vmul.f32 %v7779, %v7875
        %v7892 = vmul.f32 %v7780, %v7876
        %v7893 = vmul.f32 %v7781, %v7877
        %v7894 = vmul.f32 %v7782, %v7878
        %v7895 = vmul.f32 %v7783, %v7879
        %v7896 = vmul.f32 %v7784, %v7880
        %v7897 = vmul.f32 %v7785, %v7881
        %v7899 = vlaneseq
        %v7900 = vshrl.u32 %v7899, 7
        %v7901 = vsub.s32 0, %v7900
        %v7902 = vrot.slane %v7720, %v7901
        %v7904 = vmul.f32 %v7882, %v7902
        %v7905 = vmul.f32 %v7883, %v7902
        %v7906 = vmul.f32 %v7884, %v7902
        %v7907 = vmul.f32 %v7885, %v7902
        %v7908 = vmul.f32 %v7886, %v7902
        %v7909 = vmul.f32 %v7887, %v7902
        %v7910 = vmul.f32 %v7888, %v7902
        %v7911 = vmul.f32 %v7889, %v7902
        %v7912 = vmul.f32 %v7890, %v7902
        %v7913 = vmul.f32 %v7891, %v7902
        %v7914 = vmul.f32 %v7892, %v7902
        %v7915 = vmul.f32 %v7893, %v7902
        %v7916 = vmul.f32 %v7894, %v7902
        %v7917 = vmul.f32 %v7895, %v7902
        %v7918 = vmul.f32 %v7896, %v7902
        %v7919 = vmul.f32 %v7897, %v7902
        %v7921 = vlaneseq
        %v7922 = vshrl.u32 %v7921, 7
        %v7923 = vsub.s32 0, %v7922
        %v7924 = vrot.slane %v7721, %v7923
        %v7926 = vadd.f32 %v7904, %v7924
        %v7927 = vadd.f32 %v7905, %v7924
        %v7928 = vadd.f32 %v7906, %v7924
        %v7929 = vadd.f32 %v7907, %v7924
        %v7930 = vadd.f32 %v7908, %v7924
        %v7931 = vadd.f32 %v7909, %v7924
        %v7932 = vadd.f32 %v7910, %v7924
        %v7933 = vadd.f32 %v7911, %v7924
        %v7934 = vadd.f32 %v7912, %v7924
        %v7935 = vadd.f32 %v7913, %v7924
        %v7936 = vadd.f32 %v7914, %v7924
        %v7937 = vadd.f32 %v7915, %v7924
        %v7938 = vadd.f32 %v7916, %v7924
        %v7939 = vadd.f32 %v7917, %v7924
        %v7940 = vadd.f32 %v7918, %v7924
        %v7941 = vadd.f32 %v7919, %v7924
        %7942 = vst [vmem:[%s925] sm:$0xff] %v7926
        %7943 = vst [vmem:[%s925 + $0x8] sm:$0xff] %v7927
        %7944 = vst [vmem:[%s925 + $0x10] sm:$0xff] %v7928
        %7945 = vst [vmem:[%s925 + $0x18] sm:$0xff] %v7929
        %7946 = vst [vmem:[%s925 + $0x20] sm:$0xff] %v7930
        %7947 = vst [vmem:[%s925 + $0x28] sm:$0xff] %v7931
        %7948 = vst [vmem:[%s925 + $0x30] sm:$0xff] %v7932
        %7949 = vst [vmem:[%s925 + $0x38] sm:$0xff] %v7933
        %7950 = vst [vmem:[%s925 + $0x40] sm:$0xff] %v7934
        %7951 = vst [vmem:[%s925 + $0x48] sm:$0xff] %v7935
        %7952 = vst [vmem:[%s925 + $0x50] sm:$0xff] %v7936
        %7953 = vst [vmem:[%s925 + $0x58] sm:$0xff] %v7937
        %7954 = vst [vmem:[%s925 + $0x60] sm:$0xff] %v7938
        %7955 = vst [vmem:[%s925 + $0x68] sm:$0xff] %v7939
        %7956 = vst [vmem:[%s925 + $0x70] sm:$0xff] %v7940
        %7957 = vst [vmem:[%s925 + $0x78] sm:$0xff] %v7941
        %s7958 = sand.u32 %s584, 1
        %s7959 = scalar_lea.sflag [#allocation8], %s7958
        %s7960 = sand.u32 %s584, 1
        %s7961 = smul.addr %s7960, 128
        %s7962 = scalar_lea.vmem [#allocation23], %s7961
        // Predicated region
        $region161: #{tpu_custom_call.1} parent=115 // pred_check
          %p7963 = pneg %p594
        $region162: #{tpu_custom_call.1} parent=115 // pred_check_branch
          %7965 = sbr.rel (%p7963) target = $region164
        $region163: #{tpu_custom_call.1} parent=115 // pred_region
          %s7966 = smul.u32 16, %s53
          %s7968 = ssub.s32 2048, 2048
          %7969 = vsyncadd %s7959, %s7968
          %s7970 = smul.addr %s52, 32
          %s7971 = sadd.s32 %s7966, %s7970
          %s7972 = smul.addr %s7971, 128
          %s7973 = scalar_lea.hbm %s24, %s7972
          %s7974 = sshll.u32 %s7962, 4
          %s7975 = int_to_ptr.vmem [resolvable:$true] %s7974
          %7980 = dma.vmem_to_hbm [thread:$0]  %s7975, 2048, %s7973, %s7959, 128, 128, 8
        $region164: #{tpu_custom_call.1} parent=115 // pred_fallthru
          _
      $region116: #{tpu_custom_call.1} parent=5 // pred_fallthru
        _
      %p7981 = scmp.le.s32.totalorder 2, %s43
      // Predicated region
      $region165: #{tpu_custom_call.1} parent=5 // pred_check
        %p7982 = pneg %p7981
      $region166: #{tpu_custom_call.1} parent=5 // pred_check_branch
        %7984 = sbr.rel (%p7982) target = $region168
      $region167: #{tpu_custom_call.1} parent=5 // pred_region
        %s7985 = ssub.s32 %s43, 2
        // Predicated region
        $region169: #{tpu_custom_call.1} parent=167 // pred_check
          %p7986 = pneg %p600
        $region170: #{tpu_custom_call.1} parent=167 // pred_check_branch
          %7988 = sbr.rel (%p7986) target = $region172
        $region171: #{tpu_custom_call.1} parent=167 // pred_region
          %s7989 = sand.u32 %s585, 1
          %s7990 = scalar_lea.sflag [#allocation8], %s7989
          %s7991 = sand.u32 %s585, 1
          %s7992 = smul.addr %s7991, 128
          %s7993 = scalar_lea.vmem [#allocation23], %s7992
          %7994 = dma.done %s7990, 2048
        $region172: #{tpu_custom_call.1} parent=167 // pred_fallthru
          _
      $region168: #{tpu_custom_call.1} parent=5 // pred_fallthru
        _
    $region6: #{tpu_custom_call.1} parent=1 // loop_footer
      %s47 = sadd.s32 1, %s43
    $region7: #{tpu_custom_call.1} parent=1 // loop_footer_branch
      %42 = sbr.rel target = $region3
    $region8: #{tpu_custom_call.1} parent=1 // loop_exit
      _
    %7995 = vsyncpa [#allocation7], 1
    %s7996 = scalar_lea.sflag [#allocation7], 1
    %7997 = vsyncpa %s7996, 1
    %7998 = vsyncpa [#allocation10], 1
    %s7999 = scalar_lea.sflag [#allocation10], 1
    %8000 = vsyncpa %s7999, 1
    %8001 = vsyncpa [#allocation13], 1
    %8002 = vsyncpa [#allocation16], 1
    %8003 = vsyncpa [#allocation19], 1
    %8004 = vsyncpa [#allocation22], 1
    %8005 = vsyncpa [#allocation8], 1
    %s8006 = scalar_lea.sflag [#allocation8], 1
    %8007 = vsyncpa %s8006, 1

</llo_original>
